<compile_context>
chip_gen: v7x
topology: tpu7x:2x2x1
jax: 0.10.0
libtpu: 0.0.40
codegen_flags: <defaults>
</compile_context>

<pallas_src>
import jax
import jax.numpy as jnp
from jax.experimental import pallas as pl
from jax.experimental.pallas import tpu as pltpu


def _fixup_block_kernel(x_ref, w1_ref, w2_ref, s_ref, out_ref, pad_ref):
    # x_ref   : (1, H, W, C)   f32  VMEM block (one image per grid step)
    # w1_ref  : (3, 3, C, C)   bf16 VMEM (HWIO)
    # w2_ref  : (3, 3, C, C)   bf16 VMEM (HWIO)
    # s_ref   : (5,)           f32  SMEM  [bias1a, bias1b, bias2a, scale, bias2b]
    # out_ref : (1, H, W, C)   f32  VMEM block
    # pad_ref : (H+2, W+2, C)  bf16 VMEM scratch (shared by conv1 and conv2)
    _, H, W, C = x_ref.shape
    M = H * W

    b1a = s_ref[0]
    b1b = s_ref[1]
    b2a = s_ref[2]
    scale = s_ref[3]
    b2b = s_ref[4]

    # Zero only the 1-pixel halo (interior is fully overwritten below).  Done
    # every grid step so the kernel stays correct when the batch axis is
    # sharded across TensorCores ("parallel" semantics -> per-core scratch).
    zrow = jnp.zeros((1, W + 2, C), pad_ref.dtype)
    zcol = jnp.zeros((H + 2, 1, C), pad_ref.dtype)
    pad_ref[0:1, :, :] = zrow
    pad_ref[H + 1:H + 2, :, :] = zrow
    pad_ref[:, 0:1, :] = zcol
    pad_ref[:, W + 1:W + 2, :] = zcol

    def conv3x3(w_ref):
        # 3x3 "same" conv of the pad_ref interior as 9 plain 2D MXU matmuls.
        acc = jnp.zeros((M, C), jnp.float32)
        for kx in range(3):
            # One sublane-shifted copy per kx ...
            shifted = pad_ref[:, kx:kx + W, :].reshape((H + 2) * W, C)
            for ky in range(3):
                # ... then ky is a cheap, 8-aligned row offset (W % 8 == 0).
                win = shifted[ky * W:ky * W + M, :]
                acc = acc + jnp.dot(win, w_ref[ky, kx],
                                    preferred_element_type=jnp.float32)
        return acc

    x = x_ref[0]                                            # (H, W, C) f32

    # out = conv1(x + bias1a)
    pad_ref[1:H + 1, 1:W + 1, :] = (x + b1a).astype(pad_ref.dtype)
    out = conv3x3(w1_ref)

    # out = relu(out + bias1b)
    out = jnp.maximum(out + b1b, 0.0)

    # out = conv2(out + bias2a)   (reuse the same padded scratch; Cin == Cout)
    pad_ref[1:H + 1, 1:W + 1, :] = (out + b2a).reshape(H, W, C).astype(pad_ref.dtype)
    out = conv3x3(w2_ref)

    # out = out * scale + bias2b; out += identity; out = relu(out)
    # TODO(synk): downsample branch (downsample(x+bias1a) + zero-channel concat)
    #             not implemented; this kernel covers stride=1, downsample=None.
    out = out * scale + b2b
    out = out + x.reshape(M, C)                             # residual in f32
    out = jnp.maximum(out, 0.0)
    out_ref[...] = out.reshape(1, H, W, C).astype(out_ref.dtype)


def fixup_basic_block_nhwc(x_nhwc, w1_hwio, w2_hwio,
                           bias1a, bias1b, bias2a, scale, bias2b):
    """FixupBasicBlock.forward, NHWC activations / HWIO weights.

    Covers the stride=1 / downsample=None configuration (inplanes == planes).
    """
    N, H, W, C = x_nhwc.shape
    assert w1_hwio.shape == (3, 3, C, C) and w2_hwio.shape == (3, 3, C, C), (
        "stride=1 / downsample=None path requires inplanes == planes")

    x = x_nhwc.astype(jnp.float32)
    w1 = w1_hwio.astype(jnp.bfloat16)
    w2 = w2_hwio.astype(jnp.bfloat16)

    scalars = jnp.stack([
        jnp.asarray(bias1a, jnp.float32).reshape(()),
        jnp.asarray(bias1b, jnp.float32).reshape(()),
        jnp.asarray(bias2a, jnp.float32).reshape(()),
        jnp.asarray(scale, jnp.float32).reshape(()),
        jnp.asarray(bias2b, jnp.float32).reshape(()),
    ])

    # VMEM budget estimate (channel dim pads to 128 lanes on TPU).
    lane_c = ((C + 127) // 128) * 128
    blk_bytes = H * W * lane_c * 4                    # one f32 image block
    pad_bytes = (H + 2) * (W + 2) * lane_c * 2        # bf16 padded scratch
    w_bytes = 2 * 3 * 3 * 8 * lane_c * 2              # both weights (padded)
    est = 4 * blk_bytes + 2 * pad_bytes + w_bytes + 12 * blk_bytes
    vmem_limit = int(min(max(2 * est, 8 << 20), 48 << 20))

    flops = 2 * 2 * 9 * N * H * W * C * C             # two convs, MAC = 2 flops
    bytes_accessed = 2 * N * H * W * C * 4 + 2 * 9 * C * C * 2

    grid_spec = pltpu.PrefetchScalarGridSpec(
        num_scalar_prefetch=0,
        grid=(N,),
        in_specs=[
            pl.BlockSpec((1, H, W, C), lambda n: (n, 0, 0, 0)),       # x
            pl.BlockSpec((3, 3, C, C), lambda n: (0, 0, 0, 0)),       # conv1 w
            pl.BlockSpec((3, 3, C, C), lambda n: (0, 0, 0, 0)),       # conv2 w
            pl.BlockSpec(memory_space=pltpu.MemorySpace.SMEM),        # scalars
        ],
        out_specs=pl.BlockSpec((1, H, W, C), lambda n: (n, 0, 0, 0)),
        scratch_shapes=[pltpu.VMEM((H + 2, W + 2, C), jnp.bfloat16)],
    )

    return pl.pallas_call(
        _fixup_block_kernel,
        out_shape=jax.ShapeDtypeStruct((N, H, W, C), jnp.float32),
        grid_spec=grid_spec,
        compiler_params=pltpu.CompilerParams(
            dimension_semantics=("parallel",),
            vmem_limit_bytes=vmem_limit,
        ),
        cost_estimate=pl.CostEstimate(
            flops=flops, transcendentals=0, bytes_accessed=bytes_accessed),
    )(x, w1, w2, scalars)


def fixup_basic_block(x_nchw, w1_oihw, w2_oihw,
                      bias1a, bias1b, bias2a, scale, bias2b):
    """PyTorch-convention wrapper (NCHW activations, OIHW weights).

    The transposes below are layout glue for the PyTorch interface; real
    networks should stay NHWC end-to-end and call fixup_basic_block_nhwc with
    weights pre-transposed once at init.
    """
    x = jnp.transpose(x_nchw, (0, 2, 3, 1))
    w1 = jnp.transpose(w1_oihw, (2, 3, 1, 0))
    w2 = jnp.transpose(w2_oihw, (2, 3, 1, 0))
    out = fixup_basic_block_nhwc(x, w1, w2,
                                 bias1a, bias1b, bias2a, scale, bias2b)
    return jnp.transpose(out, (0, 3, 1, 2))


def _reference_forward(x_nchw, w1_oihw, w2_oihw,
                       bias1a, bias1b, bias2a, scale, bias2b):
    """Pure-JAX reference of FixupBasicBlock.forward (NCHW, like PyTorch)."""
    x = jnp.transpose(x_nchw, (0, 2, 3, 1)).astype(jnp.float32)
    w1 = jnp.transpose(w1_oihw, (2, 3, 1, 0)).astype(jnp.float32)
    w2 = jnp.transpose(w2_oihw, (2, 3, 1, 0)).astype(jnp.float32)

    def conv(a, w):
        return jax.lax.conv_general_dilated(
            a, w, window_strides=(1, 1), padding='SAME',
            dimension_numbers=('NHWC', 'HWIO', 'NHWC'))

    out = conv(x + bias1a[0], w1)
    out = jnp.maximum(out + bias1b[0], 0.0)
    out = conv(out + bias2a[0], w2)
    out = out * scale[0] + bias2b[0]
    out = out + x
    out = jnp.maximum(out, 0.0)
    return jnp.transpose(out, (0, 3, 1, 2))


if __name__ == "__main__":
    key = jax.random.PRNGKey(0)
    kx, kw1, kw2 = jax.random.split(key, 3)

    N, C, H, W = 2, 4, 16, 16       # inplanes == planes == 4, stride 1
    x = jax.random.normal(kx, (N, C, H, W), dtype=jnp.float32)

    # conv3x3 weights (OIHW), bias=False; Fixup scalars as in __init__.
    w1 = 0.1 * jax.random.normal(kw1, (C, C, 3, 3), dtype=jnp.float32)
    w2 = 0.1 * jax.random.normal(kw2, (C, C, 3, 3), dtype=jnp.float32)
    bias1a = jnp.zeros((1,), jnp.float32)
    bias1b = jnp.zeros((1,), jnp.float32)
    bias2a = jnp.zeros((1,), jnp.float32)
    scale = jnp.ones((1,), jnp.float32)
    bias2b = jnp.zeros((1,), jnp.float32)

    out = fixup_basic_block(x, w1, w2, bias1a, bias1b, bias2a, scale, bias2b)
    out = jax.block_until_ready(out)

    ref = _reference_forward(x, w1, w2, bias1a, bias1b, bias2a, scale, bias2b)
    ref = jax.block_until_ready(ref)

    assert out.shape == (N, C, H, W)
    assert jnp.allclose(out, ref, atol=2e-2, rtol=2e-2), (
        f"max abs diff {jnp.max(jnp.abs(out - ref))}")

    print("KERNEL_OK")
</pallas_src>

<mosaic_0001>
module attributes {stable_mosaic.version = 11 : i64} {
  func.func @_fixup_block_kernel(%arg0: i32, %arg1: memref<1x16x16x4xf32, #tpu.memory_space<vmem>>, %arg2: memref<3x3x4x4xbf16, #tpu.memory_space<vmem>>, %arg3: memref<3x3x4x4xbf16, #tpu.memory_space<vmem>>, %arg4: memref<5xf32, #tpu.memory_space<smem>>, %arg5: memref<1x16x16x4xf32, #tpu.memory_space<vmem>>, %arg6: memref<18x18x4xbf16, #tpu.memory_space<vmem>>) attributes {dimension_semantics = [#tpu.dimension_semantics<parallel>], iteration_bounds = array<i64: 2>, scalar_prefetch = 0 : i64, scratch_operands = 1 : i64, tpu.core_type = #tpu.core_type<tc>, window_params = [{transform_indices = @transform_0, window_bounds = array<i64: 1, 16, 16, 4>}, {pipeline_mode = #tpu.pipeline_mode<synchronous>, transform_indices = @transform_1, window_bounds = array<i64: 3, 3, 4, 4>}, {pipeline_mode = #tpu.pipeline_mode<synchronous>, transform_indices = @transform_2, window_bounds = array<i64: 3, 3, 4, 4>}, {transform_indices = @transform_3, window_bounds = array<i64: 5>}, {transform_indices = @transform_4, window_bounds = array<i64: 1, 16, 16, 4>}]} {
    %c0 = arith.constant 0 : index
    %0 = memref.load %arg4[%c0] : memref<5xf32, #tpu.memory_space<smem>>
    %c1 = arith.constant 1 : index
    %1 = memref.load %arg4[%c1] : memref<5xf32, #tpu.memory_space<smem>>
    %c2 = arith.constant 2 : index
    %2 = memref.load %arg4[%c2] : memref<5xf32, #tpu.memory_space<smem>>
    %c3 = arith.constant 3 : index
    %3 = memref.load %arg4[%c3] : memref<5xf32, #tpu.memory_space<smem>>
    %c4 = arith.constant 4 : index
    %4 = memref.load %arg4[%c4] : memref<5xf32, #tpu.memory_space<smem>>
    %cst = arith.constant 0.000000e+00 : bf16
    %5 = vector.broadcast %cst : bf16 to vector<1x18x4xbf16>
    %cst_0 = arith.constant 0.000000e+00 : bf16
    %6 = vector.broadcast %cst_0 : bf16 to vector<18x1x4xbf16>
    %c0_1 = arith.constant 0 : index
    %c0_2 = arith.constant 0 : index
    %c0_3 = arith.constant 0 : index
    %7 = vector.load %arg6[%c0_1, %c0_2, %c0_3] : memref<18x18x4xbf16, #tpu.memory_space<vmem>>, vector<1x18x4xbf16>
    tpu.vector_store %arg6[%c0_1, %c0_2, %c0_3], %5 {strides = array<i32>} : memref<18x18x4xbf16, #tpu.memory_space<vmem>>, vector<1x18x4xbf16>,
    %c17 = arith.constant 17 : index
    %c0_4 = arith.constant 0 : index
    %c0_5 = arith.constant 0 : index
    %8 = vector.load %arg6[%c17, %c0_4, %c0_5] : memref<18x18x4xbf16, #tpu.memory_space<vmem>>, vector<1x18x4xbf16>
    tpu.vector_store %arg6[%c17, %c0_4, %c0_5], %5 {strides = array<i32>} : memref<18x18x4xbf16, #tpu.memory_space<vmem>>, vector<1x18x4xbf16>,
    %c0_6 = arith.constant 0 : index
    %c0_7 = arith.constant 0 : index
    %c0_8 = arith.constant 0 : index
    %9 = vector.load %arg6[%c0_6, %c0_7, %c0_8] : memref<18x18x4xbf16, #tpu.memory_space<vmem>>, vector<18x1x4xbf16>
    tpu.vector_store %arg6[%c0_6, %c0_7, %c0_8], %6 {strides = array<i32>} : memref<18x18x4xbf16, #tpu.memory_space<vmem>>, vector<18x1x4xbf16>,
    %c0_9 = arith.constant 0 : index
    %c17_10 = arith.constant 17 : index
    %c0_11 = arith.constant 0 : index
    %10 = vector.load %arg6[%c0_9, %c17_10, %c0_11] : memref<18x18x4xbf16, #tpu.memory_space<vmem>>, vector<18x1x4xbf16>
    tpu.vector_store %arg6[%c0_9, %c17_10, %c0_11], %6 {strides = array<i32>} : memref<18x18x4xbf16, #tpu.memory_space<vmem>>, vector<18x1x4xbf16>,
    %c0_12 = arith.constant 0 : index
    %c0_13 = arith.constant 0 : index
    %c0_14 = arith.constant 0 : index
    %c0_15 = arith.constant 0 : index
    %11 = vector.load %arg1[%c0_12, %c0_13, %c0_14, %c0_15] : memref<1x16x16x4xf32, #tpu.memory_space<vmem>>, vector<1x16x16x4xf32>
    %12 = vector.shape_cast %11 : vector<1x16x16x4xf32> to vector<16x16x4xf32>
    %13 = vector.broadcast %0 : f32 to vector<16x16x4xf32>
    %14 = arith.addf %12, %13 : vector<16x16x4xf32>
    %15 = arith.truncf %14 : vector<16x16x4xf32> to vector<16x16x4xbf16>
    %c1_16 = arith.constant 1 : index
    %c1_17 = arith.constant 1 : index
    %c0_18 = arith.constant 0 : index
    %16 = vector.load %arg6[%c1_16, %c1_17, %c0_18] : memref<18x18x4xbf16, #tpu.memory_space<vmem>>, vector<16x16x4xbf16>
    tpu.vector_store %arg6[%c1_16, %c1_17, %c0_18], %15 {strides = array<i32>} : memref<18x18x4xbf16, #tpu.memory_space<vmem>>, vector<16x16x4xbf16>,
    %cst_19 = arith.constant 0.000000e+00 : f32
    %17 = vector.broadcast %cst_19 : f32 to vector<256x4xf32>
    %c0_20 = arith.constant 0 : index
    %c0_21 = arith.constant 0 : index
    %c0_22 = arith.constant 0 : index
    %18 = vector.load %arg6[%c0_20, %c0_21, %c0_22] : memref<18x18x4xbf16, #tpu.memory_space<vmem>>, vector<18x16x4xbf16>
    %19 = vector.shape_cast %18 : vector<18x16x4xbf16> to vector<288x4xbf16>
    %20 = vector.extract_strided_slice %19 {offsets = [0, 0], sizes = [256, 4], strides = [1, 1]} : vector<288x4xbf16> to vector<256x4xbf16>
    %c0_23 = arith.constant 0 : index
    %c0_24 = arith.constant 0 : index
    %c0_25 = arith.constant 0 : index
    %c0_26 = arith.constant 0 : index
    %21 = vector.load %arg2[%c0_23, %c0_24, %c0_25, %c0_26] : memref<3x3x4x4xbf16, #tpu.memory_space<vmem>>, vector<1x1x4x4xbf16>
    %22 = vector.shape_cast %21 : vector<1x1x4x4xbf16> to vector<4x4xbf16>
    %cst_27 = arith.constant dense<0.000000e+00> : vector<256x4xf32>
    %23 = tpu.matmul %20, %22, %cst_27 {dimension_numbers = #tpu.dot_dimension_numbers<[1], [0], [0], [1], [0, 0, 1, 1], [], []>} : vector<256x4xbf16>, vector<4x4xbf16>, vector<256x4xf32> -> vector<256x4xf32>
    %24 = arith.addf %17, %23 : vector<256x4xf32>
    %25 = vector.extract_strided_slice %19 {offsets = [16, 0], sizes = [256, 4], strides = [1, 1]} : vector<288x4xbf16> to vector<256x4xbf16>
    %c1_28 = arith.constant 1 : index
    %c0_29 = arith.constant 0 : index
    %c0_30 = arith.constant 0 : index
    %c0_31 = arith.constant 0 : index
    %26 = vector.load %arg2[%c1_28, %c0_29, %c0_30, %c0_31] : memref<3x3x4x4xbf16, #tpu.memory_space<vmem>>, vector<1x1x4x4xbf16>
    %27 = vector.shape_cast %26 : vector<1x1x4x4xbf16> to vector<4x4xbf16>
    %cst_32 = arith.constant dense<0.000000e+00> : vector<256x4xf32>
    %28 = tpu.matmul %25, %27, %cst_32 {dimension_numbers = #tpu.dot_dimension_numbers<[1], [0], [0], [1], [0, 0, 1, 1], [], []>} : vector<256x4xbf16>, vector<4x4xbf16>, vector<256x4xf32> -> vector<256x4xf32>
    %29 = arith.addf %24, %28 : vector<256x4xf32>
    %30 = vector.extract_strided_slice %19 {offsets = [32, 0], sizes = [256, 4], strides = [1, 1]} : vector<288x4xbf16> to vector<256x4xbf16>
    %c2_33 = arith.constant 2 : index
    %c0_34 = arith.constant 0 : index
    %c0_35 = arith.constant 0 : index
    %c0_36 = arith.constant 0 : index
    %31 = vector.load %arg2[%c2_33, %c0_34, %c0_35, %c0_36] : memref<3x3x4x4xbf16, #tpu.memory_space<vmem>>, vector<1x1x4x4xbf16>
    %32 = vector.shape_cast %31 : vector<1x1x4x4xbf16> to vector<4x4xbf16>
    %cst_37 = arith.constant dense<0.000000e+00> : vector<256x4xf32>
    %33 = tpu.matmul %30, %32, %cst_37 {dimension_numbers = #tpu.dot_dimension_numbers<[1], [0], [0], [1], [0, 0, 1, 1], [], []>} : vector<256x4xbf16>, vector<4x4xbf16>, vector<256x4xf32> -> vector<256x4xf32>
    %34 = arith.addf %29, %33 : vector<256x4xf32>
    %c0_38 = arith.constant 0 : index
    %c1_39 = arith.constant 1 : index
    %c0_40 = arith.constant 0 : index
    %35 = vector.load %arg6[%c0_38, %c1_39, %c0_40] : memref<18x18x4xbf16, #tpu.memory_space<vmem>>, vector<18x16x4xbf16>
    %36 = vector.shape_cast %35 : vector<18x16x4xbf16> to vector<288x4xbf16>
    %37 = vector.extract_strided_slice %36 {offsets = [0, 0], sizes = [256, 4], strides = [1, 1]} : vector<288x4xbf16> to vector<256x4xbf16>
    %c0_41 = arith.constant 0 : index
    %c1_42 = arith.constant 1 : index
    %c0_43 = arith.constant 0 : index
    %c0_44 = arith.constant 0 : index
    %38 = vector.load %arg2[%c0_41, %c1_42, %c0_43, %c0_44] : memref<3x3x4x4xbf16, #tpu.memory_space<vmem>>, vector<1x1x4x4xbf16>
    %39 = vector.shape_cast %38 : vector<1x1x4x4xbf16> to vector<4x4xbf16>
    %cst_45 = arith.constant dense<0.000000e+00> : vector<256x4xf32>
    %40 = tpu.matmul %37, %39, %cst_45 {dimension_numbers = #tpu.dot_dimension_numbers<[1], [0], [0], [1], [0, 0, 1, 1], [], []>} : vector<256x4xbf16>, vector<4x4xbf16>, vector<256x4xf32> -> vector<256x4xf32>
    %41 = arith.addf %34, %40 : vector<256x4xf32>
    %42 = vector.extract_strided_slice %36 {offsets = [16, 0], sizes = [256, 4], strides = [1, 1]} : vector<288x4xbf16> to vector<256x4xbf16>
    %c1_46 = arith.constant 1 : index
    %c1_47 = arith.constant 1 : index
    %c0_48 = arith.constant 0 : index
    %c0_49 = arith.constant 0 : index
    %43 = vector.load %arg2[%c1_46, %c1_47, %c0_48, %c0_49] : memref<3x3x4x4xbf16, #tpu.memory_space<vmem>>, vector<1x1x4x4xbf16>
    %44 = vector.shape_cast %43 : vector<1x1x4x4xbf16> to vector<4x4xbf16>
    %cst_50 = arith.constant dense<0.000000e+00> : vector<256x4xf32>
    %45 = tpu.matmul %42, %44, %cst_50 {dimension_numbers = #tpu.dot_dimension_numbers<[1], [0], [0], [1], [0, 0, 1, 1], [], []>} : vector<256x4xbf16>, vector<4x4xbf16>, vector<256x4xf32> -> vector<256x4xf32>
    %46 = arith.addf %41, %45 : vector<256x4xf32>
    %47 = vector.extract_strided_slice %36 {offsets = [32, 0], sizes = [256, 4], strides = [1, 1]} : vector<288x4xbf16> to vector<256x4xbf16>
    %c2_51 = arith.constant 2 : index
    %c1_52 = arith.constant 1 : index
    %c0_53 = arith.constant 0 : index
    %c0_54 = arith.constant 0 : index
    %48 = vector.load %arg2[%c2_51, %c1_52, %c0_53, %c0_54] : memref<3x3x4x4xbf16, #tpu.memory_space<vmem>>, vector<1x1x4x4xbf16>
    %49 = vector.shape_cast %48 : vector<1x1x4x4xbf16> to vector<4x4xbf16>
    %cst_55 = arith.constant dense<0.000000e+00> : vector<256x4xf32>
    %50 = tpu.matmul %47, %49, %cst_55 {dimension_numbers = #tpu.dot_dimension_numbers<[1], [0], [0], [1], [0, 0, 1, 1], [], []>} : vector<256x4xbf16>, vector<4x4xbf16>, vector<256x4xf32> -> vector<256x4xf32>
    %51 = arith.addf %46, %50 : vector<256x4xf32>
    %c0_56 = arith.constant 0 : index
    %c2_57 = arith.constant 2 : index
    %c0_58 = arith.constant 0 : index
    %52 = vector.load %arg6[%c0_56, %c2_57, %c0_58] : memref<18x18x4xbf16, #tpu.memory_space<vmem>>, vector<18x16x4xbf16>
    %53 = vector.shape_cast %52 : vector<18x16x4xbf16> to vector<288x4xbf16>
    %54 = vector.extract_strided_slice %53 {offsets = [0, 0], sizes = [256, 4], strides = [1, 1]} : vector<288x4xbf16> to vector<256x4xbf16>
    %c0_59 = arith.constant 0 : index
    %c2_60 = arith.constant 2 : index
    %c0_61 = arith.constant 0 : index
    %c0_62 = arith.constant 0 : index
    %55 = vector.load %arg2[%c0_59, %c2_60, %c0_61, %c0_62] : memref<3x3x4x4xbf16, #tpu.memory_space<vmem>>, vector<1x1x4x4xbf16>
    %56 = vector.shape_cast %55 : vector<1x1x4x4xbf16> to vector<4x4xbf16>
    %cst_63 = arith.constant dense<0.000000e+00> : vector<256x4xf32>
    %57 = tpu.matmul %54, %56, %cst_63 {dimension_numbers = #tpu.dot_dimension_numbers<[1], [0], [0], [1], [0, 0, 1, 1], [], []>} : vector<256x4xbf16>, vector<4x4xbf16>, vector<256x4xf32> -> vector<256x4xf32>
    %58 = arith.addf %51, %57 : vector<256x4xf32>
    %59 = vector.extract_strided_slice %53 {offsets = [16, 0], sizes = [256, 4], strides = [1, 1]} : vector<288x4xbf16> to vector<256x4xbf16>
    %c1_64 = arith.constant 1 : index
    %c2_65 = arith.constant 2 : index
    %c0_66 = arith.constant 0 : index
    %c0_67 = arith.constant 0 : index
    %60 = vector.load %arg2[%c1_64, %c2_65, %c0_66, %c0_67] : memref<3x3x4x4xbf16, #tpu.memory_space<vmem>>, vector<1x1x4x4xbf16>
    %61 = vector.shape_cast %60 : vector<1x1x4x4xbf16> to vector<4x4xbf16>
    %cst_68 = arith.constant dense<0.000000e+00> : vector<256x4xf32>
    %62 = tpu.matmul %59, %61, %cst_68 {dimension_numbers = #tpu.dot_dimension_numbers<[1], [0], [0], [1], [0, 0, 1, 1], [], []>} : vector<256x4xbf16>, vector<4x4xbf16>, vector<256x4xf32> -> vector<256x4xf32>
    %63 = arith.addf %58, %62 : vector<256x4xf32>
    %64 = vector.extract_strided_slice %53 {offsets = [32, 0], sizes = [256, 4], strides = [1, 1]} : vector<288x4xbf16> to vector<256x4xbf16>
    %c2_69 = arith.constant 2 : index
    %c2_70 = arith.constant 2 : index
    %c0_71 = arith.constant 0 : index
    %c0_72 = arith.constant 0 : index
    %65 = vector.load %arg2[%c2_69, %c2_70, %c0_71, %c0_72] : memref<3x3x4x4xbf16, #tpu.memory_space<vmem>>, vector<1x1x4x4xbf16>
    %66 = vector.shape_cast %65 : vector<1x1x4x4xbf16> to vector<4x4xbf16>
    %cst_73 = arith.constant dense<0.000000e+00> : vector<256x4xf32>
    %67 = tpu.matmul %64, %66, %cst_73 {dimension_numbers = #tpu.dot_dimension_numbers<[1], [0], [0], [1], [0, 0, 1, 1], [], []>} : vector<256x4xbf16>, vector<4x4xbf16>, vector<256x4xf32> -> vector<256x4xf32>
    %68 = arith.addf %63, %67 : vector<256x4xf32>
    %69 = vector.broadcast %1 : f32 to vector<256x4xf32>
    %70 = arith.addf %68, %69 : vector<256x4xf32>
    %cst_74 = arith.constant 0.000000e+00 : f32
    %71 = vector.broadcast %cst_74 : f32 to vector<256x4xf32>
    %72 = arith.maximumf %70, %71 : vector<256x4xf32>
    %73 = vector.broadcast %2 : f32 to vector<256x4xf32>
    %74 = arith.addf %72, %73 : vector<256x4xf32>
    %75 = vector.shape_cast %74 : vector<256x4xf32> to vector<16x16x4xf32>
    %76 = arith.truncf %75 : vector<16x16x4xf32> to vector<16x16x4xbf16>
    %c1_75 = arith.constant 1 : index
    %c1_76 = arith.constant 1 : index
    %c0_77 = arith.constant 0 : index
    %77 = vector.load %arg6[%c1_75, %c1_76, %c0_77] : memref<18x18x4xbf16, #tpu.memory_space<vmem>>, vector<16x16x4xbf16>
    tpu.vector_store %arg6[%c1_75, %c1_76, %c0_77], %76 {strides = array<i32>} : memref<18x18x4xbf16, #tpu.memory_space<vmem>>, vector<16x16x4xbf16>,
    %cst_78 = arith.constant 0.000000e+00 : f32
    %78 = vector.broadcast %cst_78 : f32 to vector<256x4xf32>
    %c0_79 = arith.constant 0 : index
    %c0_80 = arith.constant 0 : index
    %c0_81 = arith.constant 0 : index
    %79 = vector.load %arg6[%c0_79, %c0_80, %c0_81] : memref<18x18x4xbf16, #tpu.memory_space<vmem>>, vector<18x16x4xbf16>
    %80 = vector.shape_cast %79 : vector<18x16x4xbf16> to vector<288x4xbf16>
    %81 = vector.extract_strided_slice %80 {offsets = [0, 0], sizes = [256, 4], strides = [1, 1]} : vector<288x4xbf16> to vector<256x4xbf16>
    %c0_82 = arith.constant 0 : index
    %c0_83 = arith.constant 0 : index
    %c0_84 = arith.constant 0 : index
    %c0_85 = arith.constant 0 : index
    %82 = vector.load %arg3[%c0_82, %c0_83, %c0_84, %c0_85] : memref<3x3x4x4xbf16, #tpu.memory_space<vmem>>, vector<1x1x4x4xbf16>
    %83 = vector.shape_cast %82 : vector<1x1x4x4xbf16> to vector<4x4xbf16>
    %cst_86 = arith.constant dense<0.000000e+00> : vector<256x4xf32>
    %84 = tpu.matmul %81, %83, %cst_86 {dimension_numbers = #tpu.dot_dimension_numbers<[1], [0], [0], [1], [0, 0, 1, 1], [], []>} : vector<256x4xbf16>, vector<4x4xbf16>, vector<256x4xf32> -> vector<256x4xf32>
    %85 = arith.addf %78, %84 : vector<256x4xf32>
    %86 = vector.extract_strided_slice %80 {offsets = [16, 0], sizes = [256, 4], strides = [1, 1]} : vector<288x4xbf16> to vector<256x4xbf16>
    %c1_87 = arith.constant 1 : index
    %c0_88 = arith.constant 0 : index
    %c0_89 = arith.constant 0 : index
    %c0_90 = arith.constant 0 : index
    %87 = vector.load %arg3[%c1_87, %c0_88, %c0_89, %c0_90] : memref<3x3x4x4xbf16, #tpu.memory_space<vmem>>, vector<1x1x4x4xbf16>
    %88 = vector.shape_cast %87 : vector<1x1x4x4xbf16> to vector<4x4xbf16>
    %cst_91 = arith.constant dense<0.000000e+00> : vector<256x4xf32>
    %89 = tpu.matmul %86, %88, %cst_91 {dimension_numbers = #tpu.dot_dimension_numbers<[1], [0], [0], [1], [0, 0, 1, 1], [], []>} : vector<256x4xbf16>, vector<4x4xbf16>, vector<256x4xf32> -> vector<256x4xf32>
    %90 = arith.addf %85, %89 : vector<256x4xf32>
    %91 = vector.extract_strided_slice %80 {offsets = [32, 0], sizes = [256, 4], strides = [1, 1]} : vector<288x4xbf16> to vector<256x4xbf16>
    %c2_92 = arith.constant 2 : index
    %c0_93 = arith.constant 0 : index
    %c0_94 = arith.constant 0 : index
    %c0_95 = arith.constant 0 : index
    %92 = vector.load %arg3[%c2_92, %c0_93, %c0_94, %c0_95] : memref<3x3x4x4xbf16, #tpu.memory_space<vmem>>, vector<1x1x4x4xbf16>
    %93 = vector.shape_cast %92 : vector<1x1x4x4xbf16> to vector<4x4xbf16>
    %cst_96 = arith.constant dense<0.000000e+00> : vector<256x4xf32>
    %94 = tpu.matmul %91, %93, %cst_96 {dimension_numbers = #tpu.dot_dimension_numbers<[1], [0], [0], [1], [0, 0, 1, 1], [], []>} : vector<256x4xbf16>, vector<4x4xbf16>, vector<256x4xf32> -> vector<256x4xf32>
    %95 = arith.addf %90, %94 : vector<256x4xf32>
    %c0_97 = arith.constant 0 : index
    %c1_98 = arith.constant 1 : index
    %c0_99 = arith.constant 0 : index
    %96 = vector.load %arg6[%c0_97, %c1_98, %c0_99] : memref<18x18x4xbf16, #tpu.memory_space<vmem>>, vector<18x16x4xbf16>
    %97 = vector.shape_cast %96 : vector<18x16x4xbf16> to vector<288x4xbf16>
    %98 = vector.extract_strided_slice %97 {offsets = [0, 0], sizes = [256, 4], strides = [1, 1]} : vector<288x4xbf16> to vector<256x4xbf16>
    %c0_100 = arith.constant 0 : index
    %c1_101 = arith.constant 1 : index
    %c0_102 = arith.constant 0 : index
    %c0_103 = arith.constant 0 : index
    %99 = vector.load %arg3[%c0_100, %c1_101, %c0_102, %c0_103] : memref<3x3x4x4xbf16, #tpu.memory_space<vmem>>, vector<1x1x4x4xbf16>
    %100 = vector.shape_cast %99 : vector<1x1x4x4xbf16> to vector<4x4xbf16>
    %cst_104 = arith.constant dense<0.000000e+00> : vector<256x4xf32>
    %101 = tpu.matmul %98, %100, %cst_104 {dimension_numbers = #tpu.dot_dimension_numbers<[1], [0], [0], [1], [0, 0, 1, 1], [], []>} : vector<256x4xbf16>, vector<4x4xbf16>, vector<256x4xf32> -> vector<256x4xf32>
    %102 = arith.addf %95, %101 : vector<256x4xf32>
    %103 = vector.extract_strided_slice %97 {offsets = [16, 0], sizes = [256, 4], strides = [1, 1]} : vector<288x4xbf16> to vector<256x4xbf16>
    %c1_105 = arith.constant 1 : index
    %c1_106 = arith.constant 1 : index
    %c0_107 = arith.constant 0 : index
    %c0_108 = arith.constant 0 : index
    %104 = vector.load %arg3[%c1_105, %c1_106, %c0_107, %c0_108] : memref<3x3x4x4xbf16, #tpu.memory_space<vmem>>, vector<1x1x4x4xbf16>
    %105 = vector.shape_cast %104 : vector<1x1x4x4xbf16> to vector<4x4xbf16>
    %cst_109 = arith.constant dense<0.000000e+00> : vector<256x4xf32>
    %106 = tpu.matmul %103, %105, %cst_109 {dimension_numbers = #tpu.dot_dimension_numbers<[1], [0], [0], [1], [0, 0, 1, 1], [], []>} : vector<256x4xbf16>, vector<4x4xbf16>, vector<256x4xf32> -> vector<256x4xf32>
    %107 = arith.addf %102, %106 : vector<256x4xf32>
    %108 = vector.extract_strided_slice %97 {offsets = [32, 0], sizes = [256, 4], strides = [1, 1]} : vector<288x4xbf16> to vector<256x4xbf16>
    %c2_110 = arith.constant 2 : index
    %c1_111 = arith.constant 1 : index
    %c0_112 = arith.constant 0 : index
    %c0_113 = arith.constant 0 : index
    %109 = vector.load %arg3[%c2_110, %c1_111, %c0_112, %c0_113] : memref<3x3x4x4xbf16, #tpu.memory_space<vmem>>, vector<1x1x4x4xbf16>
    %110 = vector.shape_cast %109 : vector<1x1x4x4xbf16> to vector<4x4xbf16>
    %cst_114 = arith.constant dense<0.000000e+00> : vector<256x4xf32>
    %111 = tpu.matmul %108, %110, %cst_114 {dimension_numbers = #tpu.dot_dimension_numbers<[1], [0], [0], [1], [0, 0, 1, 1], [], []>} : vector<256x4xbf16>, vector<4x4xbf16>, vector<256x4xf32> -> vector<256x4xf32>
    %112 = arith.addf %107, %111 : vector<256x4xf32>
    %c0_115 = arith.constant 0 : index
    %c2_116 = arith.constant 2 : index
    %c0_117 = arith.constant 0 : index
    %113 = vector.load %arg6[%c0_115, %c2_116, %c0_117] : memref<18x18x4xbf16, #tpu.memory_space<vmem>>, vector<18x16x4xbf16>
    %114 = vector.shape_cast %113 : vector<18x16x4xbf16> to vector<288x4xbf16>
    %115 = vector.extract_strided_slice %114 {offsets = [0, 0], sizes = [256, 4], strides = [1, 1]} : vector<288x4xbf16> to vector<256x4xbf16>
    %c0_118 = arith.constant 0 : index
    %c2_119 = arith.constant 2 : index
    %c0_120 = arith.constant 0 : index
    %c0_121 = arith.constant 0 : index
    %116 = vector.load %arg3[%c0_118, %c2_119, %c0_120, %c0_121] : memref<3x3x4x4xbf16, #tpu.memory_space<vmem>>, vector<1x1x4x4xbf16>
    %117 = vector.shape_cast %116 : vector<1x1x4x4xbf16> to vector<4x4xbf16>
    %cst_122 = arith.constant dense<0.000000e+00> : vector<256x4xf32>
    %118 = tpu.matmul %115, %117, %cst_122 {dimension_numbers = #tpu.dot_dimension_numbers<[1], [0], [0], [1], [0, 0, 1, 1], [], []>} : vector<256x4xbf16>, vector<4x4xbf16>, vector<256x4xf32> -> vector<256x4xf32>
    %119 = arith.addf %112, %118 : vector<256x4xf32>
    %120 = vector.extract_strided_slice %114 {offsets = [16, 0], sizes = [256, 4], strides = [1, 1]} : vector<288x4xbf16> to vector<256x4xbf16>
    %c1_123 = arith.constant 1 : index
    %c2_124 = arith.constant 2 : index
    %c0_125 = arith.constant 0 : index
    %c0_126 = arith.constant 0 : index
    %121 = vector.load %arg3[%c1_123, %c2_124, %c0_125, %c0_126] : memref<3x3x4x4xbf16, #tpu.memory_space<vmem>>, vector<1x1x4x4xbf16>
    %122 = vector.shape_cast %121 : vector<1x1x4x4xbf16> to vector<4x4xbf16>
    %cst_127 = arith.constant dense<0.000000e+00> : vector<256x4xf32>
    %123 = tpu.matmul %120, %122, %cst_127 {dimension_numbers = #tpu.dot_dimension_numbers<[1], [0], [0], [1], [0, 0, 1, 1], [], []>} : vector<256x4xbf16>, vector<4x4xbf16>, vector<256x4xf32> -> vector<256x4xf32>
    %124 = arith.addf %119, %123 : vector<256x4xf32>
    %125 = vector.extract_strided_slice %114 {offsets = [32, 0], sizes = [256, 4], strides = [1, 1]} : vector<288x4xbf16> to vector<256x4xbf16>
    %c2_128 = arith.constant 2 : index
    %c2_129 = arith.constant 2 : index
    %c0_130 = arith.constant 0 : index
    %c0_131 = arith.constant 0 : index
    %126 = vector.load %arg3[%c2_128, %c2_129, %c0_130, %c0_131] : memref<3x3x4x4xbf16, #tpu.memory_space<vmem>>, vector<1x1x4x4xbf16>
    %127 = vector.shape_cast %126 : vector<1x1x4x4xbf16> to vector<4x4xbf16>
    %cst_132 = arith.constant dense<0.000000e+00> : vector<256x4xf32>
    %128 = tpu.matmul %125, %127, %cst_132 {dimension_numbers = #tpu.dot_dimension_numbers<[1], [0], [0], [1], [0, 0, 1, 1], [], []>} : vector<256x4xbf16>, vector<4x4xbf16>, vector<256x4xf32> -> vector<256x4xf32>
    %129 = arith.addf %124, %128 : vector<256x4xf32>
    %130 = vector.broadcast %3 : f32 to vector<256x4xf32>
    %131 = arith.mulf %129, %130 : vector<256x4xf32>
    %132 = vector.broadcast %4 : f32 to vector<256x4xf32>
    %133 = arith.addf %131, %132 : vector<256x4xf32>
    %134 = vector.shape_cast %12 : vector<16x16x4xf32> to vector<256x4xf32>
    %135 = arith.addf %133, %134 : vector<256x4xf32>
    %cst_133 = arith.constant 0.000000e+00 : f32
    %136 = vector.broadcast %cst_133 : f32 to vector<256x4xf32>
    %137 = arith.maximumf %135, %136 : vector<256x4xf32>
    %138 = vector.shape_cast %137 : vector<256x4xf32> to vector<1x16x16x4xf32>
    %c0_134 = arith.constant 0 : index
    %c0_135 = arith.constant 0 : index
    %c0_136 = arith.constant 0 : index
    %c0_137 = arith.constant 0 : index
    %139 = vector.load %arg5[%c0_134, %c0_135, %c0_136, %c0_137] : memref<1x16x16x4xf32, #tpu.memory_space<vmem>>, vector<1x16x16x4xf32>
    tpu.vector_store %arg5[%c0_134, %c0_135, %c0_136, %c0_137], %138 {strides = array<i32>} : memref<1x16x16x4xf32, #tpu.memory_space<vmem>>, vector<1x16x16x4xf32>,
    return
  }
  func.func @transform_0(%arg0: i32) -> (i32, i32, i32, i32) {
    %c0_i32 = arith.constant 0 : i32
    %c0_i32_0 = arith.constant 0 : i32
    %c0_i32_1 = arith.constant 0 : i32
    %c0_i32_2 = arith.constant 0 : i32
    return %arg0, %c0_i32, %c0_i32_0, %c0_i32_1 : i32, i32, i32, i32
  }
  func.func @transform_1(%arg0: i32) -> (i32, i32, i32, i32) {
    %c0_i32 = arith.constant 0 : i32
    %c0_i32_0 = arith.constant 0 : i32
    %c0_i32_1 = arith.constant 0 : i32
    %c0_i32_2 = arith.constant 0 : i32
    %c0_i32_3 = arith.constant 0 : i32
    return %c0_i32, %c0_i32_0, %c0_i32_1, %c0_i32_2 : i32, i32, i32, i32
  }
  func.func @transform_2(%arg0: i32) -> (i32, i32, i32, i32) {
    %c0_i32 = arith.constant 0 : i32
    %c0_i32_0 = arith.constant 0 : i32
    %c0_i32_1 = arith.constant 0 : i32
    %c0_i32_2 = arith.constant 0 : i32
    %c0_i32_3 = arith.constant 0 : i32
    return %c0_i32, %c0_i32_0, %c0_i32_1, %c0_i32_2 : i32, i32, i32, i32
  }
  func.func @transform_3(%arg0: i32) -> i32 {
    %c0_i32 = arith.constant 0 : i32
    %c0_i32_0 = arith.constant 0 : i32
    return %c0_i32 : i32
  }
  func.func @transform_4(%arg0: i32) -> (i32, i32, i32, i32) {
    %c0_i32 = arith.constant 0 : i32
    %c0_i32_0 = arith.constant 0 : i32
    %c0_i32_1 = arith.constant 0 : i32
    %c0_i32_2 = arith.constant 0 : i32
    return %arg0, %c0_i32, %c0_i32_0, %c0_i32_1 : i32, i32, i32, i32
  }
}

</mosaic_0001>

<llo_original>
// kernel: tpu_custom_call.1
$region0: #{tpu_custom_call.1}
  #allocation0 [shape = 'u32[]', space=smem, size = 0x4, offset = 0x4, fixed_abs, tag = 'smem constant byte address 0x4 - core index']
  #allocation1 [shape = 'u32[144,128]{1,0:T(1,128)}', space=vmem, size = 0x12000, scoped, tag = 'internal scratch']
  #allocation2 [shape = 'bf16[18,18,4]{2,1,0:T(8,128)(2,1)}', space=vmem, size = 0x1b000, scoped, tag = 'scratch operand']
  %s0 = inlined_call_operand.vmem [shape: f32[2,16,16,4], index: 0, kind: input, shape index: {}]
  %s1 = inlined_call_operand.vmem [shape: bf16[3,3,4,4], index: 1, kind: input, shape index: {}]
  %s2 = inlined_call_operand.vmem [shape: bf16[3,3,4,4], index: 2, kind: input, shape index: {}]
  %s3 = inlined_call_operand.vmem [shape: f32[5], index: 3, kind: input, shape index: {}]
  %s4 = inlined_call_operand.vmem [shape: f32[2,16,16,4], index: 4, kind: output, shape index: {}]
  %s5 = sld [smem:[#allocation0]]
  $region53: #{tpu_custom_call.1} parent=0
    _
  %s7 = ssub.s32 1, %s5
  %s8 = scalar_select 0, %s7, %s5
  $region1: #{tpu_custom_call.1} parent=0
    #allocation3 [shape = 'u8[512]{0}', space=smem, size = 0x200, scoped, tag = 'input window, operand 3, single buffered']
    #allocation4 [shape = 's32[2]{0}', space=sflag, size = 0x8, scoped, tag = 'scoped memory for tpu_custom_call.1']
    %9 = vsyncpa [#allocation4], 0
    loop: start=0, step=1, limit=4
    $region2: #{tpu_custom_call.1} parent=1 // loop_pre_header
      _
    $region3: #{tpu_custom_call.1} parent=1 // loop_header
      %s11 = sphi 0, %s15
      %p12 = scmp.ge.s32.totalorder %s11, 4
      %s21 = sphi 0, %s23
      %s24 = sphi 0, %s21
      %s25 = sphi 0, %s24
      %s41 = sphi 0, %s25
      %s45 = sphi 0, %s45
      %s47 = sphi 0, %s45
      %s48 = sphi 0, %s47
      %s62 = sphi 0, %s48
      %s66 = sphi 0, %s66
      %s68 = sphi 0, %s66
      %s69 = sphi 0, %s68
      %s83 = sphi 0, %s69
      %s87 = sphi 0, %s87
      %s89 = sphi 0, %s87
      %s90 = sphi 0, %s89
      %s104 = sphi 0, %s90
      %s110 = sphi 0, %s112
      %s113 = sphi 0, %s110
      %s114 = sphi 0, %s113
      %s130 = sphi 0, %s114
    $region4: #{tpu_custom_call.1} parent=1 // loop_header_branch
      %14 = sbr.rel (%p12) target = $region8
    $region5: #{tpu_custom_call.1} parent=1 // loop_body
      %s16 = ssub.s32 %s11, 1
      %s17 = ssub.s32 %s11, 2
      %s18 = sadd.s32 %s11, 1
      %s19 = ssub.s32 %s11, %s18
      %p20 = scmp.eq.s32.totalorder %s19, 0
      %s22 = sadd.s32 %s21, 1
      %s23 = scalar_select %p20, %s21, %s22
      %p26 = pneg %p20
      %p27 = scmp.eq.s32.totalorder %s11, 1
      %p28 = por %p26, %p27
      %p29 = scmp.ne.s32.totalorder %s21, %s24
      %p30 = scmp.eq.s32.totalorder %s11, 0
      %p31 = por %p29, %p30
      %p32 = scmp.ne.s32.totalorder %s21, %s24
      %p33 = scmp.eq.s32.totalorder %s16, 1
      %p34 = por %p32, %p33
      %p35 = scmp.ne.s32.totalorder %s24, %s25
      %p36 = scmp.eq.s32.totalorder %s16, 0
      %p37 = por %p35, %p36
      %p38 = scmp.ne.s32.totalorder %s24, %s25
      %p39 = scmp.eq.s32.totalorder %s17, 1
      %p40 = por %p38, %p39
      %p42 = scmp.ne.s32.totalorder %s25, %s41
      %p43 = scmp.eq.s32.totalorder %s17, 0
      %p44 = por %p42, %p43
      %s46 = sadd.s32 %s45, 1
      %p49 = scmp.eq.s32.totalorder %s11, 1
      %p50 = scmp.ne.s32.totalorder %s45, %s47
      %p51 = scmp.eq.s32.totalorder %s11, 0
      %p52 = por %p50, %p51
      %p53 = scmp.ne.s32.totalorder %s45, %s47
      %p54 = scmp.eq.s32.totalorder %s16, 1
      %p55 = por %p53, %p54
      %p56 = scmp.ne.s32.totalorder %s47, %s48
      %p57 = scmp.eq.s32.totalorder %s16, 0
      %p58 = por %p56, %p57
      %p59 = scmp.ne.s32.totalorder %s47, %s48
      %p60 = scmp.eq.s32.totalorder %s17, 1
      %p61 = por %p59, %p60
      %p63 = scmp.ne.s32.totalorder %s48, %s62
      %p64 = scmp.eq.s32.totalorder %s17, 0
      %p65 = por %p63, %p64
      %s67 = sadd.s32 %s66, 1
      %p70 = scmp.eq.s32.totalorder %s11, 1
      %p71 = scmp.ne.s32.totalorder %s66, %s68
      %p72 = scmp.eq.s32.totalorder %s11, 0
      %p73 = por %p71, %p72
      %p74 = scmp.ne.s32.totalorder %s66, %s68
      %p75 = scmp.eq.s32.totalorder %s16, 1
      %p76 = por %p74, %p75
      %p77 = scmp.ne.s32.totalorder %s68, %s69
      %p78 = scmp.eq.s32.totalorder %s16, 0
      %p79 = por %p77, %p78
      %p80 = scmp.ne.s32.totalorder %s68, %s69
      %p81 = scmp.eq.s32.totalorder %s17, 1
      %p82 = por %p80, %p81
      %p84 = scmp.ne.s32.totalorder %s69, %s83
      %p85 = scmp.eq.s32.totalorder %s17, 0
      %p86 = por %p84, %p85
      %s88 = sadd.s32 %s87, 1
      %p91 = scmp.eq.s32.totalorder %s11, 1
      %p92 = scmp.ne.s32.totalorder %s87, %s89
      %p93 = scmp.eq.s32.totalorder %s11, 0
      %p94 = por %p92, %p93
      %p95 = scmp.ne.s32.totalorder %s87, %s89
      %p96 = scmp.eq.s32.totalorder %s16, 1
      %p97 = por %p95, %p96
      %p98 = scmp.ne.s32.totalorder %s89, %s90
      %p99 = scmp.eq.s32.totalorder %s16, 0
      %p100 = por %p98, %p99
      %p101 = scmp.ne.s32.totalorder %s89, %s90
      %p102 = scmp.eq.s32.totalorder %s17, 1
      %p103 = por %p101, %p102
      %p105 = scmp.ne.s32.totalorder %s90, %s104
      %p106 = scmp.eq.s32.totalorder %s17, 0
      %p107 = por %p105, %p106
      %s108 = ssub.s32 %s11, %s18
      %p109 = scmp.eq.s32.totalorder %s108, 0
      %s111 = sadd.s32 %s110, 1
      %s112 = scalar_select %p109, %s110, %s111
      %p115 = pneg %p109
      %p116 = scmp.eq.s32.totalorder %s11, 1
      %p117 = por %p115, %p116
      %p118 = scmp.ne.s32.totalorder %s110, %s113
      %p119 = scmp.eq.s32.totalorder %s11, 0
      %p120 = por %p118, %p119
      %p121 = scmp.ne.s32.totalorder %s110, %s113
      %p122 = scmp.eq.s32.totalorder %s16, 1
      %p123 = por %p121, %p122
      %p124 = scmp.ne.s32.totalorder %s113, %s114
      %p125 = scmp.eq.s32.totalorder %s16, 0
      %p126 = por %p124, %p125
      %p127 = scmp.ne.s32.totalorder %s113, %s114
      %p128 = scmp.eq.s32.totalorder %s17, 1
      %p129 = por %p127, %p128
      %p131 = scmp.ne.s32.totalorder %s114, %s130
      %p132 = scmp.eq.s32.totalorder %s17, 0
      %p133 = por %p131, %p132
      %p134 = scmp.le.s32.totalorder 1, %s11
      %p135 = scmp.lt.s32.totalorder %s11, 3
      %p136 = pnand %p134, %p135
      %p137 = pneg %p136
      // Predicated region
      $region9: #{tpu_custom_call.1} parent=5 // pred_check
        _
      $region10: #{tpu_custom_call.1} parent=5 // pred_check_branch
        %139 = sbr.rel (%p136) target = $region12
      $region11: #{tpu_custom_call.1} parent=5 // pred_region
        %s140 = ssub.s32 %s11, 1
        // Predicated region
        $region13: #{tpu_custom_call.1} parent=11 // pred_check
          %p141 = pneg %p58
        $region14: #{tpu_custom_call.1} parent=11 // pred_check_branch
          %143 = sbr.rel (%p141) target = $region16
        $region15: #{tpu_custom_call.1} parent=11 // pred_region
          _
        $region16: #{tpu_custom_call.1} parent=11 // pred_fallthru
          _
        // Predicated region
        $region17: #{tpu_custom_call.1} parent=11 // pred_check
          %p144 = pneg %p79
        $region18: #{tpu_custom_call.1} parent=11 // pred_check_branch
          %146 = sbr.rel (%p144) target = $region20
        $region19: #{tpu_custom_call.1} parent=11 // pred_region
          _
        $region20: #{tpu_custom_call.1} parent=11 // pred_fallthru
          _
        // Predicated region
        $region21: #{tpu_custom_call.1} parent=11 // pred_check
          %p147 = pneg %p100
        $region22: #{tpu_custom_call.1} parent=11 // pred_check_branch
          %149 = sbr.rel (%p147) target = $region24
        $region23: #{tpu_custom_call.1} parent=11 // pred_region
          %s151 = ssub.s32 16, 16
          %152 = vsyncadd [#allocation4], %s151
          %s154 = sshll.u32 %s3, 4
          %s155 = int_to_ptr.vmem [resolvable:$true] %s154
          %157 = dma.vmem_to_smem %s155, 16, [#allocation3], [#allocation4]
        $region24: #{tpu_custom_call.1} parent=11 // pred_fallthru
          _
      $region12: #{tpu_custom_call.1} parent=5 // pred_fallthru
        _
      %p158 = scmp.lt.s32.totalorder %s11, 2
      // Predicated region
      $region25: #{tpu_custom_call.1} parent=5 // pred_check
        %p159 = pneg %p158
      $region26: #{tpu_custom_call.1} parent=5 // pred_check_branch
        %161 = sbr.rel (%p159) target = $region28
      $region27: #{tpu_custom_call.1} parent=5 // pred_region
        // Predicated region
        $region29: #{tpu_custom_call.1} parent=27 // pred_check
          %p162 = pneg %p31
        $region30: #{tpu_custom_call.1} parent=27 // pred_check_branch
          %164 = sbr.rel (%p162) target = $region32
        $region31: #{tpu_custom_call.1} parent=27 // pred_region
          %p165 = scmp.lt.s32.totalorder %s11, 1
          %s166 = scalar_select %p165, %s11, 1
          %s167 = smul.addr %s166, 32
          %s168 = smul.addr %s167, 8
          %s169 = scalar_lea.vmem %s0, %s168
        $region32: #{tpu_custom_call.1} parent=27 // pred_fallthru
          _
      $region28: #{tpu_custom_call.1} parent=5 // pred_fallthru
        _
      %p170 = scmp.le.s32.totalorder 1, %s11
      %p171 = scmp.lt.s32.totalorder %s11, 3
      %p172 = pnand %p170, %p171
      %p173 = pneg %p172
      // Predicated region
      $region33: #{tpu_custom_call.1} parent=5 // pred_check
        _
      $region34: #{tpu_custom_call.1} parent=5 // pred_check_branch
        %175 = sbr.rel (%p172) target = $region36
      $region35: #{tpu_custom_call.1} parent=5 // pred_region
        %s176 = ssub.s32 %s11, 1
        // Predicated region
        $region37: #{tpu_custom_call.1} parent=35 // pred_check
          %p177 = pneg %p100
        $region38: #{tpu_custom_call.1} parent=35 // pred_check_branch
          %179 = sbr.rel (%p177) target = $region40
        $region39: #{tpu_custom_call.1} parent=35 // pred_region
          %180 = dma.done [#allocation4], 16
        $region40: #{tpu_custom_call.1} parent=35 // pred_fallthru
          _
        %181 = sfence
        %p182 = scmp.lt.s32.totalorder %s16, 1
        %s183 = scalar_select %p182, %s16, 1
        %s184 = smul.addr %s183, 32
        %s185 = smul.addr %s184, 8
        %s186 = scalar_lea.vmem %s0, %s185
        %p187 = pneg %p37
        %p188 = pneg %p34
        %p189 = pneg %p58
        %p190 = pneg %p55
        %p191 = pneg %p79
        %p192 = pneg %p76
        %p193 = pneg %p100
        %p194 = pneg %p97
        %p195 = pneg %p126
        %p196 = pneg %p123
        %p197 = scmp.lt.s32.totalorder %s16, 1
        %s198 = scalar_select %p197, %s16, 1
        %s199 = smul.addr %s198, 32
        %s200 = smul.addr %s199, 8
        %s201 = scalar_lea.vmem %s4, %s200
        %p202 = scmp.lt.s32.totalorder %s16, 1
        %s203 = scalar_select %p202, %s16, 1
        %s204 = smul.addr %s203, 32
        %s205 = smul.addr %s204, 8
        %s206 = scalar_lea.vmem %s0, %s205
        %p207 = scmp.lt.s32.totalorder %s16, 1
        %s208 = scalar_select %p207, %s16, 1
        %s209 = smul.addr %s208, 32
        %s210 = smul.addr %s209, 8
        %s211 = scalar_lea.vmem %s4, %s210
        %s213 = sld [smem:[#allocation3]]
        %s214 = sld [smem:[#allocation3 + $0x1]]
        %s215 = sld [smem:[#allocation3 + $0x2]]
        %s216 = sld [smem:[#allocation3 + $0x3]]
        %s217 = sld [smem:[#allocation3 + $0x4]]
        %vm218 = vcmask 27648
        %219 = vst.msk [vmem:[#allocation2] sm:$0xf] %vm218, 0
        %220 = vst.msk [vmem:[#allocation2 + $0x4] sm:$0xf] %vm218, 0
        %vm221 = vcmask 24576
        %222 = vst.msk [vmem:[#allocation2 + $0x8] sm:$0x1] %vm221, 0
        %s223 = scalar_lea.vmem [#allocation2], 204
        %224 = vst.msk [vmem:[%s223] sm:$0xf] %vm218, 0
        %225 = vst.msk [vmem:[%s223 + $0x4] sm:$0xf] %vm218, 0
        %226 = vst.msk [vmem:[%s223 + $0x8] sm:$0x1] %vm221, 0
        %vm227 = vcmask 24576
        %vm228 = vsmask.f32 256
        %vm229 = vmand %vm227, %vm228
        %v230 = vld [vmem:[#allocation2] sm:$0x1]
        %v231 = vsel %vm229, 0, %v230
        %232 = vst [vmem:[#allocation2] sm:$0x1] %v231
        %v233 = vld [vmem:[#allocation2 + $0xc] sm:$0x1]
        %v234 = vsel %vm229, 0, %v233
        %235 = vst [vmem:[#allocation2 + $0xc] sm:$0x1] %v234
        %v236 = vld [vmem:[#allocation2 + $0x18] sm:$0x1]
        %v237 = vsel %vm229, 0, %v236
        %238 = vst [vmem:[#allocation2 + $0x18] sm:$0x1] %v237
        %v239 = vld [vmem:[#allocation2 + $0x24] sm:$0x1]
        %v240 = vsel %vm229, 0, %v239
        %241 = vst [vmem:[#allocation2 + $0x24] sm:$0x1] %v240
        %v242 = vld [vmem:[#allocation2 + $0x30] sm:$0x1]
        %v243 = vsel %vm229, 0, %v242
        %244 = vst [vmem:[#allocation2 + $0x30] sm:$0x1] %v243
        %v245 = vld [vmem:[#allocation2 + $0x3c] sm:$0x1]
        %v246 = vsel %vm229, 0, %v245
        %247 = vst [vmem:[#allocation2 + $0x3c] sm:$0x1] %v246
        %v248 = vld [vmem:[#allocation2 + $0x48] sm:$0x1]
        %v249 = vsel %vm229, 0, %v248
        %250 = vst [vmem:[#allocation2 + $0x48] sm:$0x1] %v249
        %v251 = vld [vmem:[#allocation2 + $0x54] sm:$0x1]
        %v252 = vsel %vm229, 0, %v251
        %253 = vst [vmem:[#allocation2 + $0x54] sm:$0x1] %v252
        %v254 = vld [vmem:[#allocation2 + $0x60] sm:$0x1]
        %v255 = vsel %vm229, 0, %v254
        %256 = vst [vmem:[#allocation2 + $0x60] sm:$0x1] %v255
        %v257 = vld [vmem:[#allocation2 + $0x6c] sm:$0x1]
        %v258 = vsel %vm229, 0, %v257
        %259 = vst [vmem:[#allocation2 + $0x6c] sm:$0x1] %v258
        %v260 = vld [vmem:[#allocation2 + $0x78] sm:$0x1]
        %v261 = vsel %vm229, 0, %v260
        %262 = vst [vmem:[#allocation2 + $0x78] sm:$0x1] %v261
        %v263 = vld [vmem:[#allocation2 + $0x84] sm:$0x1]
        %v264 = vsel %vm229, 0, %v263
        %265 = vst [vmem:[#allocation2 + $0x84] sm:$0x1] %v264
        %v266 = vld [vmem:[#allocation2 + $0x90] sm:$0x1]
        %v267 = vsel %vm229, 0, %v266
        %268 = vst [vmem:[#allocation2 + $0x90] sm:$0x1] %v267
        %v269 = vld [vmem:[#allocation2 + $0x9c] sm:$0x1]
        %v270 = vsel %vm229, 0, %v269
        %271 = vst [vmem:[#allocation2 + $0x9c] sm:$0x1] %v270
        %v272 = vld [vmem:[#allocation2 + $0xa8] sm:$0x1]
        %v273 = vsel %vm229, 0, %v272
        %274 = vst [vmem:[#allocation2 + $0xa8] sm:$0x1] %v273
        %v275 = vld [vmem:[#allocation2 + $0xb4] sm:$0x1]
        %v276 = vsel %vm229, 0, %v275
        %277 = vst [vmem:[#allocation2 + $0xb4] sm:$0x1] %v276
        %v278 = vld [vmem:[#allocation2 + $0xc0] sm:$0x1]
        %v279 = vsel %vm229, 0, %v278
        %280 = vst [vmem:[#allocation2 + $0xc0] sm:$0x1] %v279
        %v281 = vld [vmem:[#allocation2 + $0xcc] sm:$0x1]
        %v282 = vsel %vm229, 0, %v281
        %283 = vst [vmem:[#allocation2 + $0xcc] sm:$0x1] %v282
        %vm284 = vsmask.f32 7938
        %vm285 = vmand %vm227, %vm284
        %v286 = vld [vmem:[#allocation2 + $0x8] sm:$0x1]
        %v287 = vsel %vm285, 0, %v286
        %288 = vst [vmem:[#allocation2 + $0x8] sm:$0x1] %v287
        %v289 = vld [vmem:[#allocation2 + $0x14] sm:$0x1]
        %v290 = vsel %vm285, 0, %v289
        %291 = vst [vmem:[#allocation2 + $0x14] sm:$0x1] %v290
        %v292 = vld [vmem:[#allocation2 + $0x20] sm:$0x1]
        %v293 = vsel %vm285, 0, %v292
        %294 = vst [vmem:[#allocation2 + $0x20] sm:$0x1] %v293
        %v295 = vld [vmem:[#allocation2 + $0x2c] sm:$0x1]
        %v296 = vsel %vm285, 0, %v295
        %297 = vst [vmem:[#allocation2 + $0x2c] sm:$0x1] %v296
        %v298 = vld [vmem:[#allocation2 + $0x38] sm:$0x1]
        %v299 = vsel %vm285, 0, %v298
        %300 = vst [vmem:[#allocation2 + $0x38] sm:$0x1] %v299
        %v301 = vld [vmem:[#allocation2 + $0x44] sm:$0x1]
        %v302 = vsel %vm285, 0, %v301
        %303 = vst [vmem:[#allocation2 + $0x44] sm:$0x1] %v302
        %v304 = vld [vmem:[#allocation2 + $0x50] sm:$0x1]
        %v305 = vsel %vm285, 0, %v304
        %306 = vst [vmem:[#allocation2 + $0x50] sm:$0x1] %v305
        %v307 = vld [vmem:[#allocation2 + $0x5c] sm:$0x1]
        %v308 = vsel %vm285, 0, %v307
        %309 = vst [vmem:[#allocation2 + $0x5c] sm:$0x1] %v308
        %v310 = vld [vmem:[#allocation2 + $0x68] sm:$0x1]
        %v311 = vsel %vm285, 0, %v310
        %312 = vst [vmem:[#allocation2 + $0x68] sm:$0x1] %v311
        %v313 = vld [vmem:[#allocation2 + $0x74] sm:$0x1]
        %v314 = vsel %vm285, 0, %v313
        %315 = vst [vmem:[#allocation2 + $0x74] sm:$0x1] %v314
        %v316 = vld [vmem:[#allocation2 + $0x80] sm:$0x1]
        %v317 = vsel %vm285, 0, %v316
        %318 = vst [vmem:[#allocation2 + $0x80] sm:$0x1] %v317
        %v319 = vld [vmem:[#allocation2 + $0x8c] sm:$0x1]
        %v320 = vsel %vm285, 0, %v319
        %321 = vst [vmem:[#allocation2 + $0x8c] sm:$0x1] %v320
        %v322 = vld [vmem:[#allocation2 + $0x98] sm:$0x1]
        %v323 = vsel %vm285, 0, %v322
        %324 = vst [vmem:[#allocation2 + $0x98] sm:$0x1] %v323
        %v325 = vld [vmem:[#allocation2 + $0xa4] sm:$0x1]
        %v326 = vsel %vm285, 0, %v325
        %327 = vst [vmem:[#allocation2 + $0xa4] sm:$0x1] %v326
        %v328 = vld [vmem:[#allocation2 + $0xb0] sm:$0x1]
        %v329 = vsel %vm285, 0, %v328
        %330 = vst [vmem:[#allocation2 + $0xb0] sm:$0x1] %v329
        %v331 = vld [vmem:[#allocation2 + $0xbc] sm:$0x1]
        %v332 = vsel %vm285, 0, %v331
        %333 = vst [vmem:[#allocation2 + $0xbc] sm:$0x1] %v332
        %v334 = vld [vmem:[#allocation2 + $0xc8] sm:$0x1]
        %v335 = vsel %vm285, 0, %v334
        %336 = vst [vmem:[#allocation2 + $0xc8] sm:$0x1] %v335
        %v337 = vld [vmem:[#allocation2 + $0xd4] sm:$0x1]
        %v338 = vsel %vm285, 0, %v337
        %339 = vst [vmem:[#allocation2 + $0xd4] sm:$0x1] %v338
        %v340 = vld [vmem:[%s206] sm:$0xff]
        %v341 = vld [vmem:[%s206 + $0x8] sm:$0xff]
        %v342 = vld [vmem:[%s206 + $0x10] sm:$0xff]
        %v343 = vld [vmem:[%s206 + $0x18] sm:$0xff]
        %v344 = vld [vmem:[%s206 + $0x20] sm:$0xff]
        %v345 = vld [vmem:[%s206 + $0x28] sm:$0xff]
        %v346 = vld [vmem:[%s206 + $0x30] sm:$0xff]
        %v347 = vld [vmem:[%s206 + $0x38] sm:$0xff]
        %v348 = vld [vmem:[%s206 + $0x40] sm:$0xff]
        %v349 = vld [vmem:[%s206 + $0x48] sm:$0xff]
        %v350 = vld [vmem:[%s206 + $0x50] sm:$0xff]
        %v351 = vld [vmem:[%s206 + $0x58] sm:$0xff]
        %v352 = vld [vmem:[%s206 + $0x60] sm:$0xff]
        %v353 = vld [vmem:[%s206 + $0x68] sm:$0xff]
        %v354 = vld [vmem:[%s206 + $0x70] sm:$0xff]
        %v355 = vld [vmem:[%s206 + $0x78] sm:$0xff]
        %v356 = vld [vmem:[%s206 + $0x80] sm:$0xff]
        %v357 = vld [vmem:[%s206 + $0x88] sm:$0xff]
        %v358 = vld [vmem:[%s206 + $0x90] sm:$0xff]
        %v359 = vld [vmem:[%s206 + $0x98] sm:$0xff]
        %v360 = vld [vmem:[%s206 + $0xa0] sm:$0xff]
        %v361 = vld [vmem:[%s206 + $0xa8] sm:$0xff]
        %v362 = vld [vmem:[%s206 + $0xb0] sm:$0xff]
        %v363 = vld [vmem:[%s206 + $0xb8] sm:$0xff]
        %v364 = vld [vmem:[%s206 + $0xc0] sm:$0xff]
        %v365 = vld [vmem:[%s206 + $0xc8] sm:$0xff]
        %v366 = vld [vmem:[%s206 + $0xd0] sm:$0xff]
        %v367 = vld [vmem:[%s206 + $0xd8] sm:$0xff]
        %v368 = vld [vmem:[%s206 + $0xe0] sm:$0xff]
        %v369 = vld [vmem:[%s206 + $0xe8] sm:$0xff]
        %v370 = vld [vmem:[%s206 + $0xf0] sm:$0xff]
        %v371 = vld [vmem:[%s206 + $0xf8] sm:$0xff]
        %v372 = vstv %s213
        %v373 = vadd.f32 %v340, %v372
        %v374 = vadd.f32 %v341, %v372
        %v375 = vadd.f32 %v342, %v372
        %v376 = vadd.f32 %v343, %v372
        %v377 = vadd.f32 %v344, %v372
        %v378 = vadd.f32 %v345, %v372
        %v379 = vadd.f32 %v346, %v372
        %v380 = vadd.f32 %v347, %v372
        %v381 = vadd.f32 %v348, %v372
        %v382 = vadd.f32 %v349, %v372
        %v383 = vadd.f32 %v350, %v372
        %v384 = vadd.f32 %v351, %v372
        %v385 = vadd.f32 %v352, %v372
        %v386 = vadd.f32 %v353, %v372
        %v387 = vadd.f32 %v354, %v372
        %v388 = vadd.f32 %v355, %v372
        %v389 = vadd.f32 %v356, %v372
        %v390 = vadd.f32 %v357, %v372
        %v391 = vadd.f32 %v358, %v372
        %v392 = vadd.f32 %v359, %v372
        %v393 = vadd.f32 %v360, %v372
        %v394 = vadd.f32 %v361, %v372
        %v395 = vadd.f32 %v362, %v372
        %v396 = vadd.f32 %v363, %v372
        %v397 = vadd.f32 %v364, %v372
        %v398 = vadd.f32 %v365, %v372
        %v399 = vadd.f32 %v366, %v372
        %v400 = vadd.f32 %v367, %v372
        %v401 = vadd.f32 %v368, %v372
        %v402 = vadd.f32 %v369, %v372
        %v403 = vadd.f32 %v370, %v372
        %v404 = vadd.f32 %v371, %v372
        %v405 = vpack.c.bf16 %v374, %v373
        %v406 = vpack.c.bf16 %v376, %v375
        %v407 = vpack.c.bf16 %v378, %v377
        %v408 = vpack.c.bf16 %v380, %v379
        %v409 = vpack.c.bf16 %v382, %v381
        %v410 = vpack.c.bf16 %v384, %v383
        %v411 = vpack.c.bf16 %v386, %v385
        %v412 = vpack.c.bf16 %v388, %v387
        %v413 = vpack.c.bf16 %v390, %v389
        %v414 = vpack.c.bf16 %v392, %v391
        %v415 = vpack.c.bf16 %v394, %v393
        %v416 = vpack.c.bf16 %v396, %v395
        %v417 = vpack.c.bf16 %v398, %v397
        %v418 = vpack.c.bf16 %v400, %v399
        %v419 = vpack.c.bf16 %v402, %v401
        %v420 = vpack.c.bf16 %v404, %v403
        %v437 = vunpack.c.l.b16 %v405
        %v438 = vunpack.c.h.b16 %v405
        %v439 = vunpack.c.l.b16 %v406
        %v440 = vunpack.c.h.b16 %v406
        %v441 = vunpack.c.l.b16 %v407
        %v442 = vunpack.c.h.b16 %v407
        %v443 = vunpack.c.l.b16 %v408
        %v444 = vunpack.c.h.b16 %v408
        %v445 = vunpack.c.l.b16 %v409
        %v446 = vunpack.c.h.b16 %v409
        %v447 = vunpack.c.l.b16 %v410
        %v448 = vunpack.c.h.b16 %v410
        %v449 = vunpack.c.l.b16 %v411
        %v450 = vunpack.c.h.b16 %v411
        %v451 = vunpack.c.l.b16 %v412
        %v452 = vunpack.c.h.b16 %v412
        %v453 = vunpack.c.l.b16 %v413
        %v454 = vunpack.c.h.b16 %v413
        %v455 = vunpack.c.l.b16 %v414
        %v456 = vunpack.c.h.b16 %v414
        %v457 = vunpack.c.l.b16 %v415
        %v458 = vunpack.c.h.b16 %v415
        %v459 = vunpack.c.l.b16 %v416
        %v460 = vunpack.c.h.b16 %v416
        %v461 = vunpack.c.l.b16 %v417
        %v462 = vunpack.c.h.b16 %v417
        %v463 = vunpack.c.l.b16 %v418
        %v464 = vunpack.c.h.b16 %v418
        %v465 = vunpack.c.l.b16 %v419
        %v466 = vunpack.c.h.b16 %v419
        %v467 = vunpack.c.l.b16 %v420
        %v468 = vunpack.c.h.b16 %v420
        %v469 = vpack.c.b16 %v437, %v437
        %v470 = vpack.c.b16 %v438, %v438
        %v471 = vpack.c.b16 %v439, %v439
        %v472 = vpack.c.b16 %v440, %v440
        %v473 = vpack.c.b16 %v441, %v441
        %v474 = vpack.c.b16 %v442, %v442
        %v475 = vpack.c.b16 %v443, %v443
        %v476 = vpack.c.b16 %v444, %v444
        %v477 = vpack.c.b16 %v445, %v445
        %v478 = vpack.c.b16 %v446, %v446
        %v479 = vpack.c.b16 %v447, %v447
        %v480 = vpack.c.b16 %v448, %v448
        %v481 = vpack.c.b16 %v449, %v449
        %v482 = vpack.c.b16 %v450, %v450
        %v483 = vpack.c.b16 %v451, %v451
        %v484 = vpack.c.b16 %v452, %v452
        %v485 = vpack.c.b16 %v453, %v453
        %v486 = vpack.c.b16 %v454, %v454
        %v487 = vpack.c.b16 %v455, %v455
        %v488 = vpack.c.b16 %v456, %v456
        %v489 = vpack.c.b16 %v457, %v457
        %v490 = vpack.c.b16 %v458, %v458
        %v491 = vpack.c.b16 %v459, %v459
        %v492 = vpack.c.b16 %v460, %v460
        %v493 = vpack.c.b16 %v461, %v461
        %v494 = vpack.c.b16 %v462, %v462
        %v495 = vpack.c.b16 %v463, %v463
        %v496 = vpack.c.b16 %v464, %v464
        %v497 = vpack.c.b16 %v465, %v465
        %v498 = vpack.c.b16 %v466, %v466
        %v499 = vpack.c.b16 %v467, %v467
        %v500 = vpack.c.b16 %v468, %v468
        %vm501 = vsmask.f32 4368
        %vm502 = vmor %vm228, %vm501
        %v504 = vshrl.u32 %v469, 16
        %v506 = vrot.slane %v504, 7
        %v507 = vshll.u32 %v469, 16
        %v509 = vor.u32 %v506, %v507
        %v510 = vrot.slane %v506, 4
        %v512 = vshrl.u32 %v470, 16
        %v514 = vrot.slane %v512, 7
        %v515 = vshll.u32 %v470, 16
        %v517 = vor.u32 %v514, %v515
        %v518 = vsel %vm502, %v510, %v517
        %v519 = vrot.slane %v514, 4
        %v521 = vshrl.u32 %v471, 16
        %v523 = vrot.slane %v521, 7
        %v524 = vshll.u32 %v471, 16
        %v526 = vor.u32 %v523, %v524
        %v527 = vrot.slane %v523, 4
        %v529 = vshrl.u32 %v472, 16
        %v531 = vrot.slane %v529, 7
        %v532 = vshll.u32 %v472, 16
        %v534 = vor.u32 %v531, %v532
        %v535 = vsel %vm502, %v527, %v534
        %v536 = vrot.slane %v531, 4
        %v538 = vshrl.u32 %v473, 16
        %v540 = vrot.slane %v538, 7
        %v541 = vshll.u32 %v473, 16
        %v543 = vor.u32 %v540, %v541
        %v544 = vrot.slane %v540, 4
        %v546 = vshrl.u32 %v474, 16
        %v548 = vrot.slane %v546, 7
        %v549 = vshll.u32 %v474, 16
        %v551 = vor.u32 %v548, %v549
        %v552 = vsel %vm502, %v544, %v551
        %v553 = vrot.slane %v548, 4
        %v555 = vshrl.u32 %v475, 16
        %v557 = vrot.slane %v555, 7
        %v558 = vshll.u32 %v475, 16
        %v560 = vor.u32 %v557, %v558
        %v561 = vrot.slane %v557, 4
        %v563 = vshrl.u32 %v476, 16
        %v565 = vrot.slane %v563, 7
        %v566 = vshll.u32 %v476, 16
        %v568 = vor.u32 %v565, %v566
        %v569 = vsel %vm502, %v561, %v568
        %v570 = vrot.slane %v565, 4
        %v572 = vshrl.u32 %v477, 16
        %v574 = vrot.slane %v572, 7
        %v575 = vshll.u32 %v477, 16
        %v577 = vor.u32 %v574, %v575
        %v578 = vrot.slane %v574, 4
        %v580 = vshrl.u32 %v478, 16
        %v582 = vrot.slane %v580, 7
        %v583 = vshll.u32 %v478, 16
        %v585 = vor.u32 %v582, %v583
        %v586 = vsel %vm502, %v578, %v585
        %v587 = vrot.slane %v582, 4
        %v589 = vshrl.u32 %v479, 16
        %v591 = vrot.slane %v589, 7
        %v592 = vshll.u32 %v479, 16
        %v594 = vor.u32 %v591, %v592
        %v595 = vrot.slane %v591, 4
        %v597 = vshrl.u32 %v480, 16
        %v599 = vrot.slane %v597, 7
        %v600 = vshll.u32 %v480, 16
        %v602 = vor.u32 %v599, %v600
        %v603 = vsel %vm502, %v595, %v602
        %v604 = vrot.slane %v599, 4
        %v606 = vshrl.u32 %v481, 16
        %v608 = vrot.slane %v606, 7
        %v609 = vshll.u32 %v481, 16
        %v611 = vor.u32 %v608, %v609
        %v612 = vrot.slane %v608, 4
        %v614 = vshrl.u32 %v482, 16
        %v616 = vrot.slane %v614, 7
        %v617 = vshll.u32 %v482, 16
        %v619 = vor.u32 %v616, %v617
        %v620 = vsel %vm502, %v612, %v619
        %v621 = vrot.slane %v616, 4
        %v623 = vshrl.u32 %v483, 16
        %v625 = vrot.slane %v623, 7
        %v626 = vshll.u32 %v483, 16
        %v628 = vor.u32 %v625, %v626
        %v629 = vrot.slane %v625, 4
        %v631 = vshrl.u32 %v484, 16
        %v633 = vrot.slane %v631, 7
        %v634 = vshll.u32 %v484, 16
        %v636 = vor.u32 %v633, %v634
        %v637 = vsel %vm502, %v629, %v636
        %v638 = vrot.slane %v633, 4
        %v640 = vshrl.u32 %v485, 16
        %v642 = vrot.slane %v640, 7
        %v643 = vshll.u32 %v485, 16
        %v645 = vor.u32 %v642, %v643
        %v646 = vrot.slane %v642, 4
        %v648 = vshrl.u32 %v486, 16
        %v650 = vrot.slane %v648, 7
        %v651 = vshll.u32 %v486, 16
        %v653 = vor.u32 %v650, %v651
        %v654 = vsel %vm502, %v646, %v653
        %v655 = vrot.slane %v650, 4
        %v657 = vshrl.u32 %v487, 16
        %v659 = vrot.slane %v657, 7
        %v660 = vshll.u32 %v487, 16
        %v662 = vor.u32 %v659, %v660
        %v663 = vrot.slane %v659, 4
        %v665 = vshrl.u32 %v488, 16
        %v667 = vrot.slane %v665, 7
        %v668 = vshll.u32 %v488, 16
        %v670 = vor.u32 %v667, %v668
        %v671 = vsel %vm502, %v663, %v670
        %v672 = vrot.slane %v667, 4
        %v674 = vshrl.u32 %v489, 16
        %v676 = vrot.slane %v674, 7
        %v677 = vshll.u32 %v489, 16
        %v679 = vor.u32 %v676, %v677
        %v680 = vrot.slane %v676, 4
        %v682 = vshrl.u32 %v490, 16
        %v684 = vrot.slane %v682, 7
        %v685 = vshll.u32 %v490, 16
        %v687 = vor.u32 %v684, %v685
        %v688 = vsel %vm502, %v680, %v687
        %v689 = vrot.slane %v684, 4
        %v691 = vshrl.u32 %v491, 16
        %v693 = vrot.slane %v691, 7
        %v694 = vshll.u32 %v491, 16
        %v696 = vor.u32 %v693, %v694
        %v697 = vrot.slane %v693, 4
        %v699 = vshrl.u32 %v492, 16
        %v701 = vrot.slane %v699, 7
        %v702 = vshll.u32 %v492, 16
        %v704 = vor.u32 %v701, %v702
        %v705 = vsel %vm502, %v697, %v704
        %v706 = vrot.slane %v701, 4
        %v708 = vshrl.u32 %v493, 16
        %v710 = vrot.slane %v708, 7
        %v711 = vshll.u32 %v493, 16
        %v713 = vor.u32 %v710, %v711
        %v714 = vrot.slane %v710, 4
        %v716 = vshrl.u32 %v494, 16
        %v718 = vrot.slane %v716, 7
        %v719 = vshll.u32 %v494, 16
        %v721 = vor.u32 %v718, %v719
        %v722 = vsel %vm502, %v714, %v721
        %v723 = vrot.slane %v718, 4
        %v725 = vshrl.u32 %v495, 16
        %v727 = vrot.slane %v725, 7
        %v728 = vshll.u32 %v495, 16
        %v730 = vor.u32 %v727, %v728
        %v731 = vrot.slane %v727, 4
        %v733 = vshrl.u32 %v496, 16
        %v735 = vrot.slane %v733, 7
        %v736 = vshll.u32 %v496, 16
        %v738 = vor.u32 %v735, %v736
        %v739 = vsel %vm502, %v731, %v738
        %v740 = vrot.slane %v735, 4
        %v742 = vshrl.u32 %v497, 16
        %v744 = vrot.slane %v742, 7
        %v745 = vshll.u32 %v497, 16
        %v747 = vor.u32 %v744, %v745
        %v748 = vrot.slane %v744, 4
        %v750 = vshrl.u32 %v498, 16
        %v752 = vrot.slane %v750, 7
        %v753 = vshll.u32 %v498, 16
        %v755 = vor.u32 %v752, %v753
        %v756 = vsel %vm502, %v748, %v755
        %v757 = vrot.slane %v752, 4
        %v759 = vshrl.u32 %v499, 16
        %v761 = vrot.slane %v759, 7
        %v762 = vshll.u32 %v499, 16
        %v764 = vor.u32 %v761, %v762
        %v765 = vrot.slane %v761, 4
        %v767 = vshrl.u32 %v500, 16
        %v769 = vrot.slane %v767, 7
        %v770 = vshll.u32 %v500, 16
        %v772 = vor.u32 %v769, %v770
        %v773 = vsel %vm502, %v765, %v772
        %v774 = vrot.slane %v769, 4
        %s823 = scalar_lea.vmem [#allocation2], 12
        %vm824 = vcmask 27648
        %vm825 = vmand %vm824, %vm284
        %v826 = vld [vmem:[%s823] sm:$0xf]
        %v827 = vsel %vm825, %v509, %v826
        %828 = vst [vmem:[%s823] sm:$0xf] %v827
        %829 = vst.msk [vmem:[%s823 + $0x4] sm:$0xf] %vm218, %v518
        %v830 = vld [vmem:[%s823 + $0x8] sm:$0x1]
        %v831 = vsel %vm229, %v519, %v830
        %832 = vst [vmem:[%s823 + $0x8] sm:$0x1] %v831
        %v833 = vld [vmem:[%s823 + $0xc] sm:$0xf]
        %v834 = vsel %vm825, %v526, %v833
        %835 = vst [vmem:[%s823 + $0xc] sm:$0xf] %v834
        %836 = vst.msk [vmem:[%s823 + $0x10] sm:$0xf] %vm218, %v535
        %v837 = vld [vmem:[%s823 + $0x14] sm:$0x1]
        %v838 = vsel %vm229, %v536, %v837
        %839 = vst [vmem:[%s823 + $0x14] sm:$0x1] %v838
        %v840 = vld [vmem:[%s823 + $0x18] sm:$0xf]
        %v841 = vsel %vm825, %v543, %v840
        %842 = vst [vmem:[%s823 + $0x18] sm:$0xf] %v841
        %843 = vst.msk [vmem:[%s823 + $0x1c] sm:$0xf] %vm218, %v552
        %v844 = vld [vmem:[%s823 + $0x20] sm:$0x1]
        %v845 = vsel %vm229, %v553, %v844
        %846 = vst [vmem:[%s823 + $0x20] sm:$0x1] %v845
        %v847 = vld [vmem:[%s823 + $0x24] sm:$0xf]
        %v848 = vsel %vm825, %v560, %v847
        %849 = vst [vmem:[%s823 + $0x24] sm:$0xf] %v848
        %850 = vst.msk [vmem:[%s823 + $0x28] sm:$0xf] %vm218, %v569
        %v851 = vld [vmem:[%s823 + $0x2c] sm:$0x1]
        %v852 = vsel %vm229, %v570, %v851
        %853 = vst [vmem:[%s823 + $0x2c] sm:$0x1] %v852
        %v854 = vld [vmem:[%s823 + $0x30] sm:$0xf]
        %v855 = vsel %vm825, %v577, %v854
        %856 = vst [vmem:[%s823 + $0x30] sm:$0xf] %v855
        %857 = vst.msk [vmem:[%s823 + $0x34] sm:$0xf] %vm218, %v586
        %v858 = vld [vmem:[%s823 + $0x38] sm:$0x1]
        %v859 = vsel %vm229, %v587, %v858
        %860 = vst [vmem:[%s823 + $0x38] sm:$0x1] %v859
        %v861 = vld [vmem:[%s823 + $0x3c] sm:$0xf]
        %v862 = vsel %vm825, %v594, %v861
        %863 = vst [vmem:[%s823 + $0x3c] sm:$0xf] %v862
        %864 = vst.msk [vmem:[%s823 + $0x40] sm:$0xf] %vm218, %v603
        %v865 = vld [vmem:[%s823 + $0x44] sm:$0x1]
        %v866 = vsel %vm229, %v604, %v865
        %867 = vst [vmem:[%s823 + $0x44] sm:$0x1] %v866
        %v868 = vld [vmem:[%s823 + $0x48] sm:$0xf]
        %v869 = vsel %vm825, %v611, %v868
        %870 = vst [vmem:[%s823 + $0x48] sm:$0xf] %v869
        %871 = vst.msk [vmem:[%s823 + $0x4c] sm:$0xf] %vm218, %v620
        %v872 = vld [vmem:[%s823 + $0x50] sm:$0x1]
        %v873 = vsel %vm229, %v621, %v872
        %874 = vst [vmem:[%s823 + $0x50] sm:$0x1] %v873
        %v875 = vld [vmem:[%s823 + $0x54] sm:$0xf]
        %v876 = vsel %vm825, %v628, %v875
        %877 = vst [vmem:[%s823 + $0x54] sm:$0xf] %v876
        %878 = vst.msk [vmem:[%s823 + $0x58] sm:$0xf] %vm218, %v637
        %v879 = vld [vmem:[%s823 + $0x5c] sm:$0x1]
        %v880 = vsel %vm229, %v638, %v879
        %881 = vst [vmem:[%s823 + $0x5c] sm:$0x1] %v880
        %v882 = vld [vmem:[%s823 + $0x60] sm:$0xf]
        %v883 = vsel %vm825, %v645, %v882
        %884 = vst [vmem:[%s823 + $0x60] sm:$0xf] %v883
        %885 = vst.msk [vmem:[%s823 + $0x64] sm:$0xf] %vm218, %v654
        %v886 = vld [vmem:[%s823 + $0x68] sm:$0x1]
        %v887 = vsel %vm229, %v655, %v886
        %888 = vst [vmem:[%s823 + $0x68] sm:$0x1] %v887
        %v889 = vld [vmem:[%s823 + $0x6c] sm:$0xf]
        %v890 = vsel %vm825, %v662, %v889
        %891 = vst [vmem:[%s823 + $0x6c] sm:$0xf] %v890
        %892 = vst.msk [vmem:[%s823 + $0x70] sm:$0xf] %vm218, %v671
        %v893 = vld [vmem:[%s823 + $0x74] sm:$0x1]
        %v894 = vsel %vm229, %v672, %v893
        %895 = vst [vmem:[%s823 + $0x74] sm:$0x1] %v894
        %v896 = vld [vmem:[%s823 + $0x78] sm:$0xf]
        %v897 = vsel %vm825, %v679, %v896
        %898 = vst [vmem:[%s823 + $0x78] sm:$0xf] %v897
        %899 = vst.msk [vmem:[%s823 + $0x7c] sm:$0xf] %vm218, %v688
        %v900 = vld [vmem:[%s823 + $0x80] sm:$0x1]
        %v901 = vsel %vm229, %v689, %v900
        %902 = vst [vmem:[%s823 + $0x80] sm:$0x1] %v901
        %v903 = vld [vmem:[%s823 + $0x84] sm:$0xf]
        %v904 = vsel %vm825, %v696, %v903
        %905 = vst [vmem:[%s823 + $0x84] sm:$0xf] %v904
        %906 = vst.msk [vmem:[%s823 + $0x88] sm:$0xf] %vm218, %v705
        %v907 = vld [vmem:[%s823 + $0x8c] sm:$0x1]
        %v908 = vsel %vm229, %v706, %v907
        %909 = vst [vmem:[%s823 + $0x8c] sm:$0x1] %v908
        %v910 = vld [vmem:[%s823 + $0x90] sm:$0xf]
        %v911 = vsel %vm825, %v713, %v910
        %912 = vst [vmem:[%s823 + $0x90] sm:$0xf] %v911
        %913 = vst.msk [vmem:[%s823 + $0x94] sm:$0xf] %vm218, %v722
        %v914 = vld [vmem:[%s823 + $0x98] sm:$0x1]
        %v915 = vsel %vm229, %v723, %v914
        %916 = vst [vmem:[%s823 + $0x98] sm:$0x1] %v915
        %v917 = vld [vmem:[%s823 + $0x9c] sm:$0xf]
        %v918 = vsel %vm825, %v730, %v917
        %919 = vst [vmem:[%s823 + $0x9c] sm:$0xf] %v918
        %920 = vst.msk [vmem:[%s823 + $0xa0] sm:$0xf] %vm218, %v739
        %v921 = vld [vmem:[%s823 + $0xa4] sm:$0x1]
        %v922 = vsel %vm229, %v740, %v921
        %923 = vst [vmem:[%s823 + $0xa4] sm:$0x1] %v922
        %v924 = vld [vmem:[%s823 + $0xa8] sm:$0xf]
        %v925 = vsel %vm825, %v747, %v924
        %926 = vst [vmem:[%s823 + $0xa8] sm:$0xf] %v925
        %927 = vst.msk [vmem:[%s823 + $0xac] sm:$0xf] %vm218, %v756
        %v928 = vld [vmem:[%s823 + $0xb0] sm:$0x1]
        %v929 = vsel %vm229, %v757, %v928
        %930 = vst [vmem:[%s823 + $0xb0] sm:$0x1] %v929
        %v931 = vld [vmem:[%s823 + $0xb4] sm:$0xf]
        %v932 = vsel %vm825, %v764, %v931
        %933 = vst [vmem:[%s823 + $0xb4] sm:$0xf] %v932
        %934 = vst.msk [vmem:[%s823 + $0xb8] sm:$0xf] %vm218, %v773
        %v935 = vld [vmem:[%s823 + $0xbc] sm:$0x1]
        %v936 = vsel %vm229, %v774, %v935
        %937 = vst [vmem:[%s823 + $0xbc] sm:$0x1] %v936
        %v938 = vld [vmem:[#allocation2] sm:$0xf]
        %v939 = vld [vmem:[#allocation2 + $0x4] sm:$0xf]
        %v940 = vld [vmem:[#allocation2 + $0xc] sm:$0xf]
        %v941 = vld [vmem:[#allocation2 + $0x10] sm:$0xf]
        %v942 = vld [vmem:[#allocation2 + $0x18] sm:$0xf]
        %v943 = vld [vmem:[#allocation2 + $0x1c] sm:$0xf]
        %v944 = vld [vmem:[#allocation2 + $0x24] sm:$0xf]
        %v945 = vld [vmem:[#allocation2 + $0x28] sm:$0xf]
        %v946 = vld [vmem:[#allocation2 + $0x30] sm:$0xf]
        %v947 = vld [vmem:[#allocation2 + $0x34] sm:$0xf]
        %v948 = vld [vmem:[#allocation2 + $0x3c] sm:$0xf]
        %v949 = vld [vmem:[#allocation2 + $0x40] sm:$0xf]
        %v950 = vld [vmem:[#allocation2 + $0x48] sm:$0xf]
        %v951 = vld [vmem:[#allocation2 + $0x4c] sm:$0xf]
        %v952 = vld [vmem:[#allocation2 + $0x54] sm:$0xf]
        %v953 = vld [vmem:[#allocation2 + $0x58] sm:$0xf]
        %v954 = vld [vmem:[#allocation2 + $0x60] sm:$0xf]
        %v955 = vld [vmem:[#allocation2 + $0x64] sm:$0xf]
        %v956 = vld [vmem:[#allocation2 + $0x6c] sm:$0xf]
        %v957 = vld [vmem:[#allocation2 + $0x70] sm:$0xf]
        %v958 = vld [vmem:[#allocation2 + $0x78] sm:$0xf]
        %v959 = vld [vmem:[#allocation2 + $0x7c] sm:$0xf]
        %v960 = vld [vmem:[#allocation2 + $0x84] sm:$0xf]
        %v961 = vld [vmem:[#allocation2 + $0x88] sm:$0xf]
        %v962 = vld [vmem:[#allocation2 + $0x90] sm:$0xf]
        %v963 = vld [vmem:[#allocation2 + $0x94] sm:$0xf]
        %v964 = vld [vmem:[#allocation2 + $0x9c] sm:$0xf]
        %v965 = vld [vmem:[#allocation2 + $0xa0] sm:$0xf]
        %v966 = vld [vmem:[#allocation2 + $0xa8] sm:$0xf]
        %v967 = vld [vmem:[#allocation2 + $0xac] sm:$0xf]
        %v968 = vld [vmem:[#allocation2 + $0xb4] sm:$0xf]
        %v969 = vld [vmem:[#allocation2 + $0xb8] sm:$0xf]
        %v970 = vld [vmem:[#allocation2 + $0xc0] sm:$0xf]
        %v971 = vld [vmem:[#allocation2 + $0xc4] sm:$0xf]
        %v972 = vld [vmem:[#allocation2 + $0xcc] sm:$0xf]
        %v973 = vld [vmem:[#allocation2 + $0xd0] sm:$0xf]
        %v974 = vld [vmem:[%s1] sm:$0x3]
        %s975 = scalar_lea.vmem %s1, 6
        %v976 = vld [vmem:[%s975] sm:$0x3]
        %v1009 = vunpack.c.l.b16 %v940
        %v1010 = vunpack.c.l.b16 %v941
        %v1011 = vunpack.c.l.b16 %v942
        %v1012 = vunpack.c.l.b16 %v943
        %v1013 = vunpack.c.l.b16 %v944
        %v1014 = vunpack.c.l.b16 %v945
        %v1015 = vunpack.c.l.b16 %v946
        %v1016 = vunpack.c.l.b16 %v947
        %v1017 = vunpack.c.l.b16 %v948
        %v1018 = vunpack.c.l.b16 %v949
        %v1019 = vunpack.c.l.b16 %v950
        %v1020 = vunpack.c.l.b16 %v951
        %v1021 = vunpack.c.l.b16 %v952
        %v1022 = vunpack.c.l.b16 %v953
        %v1023 = vunpack.c.l.b16 %v954
        %v1024 = vunpack.c.l.b16 %v955
        %v1025 = vunpack.c.l.b16 %v956
        %v1026 = vunpack.c.l.b16 %v957
        %v1027 = vunpack.c.l.b16 %v958
        %v1028 = vunpack.c.l.b16 %v959
        %v1029 = vunpack.c.l.b16 %v960
        %v1030 = vunpack.c.l.b16 %v961
        %v1031 = vunpack.c.l.b16 %v962
        %v1032 = vunpack.c.l.b16 %v963
        %v1033 = vunpack.c.l.b16 %v964
        %v1034 = vunpack.c.l.b16 %v965
        %v1035 = vunpack.c.l.b16 %v966
        %v1036 = vunpack.c.l.b16 %v967
        %v1037 = vunpack.c.l.b16 %v968
        %v1038 = vunpack.c.l.b16 %v969
        %v1039 = vunpack.c.l.b16 %v970
        %v1040 = vunpack.c.l.b16 %v971
        %v1041 = vpack.c.b16 %v1010, %v1009
        %v1042 = vpack.c.b16 %v1012, %v1011
        %v1043 = vpack.c.b16 %v1014, %v1013
        %v1044 = vpack.c.b16 %v1016, %v1015
        %v1045 = vpack.c.b16 %v1018, %v1017
        %v1046 = vpack.c.b16 %v1020, %v1019
        %v1047 = vpack.c.b16 %v1022, %v1021
        %v1048 = vpack.c.b16 %v1024, %v1023
        %v1049 = vpack.c.b16 %v1026, %v1025
        %v1050 = vpack.c.b16 %v1028, %v1027
        %v1051 = vpack.c.b16 %v1030, %v1029
        %v1052 = vpack.c.b16 %v1032, %v1031
        %v1053 = vpack.c.b16 %v1034, %v1033
        %v1054 = vpack.c.b16 %v1036, %v1035
        %v1055 = vpack.c.b16 %v1038, %v1037
        %v1056 = vpack.c.b16 %v1040, %v1039
        %vm1057 = vcmask 31744
        %v1059 = vsel %vm1057, %v1041, 0
        %v1062 = vsel %vm1057, %v1042, 0
        %v1065 = vsel %vm1057, %v1043, 0
        %v1068 = vsel %vm1057, %v1044, 0
        %v1071 = vsel %vm1057, %v1045, 0
        %v1074 = vsel %vm1057, %v1046, 0
        %v1077 = vsel %vm1057, %v1047, 0
        %v1080 = vsel %vm1057, %v1048, 0
        %v1083 = vsel %vm1057, %v1049, 0
        %v1086 = vsel %vm1057, %v1050, 0
        %v1089 = vsel %vm1057, %v1051, 0
        %v1092 = vsel %vm1057, %v1052, 0
        %v1095 = vsel %vm1057, %v1053, 0
        %v1098 = vsel %vm1057, %v1054, 0
        %v1101 = vsel %vm1057, %v1055, 0
        %v1104 = vsel %vm1057, %v1056, 0
        %vm1106 = vcmask 1041408
        %v1108 = vsel %vm1106, %v976, 0
        %1110 = vmatprep.subr.bf16.mxu0 0
        %1111 = vmatpush1.bf16.msra.mxu0 %v1108
        %1112 = vmatprep.subr.bf16.mxu0 0
        %1113 = vmatpush1.bf16.msra.mxu0 0
        %1114 = vmatprep.subr.bf16.mxu0 0
        %1115 = vmatpush1.bf16.msra.mxu0 0
        %1116 = vmatprep.subr.bf16.mxu0 0
        %1117 = vmatpush1.bf16.msra.mxu0 0
        %1118 = vmatprep.subr.bf16.mxu0 0
        %1119 = vmatpush1.bf16.msra.mxu0 0
        %1120 = vmatprep.subr.bf16.mxu0 0
        %1121 = vmatpush1.bf16.msra.mxu0 0
        %1122 = vmatprep.subr.bf16.mxu0 0
        %1123 = vmatpush1.bf16.msra.mxu0 0
        %1124 = vmatprep.subr.bf16.mxu0 0
        %1125 = vmatpush1.bf16.msra.mxu0 0
        %1126 = vmatprep.subr.bf16.mxu0 0
        %1127 = vmatpush1.bf16.msra.mxu0 0
        %1128 = vmatprep.subr.bf16.mxu0 0
        %1129 = vmatpush1.bf16.msra.mxu0 0
        %1130 = vmatprep.subr.bf16.mxu0 0
        %1131 = vmatpush1.bf16.msra.mxu0 0
        %1132 = vmatprep.subr.bf16.mxu0 0
        %1133 = vmatpush1.bf16.msra.mxu0 0
        %1134 = vmatprep.subr.bf16.mxu0 0
        %1135 = vmatpush1.bf16.msra.mxu0 0
        %1136 = vmatprep.subr.bf16.mxu0 0
        %1137 = vmatpush1.bf16.msra.mxu0 0
        %1138 = vmatprep.subr.bf16.mxu0 0
        %1139 = vmatpush1.bf16.msra.mxu0 0
        %1140 = vmatprep.subr.bf16.mxu0 0
        %1141 = vmatpush1.bf16.msra.mxu0 0
        %1142 = vmatprep.mubr.bf16.mxu0 0
        %1143 = vmatmul.mubr.bf16.gmra.mrb[0].mxu0 %v1059
        %v1144 = vpop.f32.mrb[0].mxu0
        %v1145 = vadd.f32 0.0, %v1144
        %v1146 = vpop.f32.mrb[0].mxu0
        %v1147 = vpop.f32.mrb[0].mxu0
        %v1148 = vadd.f32 0.0, %v1147
        %v1149 = vpop.f32.mrb[0].mxu0
        %1150 = vmatprep.mubr.bf16.mxu0 0
        %1151 = vmatmul.mubr.bf16.gmra.mrb[0].mxu0 %v1062
        %v1152 = vpop.f32.mrb[0].mxu0
        %v1153 = vadd.f32 0.0, %v1152
        %v1154 = vpop.f32.mrb[0].mxu0
        %v1155 = vpop.f32.mrb[0].mxu0
        %v1156 = vadd.f32 0.0, %v1155
        %v1157 = vpop.f32.mrb[0].mxu0
        %1158 = vmatprep.mubr.bf16.mxu0 0
        %1159 = vmatmul.mubr.bf16.gmra.mrb[0].mxu0 %v1065
        %v1160 = vpop.f32.mrb[0].mxu0
        %v1161 = vadd.f32 0.0, %v1160
        %v1162 = vpop.f32.mrb[0].mxu0
        %v1163 = vpop.f32.mrb[0].mxu0
        %v1164 = vadd.f32 0.0, %v1163
        %v1165 = vpop.f32.mrb[0].mxu0
        %1166 = vmatprep.mubr.bf16.mxu0 0
        %1167 = vmatmul.mubr.bf16.gmra.mrb[0].mxu0 %v1068
        %v1168 = vpop.f32.mrb[0].mxu0
        %v1169 = vadd.f32 0.0, %v1168
        %v1170 = vpop.f32.mrb[0].mxu0
        %v1171 = vpop.f32.mrb[0].mxu0
        %v1172 = vadd.f32 0.0, %v1171
        %v1173 = vpop.f32.mrb[0].mxu0
        %1174 = vmatprep.mubr.bf16.mxu0 0
        %1175 = vmatmul.mubr.bf16.gmra.mrb[0].mxu0 %v1071
        %v1176 = vpop.f32.mrb[0].mxu0
        %v1177 = vadd.f32 0.0, %v1176
        %v1178 = vpop.f32.mrb[0].mxu0
        %v1179 = vpop.f32.mrb[0].mxu0
        %v1180 = vadd.f32 0.0, %v1179
        %v1181 = vpop.f32.mrb[0].mxu0
        %1182 = vmatprep.mubr.bf16.mxu0 0
        %1183 = vmatmul.mubr.bf16.gmra.mrb[0].mxu0 %v1074
        %v1184 = vpop.f32.mrb[0].mxu0
        %v1185 = vadd.f32 0.0, %v1184
        %v1186 = vpop.f32.mrb[0].mxu0
        %v1187 = vpop.f32.mrb[0].mxu0
        %v1188 = vadd.f32 0.0, %v1187
        %v1189 = vpop.f32.mrb[0].mxu0
        %1190 = vmatprep.mubr.bf16.mxu0 0
        %1191 = vmatmul.mubr.bf16.gmra.mrb[0].mxu0 %v1077
        %v1192 = vpop.f32.mrb[0].mxu0
        %v1193 = vadd.f32 0.0, %v1192
        %v1194 = vpop.f32.mrb[0].mxu0
        %v1195 = vpop.f32.mrb[0].mxu0
        %v1196 = vadd.f32 0.0, %v1195
        %v1197 = vpop.f32.mrb[0].mxu0
        %1198 = vmatprep.mubr.bf16.mxu0 0
        %1199 = vmatmul.mubr.bf16.gmra.mrb[0].mxu0 %v1080
        %v1200 = vpop.f32.mrb[0].mxu0
        %v1201 = vadd.f32 0.0, %v1200
        %v1202 = vpop.f32.mrb[0].mxu0
        %v1203 = vpop.f32.mrb[0].mxu0
        %v1204 = vadd.f32 0.0, %v1203
        %v1205 = vpop.f32.mrb[0].mxu0
        %1206 = vmatprep.mubr.bf16.mxu0 0
        %1207 = vmatmul.mubr.bf16.gmra.mrb[0].mxu0 %v1083
        %v1208 = vpop.f32.mrb[0].mxu0
        %v1209 = vadd.f32 0.0, %v1208
        %v1210 = vpop.f32.mrb[0].mxu0
        %v1211 = vpop.f32.mrb[0].mxu0
        %v1212 = vadd.f32 0.0, %v1211
        %v1213 = vpop.f32.mrb[0].mxu0
        %1214 = vmatprep.mubr.bf16.mxu0 0
        %1215 = vmatmul.mubr.bf16.gmra.mrb[0].mxu0 %v1086
        %v1216 = vpop.f32.mrb[0].mxu0
        %v1217 = vadd.f32 0.0, %v1216
        %v1218 = vpop.f32.mrb[0].mxu0
        %v1219 = vpop.f32.mrb[0].mxu0
        %v1220 = vadd.f32 0.0, %v1219
        %v1221 = vpop.f32.mrb[0].mxu0
        %1222 = vmatprep.mubr.bf16.mxu0 0
        %1223 = vmatmul.mubr.bf16.gmra.mrb[0].mxu0 %v1089
        %v1224 = vpop.f32.mrb[0].mxu0
        %v1225 = vadd.f32 0.0, %v1224
        %v1226 = vpop.f32.mrb[0].mxu0
        %v1227 = vpop.f32.mrb[0].mxu0
        %v1228 = vadd.f32 0.0, %v1227
        %v1229 = vpop.f32.mrb[0].mxu0
        %1230 = vmatprep.mubr.bf16.mxu0 0
        %1231 = vmatmul.mubr.bf16.gmra.mrb[0].mxu0 %v1092
        %v1232 = vpop.f32.mrb[0].mxu0
        %v1233 = vadd.f32 0.0, %v1232
        %v1234 = vpop.f32.mrb[0].mxu0
        %v1235 = vpop.f32.mrb[0].mxu0
        %v1236 = vadd.f32 0.0, %v1235
        %v1237 = vpop.f32.mrb[0].mxu0
        %1238 = vmatprep.mubr.bf16.mxu0 0
        %1239 = vmatmul.mubr.bf16.gmra.mrb[0].mxu0 %v1095
        %v1240 = vpop.f32.mrb[0].mxu0
        %v1241 = vadd.f32 0.0, %v1240
        %v1242 = vpop.f32.mrb[0].mxu0
        %v1243 = vpop.f32.mrb[0].mxu0
        %v1244 = vadd.f32 0.0, %v1243
        %v1245 = vpop.f32.mrb[0].mxu0
        %1246 = vmatprep.mubr.bf16.mxu0 0
        %1247 = vmatmul.mubr.bf16.gmra.mrb[0].mxu0 %v1098
        %v1248 = vpop.f32.mrb[0].mxu0
        %v1249 = vadd.f32 0.0, %v1248
        %v1250 = vpop.f32.mrb[0].mxu0
        %v1251 = vpop.f32.mrb[0].mxu0
        %v1252 = vadd.f32 0.0, %v1251
        %v1253 = vpop.f32.mrb[0].mxu0
        %1254 = vmatprep.mubr.bf16.mxu0 0
        %1255 = vmatmul.mubr.bf16.gmra.mrb[0].mxu0 %v1101
        %v1256 = vpop.f32.mrb[0].mxu0
        %v1257 = vadd.f32 0.0, %v1256
        %v1258 = vpop.f32.mrb[0].mxu0
        %v1259 = vpop.f32.mrb[0].mxu0
        %v1260 = vadd.f32 0.0, %v1259
        %v1261 = vpop.f32.mrb[0].mxu0
        %1262 = vmatprep.mubr.bf16.mxu0 0
        %1263 = vmatmul.mubr.bf16.gmra.mrb[0].mxu0 %v1104
        %v1264 = vpop.f32.mrb[0].mxu0
        %v1265 = vadd.f32 0.0, %v1264
        %v1266 = vpop.f32.mrb[0].mxu0
        %v1267 = vpop.f32.mrb[0].mxu0
        %v1268 = vadd.f32 0.0, %v1267
        %v1269 = vpop.f32.mrb[0].mxu0
        %1270 = vdwg.mxu0
        %v1273 = vunpack.c.l.b16 %v938
        %v1274 = vunpack.c.l.b16 %v939
        %v1275 = vpack.c.b16 %v1274, %v1273
        %v1277 = vsel %vm1057, %v1275, 0
        %v1280 = vsel %vm1106, %v974, 0
        %1282 = vmatprep.subr.bf16.mxu0 0
        %1283 = vmatpush1.bf16.msra.mxu0 %v1280
        %1284 = vmatprep.subr.bf16.mxu0 0
        %1285 = vmatpush1.bf16.msra.mxu0 0
        %1286 = vmatprep.subr.bf16.mxu0 0
        %1287 = vmatpush1.bf16.msra.mxu0 0
        %1288 = vmatprep.subr.bf16.mxu0 0
        %1289 = vmatpush1.bf16.msra.mxu0 0
        %1290 = vmatprep.subr.bf16.mxu0 0
        %1291 = vmatpush1.bf16.msra.mxu0 0
        %1292 = vmatprep.subr.bf16.mxu0 0
        %1293 = vmatpush1.bf16.msra.mxu0 0
        %1294 = vmatprep.subr.bf16.mxu0 0
        %1295 = vmatpush1.bf16.msra.mxu0 0
        %1296 = vmatprep.subr.bf16.mxu0 0
        %1297 = vmatpush1.bf16.msra.mxu0 0
        %1298 = vmatprep.subr.bf16.mxu0 0
        %1299 = vmatpush1.bf16.msra.mxu0 0
        %1300 = vmatprep.subr.bf16.mxu0 0
        %1301 = vmatpush1.bf16.msra.mxu0 0
        %1302 = vmatprep.subr.bf16.mxu0 0
        %1303 = vmatpush1.bf16.msra.mxu0 0
        %1304 = vmatprep.subr.bf16.mxu0 0
        %1305 = vmatpush1.bf16.msra.mxu0 0
        %1306 = vmatprep.subr.bf16.mxu0 0
        %1307 = vmatpush1.bf16.msra.mxu0 0
        %1308 = vmatprep.subr.bf16.mxu0 0
        %1309 = vmatpush1.bf16.msra.mxu0 0
        %1310 = vmatprep.subr.bf16.mxu0 0
        %1311 = vmatpush1.bf16.msra.mxu0 0
        %1312 = vmatprep.subr.bf16.mxu0 0
        %1313 = vmatpush1.bf16.msra.mxu0 0
        %1314 = vmatprep.mubr.bf16.mxu0 0
        %1315 = vmatmul.mubr.bf16.gmra.mrb[0].mxu0 %v1277
        %v1316 = vpop.f32.mrb[0].mxu0
        %v1317 = vadd.f32 %v1145, %v1316
        %v1318 = vpop.f32.mrb[0].mxu0
        %v1319 = vpop.f32.mrb[0].mxu0
        %v1320 = vadd.f32 %v1148, %v1319
        %v1321 = vpop.f32.mrb[0].mxu0
        %1322 = vmatprep.mubr.bf16.mxu0 0
        %1323 = vmatmul.mubr.bf16.gmra.mrb[0].mxu0 %v1059
        %v1324 = vpop.f32.mrb[0].mxu0
        %v1325 = vadd.f32 %v1153, %v1324
        %v1326 = vpop.f32.mrb[0].mxu0
        %v1327 = vpop.f32.mrb[0].mxu0
        %v1328 = vadd.f32 %v1156, %v1327
        %v1329 = vpop.f32.mrb[0].mxu0
        %1330 = vmatprep.mubr.bf16.mxu0 0
        %1331 = vmatmul.mubr.bf16.gmra.mrb[0].mxu0 %v1062
        %v1332 = vpop.f32.mrb[0].mxu0
        %v1333 = vadd.f32 %v1161, %v1332
        %v1334 = vpop.f32.mrb[0].mxu0
        %v1335 = vpop.f32.mrb[0].mxu0
        %v1336 = vadd.f32 %v1164, %v1335
        %v1337 = vpop.f32.mrb[0].mxu0
        %1338 = vmatprep.mubr.bf16.mxu0 0
        %1339 = vmatmul.mubr.bf16.gmra.mrb[0].mxu0 %v1065
        %v1340 = vpop.f32.mrb[0].mxu0
        %v1341 = vadd.f32 %v1169, %v1340
        %v1342 = vpop.f32.mrb[0].mxu0
        %v1343 = vpop.f32.mrb[0].mxu0
        %v1344 = vadd.f32 %v1172, %v1343
        %v1345 = vpop.f32.mrb[0].mxu0
        %1346 = vmatprep.mubr.bf16.mxu0 0
        %1347 = vmatmul.mubr.bf16.gmra.mrb[0].mxu0 %v1068
        %v1348 = vpop.f32.mrb[0].mxu0
        %v1349 = vadd.f32 %v1177, %v1348
        %v1350 = vpop.f32.mrb[0].mxu0
        %v1351 = vpop.f32.mrb[0].mxu0
        %v1352 = vadd.f32 %v1180, %v1351
        %v1353 = vpop.f32.mrb[0].mxu0
        %1354 = vmatprep.mubr.bf16.mxu0 0
        %1355 = vmatmul.mubr.bf16.gmra.mrb[0].mxu0 %v1071
        %v1356 = vpop.f32.mrb[0].mxu0
        %v1357 = vadd.f32 %v1185, %v1356
        %v1358 = vpop.f32.mrb[0].mxu0
        %v1359 = vpop.f32.mrb[0].mxu0
        %v1360 = vadd.f32 %v1188, %v1359
        %v1361 = vpop.f32.mrb[0].mxu0
        %1362 = vmatprep.mubr.bf16.mxu0 0
        %1363 = vmatmul.mubr.bf16.gmra.mrb[0].mxu0 %v1074
        %v1364 = vpop.f32.mrb[0].mxu0
        %v1365 = vadd.f32 %v1193, %v1364
        %v1366 = vpop.f32.mrb[0].mxu0
        %v1367 = vpop.f32.mrb[0].mxu0
        %v1368 = vadd.f32 %v1196, %v1367
        %v1369 = vpop.f32.mrb[0].mxu0
        %1370 = vmatprep.mubr.bf16.mxu0 0
        %1371 = vmatmul.mubr.bf16.gmra.mrb[0].mxu0 %v1077
        %v1372 = vpop.f32.mrb[0].mxu0
        %v1373 = vadd.f32 %v1201, %v1372
        %v1374 = vpop.f32.mrb[0].mxu0
        %v1375 = vpop.f32.mrb[0].mxu0
        %v1376 = vadd.f32 %v1204, %v1375
        %v1377 = vpop.f32.mrb[0].mxu0
        %1378 = vmatprep.mubr.bf16.mxu0 0
        %1379 = vmatmul.mubr.bf16.gmra.mrb[0].mxu0 %v1080
        %v1380 = vpop.f32.mrb[0].mxu0
        %v1381 = vadd.f32 %v1209, %v1380
        %v1382 = vpop.f32.mrb[0].mxu0
        %v1383 = vpop.f32.mrb[0].mxu0
        %v1384 = vadd.f32 %v1212, %v1383
        %v1385 = vpop.f32.mrb[0].mxu0
        %1386 = vmatprep.mubr.bf16.mxu0 0
        %1387 = vmatmul.mubr.bf16.gmra.mrb[0].mxu0 %v1083
        %v1388 = vpop.f32.mrb[0].mxu0
        %v1389 = vadd.f32 %v1217, %v1388
        %v1390 = vpop.f32.mrb[0].mxu0
        %v1391 = vpop.f32.mrb[0].mxu0
        %v1392 = vadd.f32 %v1220, %v1391
        %v1393 = vpop.f32.mrb[0].mxu0
        %1394 = vmatprep.mubr.bf16.mxu0 0
        %1395 = vmatmul.mubr.bf16.gmra.mrb[0].mxu0 %v1086
        %v1396 = vpop.f32.mrb[0].mxu0
        %v1397 = vadd.f32 %v1225, %v1396
        %v1398 = vpop.f32.mrb[0].mxu0
        %v1399 = vpop.f32.mrb[0].mxu0
        %v1400 = vadd.f32 %v1228, %v1399
        %v1401 = vpop.f32.mrb[0].mxu0
        %1402 = vmatprep.mubr.bf16.mxu0 0
        %1403 = vmatmul.mubr.bf16.gmra.mrb[0].mxu0 %v1089
        %v1404 = vpop.f32.mrb[0].mxu0
        %v1405 = vadd.f32 %v1233, %v1404
        %v1406 = vpop.f32.mrb[0].mxu0
        %v1407 = vpop.f32.mrb[0].mxu0
        %v1408 = vadd.f32 %v1236, %v1407
        %v1409 = vpop.f32.mrb[0].mxu0
        %1410 = vmatprep.mubr.bf16.mxu0 0
        %1411 = vmatmul.mubr.bf16.gmra.mrb[0].mxu0 %v1092
        %v1412 = vpop.f32.mrb[0].mxu0
        %v1413 = vadd.f32 %v1241, %v1412
        %v1414 = vpop.f32.mrb[0].mxu0
        %v1415 = vpop.f32.mrb[0].mxu0
        %v1416 = vadd.f32 %v1244, %v1415
        %v1417 = vpop.f32.mrb[0].mxu0
        %1418 = vmatprep.mubr.bf16.mxu0 0
        %1419 = vmatmul.mubr.bf16.gmra.mrb[0].mxu0 %v1095
        %v1420 = vpop.f32.mrb[0].mxu0
        %v1421 = vadd.f32 %v1249, %v1420
        %v1422 = vpop.f32.mrb[0].mxu0
        %v1423 = vpop.f32.mrb[0].mxu0
        %v1424 = vadd.f32 %v1252, %v1423
        %v1425 = vpop.f32.mrb[0].mxu0
        %1426 = vmatprep.mubr.bf16.mxu0 0
        %1427 = vmatmul.mubr.bf16.gmra.mrb[0].mxu0 %v1098
        %v1428 = vpop.f32.mrb[0].mxu0
        %v1429 = vadd.f32 %v1257, %v1428
        %v1430 = vpop.f32.mrb[0].mxu0
        %v1431 = vpop.f32.mrb[0].mxu0
        %v1432 = vadd.f32 %v1260, %v1431
        %v1433 = vpop.f32.mrb[0].mxu0
        %1434 = vmatprep.mubr.bf16.mxu0 0
        %1435 = vmatmul.mubr.bf16.gmra.mrb[0].mxu0 %v1101
        %v1436 = vpop.f32.mrb[0].mxu0
        %v1437 = vadd.f32 %v1265, %v1436
        %v1438 = vpop.f32.mrb[0].mxu0
        %v1439 = vpop.f32.mrb[0].mxu0
        %v1440 = vadd.f32 %v1268, %v1439
        %v1441 = vpop.f32.mrb[0].mxu0
        %1442 = vdwg.mxu0
        %s1443 = scalar_lea.vmem %s1, 12
        %v1444 = vld [vmem:[%s1443] sm:$0x3]
        %v1447 = vunpack.c.l.b16 %v972
        %v1448 = vunpack.c.l.b16 %v973
        %v1449 = vpack.c.b16 %v1448, %v1447
        %v1451 = vsel %vm1057, %v1449, 0
        %v1454 = vsel %vm1106, %v1444, 0
        %1456 = vmatprep.subr.bf16.mxu0 0
        %1457 = vmatpush1.bf16.msra.mxu0 %v1454
        %1458 = vmatprep.subr.bf16.mxu0 0
        %1459 = vmatpush1.bf16.msra.mxu0 0
        %1460 = vmatprep.subr.bf16.mxu0 0
        %1461 = vmatpush1.bf16.msra.mxu0 0
        %1462 = vmatprep.subr.bf16.mxu0 0
        %1463 = vmatpush1.bf16.msra.mxu0 0
        %1464 = vmatprep.subr.bf16.mxu0 0
        %1465 = vmatpush1.bf16.msra.mxu0 0
        %1466 = vmatprep.subr.bf16.mxu0 0
        %1467 = vmatpush1.bf16.msra.mxu0 0
        %1468 = vmatprep.subr.bf16.mxu0 0
        %1469 = vmatpush1.bf16.msra.mxu0 0
        %1470 = vmatprep.subr.bf16.mxu0 0
        %1471 = vmatpush1.bf16.msra.mxu0 0
        %1472 = vmatprep.subr.bf16.mxu0 0
        %1473 = vmatpush1.bf16.msra.mxu0 0
        %1474 = vmatprep.subr.bf16.mxu0 0
        %1475 = vmatpush1.bf16.msra.mxu0 0
        %1476 = vmatprep.subr.bf16.mxu0 0
        %1477 = vmatpush1.bf16.msra.mxu0 0
        %1478 = vmatprep.subr.bf16.mxu0 0
        %1479 = vmatpush1.bf16.msra.mxu0 0
        %1480 = vmatprep.subr.bf16.mxu0 0
        %1481 = vmatpush1.bf16.msra.mxu0 0
        %1482 = vmatprep.subr.bf16.mxu0 0
        %1483 = vmatpush1.bf16.msra.mxu0 0
        %1484 = vmatprep.subr.bf16.mxu0 0
        %1485 = vmatpush1.bf16.msra.mxu0 0
        %1486 = vmatprep.subr.bf16.mxu0 0
        %1487 = vmatpush1.bf16.msra.mxu0 0
        %1488 = vmatprep.mubr.bf16.mxu0 0
        %1489 = vmatmul.mubr.bf16.gmra.mrb[0].mxu0 %v1062
        %v1490 = vpop.f32.mrb[0].mxu0
        %v1491 = vadd.f32 0.0, %v1490
        %v1492 = vpop.f32.mrb[0].mxu0
        %v1493 = vpop.f32.mrb[0].mxu0
        %v1494 = vadd.f32 0.0, %v1493
        %v1495 = vpop.f32.mrb[0].mxu0
        %1496 = vmatprep.mubr.bf16.mxu0 0
        %1497 = vmatmul.mubr.bf16.gmra.mrb[0].mxu0 %v1065
        %v1498 = vpop.f32.mrb[0].mxu0
        %v1499 = vadd.f32 0.0, %v1498
        %v1500 = vpop.f32.mrb[0].mxu0
        %v1501 = vpop.f32.mrb[0].mxu0
        %v1502 = vadd.f32 0.0, %v1501
        %v1503 = vpop.f32.mrb[0].mxu0
        %1504 = vmatprep.mubr.bf16.mxu0 0
        %1505 = vmatmul.mubr.bf16.gmra.mrb[0].mxu0 %v1068
        %v1506 = vpop.f32.mrb[0].mxu0
        %v1507 = vadd.f32 0.0, %v1506
        %v1508 = vpop.f32.mrb[0].mxu0
        %v1509 = vpop.f32.mrb[0].mxu0
        %v1510 = vadd.f32 0.0, %v1509
        %v1511 = vpop.f32.mrb[0].mxu0
        %1512 = vmatprep.mubr.bf16.mxu0 0
        %1513 = vmatmul.mubr.bf16.gmra.mrb[0].mxu0 %v1071
        %v1514 = vpop.f32.mrb[0].mxu0
        %v1515 = vadd.f32 0.0, %v1514
        %v1516 = vpop.f32.mrb[0].mxu0
        %v1517 = vpop.f32.mrb[0].mxu0
        %v1518 = vadd.f32 0.0, %v1517
        %v1519 = vpop.f32.mrb[0].mxu0
        %1520 = vmatprep.mubr.bf16.mxu0 0
        %1521 = vmatmul.mubr.bf16.gmra.mrb[0].mxu0 %v1074
        %v1522 = vpop.f32.mrb[0].mxu0
        %v1523 = vadd.f32 0.0, %v1522
        %v1524 = vpop.f32.mrb[0].mxu0
        %v1525 = vpop.f32.mrb[0].mxu0
        %v1526 = vadd.f32 0.0, %v1525
        %v1527 = vpop.f32.mrb[0].mxu0
        %1528 = vmatprep.mubr.bf16.mxu0 0
        %1529 = vmatmul.mubr.bf16.gmra.mrb[0].mxu0 %v1077
        %v1530 = vpop.f32.mrb[0].mxu0
        %v1531 = vadd.f32 0.0, %v1530
        %v1532 = vpop.f32.mrb[0].mxu0
        %v1533 = vpop.f32.mrb[0].mxu0
        %v1534 = vadd.f32 0.0, %v1533
        %v1535 = vpop.f32.mrb[0].mxu0
        %1536 = vmatprep.mubr.bf16.mxu0 0
        %1537 = vmatmul.mubr.bf16.gmra.mrb[0].mxu0 %v1080
        %v1538 = vpop.f32.mrb[0].mxu0
        %v1539 = vadd.f32 0.0, %v1538
        %v1540 = vpop.f32.mrb[0].mxu0
        %v1541 = vpop.f32.mrb[0].mxu0
        %v1542 = vadd.f32 0.0, %v1541
        %v1543 = vpop.f32.mrb[0].mxu0
        %1544 = vmatprep.mubr.bf16.mxu0 0
        %1545 = vmatmul.mubr.bf16.gmra.mrb[0].mxu0 %v1083
        %v1546 = vpop.f32.mrb[0].mxu0
        %v1547 = vadd.f32 0.0, %v1546
        %v1548 = vpop.f32.mrb[0].mxu0
        %v1549 = vpop.f32.mrb[0].mxu0
        %v1550 = vadd.f32 0.0, %v1549
        %v1551 = vpop.f32.mrb[0].mxu0
        %1552 = vmatprep.mubr.bf16.mxu0 0
        %1553 = vmatmul.mubr.bf16.gmra.mrb[0].mxu0 %v1086
        %v1554 = vpop.f32.mrb[0].mxu0
        %v1555 = vadd.f32 0.0, %v1554
        %v1556 = vpop.f32.mrb[0].mxu0
        %v1557 = vpop.f32.mrb[0].mxu0
        %v1558 = vadd.f32 0.0, %v1557
        %v1559 = vpop.f32.mrb[0].mxu0
        %1560 = vmatprep.mubr.bf16.mxu0 0
        %1561 = vmatmul.mubr.bf16.gmra.mrb[0].mxu0 %v1089
        %v1562 = vpop.f32.mrb[0].mxu0
        %v1563 = vadd.f32 0.0, %v1562
        %v1564 = vpop.f32.mrb[0].mxu0
        %v1565 = vpop.f32.mrb[0].mxu0
        %v1566 = vadd.f32 0.0, %v1565
        %v1567 = vpop.f32.mrb[0].mxu0
        %1568 = vmatprep.mubr.bf16.mxu0 0
        %1569 = vmatmul.mubr.bf16.gmra.mrb[0].mxu0 %v1092
        %v1570 = vpop.f32.mrb[0].mxu0
        %v1571 = vadd.f32 0.0, %v1570
        %v1572 = vpop.f32.mrb[0].mxu0
        %v1573 = vpop.f32.mrb[0].mxu0
        %v1574 = vadd.f32 0.0, %v1573
        %v1575 = vpop.f32.mrb[0].mxu0
        %1576 = vmatprep.mubr.bf16.mxu0 0
        %1577 = vmatmul.mubr.bf16.gmra.mrb[0].mxu0 %v1095
        %v1578 = vpop.f32.mrb[0].mxu0
        %v1579 = vadd.f32 0.0, %v1578
        %v1580 = vpop.f32.mrb[0].mxu0
        %v1581 = vpop.f32.mrb[0].mxu0
        %v1582 = vadd.f32 0.0, %v1581
        %v1583 = vpop.f32.mrb[0].mxu0
        %1584 = vmatprep.mubr.bf16.mxu0 0
        %1585 = vmatmul.mubr.bf16.gmra.mrb[0].mxu0 %v1098
        %v1586 = vpop.f32.mrb[0].mxu0
        %v1587 = vadd.f32 0.0, %v1586
        %v1588 = vpop.f32.mrb[0].mxu0
        %v1589 = vpop.f32.mrb[0].mxu0
        %v1590 = vadd.f32 0.0, %v1589
        %v1591 = vpop.f32.mrb[0].mxu0
        %1592 = vmatprep.mubr.bf16.mxu0 0
        %1593 = vmatmul.mubr.bf16.gmra.mrb[0].mxu0 %v1101
        %v1594 = vpop.f32.mrb[0].mxu0
        %v1595 = vadd.f32 0.0, %v1594
        %v1596 = vpop.f32.mrb[0].mxu0
        %v1597 = vpop.f32.mrb[0].mxu0
        %v1598 = vadd.f32 0.0, %v1597
        %v1599 = vpop.f32.mrb[0].mxu0
        %1600 = vmatprep.mubr.bf16.mxu0 0
        %1601 = vmatmul.mubr.bf16.gmra.mrb[0].mxu0 %v1104
        %v1602 = vpop.f32.mrb[0].mxu0
        %v1603 = vadd.f32 0.0, %v1602
        %v1604 = vpop.f32.mrb[0].mxu0
        %v1605 = vpop.f32.mrb[0].mxu0
        %v1606 = vadd.f32 0.0, %v1605
        %v1607 = vpop.f32.mrb[0].mxu0
        %1608 = vmatprep.mubr.bf16.mxu0 0
        %1609 = vmatmul.mubr.bf16.gmra.mrb[0].mxu0 %v1451
        %v1610 = vpop.f32.mrb[0].mxu0
        %v1611 = vadd.f32 0.0, %v1610
        %v1612 = vpop.f32.mrb[0].mxu0
        %v1613 = vpop.f32.mrb[0].mxu0
        %v1614 = vadd.f32 0.0, %v1613
        %v1615 = vpop.f32.mrb[0].mxu0
        %1616 = vdwg.mxu0
        %v1617 = vadd.f32 %v1317, %v1491
        %v1618 = vadd.f32 %v1320, %v1494
        %v1619 = vadd.f32 %v1325, %v1499
        %v1620 = vadd.f32 %v1328, %v1502
        %v1621 = vadd.f32 %v1333, %v1507
        %v1622 = vadd.f32 %v1336, %v1510
        %v1623 = vadd.f32 %v1341, %v1515
        %v1624 = vadd.f32 %v1344, %v1518
        %v1625 = vadd.f32 %v1349, %v1523
        %v1626 = vadd.f32 %v1352, %v1526
        %v1627 = vadd.f32 %v1357, %v1531
        %v1628 = vadd.f32 %v1360, %v1534
        %v1629 = vadd.f32 %v1365, %v1539
        %v1630 = vadd.f32 %v1368, %v1542
        %v1631 = vadd.f32 %v1373, %v1547
        %v1632 = vadd.f32 %v1376, %v1550
        %v1633 = vadd.f32 %v1381, %v1555
        %v1634 = vadd.f32 %v1384, %v1558
        %v1635 = vadd.f32 %v1389, %v1563
        %v1636 = vadd.f32 %v1392, %v1566
        %v1637 = vadd.f32 %v1397, %v1571
        %v1638 = vadd.f32 %v1400, %v1574
        %v1639 = vadd.f32 %v1405, %v1579
        %v1640 = vadd.f32 %v1408, %v1582
        %v1641 = vadd.f32 %v1413, %v1587
        %v1642 = vadd.f32 %v1416, %v1590
        %v1643 = vadd.f32 %v1421, %v1595
        %v1644 = vadd.f32 %v1424, %v1598
        %v1645 = vadd.f32 %v1429, %v1603
        %v1646 = vadd.f32 %v1432, %v1606
        %v1647 = vadd.f32 %v1437, %v1611
        %v1648 = vadd.f32 %v1440, %v1614
        %v1649 = vld [vmem:[#allocation2] sm:$0xf]
        %v1650 = vld [vmem:[#allocation2 + $0x4] sm:$0xf]
        %v1651 = vld [vmem:[#allocation2 + $0x8] sm:$0x1]
        %v1652 = vld [vmem:[#allocation2 + $0xc] sm:$0xf]
        %v1653 = vld [vmem:[#allocation2 + $0x10] sm:$0xf]
        %v1654 = vld [vmem:[#allocation2 + $0x14] sm:$0x1]
        %v1655 = vld [vmem:[#allocation2 + $0x18] sm:$0xf]
        %v1656 = vld [vmem:[#allocation2 + $0x1c] sm:$0xf]
        %v1657 = vld [vmem:[#allocation2 + $0x20] sm:$0x1]
        %v1658 = vld [vmem:[#allocation2 + $0x24] sm:$0xf]
        %v1659 = vld [vmem:[#allocation2 + $0x28] sm:$0xf]
        %v1660 = vld [vmem:[#allocation2 + $0x2c] sm:$0x1]
        %v1661 = vld [vmem:[#allocation2 + $0x30] sm:$0xf]
        %v1662 = vld [vmem:[#allocation2 + $0x34] sm:$0xf]
        %v1663 = vld [vmem:[#allocation2 + $0x38] sm:$0x1]
        %v1664 = vld [vmem:[#allocation2 + $0x3c] sm:$0xf]
        %v1665 = vld [vmem:[#allocation2 + $0x40] sm:$0xf]
        %v1666 = vld [vmem:[#allocation2 + $0x44] sm:$0x1]
        %v1667 = vld [vmem:[#allocation2 + $0x48] sm:$0xf]
        %v1668 = vld [vmem:[#allocation2 + $0x4c] sm:$0xf]
        %v1669 = vld [vmem:[#allocation2 + $0x50] sm:$0x1]
        %v1670 = vld [vmem:[#allocation2 + $0x54] sm:$0xf]
        %v1671 = vld [vmem:[#allocation2 + $0x58] sm:$0xf]
        %v1672 = vld [vmem:[#allocation2 + $0x5c] sm:$0x1]
        %v1673 = vld [vmem:[#allocation2 + $0x60] sm:$0xf]
        %v1674 = vld [vmem:[#allocation2 + $0x64] sm:$0xf]
        %v1675 = vld [vmem:[#allocation2 + $0x68] sm:$0x1]
        %v1676 = vld [vmem:[#allocation2 + $0x6c] sm:$0xf]
        %v1677 = vld [vmem:[#allocation2 + $0x70] sm:$0xf]
        %v1678 = vld [vmem:[#allocation2 + $0x74] sm:$0x1]
        %v1679 = vld [vmem:[#allocation2 + $0x78] sm:$0xf]
        %v1680 = vld [vmem:[#allocation2 + $0x7c] sm:$0xf]
        %v1681 = vld [vmem:[#allocation2 + $0x80] sm:$0x1]
        %v1682 = vld [vmem:[#allocation2 + $0x84] sm:$0xf]
        %v1683 = vld [vmem:[#allocation2 + $0x88] sm:$0xf]
        %v1684 = vld [vmem:[#allocation2 + $0x8c] sm:$0x1]
        %v1685 = vld [vmem:[#allocation2 + $0x90] sm:$0xf]
        %v1686 = vld [vmem:[#allocation2 + $0x94] sm:$0xf]
        %v1687 = vld [vmem:[#allocation2 + $0x98] sm:$0x1]
        %v1688 = vld [vmem:[#allocation2 + $0x9c] sm:$0xf]
        %v1689 = vld [vmem:[#allocation2 + $0xa0] sm:$0xf]
        %v1690 = vld [vmem:[#allocation2 + $0xa4] sm:$0x1]
        %v1691 = vld [vmem:[#allocation2 + $0xa8] sm:$0xf]
        %v1692 = vld [vmem:[#allocation2 + $0xac] sm:$0xf]
        %v1693 = vld [vmem:[#allocation2 + $0xb0] sm:$0x1]
        %v1694 = vld [vmem:[#allocation2 + $0xb4] sm:$0xf]
        %v1695 = vld [vmem:[#allocation2 + $0xb8] sm:$0xf]
        %v1696 = vld [vmem:[#allocation2 + $0xbc] sm:$0x1]
        %v1697 = vld [vmem:[#allocation2 + $0xc0] sm:$0xf]
        %v1698 = vld [vmem:[#allocation2 + $0xc4] sm:$0xf]
        %v1699 = vld [vmem:[#allocation2 + $0xc8] sm:$0x1]
        %v1700 = vld [vmem:[#allocation2 + $0xcc] sm:$0xf]
        %v1701 = vld [vmem:[#allocation2 + $0xd0] sm:$0xf]
        %v1702 = vld [vmem:[#allocation2 + $0xd4] sm:$0x1]
        %vm1703 = vsmask.f32 3328
        %vm1704 = vsmask.f32 7440
        %vm1705 = vmor %vm1703, %vm1704
        %v1707 = vshrl.u32 %v1649, 16
        %v1709 = vrot.slane %v1707, 4
        %v1710 = vshll.u32 %v1649, 16
        %v1712 = vrot.slane %v1710, 5
        %v1713 = vor.u32 %v1709, %v1712
        %v1714 = vrot.slane %v1713, 4
        %v1716 = vshll.u32 %v1650, 16
        %v1718 = vrot.slane %v1716, 5
        %v1719 = vsel %vm1705, %v1714, %v1718
        %v1720 = vshrl.u32 %v1650, 16
        %v1722 = vrot.slane %v1720, 4
        %v1723 = vor.u32 %v1722, %v1718
        %v1724 = vrot.slane %v1723, 4
        %v1726 = vshll.u32 %v1651, 16
        %v1728 = vrot.slane %v1726, 5
        %v1729 = vsel %vm1705, %v1724, %v1728
        %v1731 = vshrl.u32 %v1652, 16
        %v1733 = vrot.slane %v1731, 4
        %v1734 = vshll.u32 %v1652, 16
        %v1736 = vrot.slane %v1734, 5
        %v1737 = vor.u32 %v1733, %v1736
        %v1738 = vrot.slane %v1737, 4
        %v1740 = vshll.u32 %v1653, 16
        %v1742 = vrot.slane %v1740, 5
        %v1743 = vsel %vm1705, %v1738, %v1742
        %v1744 = vshrl.u32 %v1653, 16
        %v1746 = vrot.slane %v1744, 4
        %v1747 = vor.u32 %v1746, %v1742
        %v1748 = vrot.slane %v1747, 4
        %v1750 = vshll.u32 %v1654, 16
        %v1752 = vrot.slane %v1750, 5
        %v1753 = vsel %vm1705, %v1748, %v1752
        %v1755 = vshrl.u32 %v1655, 16
        %v1757 = vrot.slane %v1755, 4
        %v1758 = vshll.u32 %v1655, 16
        %v1760 = vrot.slane %v1758, 5
        %v1761 = vor.u32 %v1757, %v1760
        %v1762 = vrot.slane %v1761, 4
        %v1764 = vshll.u32 %v1656, 16
        %v1766 = vrot.slane %v1764, 5
        %v1767 = vsel %vm1705, %v1762, %v1766
        %v1768 = vshrl.u32 %v1656, 16
        %v1770 = vrot.slane %v1768, 4
        %v1771 = vor.u32 %v1770, %v1766
        %v1772 = vrot.slane %v1771, 4
        %v1774 = vshll.u32 %v1657, 16
        %v1776 = vrot.slane %v1774, 5
        %v1777 = vsel %vm1705, %v1772, %v1776
        %v1779 = vshrl.u32 %v1658, 16
        %v1781 = vrot.slane %v1779, 4
        %v1782 = vshll.u32 %v1658, 16
        %v1784 = vrot.slane %v1782, 5
        %v1785 = vor.u32 %v1781, %v1784
        %v1786 = vrot.slane %v1785, 4
        %v1788 = vshll.u32 %v1659, 16
        %v1790 = vrot.slane %v1788, 5
        %v1791 = vsel %vm1705, %v1786, %v1790
        %v1792 = vshrl.u32 %v1659, 16
        %v1794 = vrot.slane %v1792, 4
        %v1795 = vor.u32 %v1794, %v1790
        %v1796 = vrot.slane %v1795, 4
        %v1798 = vshll.u32 %v1660, 16
        %v1800 = vrot.slane %v1798, 5
        %v1801 = vsel %vm1705, %v1796, %v1800
        %v1803 = vshrl.u32 %v1661, 16
        %v1805 = vrot.slane %v1803, 4
        %v1806 = vshll.u32 %v1661, 16
        %v1808 = vrot.slane %v1806, 5
        %v1809 = vor.u32 %v1805, %v1808
        %v1810 = vrot.slane %v1809, 4
        %v1812 = vshll.u32 %v1662, 16
        %v1814 = vrot.slane %v1812, 5
        %v1815 = vsel %vm1705, %v1810, %v1814
        %v1816 = vshrl.u32 %v1662, 16
        %v1818 = vrot.slane %v1816, 4
        %v1819 = vor.u32 %v1818, %v1814
        %v1820 = vrot.slane %v1819, 4
        %v1822 = vshll.u32 %v1663, 16
        %v1824 = vrot.slane %v1822, 5
        %v1825 = vsel %vm1705, %v1820, %v1824
        %v1827 = vshrl.u32 %v1664, 16
        %v1829 = vrot.slane %v1827, 4
        %v1830 = vshll.u32 %v1664, 16
        %v1832 = vrot.slane %v1830, 5
        %v1833 = vor.u32 %v1829, %v1832
        %v1834 = vrot.slane %v1833, 4
        %v1836 = vshll.u32 %v1665, 16
        %v1838 = vrot.slane %v1836, 5
        %v1839 = vsel %vm1705, %v1834, %v1838
        %v1840 = vshrl.u32 %v1665, 16
        %v1842 = vrot.slane %v1840, 4
        %v1843 = vor.u32 %v1842, %v1838
        %v1844 = vrot.slane %v1843, 4
        %v1846 = vshll.u32 %v1666, 16
        %v1848 = vrot.slane %v1846, 5
        %v1849 = vsel %vm1705, %v1844, %v1848
        %v1851 = vshrl.u32 %v1667, 16
        %v1853 = vrot.slane %v1851, 4
        %v1854 = vshll.u32 %v1667, 16
        %v1856 = vrot.slane %v1854, 5
        %v1857 = vor.u32 %v1853, %v1856
        %v1858 = vrot.slane %v1857, 4
        %v1860 = vshll.u32 %v1668, 16
        %v1862 = vrot.slane %v1860, 5
        %v1863 = vsel %vm1705, %v1858, %v1862
        %v1864 = vshrl.u32 %v1668, 16
        %v1866 = vrot.slane %v1864, 4
        %v1867 = vor.u32 %v1866, %v1862
        %v1868 = vrot.slane %v1867, 4
        %v1870 = vshll.u32 %v1669, 16
        %v1872 = vrot.slane %v1870, 5
        %v1873 = vsel %vm1705, %v1868, %v1872
        %v1875 = vshrl.u32 %v1670, 16
        %v1877 = vrot.slane %v1875, 4
        %v1878 = vshll.u32 %v1670, 16
        %v1880 = vrot.slane %v1878, 5
        %v1881 = vor.u32 %v1877, %v1880
        %v1882 = vrot.slane %v1881, 4
        %v1884 = vshll.u32 %v1671, 16
        %v1886 = vrot.slane %v1884, 5
        %v1887 = vsel %vm1705, %v1882, %v1886
        %v1888 = vshrl.u32 %v1671, 16
        %v1890 = vrot.slane %v1888, 4
        %v1891 = vor.u32 %v1890, %v1886
        %v1892 = vrot.slane %v1891, 4
        %v1894 = vshll.u32 %v1672, 16
        %v1896 = vrot.slane %v1894, 5
        %v1897 = vsel %vm1705, %v1892, %v1896
        %v1899 = vshrl.u32 %v1673, 16
        %v1901 = vrot.slane %v1899, 4
        %v1902 = vshll.u32 %v1673, 16
        %v1904 = vrot.slane %v1902, 5
        %v1905 = vor.u32 %v1901, %v1904
        %v1906 = vrot.slane %v1905, 4
        %v1908 = vshll.u32 %v1674, 16
        %v1910 = vrot.slane %v1908, 5
        %v1911 = vsel %vm1705, %v1906, %v1910
        %v1912 = vshrl.u32 %v1674, 16
        %v1914 = vrot.slane %v1912, 4
        %v1915 = vor.u32 %v1914, %v1910
        %v1916 = vrot.slane %v1915, 4
        %v1918 = vshll.u32 %v1675, 16
        %v1920 = vrot.slane %v1918, 5
        %v1921 = vsel %vm1705, %v1916, %v1920
        %v1923 = vshrl.u32 %v1676, 16
        %v1925 = vrot.slane %v1923, 4
        %v1926 = vshll.u32 %v1676, 16
        %v1928 = vrot.slane %v1926, 5
        %v1929 = vor.u32 %v1925, %v1928
        %v1930 = vrot.slane %v1929, 4
        %v1932 = vshll.u32 %v1677, 16
        %v1934 = vrot.slane %v1932, 5
        %v1935 = vsel %vm1705, %v1930, %v1934
        %v1936 = vshrl.u32 %v1677, 16
        %v1938 = vrot.slane %v1936, 4
        %v1939 = vor.u32 %v1938, %v1934
        %v1940 = vrot.slane %v1939, 4
        %v1942 = vshll.u32 %v1678, 16
        %v1944 = vrot.slane %v1942, 5
        %v1945 = vsel %vm1705, %v1940, %v1944
        %v1947 = vshrl.u32 %v1679, 16
        %v1949 = vrot.slane %v1947, 4
        %v1950 = vshll.u32 %v1679, 16
        %v1952 = vrot.slane %v1950, 5
        %v1953 = vor.u32 %v1949, %v1952
        %v1954 = vrot.slane %v1953, 4
        %v1956 = vshll.u32 %v1680, 16
        %v1958 = vrot.slane %v1956, 5
        %v1959 = vsel %vm1705, %v1954, %v1958
        %v1960 = vshrl.u32 %v1680, 16
        %v1962 = vrot.slane %v1960, 4
        %v1963 = vor.u32 %v1962, %v1958
        %v1964 = vrot.slane %v1963, 4
        %v1966 = vshll.u32 %v1681, 16
        %v1968 = vrot.slane %v1966, 5
        %v1969 = vsel %vm1705, %v1964, %v1968
        %v1971 = vshrl.u32 %v1682, 16
        %v1973 = vrot.slane %v1971, 4
        %v1974 = vshll.u32 %v1682, 16
        %v1976 = vrot.slane %v1974, 5
        %v1977 = vor.u32 %v1973, %v1976
        %v1978 = vrot.slane %v1977, 4
        %v1980 = vshll.u32 %v1683, 16
        %v1982 = vrot.slane %v1980, 5
        %v1983 = vsel %vm1705, %v1978, %v1982
        %v1984 = vshrl.u32 %v1683, 16
        %v1986 = vrot.slane %v1984, 4
        %v1987 = vor.u32 %v1986, %v1982
        %v1988 = vrot.slane %v1987, 4
        %v1990 = vshll.u32 %v1684, 16
        %v1992 = vrot.slane %v1990, 5
        %v1993 = vsel %vm1705, %v1988, %v1992
        %v1995 = vshrl.u32 %v1685, 16
        %v1997 = vrot.slane %v1995, 4
        %v1998 = vshll.u32 %v1685, 16
        %v2000 = vrot.slane %v1998, 5
        %v2001 = vor.u32 %v1997, %v2000
        %v2002 = vrot.slane %v2001, 4
        %v2004 = vshll.u32 %v1686, 16
        %v2006 = vrot.slane %v2004, 5
        %v2007 = vsel %vm1705, %v2002, %v2006
        %v2008 = vshrl.u32 %v1686, 16
        %v2010 = vrot.slane %v2008, 4
        %v2011 = vor.u32 %v2010, %v2006
        %v2012 = vrot.slane %v2011, 4
        %v2014 = vshll.u32 %v1687, 16
        %v2016 = vrot.slane %v2014, 5
        %v2017 = vsel %vm1705, %v2012, %v2016
        %v2019 = vshrl.u32 %v1688, 16
        %v2021 = vrot.slane %v2019, 4
        %v2022 = vshll.u32 %v1688, 16
        %v2024 = vrot.slane %v2022, 5
        %v2025 = vor.u32 %v2021, %v2024
        %v2026 = vrot.slane %v2025, 4
        %v2028 = vshll.u32 %v1689, 16
        %v2030 = vrot.slane %v2028, 5
        %v2031 = vsel %vm1705, %v2026, %v2030
        %v2032 = vshrl.u32 %v1689, 16
        %v2034 = vrot.slane %v2032, 4
        %v2035 = vor.u32 %v2034, %v2030
        %v2036 = vrot.slane %v2035, 4
        %v2038 = vshll.u32 %v1690, 16
        %v2040 = vrot.slane %v2038, 5
        %v2041 = vsel %vm1705, %v2036, %v2040
        %v2043 = vshrl.u32 %v1691, 16
        %v2045 = vrot.slane %v2043, 4
        %v2046 = vshll.u32 %v1691, 16
        %v2048 = vrot.slane %v2046, 5
        %v2049 = vor.u32 %v2045, %v2048
        %v2050 = vrot.slane %v2049, 4
        %v2052 = vshll.u32 %v1692, 16
        %v2054 = vrot.slane %v2052, 5
        %v2055 = vsel %vm1705, %v2050, %v2054
        %v2056 = vshrl.u32 %v1692, 16
        %v2058 = vrot.slane %v2056, 4
        %v2059 = vor.u32 %v2058, %v2054
        %v2060 = vrot.slane %v2059, 4
        %v2062 = vshll.u32 %v1693, 16
        %v2064 = vrot.slane %v2062, 5
        %v2065 = vsel %vm1705, %v2060, %v2064
        %v2067 = vshrl.u32 %v1694, 16
        %v2069 = vrot.slane %v2067, 4
        %v2070 = vshll.u32 %v1694, 16
        %v2072 = vrot.slane %v2070, 5
        %v2073 = vor.u32 %v2069, %v2072
        %v2074 = vrot.slane %v2073, 4
        %v2076 = vshll.u32 %v1695, 16
        %v2078 = vrot.slane %v2076, 5
        %v2079 = vsel %vm1705, %v2074, %v2078
        %v2080 = vshrl.u32 %v1695, 16
        %v2082 = vrot.slane %v2080, 4
        %v2083 = vor.u32 %v2082, %v2078
        %v2084 = vrot.slane %v2083, 4
        %v2086 = vshll.u32 %v1696, 16
        %v2088 = vrot.slane %v2086, 5
        %v2089 = vsel %vm1705, %v2084, %v2088
        %v2091 = vshrl.u32 %v1697, 16
        %v2093 = vrot.slane %v2091, 4
        %v2094 = vshll.u32 %v1697, 16
        %v2096 = vrot.slane %v2094, 5
        %v2097 = vor.u32 %v2093, %v2096
        %v2098 = vrot.slane %v2097, 4
        %v2100 = vshll.u32 %v1698, 16
        %v2102 = vrot.slane %v2100, 5
        %v2103 = vsel %vm1705, %v2098, %v2102
        %v2104 = vshrl.u32 %v1698, 16
        %v2106 = vrot.slane %v2104, 4
        %v2107 = vor.u32 %v2106, %v2102
        %v2108 = vrot.slane %v2107, 4
        %v2110 = vshll.u32 %v1699, 16
        %v2112 = vrot.slane %v2110, 5
        %v2113 = vsel %vm1705, %v2108, %v2112
        %v2115 = vshrl.u32 %v1700, 16
        %v2117 = vrot.slane %v2115, 4
        %v2118 = vshll.u32 %v1700, 16
        %v2120 = vrot.slane %v2118, 5
        %v2121 = vor.u32 %v2117, %v2120
        %v2122 = vrot.slane %v2121, 4
        %v2124 = vshll.u32 %v1701, 16
        %v2126 = vrot.slane %v2124, 5
        %v2127 = vsel %vm1705, %v2122, %v2126
        %v2128 = vshrl.u32 %v1701, 16
        %v2130 = vrot.slane %v2128, 4
        %v2131 = vor.u32 %v2130, %v2126
        %v2132 = vrot.slane %v2131, 4
        %v2134 = vshll.u32 %v1702, 16
        %v2136 = vrot.slane %v2134, 5
        %v2137 = vsel %vm1705, %v2132, %v2136
        %s2138 = scalar_lea.vmem %s1, 2
        %v2139 = vld [vmem:[%s2138] sm:$0x3]
        %v2140 = vunpack.c.l.b16 %v1719
        %v2141 = vunpack.c.l.b16 %v1729
        %v2142 = vunpack.c.l.b16 %v1743
        %v2143 = vunpack.c.l.b16 %v1753
        %v2144 = vunpack.c.l.b16 %v1767
        %v2145 = vunpack.c.l.b16 %v1777
        %v2146 = vunpack.c.l.b16 %v1791
        %v2147 = vunpack.c.l.b16 %v1801
        %v2148 = vunpack.c.l.b16 %v1815
        %v2149 = vunpack.c.l.b16 %v1825
        %v2150 = vunpack.c.l.b16 %v1839
        %v2151 = vunpack.c.l.b16 %v1849
        %v2152 = vunpack.c.l.b16 %v1863
        %v2153 = vunpack.c.l.b16 %v1873
        %v2154 = vunpack.c.l.b16 %v1887
        %v2155 = vunpack.c.l.b16 %v1897
        %v2156 = vunpack.c.l.b16 %v1911
        %v2157 = vunpack.c.l.b16 %v1921
        %v2158 = vunpack.c.l.b16 %v1935
        %v2159 = vunpack.c.l.b16 %v1945
        %v2160 = vunpack.c.l.b16 %v1959
        %v2161 = vunpack.c.l.b16 %v1969
        %v2162 = vunpack.c.l.b16 %v1983
        %v2163 = vunpack.c.l.b16 %v1993
        %v2164 = vunpack.c.l.b16 %v2007
        %v2165 = vunpack.c.l.b16 %v2017
        %v2166 = vunpack.c.l.b16 %v2031
        %v2167 = vunpack.c.l.b16 %v2041
        %v2168 = vunpack.c.l.b16 %v2055
        %v2169 = vunpack.c.l.b16 %v2065
        %v2170 = vunpack.c.l.b16 %v2079
        %v2171 = vunpack.c.l.b16 %v2089
        %v2172 = vpack.c.b16 %v2141, %v2140
        %v2173 = vpack.c.b16 %v2143, %v2142
        %v2174 = vpack.c.b16 %v2145, %v2144
        %v2175 = vpack.c.b16 %v2147, %v2146
        %v2176 = vpack.c.b16 %v2149, %v2148
        %v2177 = vpack.c.b16 %v2151, %v2150
        %v2178 = vpack.c.b16 %v2153, %v2152
        %v2179 = vpack.c.b16 %v2155, %v2154
        %v2180 = vpack.c.b16 %v2157, %v2156
        %v2181 = vpack.c.b16 %v2159, %v2158
        %v2182 = vpack.c.b16 %v2161, %v2160
        %v2183 = vpack.c.b16 %v2163, %v2162
        %v2184 = vpack.c.b16 %v2165, %v2164
        %v2185 = vpack.c.b16 %v2167, %v2166
        %v2186 = vpack.c.b16 %v2169, %v2168
        %v2187 = vpack.c.b16 %v2171, %v2170
        %v2189 = vsel %vm1057, %v2172, 0
        %v2192 = vsel %vm1057, %v2173, 0
        %v2195 = vsel %vm1057, %v2174, 0
        %v2198 = vsel %vm1057, %v2175, 0
        %v2201 = vsel %vm1057, %v2176, 0
        %v2204 = vsel %vm1057, %v2177, 0
        %v2207 = vsel %vm1057, %v2178, 0
        %v2210 = vsel %vm1057, %v2179, 0
        %v2213 = vsel %vm1057, %v2180, 0
        %v2216 = vsel %vm1057, %v2181, 0
        %v2219 = vsel %vm1057, %v2182, 0
        %v2222 = vsel %vm1057, %v2183, 0
        %v2225 = vsel %vm1057, %v2184, 0
        %v2228 = vsel %vm1057, %v2185, 0
        %v2231 = vsel %vm1057, %v2186, 0
        %v2234 = vsel %vm1057, %v2187, 0
        %v2237 = vsel %vm1106, %v2139, 0
        %2239 = vmatprep.subr.bf16.mxu0 0
        %2240 = vmatpush1.bf16.msra.mxu0 %v2237
        %2241 = vmatprep.subr.bf16.mxu0 0
        %2242 = vmatpush1.bf16.msra.mxu0 0
        %2243 = vmatprep.subr.bf16.mxu0 0
        %2244 = vmatpush1.bf16.msra.mxu0 0
        %2245 = vmatprep.subr.bf16.mxu0 0
        %2246 = vmatpush1.bf16.msra.mxu0 0
        %2247 = vmatprep.subr.bf16.mxu0 0
        %2248 = vmatpush1.bf16.msra.mxu0 0
        %2249 = vmatprep.subr.bf16.mxu0 0
        %2250 = vmatpush1.bf16.msra.mxu0 0
        %2251 = vmatprep.subr.bf16.mxu0 0
        %2252 = vmatpush1.bf16.msra.mxu0 0
        %2253 = vmatprep.subr.bf16.mxu0 0
        %2254 = vmatpush1.bf16.msra.mxu0 0
        %2255 = vmatprep.subr.bf16.mxu0 0
        %2256 = vmatpush1.bf16.msra.mxu0 0
        %2257 = vmatprep.subr.bf16.mxu0 0
        %2258 = vmatpush1.bf16.msra.mxu0 0
        %2259 = vmatprep.subr.bf16.mxu0 0
        %2260 = vmatpush1.bf16.msra.mxu0 0
        %2261 = vmatprep.subr.bf16.mxu0 0
        %2262 = vmatpush1.bf16.msra.mxu0 0
        %2263 = vmatprep.subr.bf16.mxu0 0
        %2264 = vmatpush1.bf16.msra.mxu0 0
        %2265 = vmatprep.subr.bf16.mxu0 0
        %2266 = vmatpush1.bf16.msra.mxu0 0
        %2267 = vmatprep.subr.bf16.mxu0 0
        %2268 = vmatpush1.bf16.msra.mxu0 0
        %2269 = vmatprep.subr.bf16.mxu0 0
        %2270 = vmatpush1.bf16.msra.mxu0 0
        %2271 = vmatprep.mubr.bf16.mxu0 0
        %2272 = vmatmul.mubr.bf16.gmra.mrb[0].mxu0 %v2189
        %v2273 = vpop.f32.mrb[0].mxu0
        %v2274 = vadd.f32 0.0, %v2273
        %v2275 = vpop.f32.mrb[0].mxu0
        %v2276 = vpop.f32.mrb[0].mxu0
        %v2277 = vadd.f32 0.0, %v2276
        %v2278 = vpop.f32.mrb[0].mxu0
        %2279 = vmatprep.mubr.bf16.mxu0 0
        %2280 = vmatmul.mubr.bf16.gmra.mrb[0].mxu0 %v2192
        %v2281 = vpop.f32.mrb[0].mxu0
        %v2282 = vadd.f32 0.0, %v2281
        %v2283 = vpop.f32.mrb[0].mxu0
        %v2284 = vpop.f32.mrb[0].mxu0
        %v2285 = vadd.f32 0.0, %v2284
        %v2286 = vpop.f32.mrb[0].mxu0
        %2287 = vmatprep.mubr.bf16.mxu0 0
        %2288 = vmatmul.mubr.bf16.gmra.mrb[0].mxu0 %v2195
        %v2289 = vpop.f32.mrb[0].mxu0
        %v2290 = vadd.f32 0.0, %v2289
        %v2291 = vpop.f32.mrb[0].mxu0
        %v2292 = vpop.f32.mrb[0].mxu0
        %v2293 = vadd.f32 0.0, %v2292
        %v2294 = vpop.f32.mrb[0].mxu0
        %2295 = vmatprep.mubr.bf16.mxu0 0
        %2296 = vmatmul.mubr.bf16.gmra.mrb[0].mxu0 %v2198
        %v2297 = vpop.f32.mrb[0].mxu0
        %v2298 = vadd.f32 0.0, %v2297
        %v2299 = vpop.f32.mrb[0].mxu0
        %v2300 = vpop.f32.mrb[0].mxu0
        %v2301 = vadd.f32 0.0, %v2300
        %v2302 = vpop.f32.mrb[0].mxu0
        %2303 = vmatprep.mubr.bf16.mxu0 0
        %2304 = vmatmul.mubr.bf16.gmra.mrb[0].mxu0 %v2201
        %v2305 = vpop.f32.mrb[0].mxu0
        %v2306 = vadd.f32 0.0, %v2305
        %v2307 = vpop.f32.mrb[0].mxu0
        %v2308 = vpop.f32.mrb[0].mxu0
        %v2309 = vadd.f32 0.0, %v2308
        %v2310 = vpop.f32.mrb[0].mxu0
        %2311 = vmatprep.mubr.bf16.mxu0 0
        %2312 = vmatmul.mubr.bf16.gmra.mrb[0].mxu0 %v2204
        %v2313 = vpop.f32.mrb[0].mxu0
        %v2314 = vadd.f32 0.0, %v2313
        %v2315 = vpop.f32.mrb[0].mxu0
        %v2316 = vpop.f32.mrb[0].mxu0
        %v2317 = vadd.f32 0.0, %v2316
        %v2318 = vpop.f32.mrb[0].mxu0
        %2319 = vmatprep.mubr.bf16.mxu0 0
        %2320 = vmatmul.mubr.bf16.gmra.mrb[0].mxu0 %v2207
        %v2321 = vpop.f32.mrb[0].mxu0
        %v2322 = vadd.f32 0.0, %v2321
        %v2323 = vpop.f32.mrb[0].mxu0
        %v2324 = vpop.f32.mrb[0].mxu0
        %v2325 = vadd.f32 0.0, %v2324
        %v2326 = vpop.f32.mrb[0].mxu0
        %2327 = vmatprep.mubr.bf16.mxu0 0
        %2328 = vmatmul.mubr.bf16.gmra.mrb[0].mxu0 %v2210
        %v2329 = vpop.f32.mrb[0].mxu0
        %v2330 = vadd.f32 0.0, %v2329
        %v2331 = vpop.f32.mrb[0].mxu0
        %v2332 = vpop.f32.mrb[0].mxu0
        %v2333 = vadd.f32 0.0, %v2332
        %v2334 = vpop.f32.mrb[0].mxu0
        %2335 = vmatprep.mubr.bf16.mxu0 0
        %2336 = vmatmul.mubr.bf16.gmra.mrb[0].mxu0 %v2213
        %v2337 = vpop.f32.mrb[0].mxu0
        %v2338 = vadd.f32 0.0, %v2337
        %v2339 = vpop.f32.mrb[0].mxu0
        %v2340 = vpop.f32.mrb[0].mxu0
        %v2341 = vadd.f32 0.0, %v2340
        %v2342 = vpop.f32.mrb[0].mxu0
        %2343 = vmatprep.mubr.bf16.mxu0 0
        %2344 = vmatmul.mubr.bf16.gmra.mrb[0].mxu0 %v2216
        %v2345 = vpop.f32.mrb[0].mxu0
        %v2346 = vadd.f32 0.0, %v2345
        %v2347 = vpop.f32.mrb[0].mxu0
        %v2348 = vpop.f32.mrb[0].mxu0
        %v2349 = vadd.f32 0.0, %v2348
        %v2350 = vpop.f32.mrb[0].mxu0
        %2351 = vmatprep.mubr.bf16.mxu0 0
        %2352 = vmatmul.mubr.bf16.gmra.mrb[0].mxu0 %v2219
        %v2353 = vpop.f32.mrb[0].mxu0
        %v2354 = vadd.f32 0.0, %v2353
        %v2355 = vpop.f32.mrb[0].mxu0
        %v2356 = vpop.f32.mrb[0].mxu0
        %v2357 = vadd.f32 0.0, %v2356
        %v2358 = vpop.f32.mrb[0].mxu0
        %2359 = vmatprep.mubr.bf16.mxu0 0
        %2360 = vmatmul.mubr.bf16.gmra.mrb[0].mxu0 %v2222
        %v2361 = vpop.f32.mrb[0].mxu0
        %v2362 = vadd.f32 0.0, %v2361
        %v2363 = vpop.f32.mrb[0].mxu0
        %v2364 = vpop.f32.mrb[0].mxu0
        %v2365 = vadd.f32 0.0, %v2364
        %v2366 = vpop.f32.mrb[0].mxu0
        %2367 = vmatprep.mubr.bf16.mxu0 0
        %2368 = vmatmul.mubr.bf16.gmra.mrb[0].mxu0 %v2225
        %v2369 = vpop.f32.mrb[0].mxu0
        %v2370 = vadd.f32 0.0, %v2369
        %v2371 = vpop.f32.mrb[0].mxu0
        %v2372 = vpop.f32.mrb[0].mxu0
        %v2373 = vadd.f32 0.0, %v2372
        %v2374 = vpop.f32.mrb[0].mxu0
        %2375 = vmatprep.mubr.bf16.mxu0 0
        %2376 = vmatmul.mubr.bf16.gmra.mrb[0].mxu0 %v2228
        %v2377 = vpop.f32.mrb[0].mxu0
        %v2378 = vadd.f32 0.0, %v2377
        %v2379 = vpop.f32.mrb[0].mxu0
        %v2380 = vpop.f32.mrb[0].mxu0
        %v2381 = vadd.f32 0.0, %v2380
        %v2382 = vpop.f32.mrb[0].mxu0
        %2383 = vmatprep.mubr.bf16.mxu0 0
        %2384 = vmatmul.mubr.bf16.gmra.mrb[0].mxu0 %v2231
        %v2385 = vpop.f32.mrb[0].mxu0
        %v2386 = vadd.f32 0.0, %v2385
        %v2387 = vpop.f32.mrb[0].mxu0
        %v2388 = vpop.f32.mrb[0].mxu0
        %v2389 = vadd.f32 0.0, %v2388
        %v2390 = vpop.f32.mrb[0].mxu0
        %2391 = vmatprep.mubr.bf16.mxu0 0
        %2392 = vmatmul.mubr.bf16.gmra.mrb[0].mxu0 %v2234
        %v2393 = vpop.f32.mrb[0].mxu0
        %v2394 = vadd.f32 0.0, %v2393
        %v2395 = vpop.f32.mrb[0].mxu0
        %v2396 = vpop.f32.mrb[0].mxu0
        %v2397 = vadd.f32 0.0, %v2396
        %v2398 = vpop.f32.mrb[0].mxu0
        %2399 = vdwg.mxu0
        %v2400 = vadd.f32 %v1617, %v2274
        %v2401 = vadd.f32 %v1618, %v2277
        %v2402 = vadd.f32 %v1619, %v2282
        %v2403 = vadd.f32 %v1620, %v2285
        %v2404 = vadd.f32 %v1621, %v2290
        %v2405 = vadd.f32 %v1622, %v2293
        %v2406 = vadd.f32 %v1623, %v2298
        %v2407 = vadd.f32 %v1624, %v2301
        %v2408 = vadd.f32 %v1625, %v2306
        %v2409 = vadd.f32 %v1626, %v2309
        %v2410 = vadd.f32 %v1627, %v2314
        %v2411 = vadd.f32 %v1628, %v2317
        %v2412 = vadd.f32 %v1629, %v2322
        %v2413 = vadd.f32 %v1630, %v2325
        %v2414 = vadd.f32 %v1631, %v2330
        %v2415 = vadd.f32 %v1632, %v2333
        %v2416 = vadd.f32 %v1633, %v2338
        %v2417 = vadd.f32 %v1634, %v2341
        %v2418 = vadd.f32 %v1635, %v2346
        %v2419 = vadd.f32 %v1636, %v2349
        %v2420 = vadd.f32 %v1637, %v2354
        %v2421 = vadd.f32 %v1638, %v2357
        %v2422 = vadd.f32 %v1639, %v2362
        %v2423 = vadd.f32 %v1640, %v2365
        %v2424 = vadd.f32 %v1641, %v2370
        %v2425 = vadd.f32 %v1642, %v2373
        %v2426 = vadd.f32 %v1643, %v2378
        %v2427 = vadd.f32 %v1644, %v2381
        %v2428 = vadd.f32 %v1645, %v2386
        %v2429 = vadd.f32 %v1646, %v2389
        %v2430 = vadd.f32 %v1647, %v2394
        %v2431 = vadd.f32 %v1648, %v2397
        %s2432 = scalar_lea.vmem %s1, 8
        %v2433 = vld [vmem:[%s2432] sm:$0x3]
        %v2434 = vunpack.c.l.b16 %v2103
        %v2435 = vunpack.c.l.b16 %v2113
        %v2436 = vpack.c.b16 %v2435, %v2434
        %v2438 = vsel %vm1057, %v2436, 0
        %v2441 = vsel %vm1106, %v2433, 0
        %2443 = vmatprep.subr.bf16.mxu0 0
        %2444 = vmatpush1.bf16.msra.mxu0 %v2441
        %2445 = vmatprep.subr.bf16.mxu0 0
        %2446 = vmatpush1.bf16.msra.mxu0 0
        %2447 = vmatprep.subr.bf16.mxu0 0
        %2448 = vmatpush1.bf16.msra.mxu0 0
        %2449 = vmatprep.subr.bf16.mxu0 0
        %2450 = vmatpush1.bf16.msra.mxu0 0
        %2451 = vmatprep.subr.bf16.mxu0 0
        %2452 = vmatpush1.bf16.msra.mxu0 0
        %2453 = vmatprep.subr.bf16.mxu0 0
        %2454 = vmatpush1.bf16.msra.mxu0 0
        %2455 = vmatprep.subr.bf16.mxu0 0
        %2456 = vmatpush1.bf16.msra.mxu0 0
        %2457 = vmatprep.subr.bf16.mxu0 0
        %2458 = vmatpush1.bf16.msra.mxu0 0
        %2459 = vmatprep.subr.bf16.mxu0 0
        %2460 = vmatpush1.bf16.msra.mxu0 0
        %2461 = vmatprep.subr.bf16.mxu0 0
        %2462 = vmatpush1.bf16.msra.mxu0 0
        %2463 = vmatprep.subr.bf16.mxu0 0
        %2464 = vmatpush1.bf16.msra.mxu0 0
        %2465 = vmatprep.subr.bf16.mxu0 0
        %2466 = vmatpush1.bf16.msra.mxu0 0
        %2467 = vmatprep.subr.bf16.mxu0 0
        %2468 = vmatpush1.bf16.msra.mxu0 0
        %2469 = vmatprep.subr.bf16.mxu0 0
        %2470 = vmatpush1.bf16.msra.mxu0 0
        %2471 = vmatprep.subr.bf16.mxu0 0
        %2472 = vmatpush1.bf16.msra.mxu0 0
        %2473 = vmatprep.subr.bf16.mxu0 0
        %2474 = vmatpush1.bf16.msra.mxu0 0
        %2475 = vmatprep.mubr.bf16.mxu0 0
        %2476 = vmatmul.mubr.bf16.gmra.mrb[0].mxu0 %v2192
        %v2477 = vpop.f32.mrb[0].mxu0
        %v2478 = vadd.f32 0.0, %v2477
        %v2479 = vpop.f32.mrb[0].mxu0
        %v2480 = vpop.f32.mrb[0].mxu0
        %v2481 = vadd.f32 0.0, %v2480
        %v2482 = vpop.f32.mrb[0].mxu0
        %2483 = vmatprep.mubr.bf16.mxu0 0
        %2484 = vmatmul.mubr.bf16.gmra.mrb[0].mxu0 %v2195
        %v2485 = vpop.f32.mrb[0].mxu0
        %v2486 = vadd.f32 0.0, %v2485
        %v2487 = vpop.f32.mrb[0].mxu0
        %v2488 = vpop.f32.mrb[0].mxu0
        %v2489 = vadd.f32 0.0, %v2488
        %v2490 = vpop.f32.mrb[0].mxu0
        %2491 = vmatprep.mubr.bf16.mxu0 0
        %2492 = vmatmul.mubr.bf16.gmra.mrb[0].mxu0 %v2198
        %v2493 = vpop.f32.mrb[0].mxu0
        %v2494 = vadd.f32 0.0, %v2493
        %v2495 = vpop.f32.mrb[0].mxu0
        %v2496 = vpop.f32.mrb[0].mxu0
        %v2497 = vadd.f32 0.0, %v2496
        %v2498 = vpop.f32.mrb[0].mxu0
        %2499 = vmatprep.mubr.bf16.mxu0 0
        %2500 = vmatmul.mubr.bf16.gmra.mrb[0].mxu0 %v2201
        %v2501 = vpop.f32.mrb[0].mxu0
        %v2502 = vadd.f32 0.0, %v2501
        %v2503 = vpop.f32.mrb[0].mxu0
        %v2504 = vpop.f32.mrb[0].mxu0
        %v2505 = vadd.f32 0.0, %v2504
        %v2506 = vpop.f32.mrb[0].mxu0
        %2507 = vmatprep.mubr.bf16.mxu0 0
        %2508 = vmatmul.mubr.bf16.gmra.mrb[0].mxu0 %v2204
        %v2509 = vpop.f32.mrb[0].mxu0
        %v2510 = vadd.f32 0.0, %v2509
        %v2511 = vpop.f32.mrb[0].mxu0
        %v2512 = vpop.f32.mrb[0].mxu0
        %v2513 = vadd.f32 0.0, %v2512
        %v2514 = vpop.f32.mrb[0].mxu0
        %2515 = vmatprep.mubr.bf16.mxu0 0
        %2516 = vmatmul.mubr.bf16.gmra.mrb[0].mxu0 %v2207
        %v2517 = vpop.f32.mrb[0].mxu0
        %v2518 = vadd.f32 0.0, %v2517
        %v2519 = vpop.f32.mrb[0].mxu0
        %v2520 = vpop.f32.mrb[0].mxu0
        %v2521 = vadd.f32 0.0, %v2520
        %v2522 = vpop.f32.mrb[0].mxu0
        %2523 = vmatprep.mubr.bf16.mxu0 0
        %2524 = vmatmul.mubr.bf16.gmra.mrb[0].mxu0 %v2210
        %v2525 = vpop.f32.mrb[0].mxu0
        %v2526 = vadd.f32 0.0, %v2525
        %v2527 = vpop.f32.mrb[0].mxu0
        %v2528 = vpop.f32.mrb[0].mxu0
        %v2529 = vadd.f32 0.0, %v2528
        %v2530 = vpop.f32.mrb[0].mxu0
        %2531 = vmatprep.mubr.bf16.mxu0 0
        %2532 = vmatmul.mubr.bf16.gmra.mrb[0].mxu0 %v2213
        %v2533 = vpop.f32.mrb[0].mxu0
        %v2534 = vadd.f32 0.0, %v2533
        %v2535 = vpop.f32.mrb[0].mxu0
        %v2536 = vpop.f32.mrb[0].mxu0
        %v2537 = vadd.f32 0.0, %v2536
        %v2538 = vpop.f32.mrb[0].mxu0
        %2539 = vmatprep.mubr.bf16.mxu0 0
        %2540 = vmatmul.mubr.bf16.gmra.mrb[0].mxu0 %v2216
        %v2541 = vpop.f32.mrb[0].mxu0
        %v2542 = vadd.f32 0.0, %v2541
        %v2543 = vpop.f32.mrb[0].mxu0
        %v2544 = vpop.f32.mrb[0].mxu0
        %v2545 = vadd.f32 0.0, %v2544
        %v2546 = vpop.f32.mrb[0].mxu0
        %2547 = vmatprep.mubr.bf16.mxu0 0
        %2548 = vmatmul.mubr.bf16.gmra.mrb[0].mxu0 %v2219
        %v2549 = vpop.f32.mrb[0].mxu0
        %v2550 = vadd.f32 0.0, %v2549
        %v2551 = vpop.f32.mrb[0].mxu0
        %v2552 = vpop.f32.mrb[0].mxu0
        %v2553 = vadd.f32 0.0, %v2552
        %v2554 = vpop.f32.mrb[0].mxu0
        %2555 = vmatprep.mubr.bf16.mxu0 0
        %2556 = vmatmul.mubr.bf16.gmra.mrb[0].mxu0 %v2222
        %v2557 = vpop.f32.mrb[0].mxu0
        %v2558 = vadd.f32 0.0, %v2557
        %v2559 = vpop.f32.mrb[0].mxu0
        %v2560 = vpop.f32.mrb[0].mxu0
        %v2561 = vadd.f32 0.0, %v2560
        %v2562 = vpop.f32.mrb[0].mxu0
        %2563 = vmatprep.mubr.bf16.mxu0 0
        %2564 = vmatmul.mubr.bf16.gmra.mrb[0].mxu0 %v2225
        %v2565 = vpop.f32.mrb[0].mxu0
        %v2566 = vadd.f32 0.0, %v2565
        %v2567 = vpop.f32.mrb[0].mxu0
        %v2568 = vpop.f32.mrb[0].mxu0
        %v2569 = vadd.f32 0.0, %v2568
        %v2570 = vpop.f32.mrb[0].mxu0
        %2571 = vmatprep.mubr.bf16.mxu0 0
        %2572 = vmatmul.mubr.bf16.gmra.mrb[0].mxu0 %v2228
        %v2573 = vpop.f32.mrb[0].mxu0
        %v2574 = vadd.f32 0.0, %v2573
        %v2575 = vpop.f32.mrb[0].mxu0
        %v2576 = vpop.f32.mrb[0].mxu0
        %v2577 = vadd.f32 0.0, %v2576
        %v2578 = vpop.f32.mrb[0].mxu0
        %2579 = vmatprep.mubr.bf16.mxu0 0
        %2580 = vmatmul.mubr.bf16.gmra.mrb[0].mxu0 %v2231
        %v2581 = vpop.f32.mrb[0].mxu0
        %v2582 = vadd.f32 0.0, %v2581
        %v2583 = vpop.f32.mrb[0].mxu0
        %v2584 = vpop.f32.mrb[0].mxu0
        %v2585 = vadd.f32 0.0, %v2584
        %v2586 = vpop.f32.mrb[0].mxu0
        %2587 = vmatprep.mubr.bf16.mxu0 0
        %2588 = vmatmul.mubr.bf16.gmra.mrb[0].mxu0 %v2234
        %v2589 = vpop.f32.mrb[0].mxu0
        %v2590 = vadd.f32 0.0, %v2589
        %v2591 = vpop.f32.mrb[0].mxu0
        %v2592 = vpop.f32.mrb[0].mxu0
        %v2593 = vadd.f32 0.0, %v2592
        %v2594 = vpop.f32.mrb[0].mxu0
        %2595 = vmatprep.mubr.bf16.mxu0 0
        %2596 = vmatmul.mubr.bf16.gmra.mrb[0].mxu0 %v2438
        %v2597 = vpop.f32.mrb[0].mxu0
        %v2598 = vadd.f32 0.0, %v2597
        %v2599 = vpop.f32.mrb[0].mxu0
        %v2600 = vpop.f32.mrb[0].mxu0
        %v2601 = vadd.f32 0.0, %v2600
        %v2602 = vpop.f32.mrb[0].mxu0
        %2603 = vdwg.mxu0
        %v2604 = vadd.f32 %v2400, %v2478
        %v2605 = vadd.f32 %v2401, %v2481
        %v2606 = vadd.f32 %v2402, %v2486
        %v2607 = vadd.f32 %v2403, %v2489
        %v2608 = vadd.f32 %v2404, %v2494
        %v2609 = vadd.f32 %v2405, %v2497
        %v2610 = vadd.f32 %v2406, %v2502
        %v2611 = vadd.f32 %v2407, %v2505
        %v2612 = vadd.f32 %v2408, %v2510
        %v2613 = vadd.f32 %v2409, %v2513
        %v2614 = vadd.f32 %v2410, %v2518
        %v2615 = vadd.f32 %v2411, %v2521
        %v2616 = vadd.f32 %v2412, %v2526
        %v2617 = vadd.f32 %v2413, %v2529
        %v2618 = vadd.f32 %v2414, %v2534
        %v2619 = vadd.f32 %v2415, %v2537
        %v2620 = vadd.f32 %v2416, %v2542
        %v2621 = vadd.f32 %v2417, %v2545
        %v2622 = vadd.f32 %v2418, %v2550
        %v2623 = vadd.f32 %v2419, %v2553
        %v2624 = vadd.f32 %v2420, %v2558
        %v2625 = vadd.f32 %v2421, %v2561
        %v2626 = vadd.f32 %v2422, %v2566
        %v2627 = vadd.f32 %v2423, %v2569
        %v2628 = vadd.f32 %v2424, %v2574
        %v2629 = vadd.f32 %v2425, %v2577
        %v2630 = vadd.f32 %v2426, %v2582
        %v2631 = vadd.f32 %v2427, %v2585
        %v2632 = vadd.f32 %v2428, %v2590
        %v2633 = vadd.f32 %v2429, %v2593
        %v2634 = vadd.f32 %v2430, %v2598
        %v2635 = vadd.f32 %v2431, %v2601
        %s2636 = scalar_lea.vmem %s1, 14
        %v2637 = vld [vmem:[%s2636] sm:$0x3]
        %v2638 = vunpack.c.l.b16 %v2127
        %v2639 = vunpack.c.l.b16 %v2137
        %v2640 = vpack.c.b16 %v2639, %v2638
        %v2642 = vsel %vm1057, %v2640, 0
        %v2645 = vsel %vm1106, %v2637, 0
        %2647 = vmatprep.subr.bf16.mxu0 0
        %2648 = vmatpush1.bf16.msra.mxu0 %v2645
        %2649 = vmatprep.subr.bf16.mxu0 0
        %2650 = vmatpush1.bf16.msra.mxu0 0
        %2651 = vmatprep.subr.bf16.mxu0 0
        %2652 = vmatpush1.bf16.msra.mxu0 0
        %2653 = vmatprep.subr.bf16.mxu0 0
        %2654 = vmatpush1.bf16.msra.mxu0 0
        %2655 = vmatprep.subr.bf16.mxu0 0
        %2656 = vmatpush1.bf16.msra.mxu0 0
        %2657 = vmatprep.subr.bf16.mxu0 0
        %2658 = vmatpush1.bf16.msra.mxu0 0
        %2659 = vmatprep.subr.bf16.mxu0 0
        %2660 = vmatpush1.bf16.msra.mxu0 0
        %2661 = vmatprep.subr.bf16.mxu0 0
        %2662 = vmatpush1.bf16.msra.mxu0 0
        %2663 = vmatprep.subr.bf16.mxu0 0
        %2664 = vmatpush1.bf16.msra.mxu0 0
        %2665 = vmatprep.subr.bf16.mxu0 0
        %2666 = vmatpush1.bf16.msra.mxu0 0
        %2667 = vmatprep.subr.bf16.mxu0 0
        %2668 = vmatpush1.bf16.msra.mxu0 0
        %2669 = vmatprep.subr.bf16.mxu0 0
        %2670 = vmatpush1.bf16.msra.mxu0 0
        %2671 = vmatprep.subr.bf16.mxu0 0
        %2672 = vmatpush1.bf16.msra.mxu0 0
        %2673 = vmatprep.subr.bf16.mxu0 0
        %2674 = vmatpush1.bf16.msra.mxu0 0
        %2675 = vmatprep.subr.bf16.mxu0 0
        %2676 = vmatpush1.bf16.msra.mxu0 0
        %2677 = vmatprep.subr.bf16.mxu0 0
        %2678 = vmatpush1.bf16.msra.mxu0 0
        %2679 = vmatprep.mubr.bf16.mxu0 0
        %2680 = vmatmul.mubr.bf16.gmra.mrb[0].mxu0 %v2195
        %v2681 = vpop.f32.mrb[0].mxu0
        %v2682 = vadd.f32 0.0, %v2681
        %v2683 = vpop.f32.mrb[0].mxu0
        %v2684 = vpop.f32.mrb[0].mxu0
        %v2685 = vadd.f32 0.0, %v2684
        %v2686 = vpop.f32.mrb[0].mxu0
        %2687 = vmatprep.mubr.bf16.mxu0 0
        %2688 = vmatmul.mubr.bf16.gmra.mrb[0].mxu0 %v2198
        %v2689 = vpop.f32.mrb[0].mxu0
        %v2690 = vadd.f32 0.0, %v2689
        %v2691 = vpop.f32.mrb[0].mxu0
        %v2692 = vpop.f32.mrb[0].mxu0
        %v2693 = vadd.f32 0.0, %v2692
        %v2694 = vpop.f32.mrb[0].mxu0
        %2695 = vmatprep.mubr.bf16.mxu0 0
        %2696 = vmatmul.mubr.bf16.gmra.mrb[0].mxu0 %v2201
        %v2697 = vpop.f32.mrb[0].mxu0
        %v2698 = vadd.f32 0.0, %v2697
        %v2699 = vpop.f32.mrb[0].mxu0
        %v2700 = vpop.f32.mrb[0].mxu0
        %v2701 = vadd.f32 0.0, %v2700
        %v2702 = vpop.f32.mrb[0].mxu0
        %2703 = vmatprep.mubr.bf16.mxu0 0
        %2704 = vmatmul.mubr.bf16.gmra.mrb[0].mxu0 %v2204
        %v2705 = vpop.f32.mrb[0].mxu0
        %v2706 = vadd.f32 0.0, %v2705
        %v2707 = vpop.f32.mrb[0].mxu0
        %v2708 = vpop.f32.mrb[0].mxu0
        %v2709 = vadd.f32 0.0, %v2708
        %v2710 = vpop.f32.mrb[0].mxu0
        %2711 = vmatprep.mubr.bf16.mxu0 0
        %2712 = vmatmul.mubr.bf16.gmra.mrb[0].mxu0 %v2207
        %v2713 = vpop.f32.mrb[0].mxu0
        %v2714 = vadd.f32 0.0, %v2713
        %v2715 = vpop.f32.mrb[0].mxu0
        %v2716 = vpop.f32.mrb[0].mxu0
        %v2717 = vadd.f32 0.0, %v2716
        %v2718 = vpop.f32.mrb[0].mxu0
        %2719 = vmatprep.mubr.bf16.mxu0 0
        %2720 = vmatmul.mubr.bf16.gmra.mrb[0].mxu0 %v2210
        %v2721 = vpop.f32.mrb[0].mxu0
        %v2722 = vadd.f32 0.0, %v2721
        %v2723 = vpop.f32.mrb[0].mxu0
        %v2724 = vpop.f32.mrb[0].mxu0
        %v2725 = vadd.f32 0.0, %v2724
        %v2726 = vpop.f32.mrb[0].mxu0
        %2727 = vmatprep.mubr.bf16.mxu0 0
        %2728 = vmatmul.mubr.bf16.gmra.mrb[0].mxu0 %v2213
        %v2729 = vpop.f32.mrb[0].mxu0
        %v2730 = vadd.f32 0.0, %v2729
        %v2731 = vpop.f32.mrb[0].mxu0
        %v2732 = vpop.f32.mrb[0].mxu0
        %v2733 = vadd.f32 0.0, %v2732
        %v2734 = vpop.f32.mrb[0].mxu0
        %2735 = vmatprep.mubr.bf16.mxu0 0
        %2736 = vmatmul.mubr.bf16.gmra.mrb[0].mxu0 %v2216
        %v2737 = vpop.f32.mrb[0].mxu0
        %v2738 = vadd.f32 0.0, %v2737
        %v2739 = vpop.f32.mrb[0].mxu0
        %v2740 = vpop.f32.mrb[0].mxu0
        %v2741 = vadd.f32 0.0, %v2740
        %v2742 = vpop.f32.mrb[0].mxu0
        %2743 = vmatprep.mubr.bf16.mxu0 0
        %2744 = vmatmul.mubr.bf16.gmra.mrb[0].mxu0 %v2219
        %v2745 = vpop.f32.mrb[0].mxu0
        %v2746 = vadd.f32 0.0, %v2745
        %v2747 = vpop.f32.mrb[0].mxu0
        %v2748 = vpop.f32.mrb[0].mxu0
        %v2749 = vadd.f32 0.0, %v2748
        %v2750 = vpop.f32.mrb[0].mxu0
        %2751 = vmatprep.mubr.bf16.mxu0 0
        %2752 = vmatmul.mubr.bf16.gmra.mrb[0].mxu0 %v2222
        %v2753 = vpop.f32.mrb[0].mxu0
        %v2754 = vadd.f32 0.0, %v2753
        %v2755 = vpop.f32.mrb[0].mxu0
        %v2756 = vpop.f32.mrb[0].mxu0
        %v2757 = vadd.f32 0.0, %v2756
        %v2758 = vpop.f32.mrb[0].mxu0
        %2759 = vmatprep.mubr.bf16.mxu0 0
        %2760 = vmatmul.mubr.bf16.gmra.mrb[0].mxu0 %v2225
        %v2761 = vpop.f32.mrb[0].mxu0
        %v2762 = vadd.f32 0.0, %v2761
        %v2763 = vpop.f32.mrb[0].mxu0
        %v2764 = vpop.f32.mrb[0].mxu0
        %v2765 = vadd.f32 0.0, %v2764
        %v2766 = vpop.f32.mrb[0].mxu0
        %2767 = vmatprep.mubr.bf16.mxu0 0
        %2768 = vmatmul.mubr.bf16.gmra.mrb[0].mxu0 %v2228
        %v2769 = vpop.f32.mrb[0].mxu0
        %v2770 = vadd.f32 0.0, %v2769
        %v2771 = vpop.f32.mrb[0].mxu0
        %v2772 = vpop.f32.mrb[0].mxu0
        %v2773 = vadd.f32 0.0, %v2772
        %v2774 = vpop.f32.mrb[0].mxu0
        %2775 = vmatprep.mubr.bf16.mxu0 0
        %2776 = vmatmul.mubr.bf16.gmra.mrb[0].mxu0 %v2231
        %v2777 = vpop.f32.mrb[0].mxu0
        %v2778 = vadd.f32 0.0, %v2777
        %v2779 = vpop.f32.mrb[0].mxu0
        %v2780 = vpop.f32.mrb[0].mxu0
        %v2781 = vadd.f32 0.0, %v2780
        %v2782 = vpop.f32.mrb[0].mxu0
        %2783 = vmatprep.mubr.bf16.mxu0 0
        %2784 = vmatmul.mubr.bf16.gmra.mrb[0].mxu0 %v2234
        %v2785 = vpop.f32.mrb[0].mxu0
        %v2786 = vadd.f32 0.0, %v2785
        %v2787 = vpop.f32.mrb[0].mxu0
        %v2788 = vpop.f32.mrb[0].mxu0
        %v2789 = vadd.f32 0.0, %v2788
        %v2790 = vpop.f32.mrb[0].mxu0
        %2791 = vmatprep.mubr.bf16.mxu0 0
        %2792 = vmatmul.mubr.bf16.gmra.mrb[0].mxu0 %v2438
        %v2793 = vpop.f32.mrb[0].mxu0
        %v2794 = vadd.f32 0.0, %v2793
        %v2795 = vpop.f32.mrb[0].mxu0
        %v2796 = vpop.f32.mrb[0].mxu0
        %v2797 = vadd.f32 0.0, %v2796
        %v2798 = vpop.f32.mrb[0].mxu0
        %2799 = vmatprep.mubr.bf16.mxu0 0
        %2800 = vmatmul.mubr.bf16.gmra.mrb[0].mxu0 %v2642
        %v2801 = vpop.f32.mrb[0].mxu0
        %v2802 = vadd.f32 0.0, %v2801
        %v2803 = vpop.f32.mrb[0].mxu0
        %v2804 = vpop.f32.mrb[0].mxu0
        %v2805 = vadd.f32 0.0, %v2804
        %v2806 = vpop.f32.mrb[0].mxu0
        %2807 = vdwg.mxu0
        %v2808 = vadd.f32 %v2604, %v2682
        %v2809 = vadd.f32 %v2605, %v2685
        %v2810 = vadd.f32 %v2606, %v2690
        %v2811 = vadd.f32 %v2607, %v2693
        %v2812 = vadd.f32 %v2608, %v2698
        %v2813 = vadd.f32 %v2609, %v2701
        %v2814 = vadd.f32 %v2610, %v2706
        %v2815 = vadd.f32 %v2611, %v2709
        %v2816 = vadd.f32 %v2612, %v2714
        %v2817 = vadd.f32 %v2613, %v2717
        %v2818 = vadd.f32 %v2614, %v2722
        %v2819 = vadd.f32 %v2615, %v2725
        %v2820 = vadd.f32 %v2616, %v2730
        %v2821 = vadd.f32 %v2617, %v2733
        %v2822 = vadd.f32 %v2618, %v2738
        %v2823 = vadd.f32 %v2619, %v2741
        %v2824 = vadd.f32 %v2620, %v2746
        %v2825 = vadd.f32 %v2621, %v2749
        %v2826 = vadd.f32 %v2622, %v2754
        %v2827 = vadd.f32 %v2623, %v2757
        %v2828 = vadd.f32 %v2624, %v2762
        %v2829 = vadd.f32 %v2625, %v2765
        %v2830 = vadd.f32 %v2626, %v2770
        %v2831 = vadd.f32 %v2627, %v2773
        %v2832 = vadd.f32 %v2628, %v2778
        %v2833 = vadd.f32 %v2629, %v2781
        %v2834 = vadd.f32 %v2630, %v2786
        %v2835 = vadd.f32 %v2631, %v2789
        %v2836 = vadd.f32 %v2632, %v2794
        %v2837 = vadd.f32 %v2633, %v2797
        %v2838 = vadd.f32 %v2634, %v2802
        %v2839 = vadd.f32 %v2635, %v2805
        %v2840 = vld [vmem:[#allocation2] sm:$0xe]
        %v2841 = vld [vmem:[#allocation2 + $0xc] sm:$0xe]
        %v2842 = vld [vmem:[#allocation2 + $0x18] sm:$0xe]
        %v2843 = vld [vmem:[#allocation2 + $0x24] sm:$0xe]
        %v2844 = vld [vmem:[#allocation2 + $0x30] sm:$0xe]
        %v2845 = vld [vmem:[#allocation2 + $0x3c] sm:$0xe]
        %v2846 = vld [vmem:[#allocation2 + $0x48] sm:$0xe]
        %v2847 = vld [vmem:[#allocation2 + $0x54] sm:$0xe]
        %v2848 = vld [vmem:[#allocation2 + $0x60] sm:$0xe]
        %v2849 = vld [vmem:[#allocation2 + $0x6c] sm:$0xe]
        %v2850 = vld [vmem:[#allocation2 + $0x78] sm:$0xe]
        %v2851 = vld [vmem:[#allocation2 + $0x84] sm:$0xe]
        %v2852 = vld [vmem:[#allocation2 + $0x90] sm:$0xe]
        %v2853 = vld [vmem:[#allocation2 + $0x9c] sm:$0xe]
        %v2854 = vld [vmem:[#allocation2 + $0xa8] sm:$0xe]
        %v2855 = vld [vmem:[#allocation2 + $0xb4] sm:$0xe]
        %v2856 = vld [vmem:[#allocation2 + $0xc0] sm:$0xe]
        %v2857 = vld [vmem:[#allocation2 + $0xcc] sm:$0xe]
        %vm2912 = vcmask 1042432
        %vm2913 = vcmask 1046532
        %vm2914 = vmor %vm2912, %vm2913
        %v2915 = vrot.slane %v2840, 5
        %v2916 = vrot.slane %v2915, 4
        %v2917 = vrot.slane %v1650, 5
        %v2918 = vsel %vm2914, %v2916, %v2917
        %v2919 = vrot.slane %v2917, 4
        %v2920 = vrot.slane %v1651, 5
        %v2921 = vsel %vm2914, %v2919, %v2920
        %v2922 = vrot.slane %v2841, 5
        %v2923 = vrot.slane %v2922, 4
        %v2924 = vrot.slane %v1653, 5
        %v2925 = vsel %vm2914, %v2923, %v2924
        %v2926 = vrot.slane %v2924, 4
        %v2927 = vrot.slane %v1654, 5
        %v2928 = vsel %vm2914, %v2926, %v2927
        %v2929 = vrot.slane %v2842, 5
        %v2930 = vrot.slane %v2929, 4
        %v2931 = vrot.slane %v1656, 5
        %v2932 = vsel %vm2914, %v2930, %v2931
        %v2933 = vrot.slane %v2931, 4
        %v2934 = vrot.slane %v1657, 5
        %v2935 = vsel %vm2914, %v2933, %v2934
        %v2936 = vrot.slane %v2843, 5
        %v2937 = vrot.slane %v2936, 4
        %v2938 = vrot.slane %v1659, 5
        %v2939 = vsel %vm2914, %v2937, %v2938
        %v2940 = vrot.slane %v2938, 4
        %v2941 = vrot.slane %v1660, 5
        %v2942 = vsel %vm2914, %v2940, %v2941
        %v2943 = vrot.slane %v2844, 5
        %v2944 = vrot.slane %v2943, 4
        %v2945 = vrot.slane %v1662, 5
        %v2946 = vsel %vm2914, %v2944, %v2945
        %v2947 = vrot.slane %v2945, 4
        %v2948 = vrot.slane %v1663, 5
        %v2949 = vsel %vm2914, %v2947, %v2948
        %v2950 = vrot.slane %v2845, 5
        %v2951 = vrot.slane %v2950, 4
        %v2952 = vrot.slane %v1665, 5
        %v2953 = vsel %vm2914, %v2951, %v2952
        %v2954 = vrot.slane %v2952, 4
        %v2955 = vrot.slane %v1666, 5
        %v2956 = vsel %vm2914, %v2954, %v2955
        %v2957 = vrot.slane %v2846, 5
        %v2958 = vrot.slane %v2957, 4
        %v2959 = vrot.slane %v1668, 5
        %v2960 = vsel %vm2914, %v2958, %v2959
        %v2961 = vrot.slane %v2959, 4
        %v2962 = vrot.slane %v1669, 5
        %v2963 = vsel %vm2914, %v2961, %v2962
        %v2964 = vrot.slane %v2847, 5
        %v2965 = vrot.slane %v2964, 4
        %v2966 = vrot.slane %v1671, 5
        %v2967 = vsel %vm2914, %v2965, %v2966
        %v2968 = vrot.slane %v2966, 4
        %v2969 = vrot.slane %v1672, 5
        %v2970 = vsel %vm2914, %v2968, %v2969
        %v2971 = vrot.slane %v2848, 5
        %v2972 = vrot.slane %v2971, 4
        %v2973 = vrot.slane %v1674, 5
        %v2974 = vsel %vm2914, %v2972, %v2973
        %v2975 = vrot.slane %v2973, 4
        %v2976 = vrot.slane %v1675, 5
        %v2977 = vsel %vm2914, %v2975, %v2976
        %v2978 = vrot.slane %v2849, 5
        %v2979 = vrot.slane %v2978, 4
        %v2980 = vrot.slane %v1677, 5
        %v2981 = vsel %vm2914, %v2979, %v2980
        %v2982 = vrot.slane %v2980, 4
        %v2983 = vrot.slane %v1678, 5
        %v2984 = vsel %vm2914, %v2982, %v2983
        %v2985 = vrot.slane %v2850, 5
        %v2986 = vrot.slane %v2985, 4
        %v2987 = vrot.slane %v1680, 5
        %v2988 = vsel %vm2914, %v2986, %v2987
        %v2989 = vrot.slane %v2987, 4
        %v2990 = vrot.slane %v1681, 5
        %v2991 = vsel %vm2914, %v2989, %v2990
        %v2992 = vrot.slane %v2851, 5
        %v2993 = vrot.slane %v2992, 4
        %v2994 = vrot.slane %v1683, 5
        %v2995 = vsel %vm2914, %v2993, %v2994
        %v2996 = vrot.slane %v2994, 4
        %v2997 = vrot.slane %v1684, 5
        %v2998 = vsel %vm2914, %v2996, %v2997
        %v2999 = vrot.slane %v2852, 5
        %v3000 = vrot.slane %v2999, 4
        %v3001 = vrot.slane %v1686, 5
        %v3002 = vsel %vm2914, %v3000, %v3001
        %v3003 = vrot.slane %v3001, 4
        %v3004 = vrot.slane %v1687, 5
        %v3005 = vsel %vm2914, %v3003, %v3004
        %v3006 = vrot.slane %v2853, 5
        %v3007 = vrot.slane %v3006, 4
        %v3008 = vrot.slane %v1689, 5
        %v3009 = vsel %vm2914, %v3007, %v3008
        %v3010 = vrot.slane %v3008, 4
        %v3011 = vrot.slane %v1690, 5
        %v3012 = vsel %vm2914, %v3010, %v3011
        %v3013 = vrot.slane %v2854, 5
        %v3014 = vrot.slane %v3013, 4
        %v3015 = vrot.slane %v1692, 5
        %v3016 = vsel %vm2914, %v3014, %v3015
        %v3017 = vrot.slane %v3015, 4
        %v3018 = vrot.slane %v1693, 5
        %v3019 = vsel %vm2914, %v3017, %v3018
        %v3020 = vrot.slane %v2855, 5
        %v3021 = vrot.slane %v3020, 4
        %v3022 = vrot.slane %v1695, 5
        %v3023 = vsel %vm2914, %v3021, %v3022
        %v3024 = vrot.slane %v3022, 4
        %v3025 = vrot.slane %v1696, 5
        %v3026 = vsel %vm2914, %v3024, %v3025
        %v3027 = vrot.slane %v2856, 5
        %v3028 = vrot.slane %v3027, 4
        %v3029 = vrot.slane %v1698, 5
        %v3030 = vsel %vm2914, %v3028, %v3029
        %v3031 = vrot.slane %v3029, 4
        %v3032 = vrot.slane %v1699, 5
        %v3033 = vsel %vm2914, %v3031, %v3032
        %v3034 = vrot.slane %v2857, 5
        %v3035 = vrot.slane %v3034, 4
        %v3036 = vrot.slane %v1701, 5
        %v3037 = vsel %vm2914, %v3035, %v3036
        %v3038 = vrot.slane %v3036, 4
        %v3039 = vrot.slane %v1702, 5
        %v3040 = vsel %vm2914, %v3038, %v3039
        %s3041 = scalar_lea.vmem %s1, 4
        %v3042 = vld [vmem:[%s3041] sm:$0x3]
        %v3043 = vunpack.c.l.b16 %v2918
        %v3044 = vunpack.c.l.b16 %v2921
        %v3045 = vunpack.c.l.b16 %v2925
        %v3046 = vunpack.c.l.b16 %v2928
        %v3047 = vunpack.c.l.b16 %v2932
        %v3048 = vunpack.c.l.b16 %v2935
        %v3049 = vunpack.c.l.b16 %v2939
        %v3050 = vunpack.c.l.b16 %v2942
        %v3051 = vunpack.c.l.b16 %v2946
        %v3052 = vunpack.c.l.b16 %v2949
        %v3053 = vunpack.c.l.b16 %v2953
        %v3054 = vunpack.c.l.b16 %v2956
        %v3055 = vunpack.c.l.b16 %v2960
        %v3056 = vunpack.c.l.b16 %v2963
        %v3057 = vunpack.c.l.b16 %v2967
        %v3058 = vunpack.c.l.b16 %v2970
        %v3059 = vunpack.c.l.b16 %v2974
        %v3060 = vunpack.c.l.b16 %v2977
        %v3061 = vunpack.c.l.b16 %v2981
        %v3062 = vunpack.c.l.b16 %v2984
        %v3063 = vunpack.c.l.b16 %v2988
        %v3064 = vunpack.c.l.b16 %v2991
        %v3065 = vunpack.c.l.b16 %v2995
        %v3066 = vunpack.c.l.b16 %v2998
        %v3067 = vunpack.c.l.b16 %v3002
        %v3068 = vunpack.c.l.b16 %v3005
        %v3069 = vunpack.c.l.b16 %v3009
        %v3070 = vunpack.c.l.b16 %v3012
        %v3071 = vunpack.c.l.b16 %v3016
        %v3072 = vunpack.c.l.b16 %v3019
        %v3073 = vunpack.c.l.b16 %v3023
        %v3074 = vunpack.c.l.b16 %v3026
        %v3075 = vpack.c.b16 %v3044, %v3043
        %v3076 = vpack.c.b16 %v3046, %v3045
        %v3077 = vpack.c.b16 %v3048, %v3047
        %v3078 = vpack.c.b16 %v3050, %v3049
        %v3079 = vpack.c.b16 %v3052, %v3051
        %v3080 = vpack.c.b16 %v3054, %v3053
        %v3081 = vpack.c.b16 %v3056, %v3055
        %v3082 = vpack.c.b16 %v3058, %v3057
        %v3083 = vpack.c.b16 %v3060, %v3059
        %v3084 = vpack.c.b16 %v3062, %v3061
        %v3085 = vpack.c.b16 %v3064, %v3063
        %v3086 = vpack.c.b16 %v3066, %v3065
        %v3087 = vpack.c.b16 %v3068, %v3067
        %v3088 = vpack.c.b16 %v3070, %v3069
        %v3089 = vpack.c.b16 %v3072, %v3071
        %v3090 = vpack.c.b16 %v3074, %v3073
        %v3092 = vsel %vm1057, %v3075, 0
        %v3095 = vsel %vm1057, %v3076, 0
        %v3098 = vsel %vm1057, %v3077, 0
        %v3101 = vsel %vm1057, %v3078, 0
        %v3104 = vsel %vm1057, %v3079, 0
        %v3107 = vsel %vm1057, %v3080, 0
        %v3110 = vsel %vm1057, %v3081, 0
        %v3113 = vsel %vm1057, %v3082, 0
        %v3116 = vsel %vm1057, %v3083, 0
        %v3119 = vsel %vm1057, %v3084, 0
        %v3122 = vsel %vm1057, %v3085, 0
        %v3125 = vsel %vm1057, %v3086, 0
        %v3128 = vsel %vm1057, %v3087, 0
        %v3131 = vsel %vm1057, %v3088, 0
        %v3134 = vsel %vm1057, %v3089, 0
        %v3137 = vsel %vm1057, %v3090, 0
        %v3140 = vsel %vm1106, %v3042, 0
        %3142 = vmatprep.subr.bf16.mxu0 0
        %3143 = vmatpush1.bf16.msra.mxu0 %v3140
        %3144 = vmatprep.subr.bf16.mxu0 0
        %3145 = vmatpush1.bf16.msra.mxu0 0
        %3146 = vmatprep.subr.bf16.mxu0 0
        %3147 = vmatpush1.bf16.msra.mxu0 0
        %3148 = vmatprep.subr.bf16.mxu0 0
        %3149 = vmatpush1.bf16.msra.mxu0 0
        %3150 = vmatprep.subr.bf16.mxu0 0
        %3151 = vmatpush1.bf16.msra.mxu0 0
        %3152 = vmatprep.subr.bf16.mxu0 0
        %3153 = vmatpush1.bf16.msra.mxu0 0
        %3154 = vmatprep.subr.bf16.mxu0 0
        %3155 = vmatpush1.bf16.msra.mxu0 0
        %3156 = vmatprep.subr.bf16.mxu0 0
        %3157 = vmatpush1.bf16.msra.mxu0 0
        %3158 = vmatprep.subr.bf16.mxu0 0
        %3159 = vmatpush1.bf16.msra.mxu0 0
        %3160 = vmatprep.subr.bf16.mxu0 0
        %3161 = vmatpush1.bf16.msra.mxu0 0
        %3162 = vmatprep.subr.bf16.mxu0 0
        %3163 = vmatpush1.bf16.msra.mxu0 0
        %3164 = vmatprep.subr.bf16.mxu0 0
        %3165 = vmatpush1.bf16.msra.mxu0 0
        %3166 = vmatprep.subr.bf16.mxu0 0
        %3167 = vmatpush1.bf16.msra.mxu0 0
        %3168 = vmatprep.subr.bf16.mxu0 0
        %3169 = vmatpush1.bf16.msra.mxu0 0
        %3170 = vmatprep.subr.bf16.mxu0 0
        %3171 = vmatpush1.bf16.msra.mxu0 0
        %3172 = vmatprep.subr.bf16.mxu0 0
        %3173 = vmatpush1.bf16.msra.mxu0 0
        %3174 = vmatprep.mubr.bf16.mxu0 0
        %3175 = vmatmul.mubr.bf16.gmra.mrb[0].mxu0 %v3092
        %v3176 = vpop.f32.mrb[0].mxu0
        %v3177 = vadd.f32 0.0, %v3176
        %v3178 = vpop.f32.mrb[0].mxu0
        %v3179 = vpop.f32.mrb[0].mxu0
        %v3180 = vadd.f32 0.0, %v3179
        %v3181 = vpop.f32.mrb[0].mxu0
        %3182 = vmatprep.mubr.bf16.mxu0 0
        %3183 = vmatmul.mubr.bf16.gmra.mrb[0].mxu0 %v3095
        %v3184 = vpop.f32.mrb[0].mxu0
        %v3185 = vadd.f32 0.0, %v3184
        %v3186 = vpop.f32.mrb[0].mxu0
        %v3187 = vpop.f32.mrb[0].mxu0
        %v3188 = vadd.f32 0.0, %v3187
        %v3189 = vpop.f32.mrb[0].mxu0
        %3190 = vmatprep.mubr.bf16.mxu0 0
        %3191 = vmatmul.mubr.bf16.gmra.mrb[0].mxu0 %v3098
        %v3192 = vpop.f32.mrb[0].mxu0
        %v3193 = vadd.f32 0.0, %v3192
        %v3194 = vpop.f32.mrb[0].mxu0
        %v3195 = vpop.f32.mrb[0].mxu0
        %v3196 = vadd.f32 0.0, %v3195
        %v3197 = vpop.f32.mrb[0].mxu0
        %3198 = vmatprep.mubr.bf16.mxu0 0
        %3199 = vmatmul.mubr.bf16.gmra.mrb[0].mxu0 %v3101
        %v3200 = vpop.f32.mrb[0].mxu0
        %v3201 = vadd.f32 0.0, %v3200
        %v3202 = vpop.f32.mrb[0].mxu0
        %v3203 = vpop.f32.mrb[0].mxu0
        %v3204 = vadd.f32 0.0, %v3203
        %v3205 = vpop.f32.mrb[0].mxu0
        %3206 = vmatprep.mubr.bf16.mxu0 0
        %3207 = vmatmul.mubr.bf16.gmra.mrb[0].mxu0 %v3104
        %v3208 = vpop.f32.mrb[0].mxu0
        %v3209 = vadd.f32 0.0, %v3208
        %v3210 = vpop.f32.mrb[0].mxu0
        %v3211 = vpop.f32.mrb[0].mxu0
        %v3212 = vadd.f32 0.0, %v3211
        %v3213 = vpop.f32.mrb[0].mxu0
        %3214 = vmatprep.mubr.bf16.mxu0 0
        %3215 = vmatmul.mubr.bf16.gmra.mrb[0].mxu0 %v3107
        %v3216 = vpop.f32.mrb[0].mxu0
        %v3217 = vadd.f32 0.0, %v3216
        %v3218 = vpop.f32.mrb[0].mxu0
        %v3219 = vpop.f32.mrb[0].mxu0
        %v3220 = vadd.f32 0.0, %v3219
        %v3221 = vpop.f32.mrb[0].mxu0
        %3222 = vmatprep.mubr.bf16.mxu0 0
        %3223 = vmatmul.mubr.bf16.gmra.mrb[0].mxu0 %v3110
        %v3224 = vpop.f32.mrb[0].mxu0
        %v3225 = vadd.f32 0.0, %v3224
        %v3226 = vpop.f32.mrb[0].mxu0
        %v3227 = vpop.f32.mrb[0].mxu0
        %v3228 = vadd.f32 0.0, %v3227
        %v3229 = vpop.f32.mrb[0].mxu0
        %3230 = vmatprep.mubr.bf16.mxu0 0
        %3231 = vmatmul.mubr.bf16.gmra.mrb[0].mxu0 %v3113
        %v3232 = vpop.f32.mrb[0].mxu0
        %v3233 = vadd.f32 0.0, %v3232
        %v3234 = vpop.f32.mrb[0].mxu0
        %v3235 = vpop.f32.mrb[0].mxu0
        %v3236 = vadd.f32 0.0, %v3235
        %v3237 = vpop.f32.mrb[0].mxu0
        %3238 = vmatprep.mubr.bf16.mxu0 0
        %3239 = vmatmul.mubr.bf16.gmra.mrb[0].mxu0 %v3116
        %v3240 = vpop.f32.mrb[0].mxu0
        %v3241 = vadd.f32 0.0, %v3240
        %v3242 = vpop.f32.mrb[0].mxu0
        %v3243 = vpop.f32.mrb[0].mxu0
        %v3244 = vadd.f32 0.0, %v3243
        %v3245 = vpop.f32.mrb[0].mxu0
        %3246 = vmatprep.mubr.bf16.mxu0 0
        %3247 = vmatmul.mubr.bf16.gmra.mrb[0].mxu0 %v3119
        %v3248 = vpop.f32.mrb[0].mxu0
        %v3249 = vadd.f32 0.0, %v3248
        %v3250 = vpop.f32.mrb[0].mxu0
        %v3251 = vpop.f32.mrb[0].mxu0
        %v3252 = vadd.f32 0.0, %v3251
        %v3253 = vpop.f32.mrb[0].mxu0
        %3254 = vmatprep.mubr.bf16.mxu0 0
        %3255 = vmatmul.mubr.bf16.gmra.mrb[0].mxu0 %v3122
        %v3256 = vpop.f32.mrb[0].mxu0
        %v3257 = vadd.f32 0.0, %v3256
        %v3258 = vpop.f32.mrb[0].mxu0
        %v3259 = vpop.f32.mrb[0].mxu0
        %v3260 = vadd.f32 0.0, %v3259
        %v3261 = vpop.f32.mrb[0].mxu0
        %3262 = vmatprep.mubr.bf16.mxu0 0
        %3263 = vmatmul.mubr.bf16.gmra.mrb[0].mxu0 %v3125
        %v3264 = vpop.f32.mrb[0].mxu0
        %v3265 = vadd.f32 0.0, %v3264
        %v3266 = vpop.f32.mrb[0].mxu0
        %v3267 = vpop.f32.mrb[0].mxu0
        %v3268 = vadd.f32 0.0, %v3267
        %v3269 = vpop.f32.mrb[0].mxu0
        %3270 = vmatprep.mubr.bf16.mxu0 0
        %3271 = vmatmul.mubr.bf16.gmra.mrb[0].mxu0 %v3128
        %v3272 = vpop.f32.mrb[0].mxu0
        %v3273 = vadd.f32 0.0, %v3272
        %v3274 = vpop.f32.mrb[0].mxu0
        %v3275 = vpop.f32.mrb[0].mxu0
        %v3276 = vadd.f32 0.0, %v3275
        %v3277 = vpop.f32.mrb[0].mxu0
        %3278 = vmatprep.mubr.bf16.mxu0 0
        %3279 = vmatmul.mubr.bf16.gmra.mrb[0].mxu0 %v3131
        %v3280 = vpop.f32.mrb[0].mxu0
        %v3281 = vadd.f32 0.0, %v3280
        %v3282 = vpop.f32.mrb[0].mxu0
        %v3283 = vpop.f32.mrb[0].mxu0
        %v3284 = vadd.f32 0.0, %v3283
        %v3285 = vpop.f32.mrb[0].mxu0
        %3286 = vmatprep.mubr.bf16.mxu0 0
        %3287 = vmatmul.mubr.bf16.gmra.mrb[0].mxu0 %v3134
        %v3288 = vpop.f32.mrb[0].mxu0
        %v3289 = vadd.f32 0.0, %v3288
        %v3290 = vpop.f32.mrb[0].mxu0
        %v3291 = vpop.f32.mrb[0].mxu0
        %v3292 = vadd.f32 0.0, %v3291
        %v3293 = vpop.f32.mrb[0].mxu0
        %3294 = vmatprep.mubr.bf16.mxu0 0
        %3295 = vmatmul.mubr.bf16.gmra.mrb[0].mxu0 %v3137
        %v3296 = vpop.f32.mrb[0].mxu0
        %v3297 = vadd.f32 0.0, %v3296
        %v3298 = vpop.f32.mrb[0].mxu0
        %v3299 = vpop.f32.mrb[0].mxu0
        %v3300 = vadd.f32 0.0, %v3299
        %v3301 = vpop.f32.mrb[0].mxu0
        %3302 = vdwg.mxu0
        %v3303 = vadd.f32 %v2808, %v3177
        %v3304 = vadd.f32 %v2809, %v3180
        %v3305 = vadd.f32 %v2810, %v3185
        %v3306 = vadd.f32 %v2811, %v3188
        %v3307 = vadd.f32 %v2812, %v3193
        %v3308 = vadd.f32 %v2813, %v3196
        %v3309 = vadd.f32 %v2814, %v3201
        %v3310 = vadd.f32 %v2815, %v3204
        %v3311 = vadd.f32 %v2816, %v3209
        %v3312 = vadd.f32 %v2817, %v3212
        %v3313 = vadd.f32 %v2818, %v3217
        %v3314 = vadd.f32 %v2819, %v3220
        %v3315 = vadd.f32 %v2820, %v3225
        %v3316 = vadd.f32 %v2821, %v3228
        %v3317 = vadd.f32 %v2822, %v3233
        %v3318 = vadd.f32 %v2823, %v3236
        %v3319 = vadd.f32 %v2824, %v3241
        %v3320 = vadd.f32 %v2825, %v3244
        %v3321 = vadd.f32 %v2826, %v3249
        %v3322 = vadd.f32 %v2827, %v3252
        %v3323 = vadd.f32 %v2828, %v3257
        %v3324 = vadd.f32 %v2829, %v3260
        %v3325 = vadd.f32 %v2830, %v3265
        %v3326 = vadd.f32 %v2831, %v3268
        %v3327 = vadd.f32 %v2832, %v3273
        %v3328 = vadd.f32 %v2833, %v3276
        %v3329 = vadd.f32 %v2834, %v3281
        %v3330 = vadd.f32 %v2835, %v3284
        %v3331 = vadd.f32 %v2836, %v3289
        %v3332 = vadd.f32 %v2837, %v3292
        %v3333 = vadd.f32 %v2838, %v3297
        %v3334 = vadd.f32 %v2839, %v3300
        %s3335 = scalar_lea.vmem %s1, 10
        %v3336 = vld [vmem:[%s3335] sm:$0x3]
        %v3337 = vunpack.c.l.b16 %v3030
        %v3338 = vunpack.c.l.b16 %v3033
        %v3339 = vpack.c.b16 %v3338, %v3337
        %v3341 = vsel %vm1057, %v3339, 0
        %v3344 = vsel %vm1106, %v3336, 0
        %3346 = vmatprep.subr.bf16.mxu0 0
        %3347 = vmatpush1.bf16.msra.mxu0 %v3344
        %3348 = vmatprep.subr.bf16.mxu0 0
        %3349 = vmatpush1.bf16.msra.mxu0 0
        %3350 = vmatprep.subr.bf16.mxu0 0
        %3351 = vmatpush1.bf16.msra.mxu0 0
        %3352 = vmatprep.subr.bf16.mxu0 0
        %3353 = vmatpush1.bf16.msra.mxu0 0
        %3354 = vmatprep.subr.bf16.mxu0 0
        %3355 = vmatpush1.bf16.msra.mxu0 0
        %3356 = vmatprep.subr.bf16.mxu0 0
        %3357 = vmatpush1.bf16.msra.mxu0 0
        %3358 = vmatprep.subr.bf16.mxu0 0
        %3359 = vmatpush1.bf16.msra.mxu0 0
        %3360 = vmatprep.subr.bf16.mxu0 0
        %3361 = vmatpush1.bf16.msra.mxu0 0
        %3362 = vmatprep.subr.bf16.mxu0 0
        %3363 = vmatpush1.bf16.msra.mxu0 0
        %3364 = vmatprep.subr.bf16.mxu0 0
        %3365 = vmatpush1.bf16.msra.mxu0 0
        %3366 = vmatprep.subr.bf16.mxu0 0
        %3367 = vmatpush1.bf16.msra.mxu0 0
        %3368 = vmatprep.subr.bf16.mxu0 0
        %3369 = vmatpush1.bf16.msra.mxu0 0
        %3370 = vmatprep.subr.bf16.mxu0 0
        %3371 = vmatpush1.bf16.msra.mxu0 0
        %3372 = vmatprep.subr.bf16.mxu0 0
        %3373 = vmatpush1.bf16.msra.mxu0 0
        %3374 = vmatprep.subr.bf16.mxu0 0
        %3375 = vmatpush1.bf16.msra.mxu0 0
        %3376 = vmatprep.subr.bf16.mxu0 0
        %3377 = vmatpush1.bf16.msra.mxu0 0
        %3378 = vmatprep.mubr.bf16.mxu0 0
        %3379 = vmatmul.mubr.bf16.gmra.mrb[0].mxu0 %v3095
        %v3380 = vpop.f32.mrb[0].mxu0
        %v3381 = vadd.f32 0.0, %v3380
        %v3382 = vpop.f32.mrb[0].mxu0
        %v3383 = vpop.f32.mrb[0].mxu0
        %v3384 = vadd.f32 0.0, %v3383
        %v3385 = vpop.f32.mrb[0].mxu0
        %3386 = vmatprep.mubr.bf16.mxu0 0
        %3387 = vmatmul.mubr.bf16.gmra.mrb[0].mxu0 %v3098
        %v3388 = vpop.f32.mrb[0].mxu0
        %v3389 = vadd.f32 0.0, %v3388
        %v3390 = vpop.f32.mrb[0].mxu0
        %v3391 = vpop.f32.mrb[0].mxu0
        %v3392 = vadd.f32 0.0, %v3391
        %v3393 = vpop.f32.mrb[0].mxu0
        %3394 = vmatprep.mubr.bf16.mxu0 0
        %3395 = vmatmul.mubr.bf16.gmra.mrb[0].mxu0 %v3101
        %v3396 = vpop.f32.mrb[0].mxu0
        %v3397 = vadd.f32 0.0, %v3396
        %v3398 = vpop.f32.mrb[0].mxu0
        %v3399 = vpop.f32.mrb[0].mxu0
        %v3400 = vadd.f32 0.0, %v3399
        %v3401 = vpop.f32.mrb[0].mxu0
        %3402 = vmatprep.mubr.bf16.mxu0 0
        %3403 = vmatmul.mubr.bf16.gmra.mrb[0].mxu0 %v3104
        %v3404 = vpop.f32.mrb[0].mxu0
        %v3405 = vadd.f32 0.0, %v3404
        %v3406 = vpop.f32.mrb[0].mxu0
        %v3407 = vpop.f32.mrb[0].mxu0
        %v3408 = vadd.f32 0.0, %v3407
        %v3409 = vpop.f32.mrb[0].mxu0
        %3410 = vmatprep.mubr.bf16.mxu0 0
        %3411 = vmatmul.mubr.bf16.gmra.mrb[0].mxu0 %v3107
        %v3412 = vpop.f32.mrb[0].mxu0
        %v3413 = vadd.f32 0.0, %v3412
        %v3414 = vpop.f32.mrb[0].mxu0
        %v3415 = vpop.f32.mrb[0].mxu0
        %v3416 = vadd.f32 0.0, %v3415
        %v3417 = vpop.f32.mrb[0].mxu0
        %3418 = vmatprep.mubr.bf16.mxu0 0
        %3419 = vmatmul.mubr.bf16.gmra.mrb[0].mxu0 %v3110
        %v3420 = vpop.f32.mrb[0].mxu0
        %v3421 = vadd.f32 0.0, %v3420
        %v3422 = vpop.f32.mrb[0].mxu0
        %v3423 = vpop.f32.mrb[0].mxu0
        %v3424 = vadd.f32 0.0, %v3423
        %v3425 = vpop.f32.mrb[0].mxu0
        %3426 = vmatprep.mubr.bf16.mxu0 0
        %3427 = vmatmul.mubr.bf16.gmra.mrb[0].mxu0 %v3113
        %v3428 = vpop.f32.mrb[0].mxu0
        %v3429 = vadd.f32 0.0, %v3428
        %v3430 = vpop.f32.mrb[0].mxu0
        %v3431 = vpop.f32.mrb[0].mxu0
        %v3432 = vadd.f32 0.0, %v3431
        %v3433 = vpop.f32.mrb[0].mxu0
        %3434 = vmatprep.mubr.bf16.mxu0 0
        %3435 = vmatmul.mubr.bf16.gmra.mrb[0].mxu0 %v3116
        %v3436 = vpop.f32.mrb[0].mxu0
        %v3437 = vadd.f32 0.0, %v3436
        %v3438 = vpop.f32.mrb[0].mxu0
        %v3439 = vpop.f32.mrb[0].mxu0
        %v3440 = vadd.f32 0.0, %v3439
        %v3441 = vpop.f32.mrb[0].mxu0
        %3442 = vmatprep.mubr.bf16.mxu0 0
        %3443 = vmatmul.mubr.bf16.gmra.mrb[0].mxu0 %v3119
        %v3444 = vpop.f32.mrb[0].mxu0
        %v3445 = vadd.f32 0.0, %v3444
        %v3446 = vpop.f32.mrb[0].mxu0
        %v3447 = vpop.f32.mrb[0].mxu0
        %v3448 = vadd.f32 0.0, %v3447
        %v3449 = vpop.f32.mrb[0].mxu0
        %3450 = vmatprep.mubr.bf16.mxu0 0
        %3451 = vmatmul.mubr.bf16.gmra.mrb[0].mxu0 %v3122
        %v3452 = vpop.f32.mrb[0].mxu0
        %v3453 = vadd.f32 0.0, %v3452
        %v3454 = vpop.f32.mrb[0].mxu0
        %v3455 = vpop.f32.mrb[0].mxu0
        %v3456 = vadd.f32 0.0, %v3455
        %v3457 = vpop.f32.mrb[0].mxu0
        %3458 = vmatprep.mubr.bf16.mxu0 0
        %3459 = vmatmul.mubr.bf16.gmra.mrb[0].mxu0 %v3125
        %v3460 = vpop.f32.mrb[0].mxu0
        %v3461 = vadd.f32 0.0, %v3460
        %v3462 = vpop.f32.mrb[0].mxu0
        %v3463 = vpop.f32.mrb[0].mxu0
        %v3464 = vadd.f32 0.0, %v3463
        %v3465 = vpop.f32.mrb[0].mxu0
        %3466 = vmatprep.mubr.bf16.mxu0 0
        %3467 = vmatmul.mubr.bf16.gmra.mrb[0].mxu0 %v3128
        %v3468 = vpop.f32.mrb[0].mxu0
        %v3469 = vadd.f32 0.0, %v3468
        %v3470 = vpop.f32.mrb[0].mxu0
        %v3471 = vpop.f32.mrb[0].mxu0
        %v3472 = vadd.f32 0.0, %v3471
        %v3473 = vpop.f32.mrb[0].mxu0
        %3474 = vmatprep.mubr.bf16.mxu0 0
        %3475 = vmatmul.mubr.bf16.gmra.mrb[0].mxu0 %v3131
        %v3476 = vpop.f32.mrb[0].mxu0
        %v3477 = vadd.f32 0.0, %v3476
        %v3478 = vpop.f32.mrb[0].mxu0
        %v3479 = vpop.f32.mrb[0].mxu0
        %v3480 = vadd.f32 0.0, %v3479
        %v3481 = vpop.f32.mrb[0].mxu0
        %3482 = vmatprep.mubr.bf16.mxu0 0
        %3483 = vmatmul.mubr.bf16.gmra.mrb[0].mxu0 %v3134
        %v3484 = vpop.f32.mrb[0].mxu0
        %v3485 = vadd.f32 0.0, %v3484
        %v3486 = vpop.f32.mrb[0].mxu0
        %v3487 = vpop.f32.mrb[0].mxu0
        %v3488 = vadd.f32 0.0, %v3487
        %v3489 = vpop.f32.mrb[0].mxu0
        %3490 = vmatprep.mubr.bf16.mxu0 0
        %3491 = vmatmul.mubr.bf16.gmra.mrb[0].mxu0 %v3137
        %v3492 = vpop.f32.mrb[0].mxu0
        %v3493 = vadd.f32 0.0, %v3492
        %v3494 = vpop.f32.mrb[0].mxu0
        %v3495 = vpop.f32.mrb[0].mxu0
        %v3496 = vadd.f32 0.0, %v3495
        %v3497 = vpop.f32.mrb[0].mxu0
        %3498 = vmatprep.mubr.bf16.mxu0 0
        %3499 = vmatmul.mubr.bf16.gmra.mrb[0].mxu0 %v3341
        %v3500 = vpop.f32.mrb[0].mxu0
        %v3501 = vadd.f32 0.0, %v3500
        %v3502 = vpop.f32.mrb[0].mxu0
        %v3503 = vpop.f32.mrb[0].mxu0
        %v3504 = vadd.f32 0.0, %v3503
        %v3505 = vpop.f32.mrb[0].mxu0
        %3506 = vdwg.mxu0
        %v3507 = vadd.f32 %v3303, %v3381
        %v3508 = vadd.f32 %v3304, %v3384
        %v3509 = vadd.f32 %v3305, %v3389
        %v3510 = vadd.f32 %v3306, %v3392
        %v3511 = vadd.f32 %v3307, %v3397
        %v3512 = vadd.f32 %v3308, %v3400
        %v3513 = vadd.f32 %v3309, %v3405
        %v3514 = vadd.f32 %v3310, %v3408
        %v3515 = vadd.f32 %v3311, %v3413
        %v3516 = vadd.f32 %v3312, %v3416
        %v3517 = vadd.f32 %v3313, %v3421
        %v3518 = vadd.f32 %v3314, %v3424
        %v3519 = vadd.f32 %v3315, %v3429
        %v3520 = vadd.f32 %v3316, %v3432
        %v3521 = vadd.f32 %v3317, %v3437
        %v3522 = vadd.f32 %v3318, %v3440
        %v3523 = vadd.f32 %v3319, %v3445
        %v3524 = vadd.f32 %v3320, %v3448
        %v3525 = vadd.f32 %v3321, %v3453
        %v3526 = vadd.f32 %v3322, %v3456
        %v3527 = vadd.f32 %v3323, %v3461
        %v3528 = vadd.f32 %v3324, %v3464
        %v3529 = vadd.f32 %v3325, %v3469
        %v3530 = vadd.f32 %v3326, %v3472
        %v3531 = vadd.f32 %v3327, %v3477
        %v3532 = vadd.f32 %v3328, %v3480
        %v3533 = vadd.f32 %v3329, %v3485
        %v3534 = vadd.f32 %v3330, %v3488
        %v3535 = vadd.f32 %v3331, %v3493
        %v3536 = vadd.f32 %v3332, %v3496
        %v3537 = vadd.f32 %v3333, %v3501
        %v3538 = vadd.f32 %v3334, %v3504
        %s3539 = scalar_lea.vmem %s1, 16
        %v3540 = vld [vmem:[%s3539] sm:$0x3]
        %v3541 = vunpack.c.l.b16 %v3037
        %v3542 = vunpack.c.l.b16 %v3040
        %v3543 = vpack.c.b16 %v3542, %v3541
        %v3545 = vsel %vm1057, %v3543, 0
        %v3548 = vsel %vm1106, %v3540, 0
        %3550 = vmatprep.subr.bf16.mxu0 0
        %3551 = vmatpush1.bf16.msra.mxu0 %v3548
        %3552 = vmatprep.subr.bf16.mxu0 0
        %3553 = vmatpush1.bf16.msra.mxu0 0
        %3554 = vmatprep.subr.bf16.mxu0 0
        %3555 = vmatpush1.bf16.msra.mxu0 0
        %3556 = vmatprep.subr.bf16.mxu0 0
        %3557 = vmatpush1.bf16.msra.mxu0 0
        %3558 = vmatprep.subr.bf16.mxu0 0
        %3559 = vmatpush1.bf16.msra.mxu0 0
        %3560 = vmatprep.subr.bf16.mxu0 0
        %3561 = vmatpush1.bf16.msra.mxu0 0
        %3562 = vmatprep.subr.bf16.mxu0 0
        %3563 = vmatpush1.bf16.msra.mxu0 0
        %3564 = vmatprep.subr.bf16.mxu0 0
        %3565 = vmatpush1.bf16.msra.mxu0 0
        %3566 = vmatprep.subr.bf16.mxu0 0
        %3567 = vmatpush1.bf16.msra.mxu0 0
        %3568 = vmatprep.subr.bf16.mxu0 0
        %3569 = vmatpush1.bf16.msra.mxu0 0
        %3570 = vmatprep.subr.bf16.mxu0 0
        %3571 = vmatpush1.bf16.msra.mxu0 0
        %3572 = vmatprep.subr.bf16.mxu0 0
        %3573 = vmatpush1.bf16.msra.mxu0 0
        %3574 = vmatprep.subr.bf16.mxu0 0
        %3575 = vmatpush1.bf16.msra.mxu0 0
        %3576 = vmatprep.subr.bf16.mxu0 0
        %3577 = vmatpush1.bf16.msra.mxu0 0
        %3578 = vmatprep.subr.bf16.mxu0 0
        %3579 = vmatpush1.bf16.msra.mxu0 0
        %3580 = vmatprep.subr.bf16.mxu0 0
        %3581 = vmatpush1.bf16.msra.mxu0 0
        %3582 = vmatprep.mubr.bf16.mxu0 0
        %3583 = vmatmul.mubr.bf16.gmra.mrb[0].mxu0 %v3098
        %v3584 = vpop.f32.mrb[0].mxu0
        %v3585 = vadd.f32 0.0, %v3584
        %v3586 = vpop.f32.mrb[0].mxu0
        %v3587 = vpop.f32.mrb[0].mxu0
        %v3588 = vadd.f32 0.0, %v3587
        %v3589 = vpop.f32.mrb[0].mxu0
        %3590 = vmatprep.mubr.bf16.mxu0 0
        %3591 = vmatmul.mubr.bf16.gmra.mrb[0].mxu0 %v3101
        %v3592 = vpop.f32.mrb[0].mxu0
        %v3593 = vadd.f32 0.0, %v3592
        %v3594 = vpop.f32.mrb[0].mxu0
        %v3595 = vpop.f32.mrb[0].mxu0
        %v3596 = vadd.f32 0.0, %v3595
        %v3597 = vpop.f32.mrb[0].mxu0
        %3598 = vmatprep.mubr.bf16.mxu0 0
        %3599 = vmatmul.mubr.bf16.gmra.mrb[0].mxu0 %v3104
        %v3600 = vpop.f32.mrb[0].mxu0
        %v3601 = vadd.f32 0.0, %v3600
        %v3602 = vpop.f32.mrb[0].mxu0
        %v3603 = vpop.f32.mrb[0].mxu0
        %v3604 = vadd.f32 0.0, %v3603
        %v3605 = vpop.f32.mrb[0].mxu0
        %3606 = vmatprep.mubr.bf16.mxu0 0
        %3607 = vmatmul.mubr.bf16.gmra.mrb[0].mxu0 %v3107
        %v3608 = vpop.f32.mrb[0].mxu0
        %v3609 = vadd.f32 0.0, %v3608
        %v3610 = vpop.f32.mrb[0].mxu0
        %v3611 = vpop.f32.mrb[0].mxu0
        %v3612 = vadd.f32 0.0, %v3611
        %v3613 = vpop.f32.mrb[0].mxu0
        %3614 = vmatprep.mubr.bf16.mxu0 0
        %3615 = vmatmul.mubr.bf16.gmra.mrb[0].mxu0 %v3110
        %v3616 = vpop.f32.mrb[0].mxu0
        %v3617 = vadd.f32 0.0, %v3616
        %v3618 = vpop.f32.mrb[0].mxu0
        %v3619 = vpop.f32.mrb[0].mxu0
        %v3620 = vadd.f32 0.0, %v3619
        %v3621 = vpop.f32.mrb[0].mxu0
        %3622 = vmatprep.mubr.bf16.mxu0 0
        %3623 = vmatmul.mubr.bf16.gmra.mrb[0].mxu0 %v3113
        %v3624 = vpop.f32.mrb[0].mxu0
        %v3625 = vadd.f32 0.0, %v3624
        %v3626 = vpop.f32.mrb[0].mxu0
        %v3627 = vpop.f32.mrb[0].mxu0
        %v3628 = vadd.f32 0.0, %v3627
        %v3629 = vpop.f32.mrb[0].mxu0
        %3630 = vmatprep.mubr.bf16.mxu0 0
        %3631 = vmatmul.mubr.bf16.gmra.mrb[0].mxu0 %v3116
        %v3632 = vpop.f32.mrb[0].mxu0
        %v3633 = vadd.f32 0.0, %v3632
        %v3634 = vpop.f32.mrb[0].mxu0
        %v3635 = vpop.f32.mrb[0].mxu0
        %v3636 = vadd.f32 0.0, %v3635
        %v3637 = vpop.f32.mrb[0].mxu0
        %3638 = vmatprep.mubr.bf16.mxu0 0
        %3639 = vmatmul.mubr.bf16.gmra.mrb[0].mxu0 %v3119
        %v3640 = vpop.f32.mrb[0].mxu0
        %v3641 = vadd.f32 0.0, %v3640
        %v3642 = vpop.f32.mrb[0].mxu0
        %v3643 = vpop.f32.mrb[0].mxu0
        %v3644 = vadd.f32 0.0, %v3643
        %v3645 = vpop.f32.mrb[0].mxu0
        %3646 = vmatprep.mubr.bf16.mxu0 0
        %3647 = vmatmul.mubr.bf16.gmra.mrb[0].mxu0 %v3122
        %v3648 = vpop.f32.mrb[0].mxu0
        %v3649 = vadd.f32 0.0, %v3648
        %v3650 = vpop.f32.mrb[0].mxu0
        %v3651 = vpop.f32.mrb[0].mxu0
        %v3652 = vadd.f32 0.0, %v3651
        %v3653 = vpop.f32.mrb[0].mxu0
        %3654 = vmatprep.mubr.bf16.mxu0 0
        %3655 = vmatmul.mubr.bf16.gmra.mrb[0].mxu0 %v3125
        %v3656 = vpop.f32.mrb[0].mxu0
        %v3657 = vadd.f32 0.0, %v3656
        %v3658 = vpop.f32.mrb[0].mxu0
        %v3659 = vpop.f32.mrb[0].mxu0
        %v3660 = vadd.f32 0.0, %v3659
        %v3661 = vpop.f32.mrb[0].mxu0
        %3662 = vmatprep.mubr.bf16.mxu0 0
        %3663 = vmatmul.mubr.bf16.gmra.mrb[0].mxu0 %v3128
        %v3664 = vpop.f32.mrb[0].mxu0
        %v3665 = vadd.f32 0.0, %v3664
        %v3666 = vpop.f32.mrb[0].mxu0
        %v3667 = vpop.f32.mrb[0].mxu0
        %v3668 = vadd.f32 0.0, %v3667
        %v3669 = vpop.f32.mrb[0].mxu0
        %3670 = vmatprep.mubr.bf16.mxu0 0
        %3671 = vmatmul.mubr.bf16.gmra.mrb[0].mxu0 %v3131
        %v3672 = vpop.f32.mrb[0].mxu0
        %v3673 = vadd.f32 0.0, %v3672
        %v3674 = vpop.f32.mrb[0].mxu0
        %v3675 = vpop.f32.mrb[0].mxu0
        %v3676 = vadd.f32 0.0, %v3675
        %v3677 = vpop.f32.mrb[0].mxu0
        %3678 = vmatprep.mubr.bf16.mxu0 0
        %3679 = vmatmul.mubr.bf16.gmra.mrb[0].mxu0 %v3134
        %v3680 = vpop.f32.mrb[0].mxu0
        %v3681 = vadd.f32 0.0, %v3680
        %v3682 = vpop.f32.mrb[0].mxu0
        %v3683 = vpop.f32.mrb[0].mxu0
        %v3684 = vadd.f32 0.0, %v3683
        %v3685 = vpop.f32.mrb[0].mxu0
        %3686 = vmatprep.mubr.bf16.mxu0 0
        %3687 = vmatmul.mubr.bf16.gmra.mrb[0].mxu0 %v3137
        %v3688 = vpop.f32.mrb[0].mxu0
        %v3689 = vadd.f32 0.0, %v3688
        %v3690 = vpop.f32.mrb[0].mxu0
        %v3691 = vpop.f32.mrb[0].mxu0
        %v3692 = vadd.f32 0.0, %v3691
        %v3693 = vpop.f32.mrb[0].mxu0
        %3694 = vmatprep.mubr.bf16.mxu0 0
        %3695 = vmatmul.mubr.bf16.gmra.mrb[0].mxu0 %v3341
        %v3696 = vpop.f32.mrb[0].mxu0
        %v3697 = vadd.f32 0.0, %v3696
        %v3698 = vpop.f32.mrb[0].mxu0
        %v3699 = vpop.f32.mrb[0].mxu0
        %v3700 = vadd.f32 0.0, %v3699
        %v3701 = vpop.f32.mrb[0].mxu0
        %3702 = vmatprep.mubr.bf16.mxu0 0
        %3703 = vmatmul.mubr.bf16.gmra.mrb[0].mxu0 %v3545
        %v3704 = vpop.f32.mrb[0].mxu0
        %v3705 = vadd.f32 0.0, %v3704
        %v3706 = vpop.f32.mrb[0].mxu0
        %v3707 = vpop.f32.mrb[0].mxu0
        %v3708 = vadd.f32 0.0, %v3707
        %v3709 = vpop.f32.mrb[0].mxu0
        %3710 = vdwg.mxu0
        %v3711 = vadd.f32 %v3507, %v3585
        %v3712 = vadd.f32 %v3508, %v3588
        %v3713 = vadd.f32 %v3509, %v3593
        %v3714 = vadd.f32 %v3510, %v3596
        %v3715 = vadd.f32 %v3511, %v3601
        %v3716 = vadd.f32 %v3512, %v3604
        %v3717 = vadd.f32 %v3513, %v3609
        %v3718 = vadd.f32 %v3514, %v3612
        %v3719 = vadd.f32 %v3515, %v3617
        %v3720 = vadd.f32 %v3516, %v3620
        %v3721 = vadd.f32 %v3517, %v3625
        %v3722 = vadd.f32 %v3518, %v3628
        %v3723 = vadd.f32 %v3519, %v3633
        %v3724 = vadd.f32 %v3520, %v3636
        %v3725 = vadd.f32 %v3521, %v3641
        %v3726 = vadd.f32 %v3522, %v3644
        %v3727 = vadd.f32 %v3523, %v3649
        %v3728 = vadd.f32 %v3524, %v3652
        %v3729 = vadd.f32 %v3525, %v3657
        %v3730 = vadd.f32 %v3526, %v3660
        %v3731 = vadd.f32 %v3527, %v3665
        %v3732 = vadd.f32 %v3528, %v3668
        %v3733 = vadd.f32 %v3529, %v3673
        %v3734 = vadd.f32 %v3530, %v3676
        %v3735 = vadd.f32 %v3531, %v3681
        %v3736 = vadd.f32 %v3532, %v3684
        %v3737 = vadd.f32 %v3533, %v3689
        %v3738 = vadd.f32 %v3534, %v3692
        %v3739 = vadd.f32 %v3535, %v3697
        %v3740 = vadd.f32 %v3536, %v3700
        %v3741 = vadd.f32 %v3537, %v3705
        %v3742 = vadd.f32 %v3538, %v3708
        %v3743 = vstv %s214
        %v3744 = vadd.f32 %v3711, %v3743
        %v3745 = vadd.f32 %v3712, %v3743
        %v3746 = vadd.f32 %v3713, %v3743
        %v3747 = vadd.f32 %v3714, %v3743
        %v3748 = vadd.f32 %v3715, %v3743
        %v3749 = vadd.f32 %v3716, %v3743
        %v3750 = vadd.f32 %v3717, %v3743
        %v3751 = vadd.f32 %v3718, %v3743
        %v3752 = vadd.f32 %v3719, %v3743
        %v3753 = vadd.f32 %v3720, %v3743
        %v3754 = vadd.f32 %v3721, %v3743
        %v3755 = vadd.f32 %v3722, %v3743
        %v3756 = vadd.f32 %v3723, %v3743
        %v3757 = vadd.f32 %v3724, %v3743
        %v3758 = vadd.f32 %v3725, %v3743
        %v3759 = vadd.f32 %v3726, %v3743
        %v3760 = vadd.f32 %v3727, %v3743
        %v3761 = vadd.f32 %v3728, %v3743
        %v3762 = vadd.f32 %v3729, %v3743
        %v3763 = vadd.f32 %v3730, %v3743
        %v3764 = vadd.f32 %v3731, %v3743
        %v3765 = vadd.f32 %v3732, %v3743
        %v3766 = vadd.f32 %v3733, %v3743
        %v3767 = vadd.f32 %v3734, %v3743
        %v3768 = vadd.f32 %v3735, %v3743
        %v3769 = vadd.f32 %v3736, %v3743
        %v3770 = vadd.f32 %v3737, %v3743
        %v3771 = vadd.f32 %v3738, %v3743
        %v3772 = vadd.f32 %v3739, %v3743
        %v3773 = vadd.f32 %v3740, %v3743
        %v3774 = vadd.f32 %v3741, %v3743
        %v3775 = vadd.f32 %v3742, %v3743
        %v3776 = vmax.f32 %v3744, 0.0
        %v3777 = vmax.f32 %v3745, 0.0
        %v3778 = vmax.f32 %v3746, 0.0
        %v3779 = vmax.f32 %v3747, 0.0
        %v3780 = vmax.f32 %v3748, 0.0
        %v3781 = vmax.f32 %v3749, 0.0
        %v3782 = vmax.f32 %v3750, 0.0
        %v3783 = vmax.f32 %v3751, 0.0
        %v3784 = vmax.f32 %v3752, 0.0
        %v3785 = vmax.f32 %v3753, 0.0
        %v3786 = vmax.f32 %v3754, 0.0
        %v3787 = vmax.f32 %v3755, 0.0
        %v3788 = vmax.f32 %v3756, 0.0
        %v3789 = vmax.f32 %v3757, 0.0
        %v3790 = vmax.f32 %v3758, 0.0
        %v3791 = vmax.f32 %v3759, 0.0
        %v3792 = vmax.f32 %v3760, 0.0
        %v3793 = vmax.f32 %v3761, 0.0
        %v3794 = vmax.f32 %v3762, 0.0
        %v3795 = vmax.f32 %v3763, 0.0
        %v3796 = vmax.f32 %v3764, 0.0
        %v3797 = vmax.f32 %v3765, 0.0
        %v3798 = vmax.f32 %v3766, 0.0
        %v3799 = vmax.f32 %v3767, 0.0
        %v3800 = vmax.f32 %v3768, 0.0
        %v3801 = vmax.f32 %v3769, 0.0
        %v3802 = vmax.f32 %v3770, 0.0
        %v3803 = vmax.f32 %v3771, 0.0
        %v3804 = vmax.f32 %v3772, 0.0
        %v3805 = vmax.f32 %v3773, 0.0
        %v3806 = vmax.f32 %v3774, 0.0
        %v3807 = vmax.f32 %v3775, 0.0
        %v3808 = vstv %s215
        %v3809 = vadd.f32 %v3776, %v3808
        %v3810 = vadd.f32 %v3777, %v3808
        %v3811 = vadd.f32 %v3778, %v3808
        %v3812 = vadd.f32 %v3779, %v3808
        %v3813 = vadd.f32 %v3780, %v3808
        %v3814 = vadd.f32 %v3781, %v3808
        %v3815 = vadd.f32 %v3782, %v3808
        %v3816 = vadd.f32 %v3783, %v3808
        %v3817 = vadd.f32 %v3784, %v3808
        %v3818 = vadd.f32 %v3785, %v3808
        %v3819 = vadd.f32 %v3786, %v3808
        %v3820 = vadd.f32 %v3787, %v3808
        %v3821 = vadd.f32 %v3788, %v3808
        %v3822 = vadd.f32 %v3789, %v3808
        %v3823 = vadd.f32 %v3790, %v3808
        %v3824 = vadd.f32 %v3791, %v3808
        %v3825 = vadd.f32 %v3792, %v3808
        %v3826 = vadd.f32 %v3793, %v3808
        %v3827 = vadd.f32 %v3794, %v3808
        %v3828 = vadd.f32 %v3795, %v3808
        %v3829 = vadd.f32 %v3796, %v3808
        %v3830 = vadd.f32 %v3797, %v3808
        %v3831 = vadd.f32 %v3798, %v3808
        %v3832 = vadd.f32 %v3799, %v3808
        %v3833 = vadd.f32 %v3800, %v3808
        %v3834 = vadd.f32 %v3801, %v3808
        %v3835 = vadd.f32 %v3802, %v3808
        %v3836 = vadd.f32 %v3803, %v3808
        %v3837 = vadd.f32 %v3804, %v3808
        %v3838 = vadd.f32 %v3805, %v3808
        %v3839 = vadd.f32 %v3806, %v3808
        %v3840 = vadd.f32 %v3807, %v3808
        %v3841 = vpack.c.bf16 %v3810, %v3809
        %v3842 = vpack.c.bf16 %v3812, %v3811
        %v3843 = vpack.c.bf16 %v3814, %v3813
        %v3844 = vpack.c.bf16 %v3816, %v3815
        %v3845 = vpack.c.bf16 %v3818, %v3817
        %v3846 = vpack.c.bf16 %v3820, %v3819
        %v3847 = vpack.c.bf16 %v3822, %v3821
        %v3848 = vpack.c.bf16 %v3824, %v3823
        %v3849 = vpack.c.bf16 %v3826, %v3825
        %v3850 = vpack.c.bf16 %v3828, %v3827
        %v3851 = vpack.c.bf16 %v3830, %v3829
        %v3852 = vpack.c.bf16 %v3832, %v3831
        %v3853 = vpack.c.bf16 %v3834, %v3833
        %v3854 = vpack.c.bf16 %v3836, %v3835
        %v3855 = vpack.c.bf16 %v3838, %v3837
        %v3856 = vpack.c.bf16 %v3840, %v3839
        %v3873 = vunpack.c.l.b16 %v3841
        %v3874 = vunpack.c.h.b16 %v3841
        %v3875 = vunpack.c.l.b16 %v3842
        %v3876 = vunpack.c.h.b16 %v3842
        %v3877 = vunpack.c.l.b16 %v3843
        %v3878 = vunpack.c.h.b16 %v3843
        %v3879 = vunpack.c.l.b16 %v3844
        %v3880 = vunpack.c.h.b16 %v3844
        %v3881 = vunpack.c.l.b16 %v3845
        %v3882 = vunpack.c.h.b16 %v3845
        %v3883 = vunpack.c.l.b16 %v3846
        %v3884 = vunpack.c.h.b16 %v3846
        %v3885 = vunpack.c.l.b16 %v3847
        %v3886 = vunpack.c.h.b16 %v3847
        %v3887 = vunpack.c.l.b16 %v3848
        %v3888 = vunpack.c.h.b16 %v3848
        %v3889 = vunpack.c.l.b16 %v3849
        %v3890 = vunpack.c.h.b16 %v3849
        %v3891 = vunpack.c.l.b16 %v3850
        %v3892 = vunpack.c.h.b16 %v3850
        %v3893 = vunpack.c.l.b16 %v3851
        %v3894 = vunpack.c.h.b16 %v3851
        %v3895 = vunpack.c.l.b16 %v3852
        %v3896 = vunpack.c.h.b16 %v3852
        %v3897 = vunpack.c.l.b16 %v3853
        %v3898 = vunpack.c.h.b16 %v3853
        %v3899 = vunpack.c.l.b16 %v3854
        %v3900 = vunpack.c.h.b16 %v3854
        %v3901 = vunpack.c.l.b16 %v3855
        %v3902 = vunpack.c.h.b16 %v3855
        %v3903 = vunpack.c.l.b16 %v3856
        %v3904 = vunpack.c.h.b16 %v3856
        %v3905 = vpack.c.b16 %v3873, %v3873
        %v3906 = vpack.c.b16 %v3874, %v3874
        %v3907 = vpack.c.b16 %v3875, %v3875
        %v3908 = vpack.c.b16 %v3876, %v3876
        %v3909 = vpack.c.b16 %v3877, %v3877
        %v3910 = vpack.c.b16 %v3878, %v3878
        %v3911 = vpack.c.b16 %v3879, %v3879
        %v3912 = vpack.c.b16 %v3880, %v3880
        %v3913 = vpack.c.b16 %v3881, %v3881
        %v3914 = vpack.c.b16 %v3882, %v3882
        %v3915 = vpack.c.b16 %v3883, %v3883
        %v3916 = vpack.c.b16 %v3884, %v3884
        %v3917 = vpack.c.b16 %v3885, %v3885
        %v3918 = vpack.c.b16 %v3886, %v3886
        %v3919 = vpack.c.b16 %v3887, %v3887
        %v3920 = vpack.c.b16 %v3888, %v3888
        %v3921 = vpack.c.b16 %v3889, %v3889
        %v3922 = vpack.c.b16 %v3890, %v3890
        %v3923 = vpack.c.b16 %v3891, %v3891
        %v3924 = vpack.c.b16 %v3892, %v3892
        %v3925 = vpack.c.b16 %v3893, %v3893
        %v3926 = vpack.c.b16 %v3894, %v3894
        %v3927 = vpack.c.b16 %v3895, %v3895
        %v3928 = vpack.c.b16 %v3896, %v3896
        %v3929 = vpack.c.b16 %v3897, %v3897
        %v3930 = vpack.c.b16 %v3898, %v3898
        %v3931 = vpack.c.b16 %v3899, %v3899
        %v3932 = vpack.c.b16 %v3900, %v3900
        %v3933 = vpack.c.b16 %v3901, %v3901
        %v3934 = vpack.c.b16 %v3902, %v3902
        %v3935 = vpack.c.b16 %v3903, %v3903
        %v3936 = vpack.c.b16 %v3904, %v3904
        %v3938 = vshrl.u32 %v3905, 16
        %v3940 = vrot.slane %v3938, 7
        %v3941 = vshll.u32 %v3905, 16
        %v3943 = vor.u32 %v3940, %v3941
        %v3944 = vrot.slane %v3940, 4
        %v3946 = vshrl.u32 %v3906, 16
        %v3948 = vrot.slane %v3946, 7
        %v3949 = vshll.u32 %v3906, 16
        %v3951 = vor.u32 %v3948, %v3949
        %v3952 = vsel %vm502, %v3944, %v3951
        %v3953 = vrot.slane %v3948, 4
        %v3955 = vshrl.u32 %v3907, 16
        %v3957 = vrot.slane %v3955, 7
        %v3958 = vshll.u32 %v3907, 16
        %v3960 = vor.u32 %v3957, %v3958
        %v3961 = vrot.slane %v3957, 4
        %v3963 = vshrl.u32 %v3908, 16
        %v3965 = vrot.slane %v3963, 7
        %v3966 = vshll.u32 %v3908, 16
        %v3968 = vor.u32 %v3965, %v3966
        %v3969 = vsel %vm502, %v3961, %v3968
        %v3970 = vrot.slane %v3965, 4
        %v3972 = vshrl.u32 %v3909, 16
        %v3974 = vrot.slane %v3972, 7
        %v3975 = vshll.u32 %v3909, 16
        %v3977 = vor.u32 %v3974, %v3975
        %v3978 = vrot.slane %v3974, 4
        %v3980 = vshrl.u32 %v3910, 16
        %v3982 = vrot.slane %v3980, 7
        %v3983 = vshll.u32 %v3910, 16
        %v3985 = vor.u32 %v3982, %v3983
        %v3986 = vsel %vm502, %v3978, %v3985
        %v3987 = vrot.slane %v3982, 4
        %v3989 = vshrl.u32 %v3911, 16
        %v3991 = vrot.slane %v3989, 7
        %v3992 = vshll.u32 %v3911, 16
        %v3994 = vor.u32 %v3991, %v3992
        %v3995 = vrot.slane %v3991, 4
        %v3997 = vshrl.u32 %v3912, 16
        %v3999 = vrot.slane %v3997, 7
        %v4000 = vshll.u32 %v3912, 16
        %v4002 = vor.u32 %v3999, %v4000
        %v4003 = vsel %vm502, %v3995, %v4002
        %v4004 = vrot.slane %v3999, 4
        %v4006 = vshrl.u32 %v3913, 16
        %v4008 = vrot.slane %v4006, 7
        %v4009 = vshll.u32 %v3913, 16
        %v4011 = vor.u32 %v4008, %v4009
        %v4012 = vrot.slane %v4008, 4
        %v4014 = vshrl.u32 %v3914, 16
        %v4016 = vrot.slane %v4014, 7
        %v4017 = vshll.u32 %v3914, 16
        %v4019 = vor.u32 %v4016, %v4017
        %v4020 = vsel %vm502, %v4012, %v4019
        %v4021 = vrot.slane %v4016, 4
        %v4023 = vshrl.u32 %v3915, 16
        %v4025 = vrot.slane %v4023, 7
        %v4026 = vshll.u32 %v3915, 16
        %v4028 = vor.u32 %v4025, %v4026
        %v4029 = vrot.slane %v4025, 4
        %v4031 = vshrl.u32 %v3916, 16
        %v4033 = vrot.slane %v4031, 7
        %v4034 = vshll.u32 %v3916, 16
        %v4036 = vor.u32 %v4033, %v4034
        %v4037 = vsel %vm502, %v4029, %v4036
        %v4038 = vrot.slane %v4033, 4
        %v4040 = vshrl.u32 %v3917, 16
        %v4042 = vrot.slane %v4040, 7
        %v4043 = vshll.u32 %v3917, 16
        %v4045 = vor.u32 %v4042, %v4043
        %v4046 = vrot.slane %v4042, 4
        %v4048 = vshrl.u32 %v3918, 16
        %v4050 = vrot.slane %v4048, 7
        %v4051 = vshll.u32 %v3918, 16
        %v4053 = vor.u32 %v4050, %v4051
        %v4054 = vsel %vm502, %v4046, %v4053
        %v4055 = vrot.slane %v4050, 4
        %v4057 = vshrl.u32 %v3919, 16
        %v4059 = vrot.slane %v4057, 7
        %v4060 = vshll.u32 %v3919, 16
        %v4062 = vor.u32 %v4059, %v4060
        %v4063 = vrot.slane %v4059, 4
        %v4065 = vshrl.u32 %v3920, 16
        %v4067 = vrot.slane %v4065, 7
        %v4068 = vshll.u32 %v3920, 16
        %v4070 = vor.u32 %v4067, %v4068
        %v4071 = vsel %vm502, %v4063, %v4070
        %v4072 = vrot.slane %v4067, 4
        %v4074 = vshrl.u32 %v3921, 16
        %v4076 = vrot.slane %v4074, 7
        %v4077 = vshll.u32 %v3921, 16
        %v4079 = vor.u32 %v4076, %v4077
        %v4080 = vrot.slane %v4076, 4
        %v4082 = vshrl.u32 %v3922, 16
        %v4084 = vrot.slane %v4082, 7
        %v4085 = vshll.u32 %v3922, 16
        %v4087 = vor.u32 %v4084, %v4085
        %v4088 = vsel %vm502, %v4080, %v4087
        %v4089 = vrot.slane %v4084, 4
        %v4091 = vshrl.u32 %v3923, 16
        %v4093 = vrot.slane %v4091, 7
        %v4094 = vshll.u32 %v3923, 16
        %v4096 = vor.u32 %v4093, %v4094
        %v4097 = vrot.slane %v4093, 4
        %v4099 = vshrl.u32 %v3924, 16
        %v4101 = vrot.slane %v4099, 7
        %v4102 = vshll.u32 %v3924, 16
        %v4104 = vor.u32 %v4101, %v4102
        %v4105 = vsel %vm502, %v4097, %v4104
        %v4106 = vrot.slane %v4101, 4
        %v4108 = vshrl.u32 %v3925, 16
        %v4110 = vrot.slane %v4108, 7
        %v4111 = vshll.u32 %v3925, 16
        %v4113 = vor.u32 %v4110, %v4111
        %v4114 = vrot.slane %v4110, 4
        %v4116 = vshrl.u32 %v3926, 16
        %v4118 = vrot.slane %v4116, 7
        %v4119 = vshll.u32 %v3926, 16
        %v4121 = vor.u32 %v4118, %v4119
        %v4122 = vsel %vm502, %v4114, %v4121
        %v4123 = vrot.slane %v4118, 4
        %v4125 = vshrl.u32 %v3927, 16
        %v4127 = vrot.slane %v4125, 7
        %v4128 = vshll.u32 %v3927, 16
        %v4130 = vor.u32 %v4127, %v4128
        %v4131 = vrot.slane %v4127, 4
        %v4133 = vshrl.u32 %v3928, 16
        %v4135 = vrot.slane %v4133, 7
        %v4136 = vshll.u32 %v3928, 16
        %v4138 = vor.u32 %v4135, %v4136
        %v4139 = vsel %vm502, %v4131, %v4138
        %v4140 = vrot.slane %v4135, 4
        %v4142 = vshrl.u32 %v3929, 16
        %v4144 = vrot.slane %v4142, 7
        %v4145 = vshll.u32 %v3929, 16
        %v4147 = vor.u32 %v4144, %v4145
        %v4148 = vrot.slane %v4144, 4
        %v4150 = vshrl.u32 %v3930, 16
        %v4152 = vrot.slane %v4150, 7
        %v4153 = vshll.u32 %v3930, 16
        %v4155 = vor.u32 %v4152, %v4153
        %v4156 = vsel %vm502, %v4148, %v4155
        %v4157 = vrot.slane %v4152, 4
        %v4159 = vshrl.u32 %v3931, 16
        %v4161 = vrot.slane %v4159, 7
        %v4162 = vshll.u32 %v3931, 16
        %v4164 = vor.u32 %v4161, %v4162
        %v4165 = vrot.slane %v4161, 4
        %v4167 = vshrl.u32 %v3932, 16
        %v4169 = vrot.slane %v4167, 7
        %v4170 = vshll.u32 %v3932, 16
        %v4172 = vor.u32 %v4169, %v4170
        %v4173 = vsel %vm502, %v4165, %v4172
        %v4174 = vrot.slane %v4169, 4
        %v4176 = vshrl.u32 %v3933, 16
        %v4178 = vrot.slane %v4176, 7
        %v4179 = vshll.u32 %v3933, 16
        %v4181 = vor.u32 %v4178, %v4179
        %v4182 = vrot.slane %v4178, 4
        %v4184 = vshrl.u32 %v3934, 16
        %v4186 = vrot.slane %v4184, 7
        %v4187 = vshll.u32 %v3934, 16
        %v4189 = vor.u32 %v4186, %v4187
        %v4190 = vsel %vm502, %v4182, %v4189
        %v4191 = vrot.slane %v4186, 4
        %v4193 = vshrl.u32 %v3935, 16
        %v4195 = vrot.slane %v4193, 7
        %v4196 = vshll.u32 %v3935, 16
        %v4198 = vor.u32 %v4195, %v4196
        %v4199 = vrot.slane %v4195, 4
        %v4201 = vshrl.u32 %v3936, 16
        %v4203 = vrot.slane %v4201, 7
        %v4204 = vshll.u32 %v3936, 16
        %v4206 = vor.u32 %v4203, %v4204
        %v4207 = vsel %vm502, %v4199, %v4206
        %v4208 = vrot.slane %v4203, 4
        %v4257 = vld [vmem:[%s823] sm:$0xf]
        %v4258 = vsel %vm825, %v3943, %v4257
        %4259 = vst [vmem:[%s823] sm:$0xf] %v4258
        %4260 = vst.msk [vmem:[%s823 + $0x4] sm:$0xf] %vm218, %v3952
        %v4261 = vld [vmem:[%s823 + $0x8] sm:$0x1]
        %v4262 = vsel %vm229, %v3953, %v4261
        %4263 = vst [vmem:[%s823 + $0x8] sm:$0x1] %v4262
        %v4264 = vld [vmem:[%s823 + $0xc] sm:$0xf]
        %v4265 = vsel %vm825, %v3960, %v4264
        %4266 = vst [vmem:[%s823 + $0xc] sm:$0xf] %v4265
        %4267 = vst.msk [vmem:[%s823 + $0x10] sm:$0xf] %vm218, %v3969
        %v4268 = vld [vmem:[%s823 + $0x14] sm:$0x1]
        %v4269 = vsel %vm229, %v3970, %v4268
        %4270 = vst [vmem:[%s823 + $0x14] sm:$0x1] %v4269
        %v4271 = vld [vmem:[%s823 + $0x18] sm:$0xf]
        %v4272 = vsel %vm825, %v3977, %v4271
        %4273 = vst [vmem:[%s823 + $0x18] sm:$0xf] %v4272
        %4274 = vst.msk [vmem:[%s823 + $0x1c] sm:$0xf] %vm218, %v3986
        %v4275 = vld [vmem:[%s823 + $0x20] sm:$0x1]
        %v4276 = vsel %vm229, %v3987, %v4275
        %4277 = vst [vmem:[%s823 + $0x20] sm:$0x1] %v4276
        %v4278 = vld [vmem:[%s823 + $0x24] sm:$0xf]
        %v4279 = vsel %vm825, %v3994, %v4278
        %4280 = vst [vmem:[%s823 + $0x24] sm:$0xf] %v4279
        %4281 = vst.msk [vmem:[%s823 + $0x28] sm:$0xf] %vm218, %v4003
        %v4282 = vld [vmem:[%s823 + $0x2c] sm:$0x1]
        %v4283 = vsel %vm229, %v4004, %v4282
        %4284 = vst [vmem:[%s823 + $0x2c] sm:$0x1] %v4283
        %v4285 = vld [vmem:[%s823 + $0x30] sm:$0xf]
        %v4286 = vsel %vm825, %v4011, %v4285
        %4287 = vst [vmem:[%s823 + $0x30] sm:$0xf] %v4286
        %4288 = vst.msk [vmem:[%s823 + $0x34] sm:$0xf] %vm218, %v4020
        %v4289 = vld [vmem:[%s823 + $0x38] sm:$0x1]
        %v4290 = vsel %vm229, %v4021, %v4289
        %4291 = vst [vmem:[%s823 + $0x38] sm:$0x1] %v4290
        %v4292 = vld [vmem:[%s823 + $0x3c] sm:$0xf]
        %v4293 = vsel %vm825, %v4028, %v4292
        %4294 = vst [vmem:[%s823 + $0x3c] sm:$0xf] %v4293
        %4295 = vst.msk [vmem:[%s823 + $0x40] sm:$0xf] %vm218, %v4037
        %v4296 = vld [vmem:[%s823 + $0x44] sm:$0x1]
        %v4297 = vsel %vm229, %v4038, %v4296
        %4298 = vst [vmem:[%s823 + $0x44] sm:$0x1] %v4297
        %v4299 = vld [vmem:[%s823 + $0x48] sm:$0xf]
        %v4300 = vsel %vm825, %v4045, %v4299
        %4301 = vst [vmem:[%s823 + $0x48] sm:$0xf] %v4300
        %4302 = vst.msk [vmem:[%s823 + $0x4c] sm:$0xf] %vm218, %v4054
        %v4303 = vld [vmem:[%s823 + $0x50] sm:$0x1]
        %v4304 = vsel %vm229, %v4055, %v4303
        %4305 = vst [vmem:[%s823 + $0x50] sm:$0x1] %v4304
        %v4306 = vld [vmem:[%s823 + $0x54] sm:$0xf]
        %v4307 = vsel %vm825, %v4062, %v4306
        %4308 = vst [vmem:[%s823 + $0x54] sm:$0xf] %v4307
        %4309 = vst.msk [vmem:[%s823 + $0x58] sm:$0xf] %vm218, %v4071
        %v4310 = vld [vmem:[%s823 + $0x5c] sm:$0x1]
        %v4311 = vsel %vm229, %v4072, %v4310
        %4312 = vst [vmem:[%s823 + $0x5c] sm:$0x1] %v4311
        %v4313 = vld [vmem:[%s823 + $0x60] sm:$0xf]
        %v4314 = vsel %vm825, %v4079, %v4313
        %4315 = vst [vmem:[%s823 + $0x60] sm:$0xf] %v4314
        %4316 = vst.msk [vmem:[%s823 + $0x64] sm:$0xf] %vm218, %v4088
        %v4317 = vld [vmem:[%s823 + $0x68] sm:$0x1]
        %v4318 = vsel %vm229, %v4089, %v4317
        %4319 = vst [vmem:[%s823 + $0x68] sm:$0x1] %v4318
        %v4320 = vld [vmem:[%s823 + $0x6c] sm:$0xf]
        %v4321 = vsel %vm825, %v4096, %v4320
        %4322 = vst [vmem:[%s823 + $0x6c] sm:$0xf] %v4321
        %4323 = vst.msk [vmem:[%s823 + $0x70] sm:$0xf] %vm218, %v4105
        %v4324 = vld [vmem:[%s823 + $0x74] sm:$0x1]
        %v4325 = vsel %vm229, %v4106, %v4324
        %4326 = vst [vmem:[%s823 + $0x74] sm:$0x1] %v4325
        %v4327 = vld [vmem:[%s823 + $0x78] sm:$0xf]
        %v4328 = vsel %vm825, %v4113, %v4327
        %4329 = vst [vmem:[%s823 + $0x78] sm:$0xf] %v4328
        %4330 = vst.msk [vmem:[%s823 + $0x7c] sm:$0xf] %vm218, %v4122
        %v4331 = vld [vmem:[%s823 + $0x80] sm:$0x1]
        %v4332 = vsel %vm229, %v4123, %v4331
        %4333 = vst [vmem:[%s823 + $0x80] sm:$0x1] %v4332
        %v4334 = vld [vmem:[%s823 + $0x84] sm:$0xf]
        %v4335 = vsel %vm825, %v4130, %v4334
        %4336 = vst [vmem:[%s823 + $0x84] sm:$0xf] %v4335
        %4337 = vst.msk [vmem:[%s823 + $0x88] sm:$0xf] %vm218, %v4139
        %v4338 = vld [vmem:[%s823 + $0x8c] sm:$0x1]
        %v4339 = vsel %vm229, %v4140, %v4338
        %4340 = vst [vmem:[%s823 + $0x8c] sm:$0x1] %v4339
        %v4341 = vld [vmem:[%s823 + $0x90] sm:$0xf]
        %v4342 = vsel %vm825, %v4147, %v4341
        %4343 = vst [vmem:[%s823 + $0x90] sm:$0xf] %v4342
        %4344 = vst.msk [vmem:[%s823 + $0x94] sm:$0xf] %vm218, %v4156
        %v4345 = vld [vmem:[%s823 + $0x98] sm:$0x1]
        %v4346 = vsel %vm229, %v4157, %v4345
        %4347 = vst [vmem:[%s823 + $0x98] sm:$0x1] %v4346
        %v4348 = vld [vmem:[%s823 + $0x9c] sm:$0xf]
        %v4349 = vsel %vm825, %v4164, %v4348
        %4350 = vst [vmem:[%s823 + $0x9c] sm:$0xf] %v4349
        %4351 = vst.msk [vmem:[%s823 + $0xa0] sm:$0xf] %vm218, %v4173
        %v4352 = vld [vmem:[%s823 + $0xa4] sm:$0x1]
        %v4353 = vsel %vm229, %v4174, %v4352
        %4354 = vst [vmem:[%s823 + $0xa4] sm:$0x1] %v4353
        %v4355 = vld [vmem:[%s823 + $0xa8] sm:$0xf]
        %v4356 = vsel %vm825, %v4181, %v4355
        %4357 = vst [vmem:[%s823 + $0xa8] sm:$0xf] %v4356
        %4358 = vst.msk [vmem:[%s823 + $0xac] sm:$0xf] %vm218, %v4190
        %v4359 = vld [vmem:[%s823 + $0xb0] sm:$0x1]
        %v4360 = vsel %vm229, %v4191, %v4359
        %4361 = vst [vmem:[%s823 + $0xb0] sm:$0x1] %v4360
        %v4362 = vld [vmem:[%s823 + $0xb4] sm:$0xf]
        %v4363 = vsel %vm825, %v4198, %v4362
        %4364 = vst [vmem:[%s823 + $0xb4] sm:$0xf] %v4363
        %4365 = vst.msk [vmem:[%s823 + $0xb8] sm:$0xf] %vm218, %v4207
        %v4366 = vld [vmem:[%s823 + $0xbc] sm:$0x1]
        %v4367 = vsel %vm229, %v4208, %v4366
        %4368 = vst [vmem:[%s823 + $0xbc] sm:$0x1] %v4367
        %v4369 = vld [vmem:[#allocation2] sm:$0xf]
        %v4370 = vld [vmem:[#allocation2 + $0x4] sm:$0xf]
        %v4371 = vld [vmem:[#allocation2 + $0xc] sm:$0xf]
        %v4372 = vld [vmem:[#allocation2 + $0x10] sm:$0xf]
        %v4373 = vld [vmem:[#allocation2 + $0x18] sm:$0xf]
        %v4374 = vld [vmem:[#allocation2 + $0x1c] sm:$0xf]
        %v4375 = vld [vmem:[#allocation2 + $0x24] sm:$0xf]
        %v4376 = vld [vmem:[#allocation2 + $0x28] sm:$0xf]
        %v4377 = vld [vmem:[#allocation2 + $0x30] sm:$0xf]
        %v4378 = vld [vmem:[#allocation2 + $0x34] sm:$0xf]
        %v4379 = vld [vmem:[#allocation2 + $0x3c] sm:$0xf]
        %v4380 = vld [vmem:[#allocation2 + $0x40] sm:$0xf]
        %v4381 = vld [vmem:[#allocation2 + $0x48] sm:$0xf]
        %v4382 = vld [vmem:[#allocation2 + $0x4c] sm:$0xf]
        %v4383 = vld [vmem:[#allocation2 + $0x54] sm:$0xf]
        %v4384 = vld [vmem:[#allocation2 + $0x58] sm:$0xf]
        %v4385 = vld [vmem:[#allocation2 + $0x60] sm:$0xf]
        %v4386 = vld [vmem:[#allocation2 + $0x64] sm:$0xf]
        %v4387 = vld [vmem:[#allocation2 + $0x6c] sm:$0xf]
        %v4388 = vld [vmem:[#allocation2 + $0x70] sm:$0xf]
        %v4389 = vld [vmem:[#allocation2 + $0x78] sm:$0xf]
        %v4390 = vld [vmem:[#allocation2 + $0x7c] sm:$0xf]
        %v4391 = vld [vmem:[#allocation2 + $0x84] sm:$0xf]
        %v4392 = vld [vmem:[#allocation2 + $0x88] sm:$0xf]
        %v4393 = vld [vmem:[#allocation2 + $0x90] sm:$0xf]
        %v4394 = vld [vmem:[#allocation2 + $0x94] sm:$0xf]
        %v4395 = vld [vmem:[#allocation2 + $0x9c] sm:$0xf]
        %v4396 = vld [vmem:[#allocation2 + $0xa0] sm:$0xf]
        %v4397 = vld [vmem:[#allocation2 + $0xa8] sm:$0xf]
        %v4398 = vld [vmem:[#allocation2 + $0xac] sm:$0xf]
        %v4399 = vld [vmem:[#allocation2 + $0xb4] sm:$0xf]
        %v4400 = vld [vmem:[#allocation2 + $0xb8] sm:$0xf]
        %v4401 = vld [vmem:[#allocation2 + $0xc0] sm:$0xf]
        %v4402 = vld [vmem:[#allocation2 + $0xc4] sm:$0xf]
        %v4403 = vld [vmem:[#allocation2 + $0xcc] sm:$0xf]
        %v4404 = vld [vmem:[#allocation2 + $0xd0] sm:$0xf]
        %v4405 = vld [vmem:[%s2] sm:$0x3]
        %s4406 = scalar_lea.vmem %s2, 6
        %v4407 = vld [vmem:[%s4406] sm:$0x3]
        %v4440 = vunpack.c.l.b16 %v4371
        %v4441 = vunpack.c.l.b16 %v4372
        %v4442 = vunpack.c.l.b16 %v4373
        %v4443 = vunpack.c.l.b16 %v4374
        %v4444 = vunpack.c.l.b16 %v4375
        %v4445 = vunpack.c.l.b16 %v4376
        %v4446 = vunpack.c.l.b16 %v4377
        %v4447 = vunpack.c.l.b16 %v4378
        %v4448 = vunpack.c.l.b16 %v4379
        %v4449 = vunpack.c.l.b16 %v4380
        %v4450 = vunpack.c.l.b16 %v4381
        %v4451 = vunpack.c.l.b16 %v4382
        %v4452 = vunpack.c.l.b16 %v4383
        %v4453 = vunpack.c.l.b16 %v4384
        %v4454 = vunpack.c.l.b16 %v4385
        %v4455 = vunpack.c.l.b16 %v4386
        %v4456 = vunpack.c.l.b16 %v4387
        %v4457 = vunpack.c.l.b16 %v4388
        %v4458 = vunpack.c.l.b16 %v4389
        %v4459 = vunpack.c.l.b16 %v4390
        %v4460 = vunpack.c.l.b16 %v4391
        %v4461 = vunpack.c.l.b16 %v4392
        %v4462 = vunpack.c.l.b16 %v4393
        %v4463 = vunpack.c.l.b16 %v4394
        %v4464 = vunpack.c.l.b16 %v4395
        %v4465 = vunpack.c.l.b16 %v4396
        %v4466 = vunpack.c.l.b16 %v4397
        %v4467 = vunpack.c.l.b16 %v4398
        %v4468 = vunpack.c.l.b16 %v4399
        %v4469 = vunpack.c.l.b16 %v4400
        %v4470 = vunpack.c.l.b16 %v4401
        %v4471 = vunpack.c.l.b16 %v4402
        %v4472 = vpack.c.b16 %v4441, %v4440
        %v4473 = vpack.c.b16 %v4443, %v4442
        %v4474 = vpack.c.b16 %v4445, %v4444
        %v4475 = vpack.c.b16 %v4447, %v4446
        %v4476 = vpack.c.b16 %v4449, %v4448
        %v4477 = vpack.c.b16 %v4451, %v4450
        %v4478 = vpack.c.b16 %v4453, %v4452
        %v4479 = vpack.c.b16 %v4455, %v4454
        %v4480 = vpack.c.b16 %v4457, %v4456
        %v4481 = vpack.c.b16 %v4459, %v4458
        %v4482 = vpack.c.b16 %v4461, %v4460
        %v4483 = vpack.c.b16 %v4463, %v4462
        %v4484 = vpack.c.b16 %v4465, %v4464
        %v4485 = vpack.c.b16 %v4467, %v4466
        %v4486 = vpack.c.b16 %v4469, %v4468
        %v4487 = vpack.c.b16 %v4471, %v4470
        %v4489 = vsel %vm1057, %v4472, 0
        %v4492 = vsel %vm1057, %v4473, 0
        %v4495 = vsel %vm1057, %v4474, 0
        %v4498 = vsel %vm1057, %v4475, 0
        %v4501 = vsel %vm1057, %v4476, 0
        %v4504 = vsel %vm1057, %v4477, 0
        %v4507 = vsel %vm1057, %v4478, 0
        %v4510 = vsel %vm1057, %v4479, 0
        %v4513 = vsel %vm1057, %v4480, 0
        %v4516 = vsel %vm1057, %v4481, 0
        %v4519 = vsel %vm1057, %v4482, 0
        %v4522 = vsel %vm1057, %v4483, 0
        %v4525 = vsel %vm1057, %v4484, 0
        %v4528 = vsel %vm1057, %v4485, 0
        %v4531 = vsel %vm1057, %v4486, 0
        %v4534 = vsel %vm1057, %v4487, 0
        %v4537 = vsel %vm1106, %v4407, 0
        %4539 = vmatprep.subr.bf16.mxu0 0
        %4540 = vmatpush1.bf16.msra.mxu0 %v4537
        %4541 = vmatprep.subr.bf16.mxu0 0
        %4542 = vmatpush1.bf16.msra.mxu0 0
        %4543 = vmatprep.subr.bf16.mxu0 0
        %4544 = vmatpush1.bf16.msra.mxu0 0
        %4545 = vmatprep.subr.bf16.mxu0 0
        %4546 = vmatpush1.bf16.msra.mxu0 0
        %4547 = vmatprep.subr.bf16.mxu0 0
        %4548 = vmatpush1.bf16.msra.mxu0 0
        %4549 = vmatprep.subr.bf16.mxu0 0
        %4550 = vmatpush1.bf16.msra.mxu0 0
        %4551 = vmatprep.subr.bf16.mxu0 0
        %4552 = vmatpush1.bf16.msra.mxu0 0
        %4553 = vmatprep.subr.bf16.mxu0 0
        %4554 = vmatpush1.bf16.msra.mxu0 0
        %4555 = vmatprep.subr.bf16.mxu0 0
        %4556 = vmatpush1.bf16.msra.mxu0 0
        %4557 = vmatprep.subr.bf16.mxu0 0
        %4558 = vmatpush1.bf16.msra.mxu0 0
        %4559 = vmatprep.subr.bf16.mxu0 0
        %4560 = vmatpush1.bf16.msra.mxu0 0
        %4561 = vmatprep.subr.bf16.mxu0 0
        %4562 = vmatpush1.bf16.msra.mxu0 0
        %4563 = vmatprep.subr.bf16.mxu0 0
        %4564 = vmatpush1.bf16.msra.mxu0 0
        %4565 = vmatprep.subr.bf16.mxu0 0
        %4566 = vmatpush1.bf16.msra.mxu0 0
        %4567 = vmatprep.subr.bf16.mxu0 0
        %4568 = vmatpush1.bf16.msra.mxu0 0
        %4569 = vmatprep.subr.bf16.mxu0 0
        %4570 = vmatpush1.bf16.msra.mxu0 0
        %4571 = vmatprep.mubr.bf16.mxu0 0
        %4572 = vmatmul.mubr.bf16.gmra.mrb[0].mxu0 %v4489
        %v4573 = vpop.f32.mrb[0].mxu0
        %v4574 = vadd.f32 0.0, %v4573
        %v4575 = vpop.f32.mrb[0].mxu0
        %v4576 = vpop.f32.mrb[0].mxu0
        %v4577 = vadd.f32 0.0, %v4576
        %v4578 = vpop.f32.mrb[0].mxu0
        %4579 = vmatprep.mubr.bf16.mxu0 0
        %4580 = vmatmul.mubr.bf16.gmra.mrb[0].mxu0 %v4492
        %v4581 = vpop.f32.mrb[0].mxu0
        %v4582 = vadd.f32 0.0, %v4581
        %v4583 = vpop.f32.mrb[0].mxu0
        %v4584 = vpop.f32.mrb[0].mxu0
        %v4585 = vadd.f32 0.0, %v4584
        %v4586 = vpop.f32.mrb[0].mxu0
        %4587 = vmatprep.mubr.bf16.mxu0 0
        %4588 = vmatmul.mubr.bf16.gmra.mrb[0].mxu0 %v4495
        %v4589 = vpop.f32.mrb[0].mxu0
        %v4590 = vadd.f32 0.0, %v4589
        %v4591 = vpop.f32.mrb[0].mxu0
        %v4592 = vpop.f32.mrb[0].mxu0
        %v4593 = vadd.f32 0.0, %v4592
        %v4594 = vpop.f32.mrb[0].mxu0
        %4595 = vmatprep.mubr.bf16.mxu0 0
        %4596 = vmatmul.mubr.bf16.gmra.mrb[0].mxu0 %v4498
        %v4597 = vpop.f32.mrb[0].mxu0
        %v4598 = vadd.f32 0.0, %v4597
        %v4599 = vpop.f32.mrb[0].mxu0
        %v4600 = vpop.f32.mrb[0].mxu0
        %v4601 = vadd.f32 0.0, %v4600
        %v4602 = vpop.f32.mrb[0].mxu0
        %4603 = vmatprep.mubr.bf16.mxu0 0
        %4604 = vmatmul.mubr.bf16.gmra.mrb[0].mxu0 %v4501
        %v4605 = vpop.f32.mrb[0].mxu0
        %v4606 = vadd.f32 0.0, %v4605
        %v4607 = vpop.f32.mrb[0].mxu0
        %v4608 = vpop.f32.mrb[0].mxu0
        %v4609 = vadd.f32 0.0, %v4608
        %v4610 = vpop.f32.mrb[0].mxu0
        %4611 = vmatprep.mubr.bf16.mxu0 0
        %4612 = vmatmul.mubr.bf16.gmra.mrb[0].mxu0 %v4504
        %v4613 = vpop.f32.mrb[0].mxu0
        %v4614 = vadd.f32 0.0, %v4613
        %v4615 = vpop.f32.mrb[0].mxu0
        %v4616 = vpop.f32.mrb[0].mxu0
        %v4617 = vadd.f32 0.0, %v4616
        %v4618 = vpop.f32.mrb[0].mxu0
        %4619 = vmatprep.mubr.bf16.mxu0 0
        %4620 = vmatmul.mubr.bf16.gmra.mrb[0].mxu0 %v4507
        %v4621 = vpop.f32.mrb[0].mxu0
        %v4622 = vadd.f32 0.0, %v4621
        %v4623 = vpop.f32.mrb[0].mxu0
        %v4624 = vpop.f32.mrb[0].mxu0
        %v4625 = vadd.f32 0.0, %v4624
        %v4626 = vpop.f32.mrb[0].mxu0
        %4627 = vmatprep.mubr.bf16.mxu0 0
        %4628 = vmatmul.mubr.bf16.gmra.mrb[0].mxu0 %v4510
        %v4629 = vpop.f32.mrb[0].mxu0
        %v4630 = vadd.f32 0.0, %v4629
        %v4631 = vpop.f32.mrb[0].mxu0
        %v4632 = vpop.f32.mrb[0].mxu0
        %v4633 = vadd.f32 0.0, %v4632
        %v4634 = vpop.f32.mrb[0].mxu0
        %4635 = vmatprep.mubr.bf16.mxu0 0
        %4636 = vmatmul.mubr.bf16.gmra.mrb[0].mxu0 %v4513
        %v4637 = vpop.f32.mrb[0].mxu0
        %v4638 = vadd.f32 0.0, %v4637
        %v4639 = vpop.f32.mrb[0].mxu0
        %v4640 = vpop.f32.mrb[0].mxu0
        %v4641 = vadd.f32 0.0, %v4640
        %v4642 = vpop.f32.mrb[0].mxu0
        %4643 = vmatprep.mubr.bf16.mxu0 0
        %4644 = vmatmul.mubr.bf16.gmra.mrb[0].mxu0 %v4516
        %v4645 = vpop.f32.mrb[0].mxu0
        %v4646 = vadd.f32 0.0, %v4645
        %v4647 = vpop.f32.mrb[0].mxu0
        %v4648 = vpop.f32.mrb[0].mxu0
        %v4649 = vadd.f32 0.0, %v4648
        %v4650 = vpop.f32.mrb[0].mxu0
        %4651 = vmatprep.mubr.bf16.mxu0 0
        %4652 = vmatmul.mubr.bf16.gmra.mrb[0].mxu0 %v4519
        %v4653 = vpop.f32.mrb[0].mxu0
        %v4654 = vadd.f32 0.0, %v4653
        %v4655 = vpop.f32.mrb[0].mxu0
        %v4656 = vpop.f32.mrb[0].mxu0
        %v4657 = vadd.f32 0.0, %v4656
        %v4658 = vpop.f32.mrb[0].mxu0
        %4659 = vmatprep.mubr.bf16.mxu0 0
        %4660 = vmatmul.mubr.bf16.gmra.mrb[0].mxu0 %v4522
        %v4661 = vpop.f32.mrb[0].mxu0
        %v4662 = vadd.f32 0.0, %v4661
        %v4663 = vpop.f32.mrb[0].mxu0
        %v4664 = vpop.f32.mrb[0].mxu0
        %v4665 = vadd.f32 0.0, %v4664
        %v4666 = vpop.f32.mrb[0].mxu0
        %4667 = vmatprep.mubr.bf16.mxu0 0
        %4668 = vmatmul.mubr.bf16.gmra.mrb[0].mxu0 %v4525
        %v4669 = vpop.f32.mrb[0].mxu0
        %v4670 = vadd.f32 0.0, %v4669
        %v4671 = vpop.f32.mrb[0].mxu0
        %v4672 = vpop.f32.mrb[0].mxu0
        %v4673 = vadd.f32 0.0, %v4672
        %v4674 = vpop.f32.mrb[0].mxu0
        %4675 = vmatprep.mubr.bf16.mxu0 0
        %4676 = vmatmul.mubr.bf16.gmra.mrb[0].mxu0 %v4528
        %v4677 = vpop.f32.mrb[0].mxu0
        %v4678 = vadd.f32 0.0, %v4677
        %v4679 = vpop.f32.mrb[0].mxu0
        %v4680 = vpop.f32.mrb[0].mxu0
        %v4681 = vadd.f32 0.0, %v4680
        %v4682 = vpop.f32.mrb[0].mxu0
        %4683 = vmatprep.mubr.bf16.mxu0 0
        %4684 = vmatmul.mubr.bf16.gmra.mrb[0].mxu0 %v4531
        %v4685 = vpop.f32.mrb[0].mxu0
        %v4686 = vadd.f32 0.0, %v4685
        %v4687 = vpop.f32.mrb[0].mxu0
        %v4688 = vpop.f32.mrb[0].mxu0
        %v4689 = vadd.f32 0.0, %v4688
        %v4690 = vpop.f32.mrb[0].mxu0
        %4691 = vmatprep.mubr.bf16.mxu0 0
        %4692 = vmatmul.mubr.bf16.gmra.mrb[0].mxu0 %v4534
        %v4693 = vpop.f32.mrb[0].mxu0
        %v4694 = vadd.f32 0.0, %v4693
        %v4695 = vpop.f32.mrb[0].mxu0
        %v4696 = vpop.f32.mrb[0].mxu0
        %v4697 = vadd.f32 0.0, %v4696
        %v4698 = vpop.f32.mrb[0].mxu0
        %4699 = vdwg.mxu0
        %v4702 = vunpack.c.l.b16 %v4369
        %v4703 = vunpack.c.l.b16 %v4370
        %v4704 = vpack.c.b16 %v4703, %v4702
        %v4706 = vsel %vm1057, %v4704, 0
        %v4709 = vsel %vm1106, %v4405, 0
        %4711 = vmatprep.subr.bf16.mxu0 0
        %4712 = vmatpush1.bf16.msra.mxu0 %v4709
        %4713 = vmatprep.subr.bf16.mxu0 0
        %4714 = vmatpush1.bf16.msra.mxu0 0
        %4715 = vmatprep.subr.bf16.mxu0 0
        %4716 = vmatpush1.bf16.msra.mxu0 0
        %4717 = vmatprep.subr.bf16.mxu0 0
        %4718 = vmatpush1.bf16.msra.mxu0 0
        %4719 = vmatprep.subr.bf16.mxu0 0
        %4720 = vmatpush1.bf16.msra.mxu0 0
        %4721 = vmatprep.subr.bf16.mxu0 0
        %4722 = vmatpush1.bf16.msra.mxu0 0
        %4723 = vmatprep.subr.bf16.mxu0 0
        %4724 = vmatpush1.bf16.msra.mxu0 0
        %4725 = vmatprep.subr.bf16.mxu0 0
        %4726 = vmatpush1.bf16.msra.mxu0 0
        %4727 = vmatprep.subr.bf16.mxu0 0
        %4728 = vmatpush1.bf16.msra.mxu0 0
        %4729 = vmatprep.subr.bf16.mxu0 0
        %4730 = vmatpush1.bf16.msra.mxu0 0
        %4731 = vmatprep.subr.bf16.mxu0 0
        %4732 = vmatpush1.bf16.msra.mxu0 0
        %4733 = vmatprep.subr.bf16.mxu0 0
        %4734 = vmatpush1.bf16.msra.mxu0 0
        %4735 = vmatprep.subr.bf16.mxu0 0
        %4736 = vmatpush1.bf16.msra.mxu0 0
        %4737 = vmatprep.subr.bf16.mxu0 0
        %4738 = vmatpush1.bf16.msra.mxu0 0
        %4739 = vmatprep.subr.bf16.mxu0 0
        %4740 = vmatpush1.bf16.msra.mxu0 0
        %4741 = vmatprep.subr.bf16.mxu0 0
        %4742 = vmatpush1.bf16.msra.mxu0 0
        %4743 = vmatprep.mubr.bf16.mxu0 0
        %4744 = vmatmul.mubr.bf16.gmra.mrb[0].mxu0 %v4706
        %v4745 = vpop.f32.mrb[0].mxu0
        %v4746 = vadd.f32 %v4574, %v4745
        %v4747 = vpop.f32.mrb[0].mxu0
        %v4748 = vpop.f32.mrb[0].mxu0
        %v4749 = vadd.f32 %v4577, %v4748
        %v4750 = vpop.f32.mrb[0].mxu0
        %4751 = vmatprep.mubr.bf16.mxu0 0
        %4752 = vmatmul.mubr.bf16.gmra.mrb[0].mxu0 %v4489
        %v4753 = vpop.f32.mrb[0].mxu0
        %v4754 = vadd.f32 %v4582, %v4753
        %v4755 = vpop.f32.mrb[0].mxu0
        %v4756 = vpop.f32.mrb[0].mxu0
        %v4757 = vadd.f32 %v4585, %v4756
        %v4758 = vpop.f32.mrb[0].mxu0
        %4759 = vmatprep.mubr.bf16.mxu0 0
        %4760 = vmatmul.mubr.bf16.gmra.mrb[0].mxu0 %v4492
        %v4761 = vpop.f32.mrb[0].mxu0
        %v4762 = vadd.f32 %v4590, %v4761
        %v4763 = vpop.f32.mrb[0].mxu0
        %v4764 = vpop.f32.mrb[0].mxu0
        %v4765 = vadd.f32 %v4593, %v4764
        %v4766 = vpop.f32.mrb[0].mxu0
        %4767 = vmatprep.mubr.bf16.mxu0 0
        %4768 = vmatmul.mubr.bf16.gmra.mrb[0].mxu0 %v4495
        %v4769 = vpop.f32.mrb[0].mxu0
        %v4770 = vadd.f32 %v4598, %v4769
        %v4771 = vpop.f32.mrb[0].mxu0
        %v4772 = vpop.f32.mrb[0].mxu0
        %v4773 = vadd.f32 %v4601, %v4772
        %v4774 = vpop.f32.mrb[0].mxu0
        %4775 = vmatprep.mubr.bf16.mxu0 0
        %4776 = vmatmul.mubr.bf16.gmra.mrb[0].mxu0 %v4498
        %v4777 = vpop.f32.mrb[0].mxu0
        %v4778 = vadd.f32 %v4606, %v4777
        %v4779 = vpop.f32.mrb[0].mxu0
        %v4780 = vpop.f32.mrb[0].mxu0
        %v4781 = vadd.f32 %v4609, %v4780
        %v4782 = vpop.f32.mrb[0].mxu0
        %4783 = vmatprep.mubr.bf16.mxu0 0
        %4784 = vmatmul.mubr.bf16.gmra.mrb[0].mxu0 %v4501
        %v4785 = vpop.f32.mrb[0].mxu0
        %v4786 = vadd.f32 %v4614, %v4785
        %v4787 = vpop.f32.mrb[0].mxu0
        %v4788 = vpop.f32.mrb[0].mxu0
        %v4789 = vadd.f32 %v4617, %v4788
        %v4790 = vpop.f32.mrb[0].mxu0
        %4791 = vmatprep.mubr.bf16.mxu0 0
        %4792 = vmatmul.mubr.bf16.gmra.mrb[0].mxu0 %v4504
        %v4793 = vpop.f32.mrb[0].mxu0
        %v4794 = vadd.f32 %v4622, %v4793
        %v4795 = vpop.f32.mrb[0].mxu0
        %v4796 = vpop.f32.mrb[0].mxu0
        %v4797 = vadd.f32 %v4625, %v4796
        %v4798 = vpop.f32.mrb[0].mxu0
        %4799 = vmatprep.mubr.bf16.mxu0 0
        %4800 = vmatmul.mubr.bf16.gmra.mrb[0].mxu0 %v4507
        %v4801 = vpop.f32.mrb[0].mxu0
        %v4802 = vadd.f32 %v4630, %v4801
        %v4803 = vpop.f32.mrb[0].mxu0
        %v4804 = vpop.f32.mrb[0].mxu0
        %v4805 = vadd.f32 %v4633, %v4804
        %v4806 = vpop.f32.mrb[0].mxu0
        %4807 = vmatprep.mubr.bf16.mxu0 0
        %4808 = vmatmul.mubr.bf16.gmra.mrb[0].mxu0 %v4510
        %v4809 = vpop.f32.mrb[0].mxu0
        %v4810 = vadd.f32 %v4638, %v4809
        %v4811 = vpop.f32.mrb[0].mxu0
        %v4812 = vpop.f32.mrb[0].mxu0
        %v4813 = vadd.f32 %v4641, %v4812
        %v4814 = vpop.f32.mrb[0].mxu0
        %4815 = vmatprep.mubr.bf16.mxu0 0
        %4816 = vmatmul.mubr.bf16.gmra.mrb[0].mxu0 %v4513
        %v4817 = vpop.f32.mrb[0].mxu0
        %v4818 = vadd.f32 %v4646, %v4817
        %v4819 = vpop.f32.mrb[0].mxu0
        %v4820 = vpop.f32.mrb[0].mxu0
        %v4821 = vadd.f32 %v4649, %v4820
        %v4822 = vpop.f32.mrb[0].mxu0
        %4823 = vmatprep.mubr.bf16.mxu0 0
        %4824 = vmatmul.mubr.bf16.gmra.mrb[0].mxu0 %v4516
        %v4825 = vpop.f32.mrb[0].mxu0
        %v4826 = vadd.f32 %v4654, %v4825
        %v4827 = vpop.f32.mrb[0].mxu0
        %v4828 = vpop.f32.mrb[0].mxu0
        %v4829 = vadd.f32 %v4657, %v4828
        %v4830 = vpop.f32.mrb[0].mxu0
        %4831 = vmatprep.mubr.bf16.mxu0 0
        %4832 = vmatmul.mubr.bf16.gmra.mrb[0].mxu0 %v4519
        %v4833 = vpop.f32.mrb[0].mxu0
        %v4834 = vadd.f32 %v4662, %v4833
        %v4835 = vpop.f32.mrb[0].mxu0
        %v4836 = vpop.f32.mrb[0].mxu0
        %v4837 = vadd.f32 %v4665, %v4836
        %v4838 = vpop.f32.mrb[0].mxu0
        %4839 = vmatprep.mubr.bf16.mxu0 0
        %4840 = vmatmul.mubr.bf16.gmra.mrb[0].mxu0 %v4522
        %v4841 = vpop.f32.mrb[0].mxu0
        %v4842 = vadd.f32 %v4670, %v4841
        %v4843 = vpop.f32.mrb[0].mxu0
        %v4844 = vpop.f32.mrb[0].mxu0
        %v4845 = vadd.f32 %v4673, %v4844
        %v4846 = vpop.f32.mrb[0].mxu0
        %4847 = vmatprep.mubr.bf16.mxu0 0
        %4848 = vmatmul.mubr.bf16.gmra.mrb[0].mxu0 %v4525
        %v4849 = vpop.f32.mrb[0].mxu0
        %v4850 = vadd.f32 %v4678, %v4849
        %v4851 = vpop.f32.mrb[0].mxu0
        %v4852 = vpop.f32.mrb[0].mxu0
        %v4853 = vadd.f32 %v4681, %v4852
        %v4854 = vpop.f32.mrb[0].mxu0
        %4855 = vmatprep.mubr.bf16.mxu0 0
        %4856 = vmatmul.mubr.bf16.gmra.mrb[0].mxu0 %v4528
        %v4857 = vpop.f32.mrb[0].mxu0
        %v4858 = vadd.f32 %v4686, %v4857
        %v4859 = vpop.f32.mrb[0].mxu0
        %v4860 = vpop.f32.mrb[0].mxu0
        %v4861 = vadd.f32 %v4689, %v4860
        %v4862 = vpop.f32.mrb[0].mxu0
        %4863 = vmatprep.mubr.bf16.mxu0 0
        %4864 = vmatmul.mubr.bf16.gmra.mrb[0].mxu0 %v4531
        %v4865 = vpop.f32.mrb[0].mxu0
        %v4866 = vadd.f32 %v4694, %v4865
        %v4867 = vpop.f32.mrb[0].mxu0
        %v4868 = vpop.f32.mrb[0].mxu0
        %v4869 = vadd.f32 %v4697, %v4868
        %v4870 = vpop.f32.mrb[0].mxu0
        %4871 = vdwg.mxu0
        %s4872 = scalar_lea.vmem %s2, 12
        %v4873 = vld [vmem:[%s4872] sm:$0x3]
        %v4876 = vunpack.c.l.b16 %v4403
        %v4877 = vunpack.c.l.b16 %v4404
        %v4878 = vpack.c.b16 %v4877, %v4876
        %v4880 = vsel %vm1057, %v4878, 0
        %v4883 = vsel %vm1106, %v4873, 0
        %4885 = vmatprep.subr.bf16.mxu0 0
        %4886 = vmatpush1.bf16.msra.mxu0 %v4883
        %4887 = vmatprep.subr.bf16.mxu0 0
        %4888 = vmatpush1.bf16.msra.mxu0 0
        %4889 = vmatprep.subr.bf16.mxu0 0
        %4890 = vmatpush1.bf16.msra.mxu0 0
        %4891 = vmatprep.subr.bf16.mxu0 0
        %4892 = vmatpush1.bf16.msra.mxu0 0
        %4893 = vmatprep.subr.bf16.mxu0 0
        %4894 = vmatpush1.bf16.msra.mxu0 0
        %4895 = vmatprep.subr.bf16.mxu0 0
        %4896 = vmatpush1.bf16.msra.mxu0 0
        %4897 = vmatprep.subr.bf16.mxu0 0
        %4898 = vmatpush1.bf16.msra.mxu0 0
        %4899 = vmatprep.subr.bf16.mxu0 0
        %4900 = vmatpush1.bf16.msra.mxu0 0
        %4901 = vmatprep.subr.bf16.mxu0 0
        %4902 = vmatpush1.bf16.msra.mxu0 0
        %4903 = vmatprep.subr.bf16.mxu0 0
        %4904 = vmatpush1.bf16.msra.mxu0 0
        %4905 = vmatprep.subr.bf16.mxu0 0
        %4906 = vmatpush1.bf16.msra.mxu0 0
        %4907 = vmatprep.subr.bf16.mxu0 0
        %4908 = vmatpush1.bf16.msra.mxu0 0
        %4909 = vmatprep.subr.bf16.mxu0 0
        %4910 = vmatpush1.bf16.msra.mxu0 0
        %4911 = vmatprep.subr.bf16.mxu0 0
        %4912 = vmatpush1.bf16.msra.mxu0 0
        %4913 = vmatprep.subr.bf16.mxu0 0
        %4914 = vmatpush1.bf16.msra.mxu0 0
        %4915 = vmatprep.subr.bf16.mxu0 0
        %4916 = vmatpush1.bf16.msra.mxu0 0
        %4917 = vmatprep.mubr.bf16.mxu0 0
        %4918 = vmatmul.mubr.bf16.gmra.mrb[0].mxu0 %v4492
        %v4919 = vpop.f32.mrb[0].mxu0
        %v4920 = vadd.f32 0.0, %v4919
        %v4921 = vpop.f32.mrb[0].mxu0
        %v4922 = vpop.f32.mrb[0].mxu0
        %v4923 = vadd.f32 0.0, %v4922
        %v4924 = vpop.f32.mrb[0].mxu0
        %4925 = vmatprep.mubr.bf16.mxu0 0
        %4926 = vmatmul.mubr.bf16.gmra.mrb[0].mxu0 %v4495
        %v4927 = vpop.f32.mrb[0].mxu0
        %v4928 = vadd.f32 0.0, %v4927
        %v4929 = vpop.f32.mrb[0].mxu0
        %v4930 = vpop.f32.mrb[0].mxu0
        %v4931 = vadd.f32 0.0, %v4930
        %v4932 = vpop.f32.mrb[0].mxu0
        %4933 = vmatprep.mubr.bf16.mxu0 0
        %4934 = vmatmul.mubr.bf16.gmra.mrb[0].mxu0 %v4498
        %v4935 = vpop.f32.mrb[0].mxu0
        %v4936 = vadd.f32 0.0, %v4935
        %v4937 = vpop.f32.mrb[0].mxu0
        %v4938 = vpop.f32.mrb[0].mxu0
        %v4939 = vadd.f32 0.0, %v4938
        %v4940 = vpop.f32.mrb[0].mxu0
        %4941 = vmatprep.mubr.bf16.mxu0 0
        %4942 = vmatmul.mubr.bf16.gmra.mrb[0].mxu0 %v4501
        %v4943 = vpop.f32.mrb[0].mxu0
        %v4944 = vadd.f32 0.0, %v4943
        %v4945 = vpop.f32.mrb[0].mxu0
        %v4946 = vpop.f32.mrb[0].mxu0
        %v4947 = vadd.f32 0.0, %v4946
        %v4948 = vpop.f32.mrb[0].mxu0
        %4949 = vmatprep.mubr.bf16.mxu0 0
        %4950 = vmatmul.mubr.bf16.gmra.mrb[0].mxu0 %v4504
        %v4951 = vpop.f32.mrb[0].mxu0
        %v4952 = vadd.f32 0.0, %v4951
        %v4953 = vpop.f32.mrb[0].mxu0
        %v4954 = vpop.f32.mrb[0].mxu0
        %v4955 = vadd.f32 0.0, %v4954
        %v4956 = vpop.f32.mrb[0].mxu0
        %4957 = vmatprep.mubr.bf16.mxu0 0
        %4958 = vmatmul.mubr.bf16.gmra.mrb[0].mxu0 %v4507
        %v4959 = vpop.f32.mrb[0].mxu0
        %v4960 = vadd.f32 0.0, %v4959
        %v4961 = vpop.f32.mrb[0].mxu0
        %v4962 = vpop.f32.mrb[0].mxu0
        %v4963 = vadd.f32 0.0, %v4962
        %v4964 = vpop.f32.mrb[0].mxu0
        %4965 = vmatprep.mubr.bf16.mxu0 0
        %4966 = vmatmul.mubr.bf16.gmra.mrb[0].mxu0 %v4510
        %v4967 = vpop.f32.mrb[0].mxu0
        %v4968 = vadd.f32 0.0, %v4967
        %v4969 = vpop.f32.mrb[0].mxu0
        %v4970 = vpop.f32.mrb[0].mxu0
        %v4971 = vadd.f32 0.0, %v4970
        %v4972 = vpop.f32.mrb[0].mxu0
        %4973 = vmatprep.mubr.bf16.mxu0 0
        %4974 = vmatmul.mubr.bf16.gmra.mrb[0].mxu0 %v4513
        %v4975 = vpop.f32.mrb[0].mxu0
        %v4976 = vadd.f32 0.0, %v4975
        %v4977 = vpop.f32.mrb[0].mxu0
        %v4978 = vpop.f32.mrb[0].mxu0
        %v4979 = vadd.f32 0.0, %v4978
        %v4980 = vpop.f32.mrb[0].mxu0
        %4981 = vmatprep.mubr.bf16.mxu0 0
        %4982 = vmatmul.mubr.bf16.gmra.mrb[0].mxu0 %v4516
        %v4983 = vpop.f32.mrb[0].mxu0
        %v4984 = vadd.f32 0.0, %v4983
        %v4985 = vpop.f32.mrb[0].mxu0
        %v4986 = vpop.f32.mrb[0].mxu0
        %v4987 = vadd.f32 0.0, %v4986
        %v4988 = vpop.f32.mrb[0].mxu0
        %4989 = vmatprep.mubr.bf16.mxu0 0
        %4990 = vmatmul.mubr.bf16.gmra.mrb[0].mxu0 %v4519
        %v4991 = vpop.f32.mrb[0].mxu0
        %v4992 = vadd.f32 0.0, %v4991
        %v4993 = vpop.f32.mrb[0].mxu0
        %v4994 = vpop.f32.mrb[0].mxu0
        %v4995 = vadd.f32 0.0, %v4994
        %v4996 = vpop.f32.mrb[0].mxu0
        %4997 = vmatprep.mubr.bf16.mxu0 0
        %4998 = vmatmul.mubr.bf16.gmra.mrb[0].mxu0 %v4522
        %v4999 = vpop.f32.mrb[0].mxu0
        %v5000 = vadd.f32 0.0, %v4999
        %v5001 = vpop.f32.mrb[0].mxu0
        %v5002 = vpop.f32.mrb[0].mxu0
        %v5003 = vadd.f32 0.0, %v5002
        %v5004 = vpop.f32.mrb[0].mxu0
        %5005 = vmatprep.mubr.bf16.mxu0 0
        %5006 = vmatmul.mubr.bf16.gmra.mrb[0].mxu0 %v4525
        %v5007 = vpop.f32.mrb[0].mxu0
        %v5008 = vadd.f32 0.0, %v5007
        %v5009 = vpop.f32.mrb[0].mxu0
        %v5010 = vpop.f32.mrb[0].mxu0
        %v5011 = vadd.f32 0.0, %v5010
        %v5012 = vpop.f32.mrb[0].mxu0
        %5013 = vmatprep.mubr.bf16.mxu0 0
        %5014 = vmatmul.mubr.bf16.gmra.mrb[0].mxu0 %v4528
        %v5015 = vpop.f32.mrb[0].mxu0
        %v5016 = vadd.f32 0.0, %v5015
        %v5017 = vpop.f32.mrb[0].mxu0
        %v5018 = vpop.f32.mrb[0].mxu0
        %v5019 = vadd.f32 0.0, %v5018
        %v5020 = vpop.f32.mrb[0].mxu0
        %5021 = vmatprep.mubr.bf16.mxu0 0
        %5022 = vmatmul.mubr.bf16.gmra.mrb[0].mxu0 %v4531
        %v5023 = vpop.f32.mrb[0].mxu0
        %v5024 = vadd.f32 0.0, %v5023
        %v5025 = vpop.f32.mrb[0].mxu0
        %v5026 = vpop.f32.mrb[0].mxu0
        %v5027 = vadd.f32 0.0, %v5026
        %v5028 = vpop.f32.mrb[0].mxu0
        %5029 = vmatprep.mubr.bf16.mxu0 0
        %5030 = vmatmul.mubr.bf16.gmra.mrb[0].mxu0 %v4534
        %v5031 = vpop.f32.mrb[0].mxu0
        %v5032 = vadd.f32 0.0, %v5031
        %v5033 = vpop.f32.mrb[0].mxu0
        %v5034 = vpop.f32.mrb[0].mxu0
        %v5035 = vadd.f32 0.0, %v5034
        %v5036 = vpop.f32.mrb[0].mxu0
        %5037 = vmatprep.mubr.bf16.mxu0 0
        %5038 = vmatmul.mubr.bf16.gmra.mrb[0].mxu0 %v4880
        %v5039 = vpop.f32.mrb[0].mxu0
        %v5040 = vadd.f32 0.0, %v5039
        %v5041 = vpop.f32.mrb[0].mxu0
        %v5042 = vpop.f32.mrb[0].mxu0
        %v5043 = vadd.f32 0.0, %v5042
        %v5044 = vpop.f32.mrb[0].mxu0
        %5045 = vdwg.mxu0
        %v5046 = vadd.f32 %v4746, %v4920
        %v5047 = vadd.f32 %v4749, %v4923
        %v5048 = vadd.f32 %v4754, %v4928
        %v5049 = vadd.f32 %v4757, %v4931
        %v5050 = vadd.f32 %v4762, %v4936
        %v5051 = vadd.f32 %v4765, %v4939
        %v5052 = vadd.f32 %v4770, %v4944
        %v5053 = vadd.f32 %v4773, %v4947
        %v5054 = vadd.f32 %v4778, %v4952
        %v5055 = vadd.f32 %v4781, %v4955
        %v5056 = vadd.f32 %v4786, %v4960
        %v5057 = vadd.f32 %v4789, %v4963
        %v5058 = vadd.f32 %v4794, %v4968
        %v5059 = vadd.f32 %v4797, %v4971
        %v5060 = vadd.f32 %v4802, %v4976
        %v5061 = vadd.f32 %v4805, %v4979
        %v5062 = vadd.f32 %v4810, %v4984
        %v5063 = vadd.f32 %v4813, %v4987
        %v5064 = vadd.f32 %v4818, %v4992
        %v5065 = vadd.f32 %v4821, %v4995
        %v5066 = vadd.f32 %v4826, %v5000
        %v5067 = vadd.f32 %v4829, %v5003
        %v5068 = vadd.f32 %v4834, %v5008
        %v5069 = vadd.f32 %v4837, %v5011
        %v5070 = vadd.f32 %v4842, %v5016
        %v5071 = vadd.f32 %v4845, %v5019
        %v5072 = vadd.f32 %v4850, %v5024
        %v5073 = vadd.f32 %v4853, %v5027
        %v5074 = vadd.f32 %v4858, %v5032
        %v5075 = vadd.f32 %v4861, %v5035
        %v5076 = vadd.f32 %v4866, %v5040
        %v5077 = vadd.f32 %v4869, %v5043
        %v5078 = vld [vmem:[#allocation2] sm:$0xf]
        %v5079 = vld [vmem:[#allocation2 + $0x4] sm:$0xf]
        %v5080 = vld [vmem:[#allocation2 + $0x8] sm:$0x1]
        %v5081 = vld [vmem:[#allocation2 + $0xc] sm:$0xf]
        %v5082 = vld [vmem:[#allocation2 + $0x10] sm:$0xf]
        %v5083 = vld [vmem:[#allocation2 + $0x14] sm:$0x1]
        %v5084 = vld [vmem:[#allocation2 + $0x18] sm:$0xf]
        %v5085 = vld [vmem:[#allocation2 + $0x1c] sm:$0xf]
        %v5086 = vld [vmem:[#allocation2 + $0x20] sm:$0x1]
        %v5087 = vld [vmem:[#allocation2 + $0x24] sm:$0xf]
        %v5088 = vld [vmem:[#allocation2 + $0x28] sm:$0xf]
        %v5089 = vld [vmem:[#allocation2 + $0x2c] sm:$0x1]
        %v5090 = vld [vmem:[#allocation2 + $0x30] sm:$0xf]
        %v5091 = vld [vmem:[#allocation2 + $0x34] sm:$0xf]
        %v5092 = vld [vmem:[#allocation2 + $0x38] sm:$0x1]
        %v5093 = vld [vmem:[#allocation2 + $0x3c] sm:$0xf]
        %v5094 = vld [vmem:[#allocation2 + $0x40] sm:$0xf]
        %v5095 = vld [vmem:[#allocation2 + $0x44] sm:$0x1]
        %v5096 = vld [vmem:[#allocation2 + $0x48] sm:$0xf]
        %v5097 = vld [vmem:[#allocation2 + $0x4c] sm:$0xf]
        %v5098 = vld [vmem:[#allocation2 + $0x50] sm:$0x1]
        %v5099 = vld [vmem:[#allocation2 + $0x54] sm:$0xf]
        %v5100 = vld [vmem:[#allocation2 + $0x58] sm:$0xf]
        %v5101 = vld [vmem:[#allocation2 + $0x5c] sm:$0x1]
        %v5102 = vld [vmem:[#allocation2 + $0x60] sm:$0xf]
        %v5103 = vld [vmem:[#allocation2 + $0x64] sm:$0xf]
        %v5104 = vld [vmem:[#allocation2 + $0x68] sm:$0x1]
        %v5105 = vld [vmem:[#allocation2 + $0x6c] sm:$0xf]
        %v5106 = vld [vmem:[#allocation2 + $0x70] sm:$0xf]
        %v5107 = vld [vmem:[#allocation2 + $0x74] sm:$0x1]
        %v5108 = vld [vmem:[#allocation2 + $0x78] sm:$0xf]
        %v5109 = vld [vmem:[#allocation2 + $0x7c] sm:$0xf]
        %v5110 = vld [vmem:[#allocation2 + $0x80] sm:$0x1]
        %v5111 = vld [vmem:[#allocation2 + $0x84] sm:$0xf]
        %v5112 = vld [vmem:[#allocation2 + $0x88] sm:$0xf]
        %v5113 = vld [vmem:[#allocation2 + $0x8c] sm:$0x1]
        %v5114 = vld [vmem:[#allocation2 + $0x90] sm:$0xf]
        %v5115 = vld [vmem:[#allocation2 + $0x94] sm:$0xf]
        %v5116 = vld [vmem:[#allocation2 + $0x98] sm:$0x1]
        %v5117 = vld [vmem:[#allocation2 + $0x9c] sm:$0xf]
        %v5118 = vld [vmem:[#allocation2 + $0xa0] sm:$0xf]
        %v5119 = vld [vmem:[#allocation2 + $0xa4] sm:$0x1]
        %v5120 = vld [vmem:[#allocation2 + $0xa8] sm:$0xf]
        %v5121 = vld [vmem:[#allocation2 + $0xac] sm:$0xf]
        %v5122 = vld [vmem:[#allocation2 + $0xb0] sm:$0x1]
        %v5123 = vld [vmem:[#allocation2 + $0xb4] sm:$0xf]
        %v5124 = vld [vmem:[#allocation2 + $0xb8] sm:$0xf]
        %v5125 = vld [vmem:[#allocation2 + $0xbc] sm:$0x1]
        %v5126 = vld [vmem:[#allocation2 + $0xc0] sm:$0xf]
        %v5127 = vld [vmem:[#allocation2 + $0xc4] sm:$0xf]
        %v5128 = vld [vmem:[#allocation2 + $0xc8] sm:$0x1]
        %v5129 = vld [vmem:[#allocation2 + $0xcc] sm:$0xf]
        %v5130 = vld [vmem:[#allocation2 + $0xd0] sm:$0xf]
        %v5131 = vld [vmem:[#allocation2 + $0xd4] sm:$0x1]
        %v5133 = vshrl.u32 %v5078, 16
        %v5135 = vrot.slane %v5133, 4
        %v5136 = vshll.u32 %v5078, 16
        %v5138 = vrot.slane %v5136, 5
        %v5139 = vor.u32 %v5135, %v5138
        %v5140 = vrot.slane %v5139, 4
        %v5142 = vshll.u32 %v5079, 16
        %v5144 = vrot.slane %v5142, 5
        %v5145 = vsel %vm1705, %v5140, %v5144
        %v5146 = vshrl.u32 %v5079, 16
        %v5148 = vrot.slane %v5146, 4
        %v5149 = vor.u32 %v5148, %v5144
        %v5150 = vrot.slane %v5149, 4
        %v5152 = vshll.u32 %v5080, 16
        %v5154 = vrot.slane %v5152, 5
        %v5155 = vsel %vm1705, %v5150, %v5154
        %v5157 = vshrl.u32 %v5081, 16
        %v5159 = vrot.slane %v5157, 4
        %v5160 = vshll.u32 %v5081, 16
        %v5162 = vrot.slane %v5160, 5
        %v5163 = vor.u32 %v5159, %v5162
        %v5164 = vrot.slane %v5163, 4
        %v5166 = vshll.u32 %v5082, 16
        %v5168 = vrot.slane %v5166, 5
        %v5169 = vsel %vm1705, %v5164, %v5168
        %v5170 = vshrl.u32 %v5082, 16
        %v5172 = vrot.slane %v5170, 4
        %v5173 = vor.u32 %v5172, %v5168
        %v5174 = vrot.slane %v5173, 4
        %v5176 = vshll.u32 %v5083, 16
        %v5178 = vrot.slane %v5176, 5
        %v5179 = vsel %vm1705, %v5174, %v5178
        %v5181 = vshrl.u32 %v5084, 16
        %v5183 = vrot.slane %v5181, 4
        %v5184 = vshll.u32 %v5084, 16
        %v5186 = vrot.slane %v5184, 5
        %v5187 = vor.u32 %v5183, %v5186
        %v5188 = vrot.slane %v5187, 4
        %v5190 = vshll.u32 %v5085, 16
        %v5192 = vrot.slane %v5190, 5
        %v5193 = vsel %vm1705, %v5188, %v5192
        %v5194 = vshrl.u32 %v5085, 16
        %v5196 = vrot.slane %v5194, 4
        %v5197 = vor.u32 %v5196, %v5192
        %v5198 = vrot.slane %v5197, 4
        %v5200 = vshll.u32 %v5086, 16
        %v5202 = vrot.slane %v5200, 5
        %v5203 = vsel %vm1705, %v5198, %v5202
        %v5205 = vshrl.u32 %v5087, 16
        %v5207 = vrot.slane %v5205, 4
        %v5208 = vshll.u32 %v5087, 16
        %v5210 = vrot.slane %v5208, 5
        %v5211 = vor.u32 %v5207, %v5210
        %v5212 = vrot.slane %v5211, 4
        %v5214 = vshll.u32 %v5088, 16
        %v5216 = vrot.slane %v5214, 5
        %v5217 = vsel %vm1705, %v5212, %v5216
        %v5218 = vshrl.u32 %v5088, 16
        %v5220 = vrot.slane %v5218, 4
        %v5221 = vor.u32 %v5220, %v5216
        %v5222 = vrot.slane %v5221, 4
        %v5224 = vshll.u32 %v5089, 16
        %v5226 = vrot.slane %v5224, 5
        %v5227 = vsel %vm1705, %v5222, %v5226
        %v5229 = vshrl.u32 %v5090, 16
        %v5231 = vrot.slane %v5229, 4
        %v5232 = vshll.u32 %v5090, 16
        %v5234 = vrot.slane %v5232, 5
        %v5235 = vor.u32 %v5231, %v5234
        %v5236 = vrot.slane %v5235, 4
        %v5238 = vshll.u32 %v5091, 16
        %v5240 = vrot.slane %v5238, 5
        %v5241 = vsel %vm1705, %v5236, %v5240
        %v5242 = vshrl.u32 %v5091, 16
        %v5244 = vrot.slane %v5242, 4
        %v5245 = vor.u32 %v5244, %v5240
        %v5246 = vrot.slane %v5245, 4
        %v5248 = vshll.u32 %v5092, 16
        %v5250 = vrot.slane %v5248, 5
        %v5251 = vsel %vm1705, %v5246, %v5250
        %v5253 = vshrl.u32 %v5093, 16
        %v5255 = vrot.slane %v5253, 4
        %v5256 = vshll.u32 %v5093, 16
        %v5258 = vrot.slane %v5256, 5
        %v5259 = vor.u32 %v5255, %v5258
        %v5260 = vrot.slane %v5259, 4
        %v5262 = vshll.u32 %v5094, 16
        %v5264 = vrot.slane %v5262, 5
        %v5265 = vsel %vm1705, %v5260, %v5264
        %v5266 = vshrl.u32 %v5094, 16
        %v5268 = vrot.slane %v5266, 4
        %v5269 = vor.u32 %v5268, %v5264
        %v5270 = vrot.slane %v5269, 4
        %v5272 = vshll.u32 %v5095, 16
        %v5274 = vrot.slane %v5272, 5
        %v5275 = vsel %vm1705, %v5270, %v5274
        %v5277 = vshrl.u32 %v5096, 16
        %v5279 = vrot.slane %v5277, 4
        %v5280 = vshll.u32 %v5096, 16
        %v5282 = vrot.slane %v5280, 5
        %v5283 = vor.u32 %v5279, %v5282
        %v5284 = vrot.slane %v5283, 4
        %v5286 = vshll.u32 %v5097, 16
        %v5288 = vrot.slane %v5286, 5
        %v5289 = vsel %vm1705, %v5284, %v5288
        %v5290 = vshrl.u32 %v5097, 16
        %v5292 = vrot.slane %v5290, 4
        %v5293 = vor.u32 %v5292, %v5288
        %v5294 = vrot.slane %v5293, 4
        %v5296 = vshll.u32 %v5098, 16
        %v5298 = vrot.slane %v5296, 5
        %v5299 = vsel %vm1705, %v5294, %v5298
        %v5301 = vshrl.u32 %v5099, 16
        %v5303 = vrot.slane %v5301, 4
        %v5304 = vshll.u32 %v5099, 16
        %v5306 = vrot.slane %v5304, 5
        %v5307 = vor.u32 %v5303, %v5306
        %v5308 = vrot.slane %v5307, 4
        %v5310 = vshll.u32 %v5100, 16
        %v5312 = vrot.slane %v5310, 5
        %v5313 = vsel %vm1705, %v5308, %v5312
        %v5314 = vshrl.u32 %v5100, 16
        %v5316 = vrot.slane %v5314, 4
        %v5317 = vor.u32 %v5316, %v5312
        %v5318 = vrot.slane %v5317, 4
        %v5320 = vshll.u32 %v5101, 16
        %v5322 = vrot.slane %v5320, 5
        %v5323 = vsel %vm1705, %v5318, %v5322
        %v5325 = vshrl.u32 %v5102, 16
        %v5327 = vrot.slane %v5325, 4
        %v5328 = vshll.u32 %v5102, 16
        %v5330 = vrot.slane %v5328, 5
        %v5331 = vor.u32 %v5327, %v5330
        %v5332 = vrot.slane %v5331, 4
        %v5334 = vshll.u32 %v5103, 16
        %v5336 = vrot.slane %v5334, 5
        %v5337 = vsel %vm1705, %v5332, %v5336
        %v5338 = vshrl.u32 %v5103, 16
        %v5340 = vrot.slane %v5338, 4
        %v5341 = vor.u32 %v5340, %v5336
        %v5342 = vrot.slane %v5341, 4
        %v5344 = vshll.u32 %v5104, 16
        %v5346 = vrot.slane %v5344, 5
        %v5347 = vsel %vm1705, %v5342, %v5346
        %v5349 = vshrl.u32 %v5105, 16
        %v5351 = vrot.slane %v5349, 4
        %v5352 = vshll.u32 %v5105, 16
        %v5354 = vrot.slane %v5352, 5
        %v5355 = vor.u32 %v5351, %v5354
        %v5356 = vrot.slane %v5355, 4
        %v5358 = vshll.u32 %v5106, 16
        %v5360 = vrot.slane %v5358, 5
        %v5361 = vsel %vm1705, %v5356, %v5360
        %v5362 = vshrl.u32 %v5106, 16
        %v5364 = vrot.slane %v5362, 4
        %v5365 = vor.u32 %v5364, %v5360
        %v5366 = vrot.slane %v5365, 4
        %v5368 = vshll.u32 %v5107, 16
        %v5370 = vrot.slane %v5368, 5
        %v5371 = vsel %vm1705, %v5366, %v5370
        %v5373 = vshrl.u32 %v5108, 16
        %v5375 = vrot.slane %v5373, 4
        %v5376 = vshll.u32 %v5108, 16
        %v5378 = vrot.slane %v5376, 5
        %v5379 = vor.u32 %v5375, %v5378
        %v5380 = vrot.slane %v5379, 4
        %v5382 = vshll.u32 %v5109, 16
        %v5384 = vrot.slane %v5382, 5
        %v5385 = vsel %vm1705, %v5380, %v5384
        %v5386 = vshrl.u32 %v5109, 16
        %v5388 = vrot.slane %v5386, 4
        %v5389 = vor.u32 %v5388, %v5384
        %v5390 = vrot.slane %v5389, 4
        %v5392 = vshll.u32 %v5110, 16
        %v5394 = vrot.slane %v5392, 5
        %v5395 = vsel %vm1705, %v5390, %v5394
        %v5397 = vshrl.u32 %v5111, 16
        %v5399 = vrot.slane %v5397, 4
        %v5400 = vshll.u32 %v5111, 16
        %v5402 = vrot.slane %v5400, 5
        %v5403 = vor.u32 %v5399, %v5402
        %v5404 = vrot.slane %v5403, 4
        %v5406 = vshll.u32 %v5112, 16
        %v5408 = vrot.slane %v5406, 5
        %v5409 = vsel %vm1705, %v5404, %v5408
        %v5410 = vshrl.u32 %v5112, 16
        %v5412 = vrot.slane %v5410, 4
        %v5413 = vor.u32 %v5412, %v5408
        %v5414 = vrot.slane %v5413, 4
        %v5416 = vshll.u32 %v5113, 16
        %v5418 = vrot.slane %v5416, 5
        %v5419 = vsel %vm1705, %v5414, %v5418
        %v5421 = vshrl.u32 %v5114, 16
        %v5423 = vrot.slane %v5421, 4
        %v5424 = vshll.u32 %v5114, 16
        %v5426 = vrot.slane %v5424, 5
        %v5427 = vor.u32 %v5423, %v5426
        %v5428 = vrot.slane %v5427, 4
        %v5430 = vshll.u32 %v5115, 16
        %v5432 = vrot.slane %v5430, 5
        %v5433 = vsel %vm1705, %v5428, %v5432
        %v5434 = vshrl.u32 %v5115, 16
        %v5436 = vrot.slane %v5434, 4
        %v5437 = vor.u32 %v5436, %v5432
        %v5438 = vrot.slane %v5437, 4
        %v5440 = vshll.u32 %v5116, 16
        %v5442 = vrot.slane %v5440, 5
        %v5443 = vsel %vm1705, %v5438, %v5442
        %v5445 = vshrl.u32 %v5117, 16
        %v5447 = vrot.slane %v5445, 4
        %v5448 = vshll.u32 %v5117, 16
        %v5450 = vrot.slane %v5448, 5
        %v5451 = vor.u32 %v5447, %v5450
        %v5452 = vrot.slane %v5451, 4
        %v5454 = vshll.u32 %v5118, 16
        %v5456 = vrot.slane %v5454, 5
        %v5457 = vsel %vm1705, %v5452, %v5456
        %v5458 = vshrl.u32 %v5118, 16
        %v5460 = vrot.slane %v5458, 4
        %v5461 = vor.u32 %v5460, %v5456
        %v5462 = vrot.slane %v5461, 4
        %v5464 = vshll.u32 %v5119, 16
        %v5466 = vrot.slane %v5464, 5
        %v5467 = vsel %vm1705, %v5462, %v5466
        %v5469 = vshrl.u32 %v5120, 16
        %v5471 = vrot.slane %v5469, 4
        %v5472 = vshll.u32 %v5120, 16
        %v5474 = vrot.slane %v5472, 5
        %v5475 = vor.u32 %v5471, %v5474
        %v5476 = vrot.slane %v5475, 4
        %v5478 = vshll.u32 %v5121, 16
        %v5480 = vrot.slane %v5478, 5
        %v5481 = vsel %vm1705, %v5476, %v5480
        %v5482 = vshrl.u32 %v5121, 16
        %v5484 = vrot.slane %v5482, 4
        %v5485 = vor.u32 %v5484, %v5480
        %v5486 = vrot.slane %v5485, 4
        %v5488 = vshll.u32 %v5122, 16
        %v5490 = vrot.slane %v5488, 5
        %v5491 = vsel %vm1705, %v5486, %v5490
        %v5493 = vshrl.u32 %v5123, 16
        %v5495 = vrot.slane %v5493, 4
        %v5496 = vshll.u32 %v5123, 16
        %v5498 = vrot.slane %v5496, 5
        %v5499 = vor.u32 %v5495, %v5498
        %v5500 = vrot.slane %v5499, 4
        %v5502 = vshll.u32 %v5124, 16
        %v5504 = vrot.slane %v5502, 5
        %v5505 = vsel %vm1705, %v5500, %v5504
        %v5506 = vshrl.u32 %v5124, 16
        %v5508 = vrot.slane %v5506, 4
        %v5509 = vor.u32 %v5508, %v5504
        %v5510 = vrot.slane %v5509, 4
        %v5512 = vshll.u32 %v5125, 16
        %v5514 = vrot.slane %v5512, 5
        %v5515 = vsel %vm1705, %v5510, %v5514
        %v5517 = vshrl.u32 %v5126, 16
        %v5519 = vrot.slane %v5517, 4
        %v5520 = vshll.u32 %v5126, 16
        %v5522 = vrot.slane %v5520, 5
        %v5523 = vor.u32 %v5519, %v5522
        %v5524 = vrot.slane %v5523, 4
        %v5526 = vshll.u32 %v5127, 16
        %v5528 = vrot.slane %v5526, 5
        %v5529 = vsel %vm1705, %v5524, %v5528
        %v5530 = vshrl.u32 %v5127, 16
        %v5532 = vrot.slane %v5530, 4
        %v5533 = vor.u32 %v5532, %v5528
        %v5534 = vrot.slane %v5533, 4
        %v5536 = vshll.u32 %v5128, 16
        %v5538 = vrot.slane %v5536, 5
        %v5539 = vsel %vm1705, %v5534, %v5538
        %v5541 = vshrl.u32 %v5129, 16
        %v5543 = vrot.slane %v5541, 4
        %v5544 = vshll.u32 %v5129, 16
        %v5546 = vrot.slane %v5544, 5
        %v5547 = vor.u32 %v5543, %v5546
        %v5548 = vrot.slane %v5547, 4
        %v5550 = vshll.u32 %v5130, 16
        %v5552 = vrot.slane %v5550, 5
        %v5553 = vsel %vm1705, %v5548, %v5552
        %v5554 = vshrl.u32 %v5130, 16
        %v5556 = vrot.slane %v5554, 4
        %v5557 = vor.u32 %v5556, %v5552
        %v5558 = vrot.slane %v5557, 4
        %v5560 = vshll.u32 %v5131, 16
        %v5562 = vrot.slane %v5560, 5
        %v5563 = vsel %vm1705, %v5558, %v5562
        %s5564 = scalar_lea.vmem %s2, 2
        %v5565 = vld [vmem:[%s5564] sm:$0x3]
        %v5566 = vunpack.c.l.b16 %v5145
        %v5567 = vunpack.c.l.b16 %v5155
        %v5568 = vunpack.c.l.b16 %v5169
        %v5569 = vunpack.c.l.b16 %v5179
        %v5570 = vunpack.c.l.b16 %v5193
        %v5571 = vunpack.c.l.b16 %v5203
        %v5572 = vunpack.c.l.b16 %v5217
        %v5573 = vunpack.c.l.b16 %v5227
        %v5574 = vunpack.c.l.b16 %v5241
        %v5575 = vunpack.c.l.b16 %v5251
        %v5576 = vunpack.c.l.b16 %v5265
        %v5577 = vunpack.c.l.b16 %v5275
        %v5578 = vunpack.c.l.b16 %v5289
        %v5579 = vunpack.c.l.b16 %v5299
        %v5580 = vunpack.c.l.b16 %v5313
        %v5581 = vunpack.c.l.b16 %v5323
        %v5582 = vunpack.c.l.b16 %v5337
        %v5583 = vunpack.c.l.b16 %v5347
        %v5584 = vunpack.c.l.b16 %v5361
        %v5585 = vunpack.c.l.b16 %v5371
        %v5586 = vunpack.c.l.b16 %v5385
        %v5587 = vunpack.c.l.b16 %v5395
        %v5588 = vunpack.c.l.b16 %v5409
        %v5589 = vunpack.c.l.b16 %v5419
        %v5590 = vunpack.c.l.b16 %v5433
        %v5591 = vunpack.c.l.b16 %v5443
        %v5592 = vunpack.c.l.b16 %v5457
        %v5593 = vunpack.c.l.b16 %v5467
        %v5594 = vunpack.c.l.b16 %v5481
        %v5595 = vunpack.c.l.b16 %v5491
        %v5596 = vunpack.c.l.b16 %v5505
        %v5597 = vunpack.c.l.b16 %v5515
        %v5598 = vpack.c.b16 %v5567, %v5566
        %v5599 = vpack.c.b16 %v5569, %v5568
        %v5600 = vpack.c.b16 %v5571, %v5570
        %v5601 = vpack.c.b16 %v5573, %v5572
        %v5602 = vpack.c.b16 %v5575, %v5574
        %v5603 = vpack.c.b16 %v5577, %v5576
        %v5604 = vpack.c.b16 %v5579, %v5578
        %v5605 = vpack.c.b16 %v5581, %v5580
        %v5606 = vpack.c.b16 %v5583, %v5582
        %v5607 = vpack.c.b16 %v5585, %v5584
        %v5608 = vpack.c.b16 %v5587, %v5586
        %v5609 = vpack.c.b16 %v5589, %v5588
        %v5610 = vpack.c.b16 %v5591, %v5590
        %v5611 = vpack.c.b16 %v5593, %v5592
        %v5612 = vpack.c.b16 %v5595, %v5594
        %v5613 = vpack.c.b16 %v5597, %v5596
        %v5615 = vsel %vm1057, %v5598, 0
        %v5618 = vsel %vm1057, %v5599, 0
        %v5621 = vsel %vm1057, %v5600, 0
        %v5624 = vsel %vm1057, %v5601, 0
        %v5627 = vsel %vm1057, %v5602, 0
        %v5630 = vsel %vm1057, %v5603, 0
        %v5633 = vsel %vm1057, %v5604, 0
        %v5636 = vsel %vm1057, %v5605, 0
        %v5639 = vsel %vm1057, %v5606, 0
        %v5642 = vsel %vm1057, %v5607, 0
        %v5645 = vsel %vm1057, %v5608, 0
        %v5648 = vsel %vm1057, %v5609, 0
        %v5651 = vsel %vm1057, %v5610, 0
        %v5654 = vsel %vm1057, %v5611, 0
        %v5657 = vsel %vm1057, %v5612, 0
        %v5660 = vsel %vm1057, %v5613, 0
        %v5663 = vsel %vm1106, %v5565, 0
        %5665 = vmatprep.subr.bf16.mxu0 0
        %5666 = vmatpush1.bf16.msra.mxu0 %v5663
        %5667 = vmatprep.subr.bf16.mxu0 0
        %5668 = vmatpush1.bf16.msra.mxu0 0
        %5669 = vmatprep.subr.bf16.mxu0 0
        %5670 = vmatpush1.bf16.msra.mxu0 0
        %5671 = vmatprep.subr.bf16.mxu0 0
        %5672 = vmatpush1.bf16.msra.mxu0 0
        %5673 = vmatprep.subr.bf16.mxu0 0
        %5674 = vmatpush1.bf16.msra.mxu0 0
        %5675 = vmatprep.subr.bf16.mxu0 0
        %5676 = vmatpush1.bf16.msra.mxu0 0
        %5677 = vmatprep.subr.bf16.mxu0 0
        %5678 = vmatpush1.bf16.msra.mxu0 0
        %5679 = vmatprep.subr.bf16.mxu0 0
        %5680 = vmatpush1.bf16.msra.mxu0 0
        %5681 = vmatprep.subr.bf16.mxu0 0
        %5682 = vmatpush1.bf16.msra.mxu0 0
        %5683 = vmatprep.subr.bf16.mxu0 0
        %5684 = vmatpush1.bf16.msra.mxu0 0
        %5685 = vmatprep.subr.bf16.mxu0 0
        %5686 = vmatpush1.bf16.msra.mxu0 0
        %5687 = vmatprep.subr.bf16.mxu0 0
        %5688 = vmatpush1.bf16.msra.mxu0 0
        %5689 = vmatprep.subr.bf16.mxu0 0
        %5690 = vmatpush1.bf16.msra.mxu0 0
        %5691 = vmatprep.subr.bf16.mxu0 0
        %5692 = vmatpush1.bf16.msra.mxu0 0
        %5693 = vmatprep.subr.bf16.mxu0 0
        %5694 = vmatpush1.bf16.msra.mxu0 0
        %5695 = vmatprep.subr.bf16.mxu0 0
        %5696 = vmatpush1.bf16.msra.mxu0 0
        %5697 = vmatprep.mubr.bf16.mxu0 0
        %5698 = vmatmul.mubr.bf16.gmra.mrb[0].mxu0 %v5615
        %v5699 = vpop.f32.mrb[0].mxu0
        %v5700 = vadd.f32 0.0, %v5699
        %v5701 = vpop.f32.mrb[0].mxu0
        %v5702 = vpop.f32.mrb[0].mxu0
        %v5703 = vadd.f32 0.0, %v5702
        %v5704 = vpop.f32.mrb[0].mxu0
        %5705 = vmatprep.mubr.bf16.mxu0 0
        %5706 = vmatmul.mubr.bf16.gmra.mrb[0].mxu0 %v5618
        %v5707 = vpop.f32.mrb[0].mxu0
        %v5708 = vadd.f32 0.0, %v5707
        %v5709 = vpop.f32.mrb[0].mxu0
        %v5710 = vpop.f32.mrb[0].mxu0
        %v5711 = vadd.f32 0.0, %v5710
        %v5712 = vpop.f32.mrb[0].mxu0
        %5713 = vmatprep.mubr.bf16.mxu0 0
        %5714 = vmatmul.mubr.bf16.gmra.mrb[0].mxu0 %v5621
        %v5715 = vpop.f32.mrb[0].mxu0
        %v5716 = vadd.f32 0.0, %v5715
        %v5717 = vpop.f32.mrb[0].mxu0
        %v5718 = vpop.f32.mrb[0].mxu0
        %v5719 = vadd.f32 0.0, %v5718
        %v5720 = vpop.f32.mrb[0].mxu0
        %5721 = vmatprep.mubr.bf16.mxu0 0
        %5722 = vmatmul.mubr.bf16.gmra.mrb[0].mxu0 %v5624
        %v5723 = vpop.f32.mrb[0].mxu0
        %v5724 = vadd.f32 0.0, %v5723
        %v5725 = vpop.f32.mrb[0].mxu0
        %v5726 = vpop.f32.mrb[0].mxu0
        %v5727 = vadd.f32 0.0, %v5726
        %v5728 = vpop.f32.mrb[0].mxu0
        %5729 = vmatprep.mubr.bf16.mxu0 0
        %5730 = vmatmul.mubr.bf16.gmra.mrb[0].mxu0 %v5627
        %v5731 = vpop.f32.mrb[0].mxu0
        %v5732 = vadd.f32 0.0, %v5731
        %v5733 = vpop.f32.mrb[0].mxu0
        %v5734 = vpop.f32.mrb[0].mxu0
        %v5735 = vadd.f32 0.0, %v5734
        %v5736 = vpop.f32.mrb[0].mxu0
        %5737 = vmatprep.mubr.bf16.mxu0 0
        %5738 = vmatmul.mubr.bf16.gmra.mrb[0].mxu0 %v5630
        %v5739 = vpop.f32.mrb[0].mxu0
        %v5740 = vadd.f32 0.0, %v5739
        %v5741 = vpop.f32.mrb[0].mxu0
        %v5742 = vpop.f32.mrb[0].mxu0
        %v5743 = vadd.f32 0.0, %v5742
        %v5744 = vpop.f32.mrb[0].mxu0
        %5745 = vmatprep.mubr.bf16.mxu0 0
        %5746 = vmatmul.mubr.bf16.gmra.mrb[0].mxu0 %v5633
        %v5747 = vpop.f32.mrb[0].mxu0
        %v5748 = vadd.f32 0.0, %v5747
        %v5749 = vpop.f32.mrb[0].mxu0
        %v5750 = vpop.f32.mrb[0].mxu0
        %v5751 = vadd.f32 0.0, %v5750
        %v5752 = vpop.f32.mrb[0].mxu0
        %5753 = vmatprep.mubr.bf16.mxu0 0
        %5754 = vmatmul.mubr.bf16.gmra.mrb[0].mxu0 %v5636
        %v5755 = vpop.f32.mrb[0].mxu0
        %v5756 = vadd.f32 0.0, %v5755
        %v5757 = vpop.f32.mrb[0].mxu0
        %v5758 = vpop.f32.mrb[0].mxu0
        %v5759 = vadd.f32 0.0, %v5758
        %v5760 = vpop.f32.mrb[0].mxu0
        %5761 = vmatprep.mubr.bf16.mxu0 0
        %5762 = vmatmul.mubr.bf16.gmra.mrb[0].mxu0 %v5639
        %v5763 = vpop.f32.mrb[0].mxu0
        %v5764 = vadd.f32 0.0, %v5763
        %v5765 = vpop.f32.mrb[0].mxu0
        %v5766 = vpop.f32.mrb[0].mxu0
        %v5767 = vadd.f32 0.0, %v5766
        %v5768 = vpop.f32.mrb[0].mxu0
        %5769 = vmatprep.mubr.bf16.mxu0 0
        %5770 = vmatmul.mubr.bf16.gmra.mrb[0].mxu0 %v5642
        %v5771 = vpop.f32.mrb[0].mxu0
        %v5772 = vadd.f32 0.0, %v5771
        %v5773 = vpop.f32.mrb[0].mxu0
        %v5774 = vpop.f32.mrb[0].mxu0
        %v5775 = vadd.f32 0.0, %v5774
        %v5776 = vpop.f32.mrb[0].mxu0
        %5777 = vmatprep.mubr.bf16.mxu0 0
        %5778 = vmatmul.mubr.bf16.gmra.mrb[0].mxu0 %v5645
        %v5779 = vpop.f32.mrb[0].mxu0
        %v5780 = vadd.f32 0.0, %v5779
        %v5781 = vpop.f32.mrb[0].mxu0
        %v5782 = vpop.f32.mrb[0].mxu0
        %v5783 = vadd.f32 0.0, %v5782
        %v5784 = vpop.f32.mrb[0].mxu0
        %5785 = vmatprep.mubr.bf16.mxu0 0
        %5786 = vmatmul.mubr.bf16.gmra.mrb[0].mxu0 %v5648
        %v5787 = vpop.f32.mrb[0].mxu0
        %v5788 = vadd.f32 0.0, %v5787
        %v5789 = vpop.f32.mrb[0].mxu0
        %v5790 = vpop.f32.mrb[0].mxu0
        %v5791 = vadd.f32 0.0, %v5790
        %v5792 = vpop.f32.mrb[0].mxu0
        %5793 = vmatprep.mubr.bf16.mxu0 0
        %5794 = vmatmul.mubr.bf16.gmra.mrb[0].mxu0 %v5651
        %v5795 = vpop.f32.mrb[0].mxu0
        %v5796 = vadd.f32 0.0, %v5795
        %v5797 = vpop.f32.mrb[0].mxu0
        %v5798 = vpop.f32.mrb[0].mxu0
        %v5799 = vadd.f32 0.0, %v5798
        %v5800 = vpop.f32.mrb[0].mxu0
        %5801 = vmatprep.mubr.bf16.mxu0 0
        %5802 = vmatmul.mubr.bf16.gmra.mrb[0].mxu0 %v5654
        %v5803 = vpop.f32.mrb[0].mxu0
        %v5804 = vadd.f32 0.0, %v5803
        %v5805 = vpop.f32.mrb[0].mxu0
        %v5806 = vpop.f32.mrb[0].mxu0
        %v5807 = vadd.f32 0.0, %v5806
        %v5808 = vpop.f32.mrb[0].mxu0
        %5809 = vmatprep.mubr.bf16.mxu0 0
        %5810 = vmatmul.mubr.bf16.gmra.mrb[0].mxu0 %v5657
        %v5811 = vpop.f32.mrb[0].mxu0
        %v5812 = vadd.f32 0.0, %v5811
        %v5813 = vpop.f32.mrb[0].mxu0
        %v5814 = vpop.f32.mrb[0].mxu0
        %v5815 = vadd.f32 0.0, %v5814
        %v5816 = vpop.f32.mrb[0].mxu0
        %5817 = vmatprep.mubr.bf16.mxu0 0
        %5818 = vmatmul.mubr.bf16.gmra.mrb[0].mxu0 %v5660
        %v5819 = vpop.f32.mrb[0].mxu0
        %v5820 = vadd.f32 0.0, %v5819
        %v5821 = vpop.f32.mrb[0].mxu0
        %v5822 = vpop.f32.mrb[0].mxu0
        %v5823 = vadd.f32 0.0, %v5822
        %v5824 = vpop.f32.mrb[0].mxu0
        %5825 = vdwg.mxu0
        %v5826 = vadd.f32 %v5046, %v5700
        %v5827 = vadd.f32 %v5047, %v5703
        %v5828 = vadd.f32 %v5048, %v5708
        %v5829 = vadd.f32 %v5049, %v5711
        %v5830 = vadd.f32 %v5050, %v5716
        %v5831 = vadd.f32 %v5051, %v5719
        %v5832 = vadd.f32 %v5052, %v5724
        %v5833 = vadd.f32 %v5053, %v5727
        %v5834 = vadd.f32 %v5054, %v5732
        %v5835 = vadd.f32 %v5055, %v5735
        %v5836 = vadd.f32 %v5056, %v5740
        %v5837 = vadd.f32 %v5057, %v5743
        %v5838 = vadd.f32 %v5058, %v5748
        %v5839 = vadd.f32 %v5059, %v5751
        %v5840 = vadd.f32 %v5060, %v5756
        %v5841 = vadd.f32 %v5061, %v5759
        %v5842 = vadd.f32 %v5062, %v5764
        %v5843 = vadd.f32 %v5063, %v5767
        %v5844 = vadd.f32 %v5064, %v5772
        %v5845 = vadd.f32 %v5065, %v5775
        %v5846 = vadd.f32 %v5066, %v5780
        %v5847 = vadd.f32 %v5067, %v5783
        %v5848 = vadd.f32 %v5068, %v5788
        %v5849 = vadd.f32 %v5069, %v5791
        %v5850 = vadd.f32 %v5070, %v5796
        %v5851 = vadd.f32 %v5071, %v5799
        %v5852 = vadd.f32 %v5072, %v5804
        %v5853 = vadd.f32 %v5073, %v5807
        %v5854 = vadd.f32 %v5074, %v5812
        %v5855 = vadd.f32 %v5075, %v5815
        %v5856 = vadd.f32 %v5076, %v5820
        %v5857 = vadd.f32 %v5077, %v5823
        %s5858 = scalar_lea.vmem %s2, 8
        %v5859 = vld [vmem:[%s5858] sm:$0x3]
        %v5860 = vunpack.c.l.b16 %v5529
        %v5861 = vunpack.c.l.b16 %v5539
        %v5862 = vpack.c.b16 %v5861, %v5860
        %v5864 = vsel %vm1057, %v5862, 0
        %v5867 = vsel %vm1106, %v5859, 0
        %5869 = vmatprep.subr.bf16.mxu0 0
        %5870 = vmatpush1.bf16.msra.mxu0 %v5867
        %5871 = vmatprep.subr.bf16.mxu0 0
        %5872 = vmatpush1.bf16.msra.mxu0 0
        %5873 = vmatprep.subr.bf16.mxu0 0
        %5874 = vmatpush1.bf16.msra.mxu0 0
        %5875 = vmatprep.subr.bf16.mxu0 0
        %5876 = vmatpush1.bf16.msra.mxu0 0
        %5877 = vmatprep.subr.bf16.mxu0 0
        %5878 = vmatpush1.bf16.msra.mxu0 0
        %5879 = vmatprep.subr.bf16.mxu0 0
        %5880 = vmatpush1.bf16.msra.mxu0 0
        %5881 = vmatprep.subr.bf16.mxu0 0
        %5882 = vmatpush1.bf16.msra.mxu0 0
        %5883 = vmatprep.subr.bf16.mxu0 0
        %5884 = vmatpush1.bf16.msra.mxu0 0
        %5885 = vmatprep.subr.bf16.mxu0 0
        %5886 = vmatpush1.bf16.msra.mxu0 0
        %5887 = vmatprep.subr.bf16.mxu0 0
        %5888 = vmatpush1.bf16.msra.mxu0 0
        %5889 = vmatprep.subr.bf16.mxu0 0
        %5890 = vmatpush1.bf16.msra.mxu0 0
        %5891 = vmatprep.subr.bf16.mxu0 0
        %5892 = vmatpush1.bf16.msra.mxu0 0
        %5893 = vmatprep.subr.bf16.mxu0 0
        %5894 = vmatpush1.bf16.msra.mxu0 0
        %5895 = vmatprep.subr.bf16.mxu0 0
        %5896 = vmatpush1.bf16.msra.mxu0 0
        %5897 = vmatprep.subr.bf16.mxu0 0
        %5898 = vmatpush1.bf16.msra.mxu0 0
        %5899 = vmatprep.subr.bf16.mxu0 0
        %5900 = vmatpush1.bf16.msra.mxu0 0
        %5901 = vmatprep.mubr.bf16.mxu0 0
        %5902 = vmatmul.mubr.bf16.gmra.mrb[0].mxu0 %v5618
        %v5903 = vpop.f32.mrb[0].mxu0
        %v5904 = vadd.f32 0.0, %v5903
        %v5905 = vpop.f32.mrb[0].mxu0
        %v5906 = vpop.f32.mrb[0].mxu0
        %v5907 = vadd.f32 0.0, %v5906
        %v5908 = vpop.f32.mrb[0].mxu0
        %5909 = vmatprep.mubr.bf16.mxu0 0
        %5910 = vmatmul.mubr.bf16.gmra.mrb[0].mxu0 %v5621
        %v5911 = vpop.f32.mrb[0].mxu0
        %v5912 = vadd.f32 0.0, %v5911
        %v5913 = vpop.f32.mrb[0].mxu0
        %v5914 = vpop.f32.mrb[0].mxu0
        %v5915 = vadd.f32 0.0, %v5914
        %v5916 = vpop.f32.mrb[0].mxu0
        %5917 = vmatprep.mubr.bf16.mxu0 0
        %5918 = vmatmul.mubr.bf16.gmra.mrb[0].mxu0 %v5624
        %v5919 = vpop.f32.mrb[0].mxu0
        %v5920 = vadd.f32 0.0, %v5919
        %v5921 = vpop.f32.mrb[0].mxu0
        %v5922 = vpop.f32.mrb[0].mxu0
        %v5923 = vadd.f32 0.0, %v5922
        %v5924 = vpop.f32.mrb[0].mxu0
        %5925 = vmatprep.mubr.bf16.mxu0 0
        %5926 = vmatmul.mubr.bf16.gmra.mrb[0].mxu0 %v5627
        %v5927 = vpop.f32.mrb[0].mxu0
        %v5928 = vadd.f32 0.0, %v5927
        %v5929 = vpop.f32.mrb[0].mxu0
        %v5930 = vpop.f32.mrb[0].mxu0
        %v5931 = vadd.f32 0.0, %v5930
        %v5932 = vpop.f32.mrb[0].mxu0
        %5933 = vmatprep.mubr.bf16.mxu0 0
        %5934 = vmatmul.mubr.bf16.gmra.mrb[0].mxu0 %v5630
        %v5935 = vpop.f32.mrb[0].mxu0
        %v5936 = vadd.f32 0.0, %v5935
        %v5937 = vpop.f32.mrb[0].mxu0
        %v5938 = vpop.f32.mrb[0].mxu0
        %v5939 = vadd.f32 0.0, %v5938
        %v5940 = vpop.f32.mrb[0].mxu0
        %5941 = vmatprep.mubr.bf16.mxu0 0
        %5942 = vmatmul.mubr.bf16.gmra.mrb[0].mxu0 %v5633
        %v5943 = vpop.f32.mrb[0].mxu0
        %v5944 = vadd.f32 0.0, %v5943
        %v5945 = vpop.f32.mrb[0].mxu0
        %v5946 = vpop.f32.mrb[0].mxu0
        %v5947 = vadd.f32 0.0, %v5946
        %v5948 = vpop.f32.mrb[0].mxu0
        %5949 = vmatprep.mubr.bf16.mxu0 0
        %5950 = vmatmul.mubr.bf16.gmra.mrb[0].mxu0 %v5636
        %v5951 = vpop.f32.mrb[0].mxu0
        %v5952 = vadd.f32 0.0, %v5951
        %v5953 = vpop.f32.mrb[0].mxu0
        %v5954 = vpop.f32.mrb[0].mxu0
        %v5955 = vadd.f32 0.0, %v5954
        %v5956 = vpop.f32.mrb[0].mxu0
        %5957 = vmatprep.mubr.bf16.mxu0 0
        %5958 = vmatmul.mubr.bf16.gmra.mrb[0].mxu0 %v5639
        %v5959 = vpop.f32.mrb[0].mxu0
        %v5960 = vadd.f32 0.0, %v5959
        %v5961 = vpop.f32.mrb[0].mxu0
        %v5962 = vpop.f32.mrb[0].mxu0
        %v5963 = vadd.f32 0.0, %v5962
        %v5964 = vpop.f32.mrb[0].mxu0
        %5965 = vmatprep.mubr.bf16.mxu0 0
        %5966 = vmatmul.mubr.bf16.gmra.mrb[0].mxu0 %v5642
        %v5967 = vpop.f32.mrb[0].mxu0
        %v5968 = vadd.f32 0.0, %v5967
        %v5969 = vpop.f32.mrb[0].mxu0
        %v5970 = vpop.f32.mrb[0].mxu0
        %v5971 = vadd.f32 0.0, %v5970
        %v5972 = vpop.f32.mrb[0].mxu0
        %5973 = vmatprep.mubr.bf16.mxu0 0
        %5974 = vmatmul.mubr.bf16.gmra.mrb[0].mxu0 %v5645
        %v5975 = vpop.f32.mrb[0].mxu0
        %v5976 = vadd.f32 0.0, %v5975
        %v5977 = vpop.f32.mrb[0].mxu0
        %v5978 = vpop.f32.mrb[0].mxu0
        %v5979 = vadd.f32 0.0, %v5978
        %v5980 = vpop.f32.mrb[0].mxu0
        %5981 = vmatprep.mubr.bf16.mxu0 0
        %5982 = vmatmul.mubr.bf16.gmra.mrb[0].mxu0 %v5648
        %v5983 = vpop.f32.mrb[0].mxu0
        %v5984 = vadd.f32 0.0, %v5983
        %v5985 = vpop.f32.mrb[0].mxu0
        %v5986 = vpop.f32.mrb[0].mxu0
        %v5987 = vadd.f32 0.0, %v5986
        %v5988 = vpop.f32.mrb[0].mxu0
        %5989 = vmatprep.mubr.bf16.mxu0 0
        %5990 = vmatmul.mubr.bf16.gmra.mrb[0].mxu0 %v5651
        %v5991 = vpop.f32.mrb[0].mxu0
        %v5992 = vadd.f32 0.0, %v5991
        %v5993 = vpop.f32.mrb[0].mxu0
        %v5994 = vpop.f32.mrb[0].mxu0
        %v5995 = vadd.f32 0.0, %v5994
        %v5996 = vpop.f32.mrb[0].mxu0
        %5997 = vmatprep.mubr.bf16.mxu0 0
        %5998 = vmatmul.mubr.bf16.gmra.mrb[0].mxu0 %v5654
        %v5999 = vpop.f32.mrb[0].mxu0
        %v6000 = vadd.f32 0.0, %v5999
        %v6001 = vpop.f32.mrb[0].mxu0
        %v6002 = vpop.f32.mrb[0].mxu0
        %v6003 = vadd.f32 0.0, %v6002
        %v6004 = vpop.f32.mrb[0].mxu0
        %6005 = vmatprep.mubr.bf16.mxu0 0
        %6006 = vmatmul.mubr.bf16.gmra.mrb[0].mxu0 %v5657
        %v6007 = vpop.f32.mrb[0].mxu0
        %v6008 = vadd.f32 0.0, %v6007
        %v6009 = vpop.f32.mrb[0].mxu0
        %v6010 = vpop.f32.mrb[0].mxu0
        %v6011 = vadd.f32 0.0, %v6010
        %v6012 = vpop.f32.mrb[0].mxu0
        %6013 = vmatprep.mubr.bf16.mxu0 0
        %6014 = vmatmul.mubr.bf16.gmra.mrb[0].mxu0 %v5660
        %v6015 = vpop.f32.mrb[0].mxu0
        %v6016 = vadd.f32 0.0, %v6015
        %v6017 = vpop.f32.mrb[0].mxu0
        %v6018 = vpop.f32.mrb[0].mxu0
        %v6019 = vadd.f32 0.0, %v6018
        %v6020 = vpop.f32.mrb[0].mxu0
        %6021 = vmatprep.mubr.bf16.mxu0 0
        %6022 = vmatmul.mubr.bf16.gmra.mrb[0].mxu0 %v5864
        %v6023 = vpop.f32.mrb[0].mxu0
        %v6024 = vadd.f32 0.0, %v6023
        %v6025 = vpop.f32.mrb[0].mxu0
        %v6026 = vpop.f32.mrb[0].mxu0
        %v6027 = vadd.f32 0.0, %v6026
        %v6028 = vpop.f32.mrb[0].mxu0
        %6029 = vdwg.mxu0
        %v6030 = vadd.f32 %v5826, %v5904
        %v6031 = vadd.f32 %v5827, %v5907
        %v6032 = vadd.f32 %v5828, %v5912
        %v6033 = vadd.f32 %v5829, %v5915
        %v6034 = vadd.f32 %v5830, %v5920
        %v6035 = vadd.f32 %v5831, %v5923
        %v6036 = vadd.f32 %v5832, %v5928
        %v6037 = vadd.f32 %v5833, %v5931
        %v6038 = vadd.f32 %v5834, %v5936
        %v6039 = vadd.f32 %v5835, %v5939
        %v6040 = vadd.f32 %v5836, %v5944
        %v6041 = vadd.f32 %v5837, %v5947
        %v6042 = vadd.f32 %v5838, %v5952
        %v6043 = vadd.f32 %v5839, %v5955
        %v6044 = vadd.f32 %v5840, %v5960
        %v6045 = vadd.f32 %v5841, %v5963
        %v6046 = vadd.f32 %v5842, %v5968
        %v6047 = vadd.f32 %v5843, %v5971
        %v6048 = vadd.f32 %v5844, %v5976
        %v6049 = vadd.f32 %v5845, %v5979
        %v6050 = vadd.f32 %v5846, %v5984
        %v6051 = vadd.f32 %v5847, %v5987
        %v6052 = vadd.f32 %v5848, %v5992
        %v6053 = vadd.f32 %v5849, %v5995
        %v6054 = vadd.f32 %v5850, %v6000
        %v6055 = vadd.f32 %v5851, %v6003
        %v6056 = vadd.f32 %v5852, %v6008
        %v6057 = vadd.f32 %v5853, %v6011
        %v6058 = vadd.f32 %v5854, %v6016
        %v6059 = vadd.f32 %v5855, %v6019
        %v6060 = vadd.f32 %v5856, %v6024
        %v6061 = vadd.f32 %v5857, %v6027
        %s6062 = scalar_lea.vmem %s2, 14
        %v6063 = vld [vmem:[%s6062] sm:$0x3]
        %v6064 = vunpack.c.l.b16 %v5553
        %v6065 = vunpack.c.l.b16 %v5563
        %v6066 = vpack.c.b16 %v6065, %v6064
        %v6068 = vsel %vm1057, %v6066, 0
        %v6071 = vsel %vm1106, %v6063, 0
        %6073 = vmatprep.subr.bf16.mxu0 0
        %6074 = vmatpush1.bf16.msra.mxu0 %v6071
        %6075 = vmatprep.subr.bf16.mxu0 0
        %6076 = vmatpush1.bf16.msra.mxu0 0
        %6077 = vmatprep.subr.bf16.mxu0 0
        %6078 = vmatpush1.bf16.msra.mxu0 0
        %6079 = vmatprep.subr.bf16.mxu0 0
        %6080 = vmatpush1.bf16.msra.mxu0 0
        %6081 = vmatprep.subr.bf16.mxu0 0
        %6082 = vmatpush1.bf16.msra.mxu0 0
        %6083 = vmatprep.subr.bf16.mxu0 0
        %6084 = vmatpush1.bf16.msra.mxu0 0
        %6085 = vmatprep.subr.bf16.mxu0 0
        %6086 = vmatpush1.bf16.msra.mxu0 0
        %6087 = vmatprep.subr.bf16.mxu0 0
        %6088 = vmatpush1.bf16.msra.mxu0 0
        %6089 = vmatprep.subr.bf16.mxu0 0
        %6090 = vmatpush1.bf16.msra.mxu0 0
        %6091 = vmatprep.subr.bf16.mxu0 0
        %6092 = vmatpush1.bf16.msra.mxu0 0
        %6093 = vmatprep.subr.bf16.mxu0 0
        %6094 = vmatpush1.bf16.msra.mxu0 0
        %6095 = vmatprep.subr.bf16.mxu0 0
        %6096 = vmatpush1.bf16.msra.mxu0 0
        %6097 = vmatprep.subr.bf16.mxu0 0
        %6098 = vmatpush1.bf16.msra.mxu0 0
        %6099 = vmatprep.subr.bf16.mxu0 0
        %6100 = vmatpush1.bf16.msra.mxu0 0
        %6101 = vmatprep.subr.bf16.mxu0 0
        %6102 = vmatpush1.bf16.msra.mxu0 0
        %6103 = vmatprep.subr.bf16.mxu0 0
        %6104 = vmatpush1.bf16.msra.mxu0 0
        %6105 = vmatprep.mubr.bf16.mxu0 0
        %6106 = vmatmul.mubr.bf16.gmra.mrb[0].mxu0 %v5621
        %v6107 = vpop.f32.mrb[0].mxu0
        %v6108 = vadd.f32 0.0, %v6107
        %v6109 = vpop.f32.mrb[0].mxu0
        %v6110 = vpop.f32.mrb[0].mxu0
        %v6111 = vadd.f32 0.0, %v6110
        %v6112 = vpop.f32.mrb[0].mxu0
        %6113 = vmatprep.mubr.bf16.mxu0 0
        %6114 = vmatmul.mubr.bf16.gmra.mrb[0].mxu0 %v5624
        %v6115 = vpop.f32.mrb[0].mxu0
        %v6116 = vadd.f32 0.0, %v6115
        %v6117 = vpop.f32.mrb[0].mxu0
        %v6118 = vpop.f32.mrb[0].mxu0
        %v6119 = vadd.f32 0.0, %v6118
        %v6120 = vpop.f32.mrb[0].mxu0
        %6121 = vmatprep.mubr.bf16.mxu0 0
        %6122 = vmatmul.mubr.bf16.gmra.mrb[0].mxu0 %v5627
        %v6123 = vpop.f32.mrb[0].mxu0
        %v6124 = vadd.f32 0.0, %v6123
        %v6125 = vpop.f32.mrb[0].mxu0
        %v6126 = vpop.f32.mrb[0].mxu0
        %v6127 = vadd.f32 0.0, %v6126
        %v6128 = vpop.f32.mrb[0].mxu0
        %6129 = vmatprep.mubr.bf16.mxu0 0
        %6130 = vmatmul.mubr.bf16.gmra.mrb[0].mxu0 %v5630
        %v6131 = vpop.f32.mrb[0].mxu0
        %v6132 = vadd.f32 0.0, %v6131
        %v6133 = vpop.f32.mrb[0].mxu0
        %v6134 = vpop.f32.mrb[0].mxu0
        %v6135 = vadd.f32 0.0, %v6134
        %v6136 = vpop.f32.mrb[0].mxu0
        %6137 = vmatprep.mubr.bf16.mxu0 0
        %6138 = vmatmul.mubr.bf16.gmra.mrb[0].mxu0 %v5633
        %v6139 = vpop.f32.mrb[0].mxu0
        %v6140 = vadd.f32 0.0, %v6139
        %v6141 = vpop.f32.mrb[0].mxu0
        %v6142 = vpop.f32.mrb[0].mxu0
        %v6143 = vadd.f32 0.0, %v6142
        %v6144 = vpop.f32.mrb[0].mxu0
        %6145 = vmatprep.mubr.bf16.mxu0 0
        %6146 = vmatmul.mubr.bf16.gmra.mrb[0].mxu0 %v5636
        %v6147 = vpop.f32.mrb[0].mxu0
        %v6148 = vadd.f32 0.0, %v6147
        %v6149 = vpop.f32.mrb[0].mxu0
        %v6150 = vpop.f32.mrb[0].mxu0
        %v6151 = vadd.f32 0.0, %v6150
        %v6152 = vpop.f32.mrb[0].mxu0
        %6153 = vmatprep.mubr.bf16.mxu0 0
        %6154 = vmatmul.mubr.bf16.gmra.mrb[0].mxu0 %v5639
        %v6155 = vpop.f32.mrb[0].mxu0
        %v6156 = vadd.f32 0.0, %v6155
        %v6157 = vpop.f32.mrb[0].mxu0
        %v6158 = vpop.f32.mrb[0].mxu0
        %v6159 = vadd.f32 0.0, %v6158
        %v6160 = vpop.f32.mrb[0].mxu0
        %6161 = vmatprep.mubr.bf16.mxu0 0
        %6162 = vmatmul.mubr.bf16.gmra.mrb[0].mxu0 %v5642
        %v6163 = vpop.f32.mrb[0].mxu0
        %v6164 = vadd.f32 0.0, %v6163
        %v6165 = vpop.f32.mrb[0].mxu0
        %v6166 = vpop.f32.mrb[0].mxu0
        %v6167 = vadd.f32 0.0, %v6166
        %v6168 = vpop.f32.mrb[0].mxu0
        %6169 = vmatprep.mubr.bf16.mxu0 0
        %6170 = vmatmul.mubr.bf16.gmra.mrb[0].mxu0 %v5645
        %v6171 = vpop.f32.mrb[0].mxu0
        %v6172 = vadd.f32 0.0, %v6171
        %v6173 = vpop.f32.mrb[0].mxu0
        %v6174 = vpop.f32.mrb[0].mxu0
        %v6175 = vadd.f32 0.0, %v6174
        %v6176 = vpop.f32.mrb[0].mxu0
        %6177 = vmatprep.mubr.bf16.mxu0 0
        %6178 = vmatmul.mubr.bf16.gmra.mrb[0].mxu0 %v5648
        %v6179 = vpop.f32.mrb[0].mxu0
        %v6180 = vadd.f32 0.0, %v6179
        %v6181 = vpop.f32.mrb[0].mxu0
        %v6182 = vpop.f32.mrb[0].mxu0
        %v6183 = vadd.f32 0.0, %v6182
        %v6184 = vpop.f32.mrb[0].mxu0
        %6185 = vmatprep.mubr.bf16.mxu0 0
        %6186 = vmatmul.mubr.bf16.gmra.mrb[0].mxu0 %v5651
        %v6187 = vpop.f32.mrb[0].mxu0
        %v6188 = vadd.f32 0.0, %v6187
        %v6189 = vpop.f32.mrb[0].mxu0
        %v6190 = vpop.f32.mrb[0].mxu0
        %v6191 = vadd.f32 0.0, %v6190
        %v6192 = vpop.f32.mrb[0].mxu0
        %6193 = vmatprep.mubr.bf16.mxu0 0
        %6194 = vmatmul.mubr.bf16.gmra.mrb[0].mxu0 %v5654
        %v6195 = vpop.f32.mrb[0].mxu0
        %v6196 = vadd.f32 0.0, %v6195
        %v6197 = vpop.f32.mrb[0].mxu0
        %v6198 = vpop.f32.mrb[0].mxu0
        %v6199 = vadd.f32 0.0, %v6198
        %v6200 = vpop.f32.mrb[0].mxu0
        %6201 = vmatprep.mubr.bf16.mxu0 0
        %6202 = vmatmul.mubr.bf16.gmra.mrb[0].mxu0 %v5657
        %v6203 = vpop.f32.mrb[0].mxu0
        %v6204 = vadd.f32 0.0, %v6203
        %v6205 = vpop.f32.mrb[0].mxu0
        %v6206 = vpop.f32.mrb[0].mxu0
        %v6207 = vadd.f32 0.0, %v6206
        %v6208 = vpop.f32.mrb[0].mxu0
        %6209 = vmatprep.mubr.bf16.mxu0 0
        %6210 = vmatmul.mubr.bf16.gmra.mrb[0].mxu0 %v5660
        %v6211 = vpop.f32.mrb[0].mxu0
        %v6212 = vadd.f32 0.0, %v6211
        %v6213 = vpop.f32.mrb[0].mxu0
        %v6214 = vpop.f32.mrb[0].mxu0
        %v6215 = vadd.f32 0.0, %v6214
        %v6216 = vpop.f32.mrb[0].mxu0
        %6217 = vmatprep.mubr.bf16.mxu0 0
        %6218 = vmatmul.mubr.bf16.gmra.mrb[0].mxu0 %v5864
        %v6219 = vpop.f32.mrb[0].mxu0
        %v6220 = vadd.f32 0.0, %v6219
        %v6221 = vpop.f32.mrb[0].mxu0
        %v6222 = vpop.f32.mrb[0].mxu0
        %v6223 = vadd.f32 0.0, %v6222
        %v6224 = vpop.f32.mrb[0].mxu0
        %6225 = vmatprep.mubr.bf16.mxu0 0
        %6226 = vmatmul.mubr.bf16.gmra.mrb[0].mxu0 %v6068
        %v6227 = vpop.f32.mrb[0].mxu0
        %v6228 = vadd.f32 0.0, %v6227
        %v6229 = vpop.f32.mrb[0].mxu0
        %v6230 = vpop.f32.mrb[0].mxu0
        %v6231 = vadd.f32 0.0, %v6230
        %v6232 = vpop.f32.mrb[0].mxu0
        %6233 = vdwg.mxu0
        %v6234 = vadd.f32 %v6030, %v6108
        %v6235 = vadd.f32 %v6031, %v6111
        %v6236 = vadd.f32 %v6032, %v6116
        %v6237 = vadd.f32 %v6033, %v6119
        %v6238 = vadd.f32 %v6034, %v6124
        %v6239 = vadd.f32 %v6035, %v6127
        %v6240 = vadd.f32 %v6036, %v6132
        %v6241 = vadd.f32 %v6037, %v6135
        %v6242 = vadd.f32 %v6038, %v6140
        %v6243 = vadd.f32 %v6039, %v6143
        %v6244 = vadd.f32 %v6040, %v6148
        %v6245 = vadd.f32 %v6041, %v6151
        %v6246 = vadd.f32 %v6042, %v6156
        %v6247 = vadd.f32 %v6043, %v6159
        %v6248 = vadd.f32 %v6044, %v6164
        %v6249 = vadd.f32 %v6045, %v6167
        %v6250 = vadd.f32 %v6046, %v6172
        %v6251 = vadd.f32 %v6047, %v6175
        %v6252 = vadd.f32 %v6048, %v6180
        %v6253 = vadd.f32 %v6049, %v6183
        %v6254 = vadd.f32 %v6050, %v6188
        %v6255 = vadd.f32 %v6051, %v6191
        %v6256 = vadd.f32 %v6052, %v6196
        %v6257 = vadd.f32 %v6053, %v6199
        %v6258 = vadd.f32 %v6054, %v6204
        %v6259 = vadd.f32 %v6055, %v6207
        %v6260 = vadd.f32 %v6056, %v6212
        %v6261 = vadd.f32 %v6057, %v6215
        %v6262 = vadd.f32 %v6058, %v6220
        %v6263 = vadd.f32 %v6059, %v6223
        %v6264 = vadd.f32 %v6060, %v6228
        %v6265 = vadd.f32 %v6061, %v6231
        %v6266 = vld [vmem:[#allocation2] sm:$0xe]
        %v6267 = vld [vmem:[#allocation2 + $0xc] sm:$0xe]
        %v6268 = vld [vmem:[#allocation2 + $0x18] sm:$0xe]
        %v6269 = vld [vmem:[#allocation2 + $0x24] sm:$0xe]
        %v6270 = vld [vmem:[#allocation2 + $0x30] sm:$0xe]
        %v6271 = vld [vmem:[#allocation2 + $0x3c] sm:$0xe]
        %v6272 = vld [vmem:[#allocation2 + $0x48] sm:$0xe]
        %v6273 = vld [vmem:[#allocation2 + $0x54] sm:$0xe]
        %v6274 = vld [vmem:[#allocation2 + $0x60] sm:$0xe]
        %v6275 = vld [vmem:[#allocation2 + $0x6c] sm:$0xe]
        %v6276 = vld [vmem:[#allocation2 + $0x78] sm:$0xe]
        %v6277 = vld [vmem:[#allocation2 + $0x84] sm:$0xe]
        %v6278 = vld [vmem:[#allocation2 + $0x90] sm:$0xe]
        %v6279 = vld [vmem:[#allocation2 + $0x9c] sm:$0xe]
        %v6280 = vld [vmem:[#allocation2 + $0xa8] sm:$0xe]
        %v6281 = vld [vmem:[#allocation2 + $0xb4] sm:$0xe]
        %v6282 = vld [vmem:[#allocation2 + $0xc0] sm:$0xe]
        %v6283 = vld [vmem:[#allocation2 + $0xcc] sm:$0xe]
        %v6338 = vrot.slane %v6266, 5
        %v6339 = vrot.slane %v6338, 4
        %v6340 = vrot.slane %v5079, 5
        %v6341 = vsel %vm2914, %v6339, %v6340
        %v6342 = vrot.slane %v6340, 4
        %v6343 = vrot.slane %v5080, 5
        %v6344 = vsel %vm2914, %v6342, %v6343
        %v6345 = vrot.slane %v6267, 5
        %v6346 = vrot.slane %v6345, 4
        %v6347 = vrot.slane %v5082, 5
        %v6348 = vsel %vm2914, %v6346, %v6347
        %v6349 = vrot.slane %v6347, 4
        %v6350 = vrot.slane %v5083, 5
        %v6351 = vsel %vm2914, %v6349, %v6350
        %v6352 = vrot.slane %v6268, 5
        %v6353 = vrot.slane %v6352, 4
        %v6354 = vrot.slane %v5085, 5
        %v6355 = vsel %vm2914, %v6353, %v6354
        %v6356 = vrot.slane %v6354, 4
        %v6357 = vrot.slane %v5086, 5
        %v6358 = vsel %vm2914, %v6356, %v6357
        %v6359 = vrot.slane %v6269, 5
        %v6360 = vrot.slane %v6359, 4
        %v6361 = vrot.slane %v5088, 5
        %v6362 = vsel %vm2914, %v6360, %v6361
        %v6363 = vrot.slane %v6361, 4
        %v6364 = vrot.slane %v5089, 5
        %v6365 = vsel %vm2914, %v6363, %v6364
        %v6366 = vrot.slane %v6270, 5
        %v6367 = vrot.slane %v6366, 4
        %v6368 = vrot.slane %v5091, 5
        %v6369 = vsel %vm2914, %v6367, %v6368
        %v6370 = vrot.slane %v6368, 4
        %v6371 = vrot.slane %v5092, 5
        %v6372 = vsel %vm2914, %v6370, %v6371
        %v6373 = vrot.slane %v6271, 5
        %v6374 = vrot.slane %v6373, 4
        %v6375 = vrot.slane %v5094, 5
        %v6376 = vsel %vm2914, %v6374, %v6375
        %v6377 = vrot.slane %v6375, 4
        %v6378 = vrot.slane %v5095, 5
        %v6379 = vsel %vm2914, %v6377, %v6378
        %v6380 = vrot.slane %v6272, 5
        %v6381 = vrot.slane %v6380, 4
        %v6382 = vrot.slane %v5097, 5
        %v6383 = vsel %vm2914, %v6381, %v6382
        %v6384 = vrot.slane %v6382, 4
        %v6385 = vrot.slane %v5098, 5
        %v6386 = vsel %vm2914, %v6384, %v6385
        %v6387 = vrot.slane %v6273, 5
        %v6388 = vrot.slane %v6387, 4
        %v6389 = vrot.slane %v5100, 5
        %v6390 = vsel %vm2914, %v6388, %v6389
        %v6391 = vrot.slane %v6389, 4
        %v6392 = vrot.slane %v5101, 5
        %v6393 = vsel %vm2914, %v6391, %v6392
        %v6394 = vrot.slane %v6274, 5
        %v6395 = vrot.slane %v6394, 4
        %v6396 = vrot.slane %v5103, 5
        %v6397 = vsel %vm2914, %v6395, %v6396
        %v6398 = vrot.slane %v6396, 4
        %v6399 = vrot.slane %v5104, 5
        %v6400 = vsel %vm2914, %v6398, %v6399
        %v6401 = vrot.slane %v6275, 5
        %v6402 = vrot.slane %v6401, 4
        %v6403 = vrot.slane %v5106, 5
        %v6404 = vsel %vm2914, %v6402, %v6403
        %v6405 = vrot.slane %v6403, 4
        %v6406 = vrot.slane %v5107, 5
        %v6407 = vsel %vm2914, %v6405, %v6406
        %v6408 = vrot.slane %v6276, 5
        %v6409 = vrot.slane %v6408, 4
        %v6410 = vrot.slane %v5109, 5
        %v6411 = vsel %vm2914, %v6409, %v6410
        %v6412 = vrot.slane %v6410, 4
        %v6413 = vrot.slane %v5110, 5
        %v6414 = vsel %vm2914, %v6412, %v6413
        %v6415 = vrot.slane %v6277, 5
        %v6416 = vrot.slane %v6415, 4
        %v6417 = vrot.slane %v5112, 5
        %v6418 = vsel %vm2914, %v6416, %v6417
        %v6419 = vrot.slane %v6417, 4
        %v6420 = vrot.slane %v5113, 5
        %v6421 = vsel %vm2914, %v6419, %v6420
        %v6422 = vrot.slane %v6278, 5
        %v6423 = vrot.slane %v6422, 4
        %v6424 = vrot.slane %v5115, 5
        %v6425 = vsel %vm2914, %v6423, %v6424
        %v6426 = vrot.slane %v6424, 4
        %v6427 = vrot.slane %v5116, 5
        %v6428 = vsel %vm2914, %v6426, %v6427
        %v6429 = vrot.slane %v6279, 5
        %v6430 = vrot.slane %v6429, 4
        %v6431 = vrot.slane %v5118, 5
        %v6432 = vsel %vm2914, %v6430, %v6431
        %v6433 = vrot.slane %v6431, 4
        %v6434 = vrot.slane %v5119, 5
        %v6435 = vsel %vm2914, %v6433, %v6434
        %v6436 = vrot.slane %v6280, 5
        %v6437 = vrot.slane %v6436, 4
        %v6438 = vrot.slane %v5121, 5
        %v6439 = vsel %vm2914, %v6437, %v6438
        %v6440 = vrot.slane %v6438, 4
        %v6441 = vrot.slane %v5122, 5
        %v6442 = vsel %vm2914, %v6440, %v6441
        %v6443 = vrot.slane %v6281, 5
        %v6444 = vrot.slane %v6443, 4
        %v6445 = vrot.slane %v5124, 5
        %v6446 = vsel %vm2914, %v6444, %v6445
        %v6447 = vrot.slane %v6445, 4
        %v6448 = vrot.slane %v5125, 5
        %v6449 = vsel %vm2914, %v6447, %v6448
        %v6450 = vrot.slane %v6282, 5
        %v6451 = vrot.slane %v6450, 4
        %v6452 = vrot.slane %v5127, 5
        %v6453 = vsel %vm2914, %v6451, %v6452
        %v6454 = vrot.slane %v6452, 4
        %v6455 = vrot.slane %v5128, 5
        %v6456 = vsel %vm2914, %v6454, %v6455
        %v6457 = vrot.slane %v6283, 5
        %v6458 = vrot.slane %v6457, 4
        %v6459 = vrot.slane %v5130, 5
        %v6460 = vsel %vm2914, %v6458, %v6459
        %v6461 = vrot.slane %v6459, 4
        %v6462 = vrot.slane %v5131, 5
        %v6463 = vsel %vm2914, %v6461, %v6462
        %s6464 = scalar_lea.vmem %s2, 4
        %v6465 = vld [vmem:[%s6464] sm:$0x3]
        %v6466 = vunpack.c.l.b16 %v6341
        %v6467 = vunpack.c.l.b16 %v6344
        %v6468 = vunpack.c.l.b16 %v6348
        %v6469 = vunpack.c.l.b16 %v6351
        %v6470 = vunpack.c.l.b16 %v6355
        %v6471 = vunpack.c.l.b16 %v6358
        %v6472 = vunpack.c.l.b16 %v6362
        %v6473 = vunpack.c.l.b16 %v6365
        %v6474 = vunpack.c.l.b16 %v6369
        %v6475 = vunpack.c.l.b16 %v6372
        %v6476 = vunpack.c.l.b16 %v6376
        %v6477 = vunpack.c.l.b16 %v6379
        %v6478 = vunpack.c.l.b16 %v6383
        %v6479 = vunpack.c.l.b16 %v6386
        %v6480 = vunpack.c.l.b16 %v6390
        %v6481 = vunpack.c.l.b16 %v6393
        %v6482 = vunpack.c.l.b16 %v6397
        %v6483 = vunpack.c.l.b16 %v6400
        %v6484 = vunpack.c.l.b16 %v6404
        %v6485 = vunpack.c.l.b16 %v6407
        %v6486 = vunpack.c.l.b16 %v6411
        %v6487 = vunpack.c.l.b16 %v6414
        %v6488 = vunpack.c.l.b16 %v6418
        %v6489 = vunpack.c.l.b16 %v6421
        %v6490 = vunpack.c.l.b16 %v6425
        %v6491 = vunpack.c.l.b16 %v6428
        %v6492 = vunpack.c.l.b16 %v6432
        %v6493 = vunpack.c.l.b16 %v6435
        %v6494 = vunpack.c.l.b16 %v6439
        %v6495 = vunpack.c.l.b16 %v6442
        %v6496 = vunpack.c.l.b16 %v6446
        %v6497 = vunpack.c.l.b16 %v6449
        %v6498 = vpack.c.b16 %v6467, %v6466
        %v6499 = vpack.c.b16 %v6469, %v6468
        %v6500 = vpack.c.b16 %v6471, %v6470
        %v6501 = vpack.c.b16 %v6473, %v6472
        %v6502 = vpack.c.b16 %v6475, %v6474
        %v6503 = vpack.c.b16 %v6477, %v6476
        %v6504 = vpack.c.b16 %v6479, %v6478
        %v6505 = vpack.c.b16 %v6481, %v6480
        %v6506 = vpack.c.b16 %v6483, %v6482
        %v6507 = vpack.c.b16 %v6485, %v6484
        %v6508 = vpack.c.b16 %v6487, %v6486
        %v6509 = vpack.c.b16 %v6489, %v6488
        %v6510 = vpack.c.b16 %v6491, %v6490
        %v6511 = vpack.c.b16 %v6493, %v6492
        %v6512 = vpack.c.b16 %v6495, %v6494
        %v6513 = vpack.c.b16 %v6497, %v6496
        %v6515 = vsel %vm1057, %v6498, 0
        %v6518 = vsel %vm1057, %v6499, 0
        %v6521 = vsel %vm1057, %v6500, 0
        %v6524 = vsel %vm1057, %v6501, 0
        %v6527 = vsel %vm1057, %v6502, 0
        %v6530 = vsel %vm1057, %v6503, 0
        %v6533 = vsel %vm1057, %v6504, 0
        %v6536 = vsel %vm1057, %v6505, 0
        %v6539 = vsel %vm1057, %v6506, 0
        %v6542 = vsel %vm1057, %v6507, 0
        %v6545 = vsel %vm1057, %v6508, 0
        %v6548 = vsel %vm1057, %v6509, 0
        %v6551 = vsel %vm1057, %v6510, 0
        %v6554 = vsel %vm1057, %v6511, 0
        %v6557 = vsel %vm1057, %v6512, 0
        %v6560 = vsel %vm1057, %v6513, 0
        %v6563 = vsel %vm1106, %v6465, 0
        %6565 = vmatprep.subr.bf16.mxu0 0
        %6566 = vmatpush1.bf16.msra.mxu0 %v6563
        %6567 = vmatprep.subr.bf16.mxu0 0
        %6568 = vmatpush1.bf16.msra.mxu0 0
        %6569 = vmatprep.subr.bf16.mxu0 0
        %6570 = vmatpush1.bf16.msra.mxu0 0
        %6571 = vmatprep.subr.bf16.mxu0 0
        %6572 = vmatpush1.bf16.msra.mxu0 0
        %6573 = vmatprep.subr.bf16.mxu0 0
        %6574 = vmatpush1.bf16.msra.mxu0 0
        %6575 = vmatprep.subr.bf16.mxu0 0
        %6576 = vmatpush1.bf16.msra.mxu0 0
        %6577 = vmatprep.subr.bf16.mxu0 0
        %6578 = vmatpush1.bf16.msra.mxu0 0
        %6579 = vmatprep.subr.bf16.mxu0 0
        %6580 = vmatpush1.bf16.msra.mxu0 0
        %6581 = vmatprep.subr.bf16.mxu0 0
        %6582 = vmatpush1.bf16.msra.mxu0 0
        %6583 = vmatprep.subr.bf16.mxu0 0
        %6584 = vmatpush1.bf16.msra.mxu0 0
        %6585 = vmatprep.subr.bf16.mxu0 0
        %6586 = vmatpush1.bf16.msra.mxu0 0
        %6587 = vmatprep.subr.bf16.mxu0 0
        %6588 = vmatpush1.bf16.msra.mxu0 0
        %6589 = vmatprep.subr.bf16.mxu0 0
        %6590 = vmatpush1.bf16.msra.mxu0 0
        %6591 = vmatprep.subr.bf16.mxu0 0
        %6592 = vmatpush1.bf16.msra.mxu0 0
        %6593 = vmatprep.subr.bf16.mxu0 0
        %6594 = vmatpush1.bf16.msra.mxu0 0
        %6595 = vmatprep.subr.bf16.mxu0 0
        %6596 = vmatpush1.bf16.msra.mxu0 0
        %6597 = vmatprep.mubr.bf16.mxu0 0
        %6598 = vmatmul.mubr.bf16.gmra.mrb[0].mxu0 %v6515
        %v6599 = vpop.f32.mrb[0].mxu0
        %v6600 = vadd.f32 0.0, %v6599
        %v6601 = vpop.f32.mrb[0].mxu0
        %v6602 = vpop.f32.mrb[0].mxu0
        %v6603 = vadd.f32 0.0, %v6602
        %v6604 = vpop.f32.mrb[0].mxu0
        %6605 = vmatprep.mubr.bf16.mxu0 0
        %6606 = vmatmul.mubr.bf16.gmra.mrb[0].mxu0 %v6518
        %v6607 = vpop.f32.mrb[0].mxu0
        %v6608 = vadd.f32 0.0, %v6607
        %v6609 = vpop.f32.mrb[0].mxu0
        %v6610 = vpop.f32.mrb[0].mxu0
        %v6611 = vadd.f32 0.0, %v6610
        %v6612 = vpop.f32.mrb[0].mxu0
        %6613 = vmatprep.mubr.bf16.mxu0 0
        %6614 = vmatmul.mubr.bf16.gmra.mrb[0].mxu0 %v6521
        %v6615 = vpop.f32.mrb[0].mxu0
        %v6616 = vadd.f32 0.0, %v6615
        %v6617 = vpop.f32.mrb[0].mxu0
        %v6618 = vpop.f32.mrb[0].mxu0
        %v6619 = vadd.f32 0.0, %v6618
        %v6620 = vpop.f32.mrb[0].mxu0
        %6621 = vmatprep.mubr.bf16.mxu0 0
        %6622 = vmatmul.mubr.bf16.gmra.mrb[0].mxu0 %v6524
        %v6623 = vpop.f32.mrb[0].mxu0
        %v6624 = vadd.f32 0.0, %v6623
        %v6625 = vpop.f32.mrb[0].mxu0
        %v6626 = vpop.f32.mrb[0].mxu0
        %v6627 = vadd.f32 0.0, %v6626
        %v6628 = vpop.f32.mrb[0].mxu0
        %6629 = vmatprep.mubr.bf16.mxu0 0
        %6630 = vmatmul.mubr.bf16.gmra.mrb[0].mxu0 %v6527
        %v6631 = vpop.f32.mrb[0].mxu0
        %v6632 = vadd.f32 0.0, %v6631
        %v6633 = vpop.f32.mrb[0].mxu0
        %v6634 = vpop.f32.mrb[0].mxu0
        %v6635 = vadd.f32 0.0, %v6634
        %v6636 = vpop.f32.mrb[0].mxu0
        %6637 = vmatprep.mubr.bf16.mxu0 0
        %6638 = vmatmul.mubr.bf16.gmra.mrb[0].mxu0 %v6530
        %v6639 = vpop.f32.mrb[0].mxu0
        %v6640 = vadd.f32 0.0, %v6639
        %v6641 = vpop.f32.mrb[0].mxu0
        %v6642 = vpop.f32.mrb[0].mxu0
        %v6643 = vadd.f32 0.0, %v6642
        %v6644 = vpop.f32.mrb[0].mxu0
        %6645 = vmatprep.mubr.bf16.mxu0 0
        %6646 = vmatmul.mubr.bf16.gmra.mrb[0].mxu0 %v6533
        %v6647 = vpop.f32.mrb[0].mxu0
        %v6648 = vadd.f32 0.0, %v6647
        %v6649 = vpop.f32.mrb[0].mxu0
        %v6650 = vpop.f32.mrb[0].mxu0
        %v6651 = vadd.f32 0.0, %v6650
        %v6652 = vpop.f32.mrb[0].mxu0
        %6653 = vmatprep.mubr.bf16.mxu0 0
        %6654 = vmatmul.mubr.bf16.gmra.mrb[0].mxu0 %v6536
        %v6655 = vpop.f32.mrb[0].mxu0
        %v6656 = vadd.f32 0.0, %v6655
        %v6657 = vpop.f32.mrb[0].mxu0
        %v6658 = vpop.f32.mrb[0].mxu0
        %v6659 = vadd.f32 0.0, %v6658
        %v6660 = vpop.f32.mrb[0].mxu0
        %6661 = vmatprep.mubr.bf16.mxu0 0
        %6662 = vmatmul.mubr.bf16.gmra.mrb[0].mxu0 %v6539
        %v6663 = vpop.f32.mrb[0].mxu0
        %v6664 = vadd.f32 0.0, %v6663
        %v6665 = vpop.f32.mrb[0].mxu0
        %v6666 = vpop.f32.mrb[0].mxu0
        %v6667 = vadd.f32 0.0, %v6666
        %v6668 = vpop.f32.mrb[0].mxu0
        %6669 = vmatprep.mubr.bf16.mxu0 0
        %6670 = vmatmul.mubr.bf16.gmra.mrb[0].mxu0 %v6542
        %v6671 = vpop.f32.mrb[0].mxu0
        %v6672 = vadd.f32 0.0, %v6671
        %v6673 = vpop.f32.mrb[0].mxu0
        %v6674 = vpop.f32.mrb[0].mxu0
        %v6675 = vadd.f32 0.0, %v6674
        %v6676 = vpop.f32.mrb[0].mxu0
        %6677 = vmatprep.mubr.bf16.mxu0 0
        %6678 = vmatmul.mubr.bf16.gmra.mrb[0].mxu0 %v6545
        %v6679 = vpop.f32.mrb[0].mxu0
        %v6680 = vadd.f32 0.0, %v6679
        %v6681 = vpop.f32.mrb[0].mxu0
        %v6682 = vpop.f32.mrb[0].mxu0
        %v6683 = vadd.f32 0.0, %v6682
        %v6684 = vpop.f32.mrb[0].mxu0
        %6685 = vmatprep.mubr.bf16.mxu0 0
        %6686 = vmatmul.mubr.bf16.gmra.mrb[0].mxu0 %v6548
        %v6687 = vpop.f32.mrb[0].mxu0
        %v6688 = vadd.f32 0.0, %v6687
        %v6689 = vpop.f32.mrb[0].mxu0
        %v6690 = vpop.f32.mrb[0].mxu0
        %v6691 = vadd.f32 0.0, %v6690
        %v6692 = vpop.f32.mrb[0].mxu0
        %6693 = vmatprep.mubr.bf16.mxu0 0
        %6694 = vmatmul.mubr.bf16.gmra.mrb[0].mxu0 %v6551
        %v6695 = vpop.f32.mrb[0].mxu0
        %v6696 = vadd.f32 0.0, %v6695
        %v6697 = vpop.f32.mrb[0].mxu0
        %v6698 = vpop.f32.mrb[0].mxu0
        %v6699 = vadd.f32 0.0, %v6698
        %v6700 = vpop.f32.mrb[0].mxu0
        %6701 = vmatprep.mubr.bf16.mxu0 0
        %6702 = vmatmul.mubr.bf16.gmra.mrb[0].mxu0 %v6554
        %v6703 = vpop.f32.mrb[0].mxu0
        %v6704 = vadd.f32 0.0, %v6703
        %v6705 = vpop.f32.mrb[0].mxu0
        %v6706 = vpop.f32.mrb[0].mxu0
        %v6707 = vadd.f32 0.0, %v6706
        %v6708 = vpop.f32.mrb[0].mxu0
        %6709 = vmatprep.mubr.bf16.mxu0 0
        %6710 = vmatmul.mubr.bf16.gmra.mrb[0].mxu0 %v6557
        %v6711 = vpop.f32.mrb[0].mxu0
        %v6712 = vadd.f32 0.0, %v6711
        %v6713 = vpop.f32.mrb[0].mxu0
        %v6714 = vpop.f32.mrb[0].mxu0
        %v6715 = vadd.f32 0.0, %v6714
        %v6716 = vpop.f32.mrb[0].mxu0
        %6717 = vmatprep.mubr.bf16.mxu0 0
        %6718 = vmatmul.mubr.bf16.gmra.mrb[0].mxu0 %v6560
        %v6719 = vpop.f32.mrb[0].mxu0
        %v6720 = vadd.f32 0.0, %v6719
        %v6721 = vpop.f32.mrb[0].mxu0
        %v6722 = vpop.f32.mrb[0].mxu0
        %v6723 = vadd.f32 0.0, %v6722
        %v6724 = vpop.f32.mrb[0].mxu0
        %6725 = vdwg.mxu0
        %v6726 = vadd.f32 %v6234, %v6600
        %v6727 = vadd.f32 %v6235, %v6603
        %v6728 = vadd.f32 %v6236, %v6608
        %v6729 = vadd.f32 %v6237, %v6611
        %v6730 = vadd.f32 %v6238, %v6616
        %v6731 = vadd.f32 %v6239, %v6619
        %v6732 = vadd.f32 %v6240, %v6624
        %v6733 = vadd.f32 %v6241, %v6627
        %v6734 = vadd.f32 %v6242, %v6632
        %v6735 = vadd.f32 %v6243, %v6635
        %v6736 = vadd.f32 %v6244, %v6640
        %v6737 = vadd.f32 %v6245, %v6643
        %v6738 = vadd.f32 %v6246, %v6648
        %v6739 = vadd.f32 %v6247, %v6651
        %v6740 = vadd.f32 %v6248, %v6656
        %v6741 = vadd.f32 %v6249, %v6659
        %v6742 = vadd.f32 %v6250, %v6664
        %v6743 = vadd.f32 %v6251, %v6667
        %v6744 = vadd.f32 %v6252, %v6672
        %v6745 = vadd.f32 %v6253, %v6675
        %v6746 = vadd.f32 %v6254, %v6680
        %v6747 = vadd.f32 %v6255, %v6683
        %v6748 = vadd.f32 %v6256, %v6688
        %v6749 = vadd.f32 %v6257, %v6691
        %v6750 = vadd.f32 %v6258, %v6696
        %v6751 = vadd.f32 %v6259, %v6699
        %v6752 = vadd.f32 %v6260, %v6704
        %v6753 = vadd.f32 %v6261, %v6707
        %v6754 = vadd.f32 %v6262, %v6712
        %v6755 = vadd.f32 %v6263, %v6715
        %v6756 = vadd.f32 %v6264, %v6720
        %v6757 = vadd.f32 %v6265, %v6723
        %s6758 = scalar_lea.vmem %s2, 10
        %v6759 = vld [vmem:[%s6758] sm:$0x3]
        %v6760 = vunpack.c.l.b16 %v6453
        %v6761 = vunpack.c.l.b16 %v6456
        %v6762 = vpack.c.b16 %v6761, %v6760
        %v6764 = vsel %vm1057, %v6762, 0
        %v6767 = vsel %vm1106, %v6759, 0
        %6769 = vmatprep.subr.bf16.mxu0 0
        %6770 = vmatpush1.bf16.msra.mxu0 %v6767
        %6771 = vmatprep.subr.bf16.mxu0 0
        %6772 = vmatpush1.bf16.msra.mxu0 0
        %6773 = vmatprep.subr.bf16.mxu0 0
        %6774 = vmatpush1.bf16.msra.mxu0 0
        %6775 = vmatprep.subr.bf16.mxu0 0
        %6776 = vmatpush1.bf16.msra.mxu0 0
        %6777 = vmatprep.subr.bf16.mxu0 0
        %6778 = vmatpush1.bf16.msra.mxu0 0
        %6779 = vmatprep.subr.bf16.mxu0 0
        %6780 = vmatpush1.bf16.msra.mxu0 0
        %6781 = vmatprep.subr.bf16.mxu0 0
        %6782 = vmatpush1.bf16.msra.mxu0 0
        %6783 = vmatprep.subr.bf16.mxu0 0
        %6784 = vmatpush1.bf16.msra.mxu0 0
        %6785 = vmatprep.subr.bf16.mxu0 0
        %6786 = vmatpush1.bf16.msra.mxu0 0
        %6787 = vmatprep.subr.bf16.mxu0 0
        %6788 = vmatpush1.bf16.msra.mxu0 0
        %6789 = vmatprep.subr.bf16.mxu0 0
        %6790 = vmatpush1.bf16.msra.mxu0 0
        %6791 = vmatprep.subr.bf16.mxu0 0
        %6792 = vmatpush1.bf16.msra.mxu0 0
        %6793 = vmatprep.subr.bf16.mxu0 0
        %6794 = vmatpush1.bf16.msra.mxu0 0
        %6795 = vmatprep.subr.bf16.mxu0 0
        %6796 = vmatpush1.bf16.msra.mxu0 0
        %6797 = vmatprep.subr.bf16.mxu0 0
        %6798 = vmatpush1.bf16.msra.mxu0 0
        %6799 = vmatprep.subr.bf16.mxu0 0
        %6800 = vmatpush1.bf16.msra.mxu0 0
        %6801 = vmatprep.mubr.bf16.mxu0 0
        %6802 = vmatmul.mubr.bf16.gmra.mrb[0].mxu0 %v6518
        %v6803 = vpop.f32.mrb[0].mxu0
        %v6804 = vadd.f32 0.0, %v6803
        %v6805 = vpop.f32.mrb[0].mxu0
        %v6806 = vpop.f32.mrb[0].mxu0
        %v6807 = vadd.f32 0.0, %v6806
        %v6808 = vpop.f32.mrb[0].mxu0
        %6809 = vmatprep.mubr.bf16.mxu0 0
        %6810 = vmatmul.mubr.bf16.gmra.mrb[0].mxu0 %v6521
        %v6811 = vpop.f32.mrb[0].mxu0
        %v6812 = vadd.f32 0.0, %v6811
        %v6813 = vpop.f32.mrb[0].mxu0
        %v6814 = vpop.f32.mrb[0].mxu0
        %v6815 = vadd.f32 0.0, %v6814
        %v6816 = vpop.f32.mrb[0].mxu0
        %6817 = vmatprep.mubr.bf16.mxu0 0
        %6818 = vmatmul.mubr.bf16.gmra.mrb[0].mxu0 %v6524
        %v6819 = vpop.f32.mrb[0].mxu0
        %v6820 = vadd.f32 0.0, %v6819
        %v6821 = vpop.f32.mrb[0].mxu0
        %v6822 = vpop.f32.mrb[0].mxu0
        %v6823 = vadd.f32 0.0, %v6822
        %v6824 = vpop.f32.mrb[0].mxu0
        %6825 = vmatprep.mubr.bf16.mxu0 0
        %6826 = vmatmul.mubr.bf16.gmra.mrb[0].mxu0 %v6527
        %v6827 = vpop.f32.mrb[0].mxu0
        %v6828 = vadd.f32 0.0, %v6827
        %v6829 = vpop.f32.mrb[0].mxu0
        %v6830 = vpop.f32.mrb[0].mxu0
        %v6831 = vadd.f32 0.0, %v6830
        %v6832 = vpop.f32.mrb[0].mxu0
        %6833 = vmatprep.mubr.bf16.mxu0 0
        %6834 = vmatmul.mubr.bf16.gmra.mrb[0].mxu0 %v6530
        %v6835 = vpop.f32.mrb[0].mxu0
        %v6836 = vadd.f32 0.0, %v6835
        %v6837 = vpop.f32.mrb[0].mxu0
        %v6838 = vpop.f32.mrb[0].mxu0
        %v6839 = vadd.f32 0.0, %v6838
        %v6840 = vpop.f32.mrb[0].mxu0
        %6841 = vmatprep.mubr.bf16.mxu0 0
        %6842 = vmatmul.mubr.bf16.gmra.mrb[0].mxu0 %v6533
        %v6843 = vpop.f32.mrb[0].mxu0
        %v6844 = vadd.f32 0.0, %v6843
        %v6845 = vpop.f32.mrb[0].mxu0
        %v6846 = vpop.f32.mrb[0].mxu0
        %v6847 = vadd.f32 0.0, %v6846
        %v6848 = vpop.f32.mrb[0].mxu0
        %6849 = vmatprep.mubr.bf16.mxu0 0
        %6850 = vmatmul.mubr.bf16.gmra.mrb[0].mxu0 %v6536
        %v6851 = vpop.f32.mrb[0].mxu0
        %v6852 = vadd.f32 0.0, %v6851
        %v6853 = vpop.f32.mrb[0].mxu0
        %v6854 = vpop.f32.mrb[0].mxu0
        %v6855 = vadd.f32 0.0, %v6854
        %v6856 = vpop.f32.mrb[0].mxu0
        %6857 = vmatprep.mubr.bf16.mxu0 0
        %6858 = vmatmul.mubr.bf16.gmra.mrb[0].mxu0 %v6539
        %v6859 = vpop.f32.mrb[0].mxu0
        %v6860 = vadd.f32 0.0, %v6859
        %v6861 = vpop.f32.mrb[0].mxu0
        %v6862 = vpop.f32.mrb[0].mxu0
        %v6863 = vadd.f32 0.0, %v6862
        %v6864 = vpop.f32.mrb[0].mxu0
        %6865 = vmatprep.mubr.bf16.mxu0 0
        %6866 = vmatmul.mubr.bf16.gmra.mrb[0].mxu0 %v6542
        %v6867 = vpop.f32.mrb[0].mxu0
        %v6868 = vadd.f32 0.0, %v6867
        %v6869 = vpop.f32.mrb[0].mxu0
        %v6870 = vpop.f32.mrb[0].mxu0
        %v6871 = vadd.f32 0.0, %v6870
        %v6872 = vpop.f32.mrb[0].mxu0
        %6873 = vmatprep.mubr.bf16.mxu0 0
        %6874 = vmatmul.mubr.bf16.gmra.mrb[0].mxu0 %v6545
        %v6875 = vpop.f32.mrb[0].mxu0
        %v6876 = vadd.f32 0.0, %v6875
        %v6877 = vpop.f32.mrb[0].mxu0
        %v6878 = vpop.f32.mrb[0].mxu0
        %v6879 = vadd.f32 0.0, %v6878
        %v6880 = vpop.f32.mrb[0].mxu0
        %6881 = vmatprep.mubr.bf16.mxu0 0
        %6882 = vmatmul.mubr.bf16.gmra.mrb[0].mxu0 %v6548
        %v6883 = vpop.f32.mrb[0].mxu0
        %v6884 = vadd.f32 0.0, %v6883
        %v6885 = vpop.f32.mrb[0].mxu0
        %v6886 = vpop.f32.mrb[0].mxu0
        %v6887 = vadd.f32 0.0, %v6886
        %v6888 = vpop.f32.mrb[0].mxu0
        %6889 = vmatprep.mubr.bf16.mxu0 0
        %6890 = vmatmul.mubr.bf16.gmra.mrb[0].mxu0 %v6551
        %v6891 = vpop.f32.mrb[0].mxu0
        %v6892 = vadd.f32 0.0, %v6891
        %v6893 = vpop.f32.mrb[0].mxu0
        %v6894 = vpop.f32.mrb[0].mxu0
        %v6895 = vadd.f32 0.0, %v6894
        %v6896 = vpop.f32.mrb[0].mxu0
        %6897 = vmatprep.mubr.bf16.mxu0 0
        %6898 = vmatmul.mubr.bf16.gmra.mrb[0].mxu0 %v6554
        %v6899 = vpop.f32.mrb[0].mxu0
        %v6900 = vadd.f32 0.0, %v6899
        %v6901 = vpop.f32.mrb[0].mxu0
        %v6902 = vpop.f32.mrb[0].mxu0
        %v6903 = vadd.f32 0.0, %v6902
        %v6904 = vpop.f32.mrb[0].mxu0
        %6905 = vmatprep.mubr.bf16.mxu0 0
        %6906 = vmatmul.mubr.bf16.gmra.mrb[0].mxu0 %v6557
        %v6907 = vpop.f32.mrb[0].mxu0
        %v6908 = vadd.f32 0.0, %v6907
        %v6909 = vpop.f32.mrb[0].mxu0
        %v6910 = vpop.f32.mrb[0].mxu0
        %v6911 = vadd.f32 0.0, %v6910
        %v6912 = vpop.f32.mrb[0].mxu0
        %6913 = vmatprep.mubr.bf16.mxu0 0
        %6914 = vmatmul.mubr.bf16.gmra.mrb[0].mxu0 %v6560
        %v6915 = vpop.f32.mrb[0].mxu0
        %v6916 = vadd.f32 0.0, %v6915
        %v6917 = vpop.f32.mrb[0].mxu0
        %v6918 = vpop.f32.mrb[0].mxu0
        %v6919 = vadd.f32 0.0, %v6918
        %v6920 = vpop.f32.mrb[0].mxu0
        %6921 = vmatprep.mubr.bf16.mxu0 0
        %6922 = vmatmul.mubr.bf16.gmra.mrb[0].mxu0 %v6764
        %v6923 = vpop.f32.mrb[0].mxu0
        %v6924 = vadd.f32 0.0, %v6923
        %v6925 = vpop.f32.mrb[0].mxu0
        %v6926 = vpop.f32.mrb[0].mxu0
        %v6927 = vadd.f32 0.0, %v6926
        %v6928 = vpop.f32.mrb[0].mxu0
        %6929 = vdwg.mxu0
        %v6930 = vadd.f32 %v6726, %v6804
        %v6931 = vadd.f32 %v6727, %v6807
        %v6932 = vadd.f32 %v6728, %v6812
        %v6933 = vadd.f32 %v6729, %v6815
        %v6934 = vadd.f32 %v6730, %v6820
        %v6935 = vadd.f32 %v6731, %v6823
        %v6936 = vadd.f32 %v6732, %v6828
        %v6937 = vadd.f32 %v6733, %v6831
        %v6938 = vadd.f32 %v6734, %v6836
        %v6939 = vadd.f32 %v6735, %v6839
        %v6940 = vadd.f32 %v6736, %v6844
        %v6941 = vadd.f32 %v6737, %v6847
        %v6942 = vadd.f32 %v6738, %v6852
        %v6943 = vadd.f32 %v6739, %v6855
        %v6944 = vadd.f32 %v6740, %v6860
        %v6945 = vadd.f32 %v6741, %v6863
        %v6946 = vadd.f32 %v6742, %v6868
        %v6947 = vadd.f32 %v6743, %v6871
        %v6948 = vadd.f32 %v6744, %v6876
        %v6949 = vadd.f32 %v6745, %v6879
        %v6950 = vadd.f32 %v6746, %v6884
        %v6951 = vadd.f32 %v6747, %v6887
        %v6952 = vadd.f32 %v6748, %v6892
        %v6953 = vadd.f32 %v6749, %v6895
        %v6954 = vadd.f32 %v6750, %v6900
        %v6955 = vadd.f32 %v6751, %v6903
        %v6956 = vadd.f32 %v6752, %v6908
        %v6957 = vadd.f32 %v6753, %v6911
        %v6958 = vadd.f32 %v6754, %v6916
        %v6959 = vadd.f32 %v6755, %v6919
        %v6960 = vadd.f32 %v6756, %v6924
        %v6961 = vadd.f32 %v6757, %v6927
        %s6962 = scalar_lea.vmem %s2, 16
        %v6963 = vld [vmem:[%s6962] sm:$0x3]
        %v6964 = vunpack.c.l.b16 %v6460
        %v6965 = vunpack.c.l.b16 %v6463
        %v6966 = vpack.c.b16 %v6965, %v6964
        %v6968 = vsel %vm1057, %v6966, 0
        %v6971 = vsel %vm1106, %v6963, 0
        %6973 = vmatprep.subr.bf16.mxu0 0
        %6974 = vmatpush1.bf16.msra.mxu0 %v6971
        %6975 = vmatprep.subr.bf16.mxu0 0
        %6976 = vmatpush1.bf16.msra.mxu0 0
        %6977 = vmatprep.subr.bf16.mxu0 0
        %6978 = vmatpush1.bf16.msra.mxu0 0
        %6979 = vmatprep.subr.bf16.mxu0 0
        %6980 = vmatpush1.bf16.msra.mxu0 0
        %6981 = vmatprep.subr.bf16.mxu0 0
        %6982 = vmatpush1.bf16.msra.mxu0 0
        %6983 = vmatprep.subr.bf16.mxu0 0
        %6984 = vmatpush1.bf16.msra.mxu0 0
        %6985 = vmatprep.subr.bf16.mxu0 0
        %6986 = vmatpush1.bf16.msra.mxu0 0
        %6987 = vmatprep.subr.bf16.mxu0 0
        %6988 = vmatpush1.bf16.msra.mxu0 0
        %6989 = vmatprep.subr.bf16.mxu0 0
        %6990 = vmatpush1.bf16.msra.mxu0 0
        %6991 = vmatprep.subr.bf16.mxu0 0
        %6992 = vmatpush1.bf16.msra.mxu0 0
        %6993 = vmatprep.subr.bf16.mxu0 0
        %6994 = vmatpush1.bf16.msra.mxu0 0
        %6995 = vmatprep.subr.bf16.mxu0 0
        %6996 = vmatpush1.bf16.msra.mxu0 0
        %6997 = vmatprep.subr.bf16.mxu0 0
        %6998 = vmatpush1.bf16.msra.mxu0 0
        %6999 = vmatprep.subr.bf16.mxu0 0
        %7000 = vmatpush1.bf16.msra.mxu0 0
        %7001 = vmatprep.subr.bf16.mxu0 0
        %7002 = vmatpush1.bf16.msra.mxu0 0
        %7003 = vmatprep.subr.bf16.mxu0 0
        %7004 = vmatpush1.bf16.msra.mxu0 0
        %7005 = vmatprep.mubr.bf16.mxu0 0
        %7006 = vmatmul.mubr.bf16.gmra.mrb[0].mxu0 %v6521
        %v7007 = vpop.f32.mrb[0].mxu0
        %v7008 = vadd.f32 0.0, %v7007
        %v7009 = vpop.f32.mrb[0].mxu0
        %v7010 = vpop.f32.mrb[0].mxu0
        %v7011 = vadd.f32 0.0, %v7010
        %v7012 = vpop.f32.mrb[0].mxu0
        %7013 = vmatprep.mubr.bf16.mxu0 0
        %7014 = vmatmul.mubr.bf16.gmra.mrb[0].mxu0 %v6524
        %v7015 = vpop.f32.mrb[0].mxu0
        %v7016 = vadd.f32 0.0, %v7015
        %v7017 = vpop.f32.mrb[0].mxu0
        %v7018 = vpop.f32.mrb[0].mxu0
        %v7019 = vadd.f32 0.0, %v7018
        %v7020 = vpop.f32.mrb[0].mxu0
        %7021 = vmatprep.mubr.bf16.mxu0 0
        %7022 = vmatmul.mubr.bf16.gmra.mrb[0].mxu0 %v6527
        %v7023 = vpop.f32.mrb[0].mxu0
        %v7024 = vadd.f32 0.0, %v7023
        %v7025 = vpop.f32.mrb[0].mxu0
        %v7026 = vpop.f32.mrb[0].mxu0
        %v7027 = vadd.f32 0.0, %v7026
        %v7028 = vpop.f32.mrb[0].mxu0
        %7029 = vmatprep.mubr.bf16.mxu0 0
        %7030 = vmatmul.mubr.bf16.gmra.mrb[0].mxu0 %v6530
        %v7031 = vpop.f32.mrb[0].mxu0
        %v7032 = vadd.f32 0.0, %v7031
        %v7033 = vpop.f32.mrb[0].mxu0
        %v7034 = vpop.f32.mrb[0].mxu0
        %v7035 = vadd.f32 0.0, %v7034
        %v7036 = vpop.f32.mrb[0].mxu0
        %7037 = vmatprep.mubr.bf16.mxu0 0
        %7038 = vmatmul.mubr.bf16.gmra.mrb[0].mxu0 %v6533
        %v7039 = vpop.f32.mrb[0].mxu0
        %v7040 = vadd.f32 0.0, %v7039
        %v7041 = vpop.f32.mrb[0].mxu0
        %v7042 = vpop.f32.mrb[0].mxu0
        %v7043 = vadd.f32 0.0, %v7042
        %v7044 = vpop.f32.mrb[0].mxu0
        %7045 = vmatprep.mubr.bf16.mxu0 0
        %7046 = vmatmul.mubr.bf16.gmra.mrb[0].mxu0 %v6536
        %v7047 = vpop.f32.mrb[0].mxu0
        %v7048 = vadd.f32 0.0, %v7047
        %v7049 = vpop.f32.mrb[0].mxu0
        %v7050 = vpop.f32.mrb[0].mxu0
        %v7051 = vadd.f32 0.0, %v7050
        %v7052 = vpop.f32.mrb[0].mxu0
        %7053 = vmatprep.mubr.bf16.mxu0 0
        %7054 = vmatmul.mubr.bf16.gmra.mrb[0].mxu0 %v6539
        %v7055 = vpop.f32.mrb[0].mxu0
        %v7056 = vadd.f32 0.0, %v7055
        %v7057 = vpop.f32.mrb[0].mxu0
        %v7058 = vpop.f32.mrb[0].mxu0
        %v7059 = vadd.f32 0.0, %v7058
        %v7060 = vpop.f32.mrb[0].mxu0
        %7061 = vmatprep.mubr.bf16.mxu0 0
        %7062 = vmatmul.mubr.bf16.gmra.mrb[0].mxu0 %v6542
        %v7063 = vpop.f32.mrb[0].mxu0
        %v7064 = vadd.f32 0.0, %v7063
        %v7065 = vpop.f32.mrb[0].mxu0
        %v7066 = vpop.f32.mrb[0].mxu0
        %v7067 = vadd.f32 0.0, %v7066
        %v7068 = vpop.f32.mrb[0].mxu0
        %7069 = vmatprep.mubr.bf16.mxu0 0
        %7070 = vmatmul.mubr.bf16.gmra.mrb[0].mxu0 %v6545
        %v7071 = vpop.f32.mrb[0].mxu0
        %v7072 = vadd.f32 0.0, %v7071
        %v7073 = vpop.f32.mrb[0].mxu0
        %v7074 = vpop.f32.mrb[0].mxu0
        %v7075 = vadd.f32 0.0, %v7074
        %v7076 = vpop.f32.mrb[0].mxu0
        %7077 = vmatprep.mubr.bf16.mxu0 0
        %7078 = vmatmul.mubr.bf16.gmra.mrb[0].mxu0 %v6548
        %v7079 = vpop.f32.mrb[0].mxu0
        %v7080 = vadd.f32 0.0, %v7079
        %v7081 = vpop.f32.mrb[0].mxu0
        %v7082 = vpop.f32.mrb[0].mxu0
        %v7083 = vadd.f32 0.0, %v7082
        %v7084 = vpop.f32.mrb[0].mxu0
        %7085 = vmatprep.mubr.bf16.mxu0 0
        %7086 = vmatmul.mubr.bf16.gmra.mrb[0].mxu0 %v6551
        %v7087 = vpop.f32.mrb[0].mxu0
        %v7088 = vadd.f32 0.0, %v7087
        %v7089 = vpop.f32.mrb[0].mxu0
        %v7090 = vpop.f32.mrb[0].mxu0
        %v7091 = vadd.f32 0.0, %v7090
        %v7092 = vpop.f32.mrb[0].mxu0
        %7093 = vmatprep.mubr.bf16.mxu0 0
        %7094 = vmatmul.mubr.bf16.gmra.mrb[0].mxu0 %v6554
        %v7095 = vpop.f32.mrb[0].mxu0
        %v7096 = vadd.f32 0.0, %v7095
        %v7097 = vpop.f32.mrb[0].mxu0
        %v7098 = vpop.f32.mrb[0].mxu0
        %v7099 = vadd.f32 0.0, %v7098
        %v7100 = vpop.f32.mrb[0].mxu0
        %7101 = vmatprep.mubr.bf16.mxu0 0
        %7102 = vmatmul.mubr.bf16.gmra.mrb[0].mxu0 %v6557
        %v7103 = vpop.f32.mrb[0].mxu0
        %v7104 = vadd.f32 0.0, %v7103
        %v7105 = vpop.f32.mrb[0].mxu0
        %v7106 = vpop.f32.mrb[0].mxu0
        %v7107 = vadd.f32 0.0, %v7106
        %v7108 = vpop.f32.mrb[0].mxu0
        %7109 = vmatprep.mubr.bf16.mxu0 0
        %7110 = vmatmul.mubr.bf16.gmra.mrb[0].mxu0 %v6560
        %v7111 = vpop.f32.mrb[0].mxu0
        %v7112 = vadd.f32 0.0, %v7111
        %v7113 = vpop.f32.mrb[0].mxu0
        %v7114 = vpop.f32.mrb[0].mxu0
        %v7115 = vadd.f32 0.0, %v7114
        %v7116 = vpop.f32.mrb[0].mxu0
        %7117 = vmatprep.mubr.bf16.mxu0 0
        %7118 = vmatmul.mubr.bf16.gmra.mrb[0].mxu0 %v6764
        %v7119 = vpop.f32.mrb[0].mxu0
        %v7120 = vadd.f32 0.0, %v7119
        %v7121 = vpop.f32.mrb[0].mxu0
        %v7122 = vpop.f32.mrb[0].mxu0
        %v7123 = vadd.f32 0.0, %v7122
        %v7124 = vpop.f32.mrb[0].mxu0
        %7125 = vmatprep.mubr.bf16.mxu0 0
        %7126 = vmatmul.mubr.bf16.gmra.mrb[0].mxu0 %v6968
        %v7127 = vpop.f32.mrb[0].mxu0
        %v7128 = vadd.f32 0.0, %v7127
        %v7129 = vpop.f32.mrb[0].mxu0
        %v7130 = vpop.f32.mrb[0].mxu0
        %v7131 = vadd.f32 0.0, %v7130
        %v7132 = vpop.f32.mrb[0].mxu0
        %7133 = vdwg.mxu0
        %v7134 = vadd.f32 %v6930, %v7008
        %v7135 = vadd.f32 %v6931, %v7011
        %v7136 = vadd.f32 %v6932, %v7016
        %v7137 = vadd.f32 %v6933, %v7019
        %v7138 = vadd.f32 %v6934, %v7024
        %v7139 = vadd.f32 %v6935, %v7027
        %v7140 = vadd.f32 %v6936, %v7032
        %v7141 = vadd.f32 %v6937, %v7035
        %v7142 = vadd.f32 %v6938, %v7040
        %v7143 = vadd.f32 %v6939, %v7043
        %v7144 = vadd.f32 %v6940, %v7048
        %v7145 = vadd.f32 %v6941, %v7051
        %v7146 = vadd.f32 %v6942, %v7056
        %v7147 = vadd.f32 %v6943, %v7059
        %v7148 = vadd.f32 %v6944, %v7064
        %v7149 = vadd.f32 %v6945, %v7067
        %v7150 = vadd.f32 %v6946, %v7072
        %v7151 = vadd.f32 %v6947, %v7075
        %v7152 = vadd.f32 %v6948, %v7080
        %v7153 = vadd.f32 %v6949, %v7083
        %v7154 = vadd.f32 %v6950, %v7088
        %v7155 = vadd.f32 %v6951, %v7091
        %v7156 = vadd.f32 %v6952, %v7096
        %v7157 = vadd.f32 %v6953, %v7099
        %v7158 = vadd.f32 %v6954, %v7104
        %v7159 = vadd.f32 %v6955, %v7107
        %v7160 = vadd.f32 %v6956, %v7112
        %v7161 = vadd.f32 %v6957, %v7115
        %v7162 = vadd.f32 %v6958, %v7120
        %v7163 = vadd.f32 %v6959, %v7123
        %v7164 = vadd.f32 %v6960, %v7128
        %v7165 = vadd.f32 %v6961, %v7131
        %v7166 = vstv %s216
        %v7167 = vmul.f32 %v7134, %v7166
        %v7168 = vmul.f32 %v7135, %v7166
        %v7169 = vmul.f32 %v7136, %v7166
        %v7170 = vmul.f32 %v7137, %v7166
        %v7171 = vmul.f32 %v7138, %v7166
        %v7172 = vmul.f32 %v7139, %v7166
        %v7173 = vmul.f32 %v7140, %v7166
        %v7174 = vmul.f32 %v7141, %v7166
        %v7175 = vmul.f32 %v7142, %v7166
        %v7176 = vmul.f32 %v7143, %v7166
        %v7177 = vmul.f32 %v7144, %v7166
        %v7178 = vmul.f32 %v7145, %v7166
        %v7179 = vmul.f32 %v7146, %v7166
        %v7180 = vmul.f32 %v7147, %v7166
        %v7181 = vmul.f32 %v7148, %v7166
        %v7182 = vmul.f32 %v7149, %v7166
        %v7183 = vmul.f32 %v7150, %v7166
        %v7184 = vmul.f32 %v7151, %v7166
        %v7185 = vmul.f32 %v7152, %v7166
        %v7186 = vmul.f32 %v7153, %v7166
        %v7187 = vmul.f32 %v7154, %v7166
        %v7188 = vmul.f32 %v7155, %v7166
        %v7189 = vmul.f32 %v7156, %v7166
        %v7190 = vmul.f32 %v7157, %v7166
        %v7191 = vmul.f32 %v7158, %v7166
        %v7192 = vmul.f32 %v7159, %v7166
        %v7193 = vmul.f32 %v7160, %v7166
        %v7194 = vmul.f32 %v7161, %v7166
        %v7195 = vmul.f32 %v7162, %v7166
        %v7196 = vmul.f32 %v7163, %v7166
        %v7197 = vmul.f32 %v7164, %v7166
        %v7198 = vmul.f32 %v7165, %v7166
        %v7199 = vstv %s217
        %v7200 = vadd.f32 %v7167, %v7199
        %v7201 = vadd.f32 %v7168, %v7199
        %v7202 = vadd.f32 %v7169, %v7199
        %v7203 = vadd.f32 %v7170, %v7199
        %v7204 = vadd.f32 %v7171, %v7199
        %v7205 = vadd.f32 %v7172, %v7199
        %v7206 = vadd.f32 %v7173, %v7199
        %v7207 = vadd.f32 %v7174, %v7199
        %v7208 = vadd.f32 %v7175, %v7199
        %v7209 = vadd.f32 %v7176, %v7199
        %v7210 = vadd.f32 %v7177, %v7199
        %v7211 = vadd.f32 %v7178, %v7199
        %v7212 = vadd.f32 %v7179, %v7199
        %v7213 = vadd.f32 %v7180, %v7199
        %v7214 = vadd.f32 %v7181, %v7199
        %v7215 = vadd.f32 %v7182, %v7199
        %v7216 = vadd.f32 %v7183, %v7199
        %v7217 = vadd.f32 %v7184, %v7199
        %v7218 = vadd.f32 %v7185, %v7199
        %v7219 = vadd.f32 %v7186, %v7199
        %v7220 = vadd.f32 %v7187, %v7199
        %v7221 = vadd.f32 %v7188, %v7199
        %v7222 = vadd.f32 %v7189, %v7199
        %v7223 = vadd.f32 %v7190, %v7199
        %v7224 = vadd.f32 %v7191, %v7199
        %v7225 = vadd.f32 %v7192, %v7199
        %v7226 = vadd.f32 %v7193, %v7199
        %v7227 = vadd.f32 %v7194, %v7199
        %v7228 = vadd.f32 %v7195, %v7199
        %v7229 = vadd.f32 %v7196, %v7199
        %v7230 = vadd.f32 %v7197, %v7199
        %v7231 = vadd.f32 %v7198, %v7199
        %v7232 = vadd.f32 %v7200, %v340
        %v7233 = vadd.f32 %v7201, %v341
        %v7234 = vadd.f32 %v7202, %v342
        %v7235 = vadd.f32 %v7203, %v343
        %v7236 = vadd.f32 %v7204, %v344
        %v7237 = vadd.f32 %v7205, %v345
        %v7238 = vadd.f32 %v7206, %v346
        %v7239 = vadd.f32 %v7207, %v347
        %v7240 = vadd.f32 %v7208, %v348
        %v7241 = vadd.f32 %v7209, %v349
        %v7242 = vadd.f32 %v7210, %v350
        %v7243 = vadd.f32 %v7211, %v351
        %v7244 = vadd.f32 %v7212, %v352
        %v7245 = vadd.f32 %v7213, %v353
        %v7246 = vadd.f32 %v7214, %v354
        %v7247 = vadd.f32 %v7215, %v355
        %v7248 = vadd.f32 %v7216, %v356
        %v7249 = vadd.f32 %v7217, %v357
        %v7250 = vadd.f32 %v7218, %v358
        %v7251 = vadd.f32 %v7219, %v359
        %v7252 = vadd.f32 %v7220, %v360
        %v7253 = vadd.f32 %v7221, %v361
        %v7254 = vadd.f32 %v7222, %v362
        %v7255 = vadd.f32 %v7223, %v363
        %v7256 = vadd.f32 %v7224, %v364
        %v7257 = vadd.f32 %v7225, %v365
        %v7258 = vadd.f32 %v7226, %v366
        %v7259 = vadd.f32 %v7227, %v367
        %v7260 = vadd.f32 %v7228, %v368
        %v7261 = vadd.f32 %v7229, %v369
        %v7262 = vadd.f32 %v7230, %v370
        %v7263 = vadd.f32 %v7231, %v371
        %v7264 = vmax.f32 %v7232, 0.0
        %v7265 = vmax.f32 %v7233, 0.0
        %v7266 = vmax.f32 %v7234, 0.0
        %v7267 = vmax.f32 %v7235, 0.0
        %v7268 = vmax.f32 %v7236, 0.0
        %v7269 = vmax.f32 %v7237, 0.0
        %v7270 = vmax.f32 %v7238, 0.0
        %v7271 = vmax.f32 %v7239, 0.0
        %v7272 = vmax.f32 %v7240, 0.0
        %v7273 = vmax.f32 %v7241, 0.0
        %v7274 = vmax.f32 %v7242, 0.0
        %v7275 = vmax.f32 %v7243, 0.0
        %v7276 = vmax.f32 %v7244, 0.0
        %v7277 = vmax.f32 %v7245, 0.0
        %v7278 = vmax.f32 %v7246, 0.0
        %v7279 = vmax.f32 %v7247, 0.0
        %v7280 = vmax.f32 %v7248, 0.0
        %v7281 = vmax.f32 %v7249, 0.0
        %v7282 = vmax.f32 %v7250, 0.0
        %v7283 = vmax.f32 %v7251, 0.0
        %v7284 = vmax.f32 %v7252, 0.0
        %v7285 = vmax.f32 %v7253, 0.0
        %v7286 = vmax.f32 %v7254, 0.0
        %v7287 = vmax.f32 %v7255, 0.0
        %v7288 = vmax.f32 %v7256, 0.0
        %v7289 = vmax.f32 %v7257, 0.0
        %v7290 = vmax.f32 %v7258, 0.0
        %v7291 = vmax.f32 %v7259, 0.0
        %v7292 = vmax.f32 %v7260, 0.0
        %v7293 = vmax.f32 %v7261, 0.0
        %v7294 = vmax.f32 %v7262, 0.0
        %v7295 = vmax.f32 %v7263, 0.0
        %7296 = vst.msk [vmem:[%s211] sm:$0xff] %vm1057, %v7264
        %7297 = vst.msk [vmem:[%s211 + $0x8] sm:$0xff] %vm1057, %v7265
        %7298 = vst.msk [vmem:[%s211 + $0x10] sm:$0xff] %vm1057, %v7266
        %7299 = vst.msk [vmem:[%s211 + $0x18] sm:$0xff] %vm1057, %v7267
        %7300 = vst.msk [vmem:[%s211 + $0x20] sm:$0xff] %vm1057, %v7268
        %7301 = vst.msk [vmem:[%s211 + $0x28] sm:$0xff] %vm1057, %v7269
        %7302 = vst.msk [vmem:[%s211 + $0x30] sm:$0xff] %vm1057, %v7270
        %7303 = vst.msk [vmem:[%s211 + $0x38] sm:$0xff] %vm1057, %v7271
        %7304 = vst.msk [vmem:[%s211 + $0x40] sm:$0xff] %vm1057, %v7272
        %7305 = vst.msk [vmem:[%s211 + $0x48] sm:$0xff] %vm1057, %v7273
        %7306 = vst.msk [vmem:[%s211 + $0x50] sm:$0xff] %vm1057, %v7274
        %7307 = vst.msk [vmem:[%s211 + $0x58] sm:$0xff] %vm1057, %v7275
        %7308 = vst.msk [vmem:[%s211 + $0x60] sm:$0xff] %vm1057, %v7276
        %7309 = vst.msk [vmem:[%s211 + $0x68] sm:$0xff] %vm1057, %v7277
        %7310 = vst.msk [vmem:[%s211 + $0x70] sm:$0xff] %vm1057, %v7278
        %7311 = vst.msk [vmem:[%s211 + $0x78] sm:$0xff] %vm1057, %v7279
        %7312 = vst.msk [vmem:[%s211 + $0x80] sm:$0xff] %vm1057, %v7280
        %7313 = vst.msk [vmem:[%s211 + $0x88] sm:$0xff] %vm1057, %v7281
        %7314 = vst.msk [vmem:[%s211 + $0x90] sm:$0xff] %vm1057, %v7282
        %7315 = vst.msk [vmem:[%s211 + $0x98] sm:$0xff] %vm1057, %v7283
        %7316 = vst.msk [vmem:[%s211 + $0xa0] sm:$0xff] %vm1057, %v7284
        %7317 = vst.msk [vmem:[%s211 + $0xa8] sm:$0xff] %vm1057, %v7285
        %7318 = vst.msk [vmem:[%s211 + $0xb0] sm:$0xff] %vm1057, %v7286
        %7319 = vst.msk [vmem:[%s211 + $0xb8] sm:$0xff] %vm1057, %v7287
        %7320 = vst.msk [vmem:[%s211 + $0xc0] sm:$0xff] %vm1057, %v7288
        %7321 = vst.msk [vmem:[%s211 + $0xc8] sm:$0xff] %vm1057, %v7289
        %7322 = vst.msk [vmem:[%s211 + $0xd0] sm:$0xff] %vm1057, %v7290
        %7323 = vst.msk [vmem:[%s211 + $0xd8] sm:$0xff] %vm1057, %v7291
        %7324 = vst.msk [vmem:[%s211 + $0xe0] sm:$0xff] %vm1057, %v7292
        %7325 = vst.msk [vmem:[%s211 + $0xe8] sm:$0xff] %vm1057, %v7293
        %7326 = vst.msk [vmem:[%s211 + $0xf0] sm:$0xff] %vm1057, %v7294
        %7327 = vst.msk [vmem:[%s211 + $0xf8] sm:$0xff] %vm1057, %v7295
        %p7328 = scmp.lt.s32.totalorder %s16, 1
        %s7329 = scalar_select %p7328, %s16, 1
        %s7330 = smul.addr %s7329, 32
        %s7331 = smul.addr %s7330, 8
        %s7332 = scalar_lea.vmem %s4, %s7331
        // Predicated region
        $region41: #{tpu_custom_call.1} parent=35 // pred_check
          %p7333 = pneg %p123
        $region42: #{tpu_custom_call.1} parent=35 // pred_check_branch
          %7335 = sbr.rel (%p7333) target = $region44
        $region43: #{tpu_custom_call.1} parent=35 // pred_region
          _
        $region44: #{tpu_custom_call.1} parent=35 // pred_fallthru
          _
      $region36: #{tpu_custom_call.1} parent=5 // pred_fallthru
        _
      %p7336 = scmp.le.s32.totalorder 2, %s11
      // Predicated region
      $region45: #{tpu_custom_call.1} parent=5 // pred_check
        %p7337 = pneg %p7336
      $region46: #{tpu_custom_call.1} parent=5 // pred_check_branch
        %7339 = sbr.rel (%p7337) target = $region48
      $region47: #{tpu_custom_call.1} parent=5 // pred_region
        %s7340 = ssub.s32 %s11, 2
        // Predicated region
        $region49: #{tpu_custom_call.1} parent=47 // pred_check
          %p7341 = pneg %p129
        $region50: #{tpu_custom_call.1} parent=47 // pred_check_branch
          %7343 = sbr.rel (%p7341) target = $region52
        $region51: #{tpu_custom_call.1} parent=47 // pred_region
          %p7344 = scmp.lt.s32.totalorder %s17, 1
          %s7345 = scalar_select %p7344, %s17, 1
          %s7346 = smul.addr %s7345, 32
          %s7347 = smul.addr %s7346, 8
          %s7348 = scalar_lea.vmem %s4, %s7347
        $region52: #{tpu_custom_call.1} parent=47 // pred_fallthru
          _
      $region48: #{tpu_custom_call.1} parent=5 // pred_fallthru
        _
    $region6: #{tpu_custom_call.1} parent=1 // loop_footer
      %s15 = sadd.s32 1, %s11
    $region7: #{tpu_custom_call.1} parent=1 // loop_footer_branch
      %10 = sbr.rel target = $region3
    $region8: #{tpu_custom_call.1} parent=1 // loop_exit
      _
    %7349 = vsyncpa [#allocation4], 1
    %s7350 = scalar_lea.sflag [#allocation4], 1
    %7351 = vsyncpa %s7350, 1

</llo_original>
